<compile_context>
chip_gen: v7x
topology: tpu7x:2x2x1
jax: 0.10.0
libtpu: 0.0.40
codegen_flags: <defaults>
</compile_context>

<pallas_src>
import functools

import numpy as np
import jax
import jax.numpy as jnp
from jax.experimental import pallas as pl
from jax.experimental.pallas import tpu as pltpu


# ----------------------------------------------------------------------------
# Wrapper-side weight preparation: block-Toeplitz matrices over the W axis.
# ----------------------------------------------------------------------------
def _shift_select(W, K, dilation):
    """S[k, w_in, w_out] = 1 iff w_in == w_out + (k - K//2) * dilation, in range."""
    S = np.zeros((K, W, W), np.float32)
    for k in range(K):
        off = (k - K // 2) * dilation
        for wo in range(W):
            wi = wo + off
            if 0 <= wi < W:
                S[k, wi, wo] = 1.0
    return jnp.asarray(S)


def _dense_toeplitz(w, W, dilation):
    """(3, 3, Cp, Co) conv weight -> (3, W*Cp, W*Co) per-kh block-Toeplitz."""
    KH, KW, Cp, Co = w.shape
    S = _shift_select(W, KW, dilation)
    M = jnp.einsum("kxw,hkcd->hxcwd", S, w)          # (KH, W, Cp, W, Co)
    return M.reshape(KH, W * Cp, W * Co)


def _depthwise_toeplitz(dw, W):
    """(9, 9, C) depthwise weight -> (9, W*C, W*C) per-kh block-Toeplitz."""
    KH, KW, C = dw.shape
    S = _shift_select(W, KW, 1)                      # depthwise is never dilated
    D = jnp.einsum("kxw,hkc,cd->hxcwd", S, dw, jnp.eye(C, dtype=dw.dtype))
    return D.reshape(KH, W * C, W * C)


def _prepare_weights(params, W, C, dils):
    d_c1, d_c23, d_bn, d_d1 = dils

    def pad_cin(w):  # zero-pad input channels up to C (matches zero-padded x)
        return jnp.pad(w, ((0, 0), (0, 0), (0, C - w.shape[2]), (0, 0)))

    Ms = [
        _dense_toeplitz(pad_cin(params["c1"]["w"]), W, d_c1),
        _dense_toeplitz(params["c2"]["w"], W, d_c23),
        _dense_toeplitz(params["c3"]["w"], W, d_c23),
        _dense_toeplitz(params["bn"]["w"], W, d_bn),
    ]
    for name, d in (("d3", d_c23), ("d2", d_c23), ("d1", d_d1)):
        w = params[name]["w"]
        Ms.append(_dense_toeplitz(w[:, :, :C, :], W, d))   # "x" half of torch.cat
        Ms.append(_dense_toeplitz(w[:, :, C:, :], W, d))   # "skip" half
    M_all = jnp.stack(Ms).astype(jnp.bfloat16)             # (10, 3, W*C, W*C)

    order = ("c1", "c2", "c3", "bn", "d3", "d2", "d1")
    D_all = jnp.stack([_depthwise_toeplitz(params[n]["dw"], W) for n in order]
                      ).astype(jnp.bfloat16)               # (7, 9, W*C, W*C)
    b_all = jnp.stack([jnp.tile(params[n]["b"], W) for n in order]
                      ).reshape(7, 1, W * C).astype(jnp.float32)
    db_all = jnp.stack([jnp.tile(params[n]["db"], W) for n in order]
                       ).reshape(7, 1, W * C).astype(jnp.float32)
    return M_all, D_all, b_all, db_all


# ----------------------------------------------------------------------------
# Fused encoder-block kernel (one batch element per grid step).
# ----------------------------------------------------------------------------
def _encoder_kernel(x_ref, M_ref, D_ref, b_ref, db_ref, o_ref, *, H, W, C, blk_dils):
    """x_ref : (1, H, W*C)       f32  input, channels zero-padded to C
       M_ref : (10, 3, W*C, W*C) bf16 dense-conv block-Toeplitz weights (per kh)
       D_ref : (7, 9, W*C, W*C)  bf16 depthwise block-Toeplitz weights (per kh)
       b_ref : (7, 1, W*C)       f32  dense-conv bias rows (tiled over W)
       db_ref: (7, 1, W*C)       f32  depthwise bias rows
       o_ref : (1, H, W*C)       f32  output (d1)"""
    WC = W * C

    def hpad(a, p):  # zero-pad rows (H axis) only; W padding is baked into weights
        z = jnp.zeros((p, WC), jnp.float32)
        return jnp.concatenate([z, a, z], axis=0)

    def dense_conv(parts, blk):
        dil = blk_dils[blk]
        acc = jnp.zeros((H, WC), jnp.float32)
        for act, part in parts:
            ap = hpad(act, dil)
            for kh in range(3):
                lhs = ap[kh * dil:kh * dil + H, :].astype(jnp.bfloat16)
                acc = acc + jnp.dot(lhs, M_ref[part, kh],
                                    preferred_element_type=jnp.float32)
        return acc + b_ref[blk]

    def x_unit(y, blk):
        rp = hpad(jnp.maximum(y, 0.0), 4)            # relu, pad 4 rows each side
        z = jnp.zeros((H, WC), jnp.float32)
        for kh in range(9):
            lhs = rp[kh:kh + H, :].astype(jnp.bfloat16)
            z = z + jnp.dot(lhs, D_ref[blk, kh], preferred_element_type=jnp.float32)
        gate = jnp.exp(-jnp.square(z + db_ref[blk]))  # Gaussian activation
        return gate * y                               # gate the pre-relu conv output

    def conv_block(parts, blk):
        return x_unit(dense_conv(parts, blk), blk)

    x = x_ref[0]
    c1 = conv_block([(x, 0)], 0)
    c2 = conv_block([(c1, 1)], 1)
    c3 = conv_block([(c2, 2)], 2)
    bn = conv_block([(c3, 3)], 3)
    d3 = conv_block([(bn, 4), (c3, 5)], 4)   # torch.cat([bn, c3]) split over channels
    d2 = conv_block([(d3, 6), (c2, 7)], 5)
    d1 = conv_block([(d2, 8), (c1, 9)], 6)
    o_ref[0] = d1


@functools.partial(jax.jit, static_argnames=("level",))
def encoder_block_apply(params, x_nchw, level=1):
    N, Cin, H, W = x_nchw.shape
    C = params["c1"]["w"].shape[3]
    if Cin > C:
        # TODO(synk): in_channels > out_channels would need a wider lane layout for c1.
        raise NotImplementedError("in_channels > out_channels not supported")
    WC = W * C

    d_c1 = 2 if level == 3 else 1
    d_c23 = 2 ** (level - 1)
    d_bn = 2 ** (level + 1)
    d_d1 = 2 if level == 3 else 1
    blk_dils = (d_c1, d_c23, d_c23, d_bn, d_c23, d_c23, d_d1)

    M_all, D_all, b_all, db_all = _prepare_weights(
        params, W, C, (d_c1, d_c23, d_bn, d_d1))

    # NCHW -> lane-dense (N, H, W*C), zero-padding channels up to C.
    x = jnp.transpose(x_nchw, (0, 2, 3, 1)).astype(jnp.float32)
    x = jnp.pad(x, ((0, 0), (0, 0), (0, 0), (0, C - Cin))).reshape(N, H, WC)

    kern = functools.partial(_encoder_kernel, H=H, W=W, C=C, blk_dils=blk_dils)
    out = pl.pallas_call(
        kern,
        out_shape=jax.ShapeDtypeStruct((N, H, WC), jnp.float32),
        grid=(N,),
        in_specs=[
            pl.BlockSpec((1, H, WC), lambda n: (n, 0, 0)),
            pl.BlockSpec(M_all.shape, lambda n: (0, 0, 0, 0)),
            pl.BlockSpec(D_all.shape, lambda n: (0, 0, 0, 0)),
            pl.BlockSpec(b_all.shape, lambda n: (0, 0, 0)),
            pl.BlockSpec(db_all.shape, lambda n: (0, 0, 0)),
        ],
        out_specs=pl.BlockSpec((1, H, WC), lambda n: (n, 0, 0)),
        compiler_params=pltpu.CompilerParams(dimension_semantics=("parallel",)),
    )(x, M_all, D_all, b_all, db_all)

    return jnp.transpose(out.reshape(N, H, W, C), (0, 3, 1, 2))


# ----------------------------------------------------------------------------
# Parameter init (same layout as before: w (KH,KW,Cin,Cout), dw (9,9,C)).
# ----------------------------------------------------------------------------
def init_conv_block(key, cin, cout, k=3, dwk=9):
    k1, k2, k3, k4 = jax.random.split(key, 4)
    return {
        "w": jax.random.normal(k1, (k, k, cin, cout), jnp.float32) * 0.1,
        "b": jax.random.normal(k2, (cout,), jnp.float32) * 0.1,
        "dw": jax.random.normal(k3, (dwk, dwk, cout), jnp.float32) * 0.05,
        "db": jax.random.normal(k4, (cout,), jnp.float32) * 0.05,
    }


def init_encoder_block(key, in_channels, out_channels):
    keys = jax.random.split(key, 7)
    return {
        "c1": init_conv_block(keys[0], in_channels, out_channels),
        "c2": init_conv_block(keys[1], out_channels, out_channels),
        "c3": init_conv_block(keys[2], out_channels, out_channels),
        "bn": init_conv_block(keys[3], out_channels, out_channels),
        "d3": init_conv_block(keys[4], 2 * out_channels, out_channels),
        "d2": init_conv_block(keys[5], 2 * out_channels, out_channels),
        "d1": init_conv_block(keys[6], 2 * out_channels, out_channels),
    }


# ----------------------------------------------------------------------------
# Plain-JAX (XLA conv) reference, for in-script correctness verification.
# ----------------------------------------------------------------------------
def _conv_block_ref(p, x, dilation):
    d = dilation
    y = jax.lax.conv_general_dilated(
        x, p["w"], (1, 1), [(d, d), (d, d)], rhs_dilation=(d, d),
        dimension_numbers=("NHWC", "HWIO", "NHWC")) + p["b"]
    K, _, C = p["dw"].shape
    pd = K // 2
    z = jax.lax.conv_general_dilated(
        jnp.maximum(y, 0.0), p["dw"].reshape(K, K, 1, C), (1, 1),
        [(pd, pd), (pd, pd)],
        dimension_numbers=("NHWC", "HWIO", "NHWC"),
        feature_group_count=C) + p["db"]
    return jnp.exp(-jnp.square(z)) * y


def encoder_block_ref(params, x_nchw, level=1):
    d_c1 = 2 if level == 3 else 1
    d_c23 = 2 ** (level - 1)
    d_bn = 2 ** (level + 1)
    d_d1 = 2 if level == 3 else 1
    x = jnp.transpose(x_nchw, (0, 2, 3, 1))
    c1 = _conv_block_ref(params["c1"], x, d_c1)
    c2 = _conv_block_ref(params["c2"], c1, d_c23)
    c3 = _conv_block_ref(params["c3"], c2, d_c23)
    bn = _conv_block_ref(params["bn"], c3, d_bn)
    d3 = _conv_block_ref(params["d3"], jnp.concatenate([bn, c3], -1), d_c23)
    d2 = _conv_block_ref(params["d2"], jnp.concatenate([d3, c2], -1), d_c23)
    d1 = _conv_block_ref(params["d1"], jnp.concatenate([d2, c1], -1), d_d1)
    return jnp.transpose(d1, (0, 3, 1, 2))


if __name__ == "__main__":
    key = jax.random.PRNGKey(0)
    k_param, k_x = jax.random.split(key)

    N, Cin, H, W = 2, 4, 16, 16
    Cout = 8
    x = jax.random.normal(k_x, (N, Cin, H, W), jnp.float32)
    params = init_encoder_block(k_param, Cin, Cout)

    out = jax.block_until_ready(encoder_block_apply(params, x, level=1))
    assert out.shape == (N, Cout, H, W), out.shape
    assert bool(jnp.all(jnp.isfinite(out)))

    # Verify against a plain-JAX reference (bf16 MXU weights vs f32 ref -> loose tol).
    ref = jax.block_until_ready(encoder_block_ref(params, x, level=1))
    max_err = float(jnp.max(jnp.abs(out - ref)))
    assert max_err < 1e-1, f"max abs err vs reference: {max_err}"

    print("KERNEL_OK")
</pallas_src>

<mosaic_0001>
module attributes {stable_mosaic.version = 11 : i64} {
  func.func @_encoder_kernel(%arg0: i32, %arg1: memref<1x16x128xf32, #tpu.memory_space<vmem>>, %arg2: memref<10x3x128x128xbf16, #tpu.memory_space<vmem>>, %arg3: memref<7x9x128x128xbf16, #tpu.memory_space<vmem>>, %arg4: memref<7x1x128xf32, #tpu.memory_space<vmem>>, %arg5: memref<7x1x128xf32, #tpu.memory_space<vmem>>, %arg6: memref<1x16x128xf32, #tpu.memory_space<vmem>>) attributes {dimension_semantics = [#tpu.dimension_semantics<parallel>], iteration_bounds = array<i64: 2>, scalar_prefetch = 0 : i64, scratch_operands = 0 : i64, tpu.core_type = #tpu.core_type<tc>, window_params = [{transform_indices = @transform_0, window_bounds = array<i64: 1, 16, 128>}, {pipeline_mode = #tpu.pipeline_mode<synchronous>, transform_indices = @transform_1, window_bounds = array<i64: 10, 3, 128, 128>}, {pipeline_mode = #tpu.pipeline_mode<synchronous>, transform_indices = @transform_2, window_bounds = array<i64: 7, 9, 128, 128>}, {pipeline_mode = #tpu.pipeline_mode<synchronous>, transform_indices = @transform_3, window_bounds = array<i64: 7, 1, 128>}, {pipeline_mode = #tpu.pipeline_mode<synchronous>, transform_indices = @transform_4, window_bounds = array<i64: 7, 1, 128>}, {transform_indices = @transform_5, window_bounds = array<i64: 1, 16, 128>}]} {
    %c0 = arith.constant 0 : index
    %c0_0 = arith.constant 0 : index
    %c0_1 = arith.constant 0 : index
    %0 = vector.load %arg1[%c0, %c0_0, %c0_1] : memref<1x16x128xf32, #tpu.memory_space<vmem>>, vector<1x16x128xf32>
    %1 = vector.shape_cast %0 : vector<1x16x128xf32> to vector<16x128xf32>
    %cst = arith.constant 0.000000e+00 : f32
    %2 = vector.broadcast %cst : f32 to vector<16x128xf32>
    %cst_2 = arith.constant 0.000000e+00 : f32
    %3 = vector.broadcast %cst_2 : f32 to vector<1x128xf32>
    %4 = tpu.concatenate %3, %1, %3 in 0 : vector<1x128xf32>, vector<16x128xf32>, vector<1x128xf32> -> vector<18x128xf32>
    %5 = vector.extract_strided_slice %4 {offsets = [0, 0], sizes = [16, 128], strides = [1, 1]} : vector<18x128xf32> to vector<16x128xf32>
    %6 = arith.truncf %5 : vector<16x128xf32> to vector<16x128xbf16>
    %c0_3 = arith.constant 0 : index
    %c0_4 = arith.constant 0 : index
    %c0_5 = arith.constant 0 : index
    %c0_6 = arith.constant 0 : index
    %7 = vector.load %arg2[%c0_3, %c0_4, %c0_5, %c0_6] : memref<10x3x128x128xbf16, #tpu.memory_space<vmem>>, vector<1x1x128x128xbf16>
    %8 = vector.shape_cast %7 : vector<1x1x128x128xbf16> to vector<128x128xbf16>
    %cst_7 = arith.constant dense<0.000000e+00> : vector<16x128xf32>
    %9 = tpu.matmul %6, %8, %cst_7 {dimension_numbers = #tpu.dot_dimension_numbers<[1], [0], [0], [1], [0, 0, 1, 1], [], []>} : vector<16x128xbf16>, vector<128x128xbf16>, vector<16x128xf32> -> vector<16x128xf32>
    %10 = arith.addf %2, %9 : vector<16x128xf32>
    %11 = vector.extract_strided_slice %4 {offsets = [1, 0], sizes = [16, 128], strides = [1, 1]} : vector<18x128xf32> to vector<16x128xf32>
    %12 = arith.truncf %11 : vector<16x128xf32> to vector<16x128xbf16>
    %c0_8 = arith.constant 0 : index
    %c1 = arith.constant 1 : index
    %c0_9 = arith.constant 0 : index
    %c0_10 = arith.constant 0 : index
    %13 = vector.load %arg2[%c0_8, %c1, %c0_9, %c0_10] : memref<10x3x128x128xbf16, #tpu.memory_space<vmem>>, vector<1x1x128x128xbf16>
    %14 = vector.shape_cast %13 : vector<1x1x128x128xbf16> to vector<128x128xbf16>
    %cst_11 = arith.constant dense<0.000000e+00> : vector<16x128xf32>
    %15 = tpu.matmul %12, %14, %cst_11 {dimension_numbers = #tpu.dot_dimension_numbers<[1], [0], [0], [1], [0, 0, 1, 1], [], []>} : vector<16x128xbf16>, vector<128x128xbf16>, vector<16x128xf32> -> vector<16x128xf32>
    %16 = arith.addf %10, %15 : vector<16x128xf32>
    %17 = vector.extract_strided_slice %4 {offsets = [2, 0], sizes = [16, 128], strides = [1, 1]} : vector<18x128xf32> to vector<16x128xf32>
    %18 = arith.truncf %17 : vector<16x128xf32> to vector<16x128xbf16>
    %c0_12 = arith.constant 0 : index
    %c2 = arith.constant 2 : index
    %c0_13 = arith.constant 0 : index
    %c0_14 = arith.constant 0 : index
    %19 = vector.load %arg2[%c0_12, %c2, %c0_13, %c0_14] : memref<10x3x128x128xbf16, #tpu.memory_space<vmem>>, vector<1x1x128x128xbf16>
    %20 = vector.shape_cast %19 : vector<1x1x128x128xbf16> to vector<128x128xbf16>
    %cst_15 = arith.constant dense<0.000000e+00> : vector<16x128xf32>
    %21 = tpu.matmul %18, %20, %cst_15 {dimension_numbers = #tpu.dot_dimension_numbers<[1], [0], [0], [1], [0, 0, 1, 1], [], []>} : vector<16x128xbf16>, vector<128x128xbf16>, vector<16x128xf32> -> vector<16x128xf32>
    %22 = arith.addf %16, %21 : vector<16x128xf32>
    %c0_16 = arith.constant 0 : index
    %c0_17 = arith.constant 0 : index
    %c0_18 = arith.constant 0 : index
    %23 = vector.load %arg4[%c0_16, %c0_17, %c0_18] : memref<7x1x128xf32, #tpu.memory_space<vmem>>, vector<1x1x128xf32>
    %24 = vector.shape_cast %23 : vector<1x1x128xf32> to vector<1x128xf32>
    %25 = vector.broadcast %24 : vector<1x128xf32> to vector<16x128xf32>
    %26 = arith.addf %22, %25 : vector<16x128xf32>
    %cst_19 = arith.constant 0.000000e+00 : f32
    %27 = vector.broadcast %cst_19 : f32 to vector<16x128xf32>
    %28 = arith.maximumf %26, %27 : vector<16x128xf32>
    %cst_20 = arith.constant 0.000000e+00 : f32
    %29 = vector.broadcast %cst_20 : f32 to vector<4x128xf32>
    %30 = tpu.concatenate %29, %28, %29 in 0 : vector<4x128xf32>, vector<16x128xf32>, vector<4x128xf32> -> vector<24x128xf32>
    %cst_21 = arith.constant 0.000000e+00 : f32
    %31 = vector.broadcast %cst_21 : f32 to vector<16x128xf32>
    %32 = vector.extract_strided_slice %30 {offsets = [0, 0], sizes = [16, 128], strides = [1, 1]} : vector<24x128xf32> to vector<16x128xf32>
    %33 = arith.truncf %32 : vector<16x128xf32> to vector<16x128xbf16>
    %c0_22 = arith.constant 0 : index
    %c0_23 = arith.constant 0 : index
    %c0_24 = arith.constant 0 : index
    %c0_25 = arith.constant 0 : index
    %34 = vector.load %arg3[%c0_22, %c0_23, %c0_24, %c0_25] : memref<7x9x128x128xbf16, #tpu.memory_space<vmem>>, vector<1x1x128x128xbf16>
    %35 = vector.shape_cast %34 : vector<1x1x128x128xbf16> to vector<128x128xbf16>
    %cst_26 = arith.constant dense<0.000000e+00> : vector<16x128xf32>
    %36 = tpu.matmul %33, %35, %cst_26 {dimension_numbers = #tpu.dot_dimension_numbers<[1], [0], [0], [1], [0, 0, 1, 1], [], []>} : vector<16x128xbf16>, vector<128x128xbf16>, vector<16x128xf32> -> vector<16x128xf32>
    %37 = arith.addf %31, %36 : vector<16x128xf32>
    %38 = vector.extract_strided_slice %30 {offsets = [1, 0], sizes = [16, 128], strides = [1, 1]} : vector<24x128xf32> to vector<16x128xf32>
    %39 = arith.truncf %38 : vector<16x128xf32> to vector<16x128xbf16>
    %c0_27 = arith.constant 0 : index
    %c1_28 = arith.constant 1 : index
    %c0_29 = arith.constant 0 : index
    %c0_30 = arith.constant 0 : index
    %40 = vector.load %arg3[%c0_27, %c1_28, %c0_29, %c0_30] : memref<7x9x128x128xbf16, #tpu.memory_space<vmem>>, vector<1x1x128x128xbf16>
    %41 = vector.shape_cast %40 : vector<1x1x128x128xbf16> to vector<128x128xbf16>
    %cst_31 = arith.constant dense<0.000000e+00> : vector<16x128xf32>
    %42 = tpu.matmul %39, %41, %cst_31 {dimension_numbers = #tpu.dot_dimension_numbers<[1], [0], [0], [1], [0, 0, 1, 1], [], []>} : vector<16x128xbf16>, vector<128x128xbf16>, vector<16x128xf32> -> vector<16x128xf32>
    %43 = arith.addf %37, %42 : vector<16x128xf32>
    %44 = vector.extract_strided_slice %30 {offsets = [2, 0], sizes = [16, 128], strides = [1, 1]} : vector<24x128xf32> to vector<16x128xf32>
    %45 = arith.truncf %44 : vector<16x128xf32> to vector<16x128xbf16>
    %c0_32 = arith.constant 0 : index
    %c2_33 = arith.constant 2 : index
    %c0_34 = arith.constant 0 : index
    %c0_35 = arith.constant 0 : index
    %46 = vector.load %arg3[%c0_32, %c2_33, %c0_34, %c0_35] : memref<7x9x128x128xbf16, #tpu.memory_space<vmem>>, vector<1x1x128x128xbf16>
    %47 = vector.shape_cast %46 : vector<1x1x128x128xbf16> to vector<128x128xbf16>
    %cst_36 = arith.constant dense<0.000000e+00> : vector<16x128xf32>
    %48 = tpu.matmul %45, %47, %cst_36 {dimension_numbers = #tpu.dot_dimension_numbers<[1], [0], [0], [1], [0, 0, 1, 1], [], []>} : vector<16x128xbf16>, vector<128x128xbf16>, vector<16x128xf32> -> vector<16x128xf32>
    %49 = arith.addf %43, %48 : vector<16x128xf32>
    %50 = vector.extract_strided_slice %30 {offsets = [3, 0], sizes = [16, 128], strides = [1, 1]} : vector<24x128xf32> to vector<16x128xf32>
    %51 = arith.truncf %50 : vector<16x128xf32> to vector<16x128xbf16>
    %c0_37 = arith.constant 0 : index
    %c3 = arith.constant 3 : index
    %c0_38 = arith.constant 0 : index
    %c0_39 = arith.constant 0 : index
    %52 = vector.load %arg3[%c0_37, %c3, %c0_38, %c0_39] : memref<7x9x128x128xbf16, #tpu.memory_space<vmem>>, vector<1x1x128x128xbf16>
    %53 = vector.shape_cast %52 : vector<1x1x128x128xbf16> to vector<128x128xbf16>
    %cst_40 = arith.constant dense<0.000000e+00> : vector<16x128xf32>
    %54 = tpu.matmul %51, %53, %cst_40 {dimension_numbers = #tpu.dot_dimension_numbers<[1], [0], [0], [1], [0, 0, 1, 1], [], []>} : vector<16x128xbf16>, vector<128x128xbf16>, vector<16x128xf32> -> vector<16x128xf32>
    %55 = arith.addf %49, %54 : vector<16x128xf32>
    %56 = vector.extract_strided_slice %30 {offsets = [4, 0], sizes = [16, 128], strides = [1, 1]} : vector<24x128xf32> to vector<16x128xf32>
    %57 = arith.truncf %56 : vector<16x128xf32> to vector<16x128xbf16>
    %c0_41 = arith.constant 0 : index
    %c4 = arith.constant 4 : index
    %c0_42 = arith.constant 0 : index
    %c0_43 = arith.constant 0 : index
    %58 = vector.load %arg3[%c0_41, %c4, %c0_42, %c0_43] : memref<7x9x128x128xbf16, #tpu.memory_space<vmem>>, vector<1x1x128x128xbf16>
    %59 = vector.shape_cast %58 : vector<1x1x128x128xbf16> to vector<128x128xbf16>
    %cst_44 = arith.constant dense<0.000000e+00> : vector<16x128xf32>
    %60 = tpu.matmul %57, %59, %cst_44 {dimension_numbers = #tpu.dot_dimension_numbers<[1], [0], [0], [1], [0, 0, 1, 1], [], []>} : vector<16x128xbf16>, vector<128x128xbf16>, vector<16x128xf32> -> vector<16x128xf32>
    %61 = arith.addf %55, %60 : vector<16x128xf32>
    %62 = vector.extract_strided_slice %30 {offsets = [5, 0], sizes = [16, 128], strides = [1, 1]} : vector<24x128xf32> to vector<16x128xf32>
    %63 = arith.truncf %62 : vector<16x128xf32> to vector<16x128xbf16>
    %c0_45 = arith.constant 0 : index
    %c5 = arith.constant 5 : index
    %c0_46 = arith.constant 0 : index
    %c0_47 = arith.constant 0 : index
    %64 = vector.load %arg3[%c0_45, %c5, %c0_46, %c0_47] : memref<7x9x128x128xbf16, #tpu.memory_space<vmem>>, vector<1x1x128x128xbf16>
    %65 = vector.shape_cast %64 : vector<1x1x128x128xbf16> to vector<128x128xbf16>
    %cst_48 = arith.constant dense<0.000000e+00> : vector<16x128xf32>
    %66 = tpu.matmul %63, %65, %cst_48 {dimension_numbers = #tpu.dot_dimension_numbers<[1], [0], [0], [1], [0, 0, 1, 1], [], []>} : vector<16x128xbf16>, vector<128x128xbf16>, vector<16x128xf32> -> vector<16x128xf32>
    %67 = arith.addf %61, %66 : vector<16x128xf32>
    %68 = vector.extract_strided_slice %30 {offsets = [6, 0], sizes = [16, 128], strides = [1, 1]} : vector<24x128xf32> to vector<16x128xf32>
    %69 = arith.truncf %68 : vector<16x128xf32> to vector<16x128xbf16>
    %c0_49 = arith.constant 0 : index
    %c6 = arith.constant 6 : index
    %c0_50 = arith.constant 0 : index
    %c0_51 = arith.constant 0 : index
    %70 = vector.load %arg3[%c0_49, %c6, %c0_50, %c0_51] : memref<7x9x128x128xbf16, #tpu.memory_space<vmem>>, vector<1x1x128x128xbf16>
    %71 = vector.shape_cast %70 : vector<1x1x128x128xbf16> to vector<128x128xbf16>
    %cst_52 = arith.constant dense<0.000000e+00> : vector<16x128xf32>
    %72 = tpu.matmul %69, %71, %cst_52 {dimension_numbers = #tpu.dot_dimension_numbers<[1], [0], [0], [1], [0, 0, 1, 1], [], []>} : vector<16x128xbf16>, vector<128x128xbf16>, vector<16x128xf32> -> vector<16x128xf32>
    %73 = arith.addf %67, %72 : vector<16x128xf32>
    %74 = vector.extract_strided_slice %30 {offsets = [7, 0], sizes = [16, 128], strides = [1, 1]} : vector<24x128xf32> to vector<16x128xf32>
    %75 = arith.truncf %74 : vector<16x128xf32> to vector<16x128xbf16>
    %c0_53 = arith.constant 0 : index
    %c7 = arith.constant 7 : index
    %c0_54 = arith.constant 0 : index
    %c0_55 = arith.constant 0 : index
    %76 = vector.load %arg3[%c0_53, %c7, %c0_54, %c0_55] : memref<7x9x128x128xbf16, #tpu.memory_space<vmem>>, vector<1x1x128x128xbf16>
    %77 = vector.shape_cast %76 : vector<1x1x128x128xbf16> to vector<128x128xbf16>
    %cst_56 = arith.constant dense<0.000000e+00> : vector<16x128xf32>
    %78 = tpu.matmul %75, %77, %cst_56 {dimension_numbers = #tpu.dot_dimension_numbers<[1], [0], [0], [1], [0, 0, 1, 1], [], []>} : vector<16x128xbf16>, vector<128x128xbf16>, vector<16x128xf32> -> vector<16x128xf32>
    %79 = arith.addf %73, %78 : vector<16x128xf32>
    %80 = vector.extract_strided_slice %30 {offsets = [8, 0], sizes = [16, 128], strides = [1, 1]} : vector<24x128xf32> to vector<16x128xf32>
    %81 = arith.truncf %80 : vector<16x128xf32> to vector<16x128xbf16>
    %c0_57 = arith.constant 0 : index
    %c8 = arith.constant 8 : index
    %c0_58 = arith.constant 0 : index
    %c0_59 = arith.constant 0 : index
    %82 = vector.load %arg3[%c0_57, %c8, %c0_58, %c0_59] : memref<7x9x128x128xbf16, #tpu.memory_space<vmem>>, vector<1x1x128x128xbf16>
    %83 = vector.shape_cast %82 : vector<1x1x128x128xbf16> to vector<128x128xbf16>
    %cst_60 = arith.constant dense<0.000000e+00> : vector<16x128xf32>
    %84 = tpu.matmul %81, %83, %cst_60 {dimension_numbers = #tpu.dot_dimension_numbers<[1], [0], [0], [1], [0, 0, 1, 1], [], []>} : vector<16x128xbf16>, vector<128x128xbf16>, vector<16x128xf32> -> vector<16x128xf32>
    %85 = arith.addf %79, %84 : vector<16x128xf32>
    %c0_61 = arith.constant 0 : index
    %c0_62 = arith.constant 0 : index
    %c0_63 = arith.constant 0 : index
    %86 = vector.load %arg5[%c0_61, %c0_62, %c0_63] : memref<7x1x128xf32, #tpu.memory_space<vmem>>, vector<1x1x128xf32>
    %87 = vector.shape_cast %86 : vector<1x1x128xf32> to vector<1x128xf32>
    %88 = vector.broadcast %87 : vector<1x128xf32> to vector<16x128xf32>
    %89 = arith.addf %85, %88 : vector<16x128xf32>
    %90 = arith.mulf %89, %89 : vector<16x128xf32>
    %cst_64 = arith.constant 0.000000e+00 : f32
    %91 = vector.broadcast %cst_64 : f32 to vector<16x128xf32>
    %92 = arith.subf %91, %90 : vector<16x128xf32>
    %93 = math.exp %92 : vector<16x128xf32>
    %94 = arith.mulf %93, %26 : vector<16x128xf32>
    %cst_65 = arith.constant 0.000000e+00 : f32
    %95 = vector.broadcast %cst_65 : f32 to vector<16x128xf32>
    %cst_66 = arith.constant 0.000000e+00 : f32
    %96 = vector.broadcast %cst_66 : f32 to vector<1x128xf32>
    %97 = tpu.concatenate %96, %94, %96 in 0 : vector<1x128xf32>, vector<16x128xf32>, vector<1x128xf32> -> vector<18x128xf32>
    %98 = vector.extract_strided_slice %97 {offsets = [0, 0], sizes = [16, 128], strides = [1, 1]} : vector<18x128xf32> to vector<16x128xf32>
    %99 = arith.truncf %98 : vector<16x128xf32> to vector<16x128xbf16>
    %c1_67 = arith.constant 1 : index
    %c0_68 = arith.constant 0 : index
    %c0_69 = arith.constant 0 : index
    %c0_70 = arith.constant 0 : index
    %100 = vector.load %arg2[%c1_67, %c0_68, %c0_69, %c0_70] : memref<10x3x128x128xbf16, #tpu.memory_space<vmem>>, vector<1x1x128x128xbf16>
    %101 = vector.shape_cast %100 : vector<1x1x128x128xbf16> to vector<128x128xbf16>
    %cst_71 = arith.constant dense<0.000000e+00> : vector<16x128xf32>
    %102 = tpu.matmul %99, %101, %cst_71 {dimension_numbers = #tpu.dot_dimension_numbers<[1], [0], [0], [1], [0, 0, 1, 1], [], []>} : vector<16x128xbf16>, vector<128x128xbf16>, vector<16x128xf32> -> vector<16x128xf32>
    %103 = arith.addf %95, %102 : vector<16x128xf32>
    %104 = vector.extract_strided_slice %97 {offsets = [1, 0], sizes = [16, 128], strides = [1, 1]} : vector<18x128xf32> to vector<16x128xf32>
    %105 = arith.truncf %104 : vector<16x128xf32> to vector<16x128xbf16>
    %c1_72 = arith.constant 1 : index
    %c1_73 = arith.constant 1 : index
    %c0_74 = arith.constant 0 : index
    %c0_75 = arith.constant 0 : index
    %106 = vector.load %arg2[%c1_72, %c1_73, %c0_74, %c0_75] : memref<10x3x128x128xbf16, #tpu.memory_space<vmem>>, vector<1x1x128x128xbf16>
    %107 = vector.shape_cast %106 : vector<1x1x128x128xbf16> to vector<128x128xbf16>
    %cst_76 = arith.constant dense<0.000000e+00> : vector<16x128xf32>
    %108 = tpu.matmul %105, %107, %cst_76 {dimension_numbers = #tpu.dot_dimension_numbers<[1], [0], [0], [1], [0, 0, 1, 1], [], []>} : vector<16x128xbf16>, vector<128x128xbf16>, vector<16x128xf32> -> vector<16x128xf32>
    %109 = arith.addf %103, %108 : vector<16x128xf32>
    %110 = vector.extract_strided_slice %97 {offsets = [2, 0], sizes = [16, 128], strides = [1, 1]} : vector<18x128xf32> to vector<16x128xf32>
    %111 = arith.truncf %110 : vector<16x128xf32> to vector<16x128xbf16>
    %c1_77 = arith.constant 1 : index
    %c2_78 = arith.constant 2 : index
    %c0_79 = arith.constant 0 : index
    %c0_80 = arith.constant 0 : index
    %112 = vector.load %arg2[%c1_77, %c2_78, %c0_79, %c0_80] : memref<10x3x128x128xbf16, #tpu.memory_space<vmem>>, vector<1x1x128x128xbf16>
    %113 = vector.shape_cast %112 : vector<1x1x128x128xbf16> to vector<128x128xbf16>
    %cst_81 = arith.constant dense<0.000000e+00> : vector<16x128xf32>
    %114 = tpu.matmul %111, %113, %cst_81 {dimension_numbers = #tpu.dot_dimension_numbers<[1], [0], [0], [1], [0, 0, 1, 1], [], []>} : vector<16x128xbf16>, vector<128x128xbf16>, vector<16x128xf32> -> vector<16x128xf32>
    %115 = arith.addf %109, %114 : vector<16x128xf32>
    %c1_82 = arith.constant 1 : index
    %c0_83 = arith.constant 0 : index
    %c0_84 = arith.constant 0 : index
    %116 = vector.load %arg4[%c1_82, %c0_83, %c0_84] : memref<7x1x128xf32, #tpu.memory_space<vmem>>, vector<1x1x128xf32>
    %117 = vector.shape_cast %116 : vector<1x1x128xf32> to vector<1x128xf32>
    %118 = vector.broadcast %117 : vector<1x128xf32> to vector<16x128xf32>
    %119 = arith.addf %115, %118 : vector<16x128xf32>
    %cst_85 = arith.constant 0.000000e+00 : f32
    %120 = vector.broadcast %cst_85 : f32 to vector<16x128xf32>
    %121 = arith.maximumf %119, %120 : vector<16x128xf32>
    %cst_86 = arith.constant 0.000000e+00 : f32
    %122 = vector.broadcast %cst_86 : f32 to vector<4x128xf32>
    %123 = tpu.concatenate %122, %121, %122 in 0 : vector<4x128xf32>, vector<16x128xf32>, vector<4x128xf32> -> vector<24x128xf32>
    %cst_87 = arith.constant 0.000000e+00 : f32
    %124 = vector.broadcast %cst_87 : f32 to vector<16x128xf32>
    %125 = vector.extract_strided_slice %123 {offsets = [0, 0], sizes = [16, 128], strides = [1, 1]} : vector<24x128xf32> to vector<16x128xf32>
    %126 = arith.truncf %125 : vector<16x128xf32> to vector<16x128xbf16>
    %c1_88 = arith.constant 1 : index
    %c0_89 = arith.constant 0 : index
    %c0_90 = arith.constant 0 : index
    %c0_91 = arith.constant 0 : index
    %127 = vector.load %arg3[%c1_88, %c0_89, %c0_90, %c0_91] : memref<7x9x128x128xbf16, #tpu.memory_space<vmem>>, vector<1x1x128x128xbf16>
    %128 = vector.shape_cast %127 : vector<1x1x128x128xbf16> to vector<128x128xbf16>
    %cst_92 = arith.constant dense<0.000000e+00> : vector<16x128xf32>
    %129 = tpu.matmul %126, %128, %cst_92 {dimension_numbers = #tpu.dot_dimension_numbers<[1], [0], [0], [1], [0, 0, 1, 1], [], []>} : vector<16x128xbf16>, vector<128x128xbf16>, vector<16x128xf32> -> vector<16x128xf32>
    %130 = arith.addf %124, %129 : vector<16x128xf32>
    %131 = vector.extract_strided_slice %123 {offsets = [1, 0], sizes = [16, 128], strides = [1, 1]} : vector<24x128xf32> to vector<16x128xf32>
    %132 = arith.truncf %131 : vector<16x128xf32> to vector<16x128xbf16>
    %c1_93 = arith.constant 1 : index
    %c1_94 = arith.constant 1 : index
    %c0_95 = arith.constant 0 : index
    %c0_96 = arith.constant 0 : index
    %133 = vector.load %arg3[%c1_93, %c1_94, %c0_95, %c0_96] : memref<7x9x128x128xbf16, #tpu.memory_space<vmem>>, vector<1x1x128x128xbf16>
    %134 = vector.shape_cast %133 : vector<1x1x128x128xbf16> to vector<128x128xbf16>
    %cst_97 = arith.constant dense<0.000000e+00> : vector<16x128xf32>
    %135 = tpu.matmul %132, %134, %cst_97 {dimension_numbers = #tpu.dot_dimension_numbers<[1], [0], [0], [1], [0, 0, 1, 1], [], []>} : vector<16x128xbf16>, vector<128x128xbf16>, vector<16x128xf32> -> vector<16x128xf32>
    %136 = arith.addf %130, %135 : vector<16x128xf32>
    %137 = vector.extract_strided_slice %123 {offsets = [2, 0], sizes = [16, 128], strides = [1, 1]} : vector<24x128xf32> to vector<16x128xf32>
    %138 = arith.truncf %137 : vector<16x128xf32> to vector<16x128xbf16>
    %c1_98 = arith.constant 1 : index
    %c2_99 = arith.constant 2 : index
    %c0_100 = arith.constant 0 : index
    %c0_101 = arith.constant 0 : index
    %139 = vector.load %arg3[%c1_98, %c2_99, %c0_100, %c0_101] : memref<7x9x128x128xbf16, #tpu.memory_space<vmem>>, vector<1x1x128x128xbf16>
    %140 = vector.shape_cast %139 : vector<1x1x128x128xbf16> to vector<128x128xbf16>
    %cst_102 = arith.constant dense<0.000000e+00> : vector<16x128xf32>
    %141 = tpu.matmul %138, %140, %cst_102 {dimension_numbers = #tpu.dot_dimension_numbers<[1], [0], [0], [1], [0, 0, 1, 1], [], []>} : vector<16x128xbf16>, vector<128x128xbf16>, vector<16x128xf32> -> vector<16x128xf32>
    %142 = arith.addf %136, %141 : vector<16x128xf32>
    %143 = vector.extract_strided_slice %123 {offsets = [3, 0], sizes = [16, 128], strides = [1, 1]} : vector<24x128xf32> to vector<16x128xf32>
    %144 = arith.truncf %143 : vector<16x128xf32> to vector<16x128xbf16>
    %c1_103 = arith.constant 1 : index
    %c3_104 = arith.constant 3 : index
    %c0_105 = arith.constant 0 : index
    %c0_106 = arith.constant 0 : index
    %145 = vector.load %arg3[%c1_103, %c3_104, %c0_105, %c0_106] : memref<7x9x128x128xbf16, #tpu.memory_space<vmem>>, vector<1x1x128x128xbf16>
    %146 = vector.shape_cast %145 : vector<1x1x128x128xbf16> to vector<128x128xbf16>
    %cst_107 = arith.constant dense<0.000000e+00> : vector<16x128xf32>
    %147 = tpu.matmul %144, %146, %cst_107 {dimension_numbers = #tpu.dot_dimension_numbers<[1], [0], [0], [1], [0, 0, 1, 1], [], []>} : vector<16x128xbf16>, vector<128x128xbf16>, vector<16x128xf32> -> vector<16x128xf32>
    %148 = arith.addf %142, %147 : vector<16x128xf32>
    %149 = vector.extract_strided_slice %123 {offsets = [4, 0], sizes = [16, 128], strides = [1, 1]} : vector<24x128xf32> to vector<16x128xf32>
    %150 = arith.truncf %149 : vector<16x128xf32> to vector<16x128xbf16>
    %c1_108 = arith.constant 1 : index
    %c4_109 = arith.constant 4 : index
    %c0_110 = arith.constant 0 : index
    %c0_111 = arith.constant 0 : index
    %151 = vector.load %arg3[%c1_108, %c4_109, %c0_110, %c0_111] : memref<7x9x128x128xbf16, #tpu.memory_space<vmem>>, vector<1x1x128x128xbf16>
    %152 = vector.shape_cast %151 : vector<1x1x128x128xbf16> to vector<128x128xbf16>
    %cst_112 = arith.constant dense<0.000000e+00> : vector<16x128xf32>
    %153 = tpu.matmul %150, %152, %cst_112 {dimension_numbers = #tpu.dot_dimension_numbers<[1], [0], [0], [1], [0, 0, 1, 1], [], []>} : vector<16x128xbf16>, vector<128x128xbf16>, vector<16x128xf32> -> vector<16x128xf32>
    %154 = arith.addf %148, %153 : vector<16x128xf32>
    %155 = vector.extract_strided_slice %123 {offsets = [5, 0], sizes = [16, 128], strides = [1, 1]} : vector<24x128xf32> to vector<16x128xf32>
    %156 = arith.truncf %155 : vector<16x128xf32> to vector<16x128xbf16>
    %c1_113 = arith.constant 1 : index
    %c5_114 = arith.constant 5 : index
    %c0_115 = arith.constant 0 : index
    %c0_116 = arith.constant 0 : index
    %157 = vector.load %arg3[%c1_113, %c5_114, %c0_115, %c0_116] : memref<7x9x128x128xbf16, #tpu.memory_space<vmem>>, vector<1x1x128x128xbf16>
    %158 = vector.shape_cast %157 : vector<1x1x128x128xbf16> to vector<128x128xbf16>
    %cst_117 = arith.constant dense<0.000000e+00> : vector<16x128xf32>
    %159 = tpu.matmul %156, %158, %cst_117 {dimension_numbers = #tpu.dot_dimension_numbers<[1], [0], [0], [1], [0, 0, 1, 1], [], []>} : vector<16x128xbf16>, vector<128x128xbf16>, vector<16x128xf32> -> vector<16x128xf32>
    %160 = arith.addf %154, %159 : vector<16x128xf32>
    %161 = vector.extract_strided_slice %123 {offsets = [6, 0], sizes = [16, 128], strides = [1, 1]} : vector<24x128xf32> to vector<16x128xf32>
    %162 = arith.truncf %161 : vector<16x128xf32> to vector<16x128xbf16>
    %c1_118 = arith.constant 1 : index
    %c6_119 = arith.constant 6 : index
    %c0_120 = arith.constant 0 : index
    %c0_121 = arith.constant 0 : index
    %163 = vector.load %arg3[%c1_118, %c6_119, %c0_120, %c0_121] : memref<7x9x128x128xbf16, #tpu.memory_space<vmem>>, vector<1x1x128x128xbf16>
    %164 = vector.shape_cast %163 : vector<1x1x128x128xbf16> to vector<128x128xbf16>
    %cst_122 = arith.constant dense<0.000000e+00> : vector<16x128xf32>
    %165 = tpu.matmul %162, %164, %cst_122 {dimension_numbers = #tpu.dot_dimension_numbers<[1], [0], [0], [1], [0, 0, 1, 1], [], []>} : vector<16x128xbf16>, vector<128x128xbf16>, vector<16x128xf32> -> vector<16x128xf32>
    %166 = arith.addf %160, %165 : vector<16x128xf32>
    %167 = vector.extract_strided_slice %123 {offsets = [7, 0], sizes = [16, 128], strides = [1, 1]} : vector<24x128xf32> to vector<16x128xf32>
    %168 = arith.truncf %167 : vector<16x128xf32> to vector<16x128xbf16>
    %c1_123 = arith.constant 1 : index
    %c7_124 = arith.constant 7 : index
    %c0_125 = arith.constant 0 : index
    %c0_126 = arith.constant 0 : index
    %169 = vector.load %arg3[%c1_123, %c7_124, %c0_125, %c0_126] : memref<7x9x128x128xbf16, #tpu.memory_space<vmem>>, vector<1x1x128x128xbf16>
    %170 = vector.shape_cast %169 : vector<1x1x128x128xbf16> to vector<128x128xbf16>
    %cst_127 = arith.constant dense<0.000000e+00> : vector<16x128xf32>
    %171 = tpu.matmul %168, %170, %cst_127 {dimension_numbers = #tpu.dot_dimension_numbers<[1], [0], [0], [1], [0, 0, 1, 1], [], []>} : vector<16x128xbf16>, vector<128x128xbf16>, vector<16x128xf32> -> vector<16x128xf32>
    %172 = arith.addf %166, %171 : vector<16x128xf32>
    %173 = vector.extract_strided_slice %123 {offsets = [8, 0], sizes = [16, 128], strides = [1, 1]} : vector<24x128xf32> to vector<16x128xf32>
    %174 = arith.truncf %173 : vector<16x128xf32> to vector<16x128xbf16>
    %c1_128 = arith.constant 1 : index
    %c8_129 = arith.constant 8 : index
    %c0_130 = arith.constant 0 : index
    %c0_131 = arith.constant 0 : index
    %175 = vector.load %arg3[%c1_128, %c8_129, %c0_130, %c0_131] : memref<7x9x128x128xbf16, #tpu.memory_space<vmem>>, vector<1x1x128x128xbf16>
    %176 = vector.shape_cast %175 : vector<1x1x128x128xbf16> to vector<128x128xbf16>
    %cst_132 = arith.constant dense<0.000000e+00> : vector<16x128xf32>
    %177 = tpu.matmul %174, %176, %cst_132 {dimension_numbers = #tpu.dot_dimension_numbers<[1], [0], [0], [1], [0, 0, 1, 1], [], []>} : vector<16x128xbf16>, vector<128x128xbf16>, vector<16x128xf32> -> vector<16x128xf32>
    %178 = arith.addf %172, %177 : vector<16x128xf32>
    %c1_133 = arith.constant 1 : index
    %c0_134 = arith.constant 0 : index
    %c0_135 = arith.constant 0 : index
    %179 = vector.load %arg5[%c1_133, %c0_134, %c0_135] : memref<7x1x128xf32, #tpu.memory_space<vmem>>, vector<1x1x128xf32>
    %180 = vector.shape_cast %179 : vector<1x1x128xf32> to vector<1x128xf32>
    %181 = vector.broadcast %180 : vector<1x128xf32> to vector<16x128xf32>
    %182 = arith.addf %178, %181 : vector<16x128xf32>
    %183 = arith.mulf %182, %182 : vector<16x128xf32>
    %cst_136 = arith.constant 0.000000e+00 : f32
    %184 = vector.broadcast %cst_136 : f32 to vector<16x128xf32>
    %185 = arith.subf %184, %183 : vector<16x128xf32>
    %186 = math.exp %185 : vector<16x128xf32>
    %187 = arith.mulf %186, %119 : vector<16x128xf32>
    %cst_137 = arith.constant 0.000000e+00 : f32
    %188 = vector.broadcast %cst_137 : f32 to vector<16x128xf32>
    %cst_138 = arith.constant 0.000000e+00 : f32
    %189 = vector.broadcast %cst_138 : f32 to vector<1x128xf32>
    %190 = tpu.concatenate %189, %187, %189 in 0 : vector<1x128xf32>, vector<16x128xf32>, vector<1x128xf32> -> vector<18x128xf32>
    %191 = vector.extract_strided_slice %190 {offsets = [0, 0], sizes = [16, 128], strides = [1, 1]} : vector<18x128xf32> to vector<16x128xf32>
    %192 = arith.truncf %191 : vector<16x128xf32> to vector<16x128xbf16>
    %c2_139 = arith.constant 2 : index
    %c0_140 = arith.constant 0 : index
    %c0_141 = arith.constant 0 : index
    %c0_142 = arith.constant 0 : index
    %193 = vector.load %arg2[%c2_139, %c0_140, %c0_141, %c0_142] : memref<10x3x128x128xbf16, #tpu.memory_space<vmem>>, vector<1x1x128x128xbf16>
    %194 = vector.shape_cast %193 : vector<1x1x128x128xbf16> to vector<128x128xbf16>
    %cst_143 = arith.constant dense<0.000000e+00> : vector<16x128xf32>
    %195 = tpu.matmul %192, %194, %cst_143 {dimension_numbers = #tpu.dot_dimension_numbers<[1], [0], [0], [1], [0, 0, 1, 1], [], []>} : vector<16x128xbf16>, vector<128x128xbf16>, vector<16x128xf32> -> vector<16x128xf32>
    %196 = arith.addf %188, %195 : vector<16x128xf32>
    %197 = vector.extract_strided_slice %190 {offsets = [1, 0], sizes = [16, 128], strides = [1, 1]} : vector<18x128xf32> to vector<16x128xf32>
    %198 = arith.truncf %197 : vector<16x128xf32> to vector<16x128xbf16>
    %c2_144 = arith.constant 2 : index
    %c1_145 = arith.constant 1 : index
    %c0_146 = arith.constant 0 : index
    %c0_147 = arith.constant 0 : index
    %199 = vector.load %arg2[%c2_144, %c1_145, %c0_146, %c0_147] : memref<10x3x128x128xbf16, #tpu.memory_space<vmem>>, vector<1x1x128x128xbf16>
    %200 = vector.shape_cast %199 : vector<1x1x128x128xbf16> to vector<128x128xbf16>
    %cst_148 = arith.constant dense<0.000000e+00> : vector<16x128xf32>
    %201 = tpu.matmul %198, %200, %cst_148 {dimension_numbers = #tpu.dot_dimension_numbers<[1], [0], [0], [1], [0, 0, 1, 1], [], []>} : vector<16x128xbf16>, vector<128x128xbf16>, vector<16x128xf32> -> vector<16x128xf32>
    %202 = arith.addf %196, %201 : vector<16x128xf32>
    %203 = vector.extract_strided_slice %190 {offsets = [2, 0], sizes = [16, 128], strides = [1, 1]} : vector<18x128xf32> to vector<16x128xf32>
    %204 = arith.truncf %203 : vector<16x128xf32> to vector<16x128xbf16>
    %c2_149 = arith.constant 2 : index
    %c2_150 = arith.constant 2 : index
    %c0_151 = arith.constant 0 : index
    %c0_152 = arith.constant 0 : index
    %205 = vector.load %arg2[%c2_149, %c2_150, %c0_151, %c0_152] : memref<10x3x128x128xbf16, #tpu.memory_space<vmem>>, vector<1x1x128x128xbf16>
    %206 = vector.shape_cast %205 : vector<1x1x128x128xbf16> to vector<128x128xbf16>
    %cst_153 = arith.constant dense<0.000000e+00> : vector<16x128xf32>
    %207 = tpu.matmul %204, %206, %cst_153 {dimension_numbers = #tpu.dot_dimension_numbers<[1], [0], [0], [1], [0, 0, 1, 1], [], []>} : vector<16x128xbf16>, vector<128x128xbf16>, vector<16x128xf32> -> vector<16x128xf32>
    %208 = arith.addf %202, %207 : vector<16x128xf32>
    %c2_154 = arith.constant 2 : index
    %c0_155 = arith.constant 0 : index
    %c0_156 = arith.constant 0 : index
    %209 = vector.load %arg4[%c2_154, %c0_155, %c0_156] : memref<7x1x128xf32, #tpu.memory_space<vmem>>, vector<1x1x128xf32>
    %210 = vector.shape_cast %209 : vector<1x1x128xf32> to vector<1x128xf32>
    %211 = vector.broadcast %210 : vector<1x128xf32> to vector<16x128xf32>
    %212 = arith.addf %208, %211 : vector<16x128xf32>
    %cst_157 = arith.constant 0.000000e+00 : f32
    %213 = vector.broadcast %cst_157 : f32 to vector<16x128xf32>
    %214 = arith.maximumf %212, %213 : vector<16x128xf32>
    %cst_158 = arith.constant 0.000000e+00 : f32
    %215 = vector.broadcast %cst_158 : f32 to vector<4x128xf32>
    %216 = tpu.concatenate %215, %214, %215 in 0 : vector<4x128xf32>, vector<16x128xf32>, vector<4x128xf32> -> vector<24x128xf32>
    %cst_159 = arith.constant 0.000000e+00 : f32
    %217 = vector.broadcast %cst_159 : f32 to vector<16x128xf32>
    %218 = vector.extract_strided_slice %216 {offsets = [0, 0], sizes = [16, 128], strides = [1, 1]} : vector<24x128xf32> to vector<16x128xf32>
    %219 = arith.truncf %218 : vector<16x128xf32> to vector<16x128xbf16>
    %c2_160 = arith.constant 2 : index
    %c0_161 = arith.constant 0 : index
    %c0_162 = arith.constant 0 : index
    %c0_163 = arith.constant 0 : index
    %220 = vector.load %arg3[%c2_160, %c0_161, %c0_162, %c0_163] : memref<7x9x128x128xbf16, #tpu.memory_space<vmem>>, vector<1x1x128x128xbf16>
    %221 = vector.shape_cast %220 : vector<1x1x128x128xbf16> to vector<128x128xbf16>
    %cst_164 = arith.constant dense<0.000000e+00> : vector<16x128xf32>
    %222 = tpu.matmul %219, %221, %cst_164 {dimension_numbers = #tpu.dot_dimension_numbers<[1], [0], [0], [1], [0, 0, 1, 1], [], []>} : vector<16x128xbf16>, vector<128x128xbf16>, vector<16x128xf32> -> vector<16x128xf32>
    %223 = arith.addf %217, %222 : vector<16x128xf32>
    %224 = vector.extract_strided_slice %216 {offsets = [1, 0], sizes = [16, 128], strides = [1, 1]} : vector<24x128xf32> to vector<16x128xf32>
    %225 = arith.truncf %224 : vector<16x128xf32> to vector<16x128xbf16>
    %c2_165 = arith.constant 2 : index
    %c1_166 = arith.constant 1 : index
    %c0_167 = arith.constant 0 : index
    %c0_168 = arith.constant 0 : index
    %226 = vector.load %arg3[%c2_165, %c1_166, %c0_167, %c0_168] : memref<7x9x128x128xbf16, #tpu.memory_space<vmem>>, vector<1x1x128x128xbf16>
    %227 = vector.shape_cast %226 : vector<1x1x128x128xbf16> to vector<128x128xbf16>
    %cst_169 = arith.constant dense<0.000000e+00> : vector<16x128xf32>
    %228 = tpu.matmul %225, %227, %cst_169 {dimension_numbers = #tpu.dot_dimension_numbers<[1], [0], [0], [1], [0, 0, 1, 1], [], []>} : vector<16x128xbf16>, vector<128x128xbf16>, vector<16x128xf32> -> vector<16x128xf32>
    %229 = arith.addf %223, %228 : vector<16x128xf32>
    %230 = vector.extract_strided_slice %216 {offsets = [2, 0], sizes = [16, 128], strides = [1, 1]} : vector<24x128xf32> to vector<16x128xf32>
    %231 = arith.truncf %230 : vector<16x128xf32> to vector<16x128xbf16>
    %c2_170 = arith.constant 2 : index
    %c2_171 = arith.constant 2 : index
    %c0_172 = arith.constant 0 : index
    %c0_173 = arith.constant 0 : index
    %232 = vector.load %arg3[%c2_170, %c2_171, %c0_172, %c0_173] : memref<7x9x128x128xbf16, #tpu.memory_space<vmem>>, vector<1x1x128x128xbf16>
    %233 = vector.shape_cast %232 : vector<1x1x128x128xbf16> to vector<128x128xbf16>
    %cst_174 = arith.constant dense<0.000000e+00> : vector<16x128xf32>
    %234 = tpu.matmul %231, %233, %cst_174 {dimension_numbers = #tpu.dot_dimension_numbers<[1], [0], [0], [1], [0, 0, 1, 1], [], []>} : vector<16x128xbf16>, vector<128x128xbf16>, vector<16x128xf32> -> vector<16x128xf32>
    %235 = arith.addf %229, %234 : vector<16x128xf32>
    %236 = vector.extract_strided_slice %216 {offsets = [3, 0], sizes = [16, 128], strides = [1, 1]} : vector<24x128xf32> to vector<16x128xf32>
    %237 = arith.truncf %236 : vector<16x128xf32> to vector<16x128xbf16>
    %c2_175 = arith.constant 2 : index
    %c3_176 = arith.constant 3 : index
    %c0_177 = arith.constant 0 : index
    %c0_178 = arith.constant 0 : index
    %238 = vector.load %arg3[%c2_175, %c3_176, %c0_177, %c0_178] : memref<7x9x128x128xbf16, #tpu.memory_space<vmem>>, vector<1x1x128x128xbf16>
    %239 = vector.shape_cast %238 : vector<1x1x128x128xbf16> to vector<128x128xbf16>
    %cst_179 = arith.constant dense<0.000000e+00> : vector<16x128xf32>
    %240 = tpu.matmul %237, %239, %cst_179 {dimension_numbers = #tpu.dot_dimension_numbers<[1], [0], [0], [1], [0, 0, 1, 1], [], []>} : vector<16x128xbf16>, vector<128x128xbf16>, vector<16x128xf32> -> vector<16x128xf32>
    %241 = arith.addf %235, %240 : vector<16x128xf32>
    %242 = vector.extract_strided_slice %216 {offsets = [4, 0], sizes = [16, 128], strides = [1, 1]} : vector<24x128xf32> to vector<16x128xf32>
    %243 = arith.truncf %242 : vector<16x128xf32> to vector<16x128xbf16>
    %c2_180 = arith.constant 2 : index
    %c4_181 = arith.constant 4 : index
    %c0_182 = arith.constant 0 : index
    %c0_183 = arith.constant 0 : index
    %244 = vector.load %arg3[%c2_180, %c4_181, %c0_182, %c0_183] : memref<7x9x128x128xbf16, #tpu.memory_space<vmem>>, vector<1x1x128x128xbf16>
    %245 = vector.shape_cast %244 : vector<1x1x128x128xbf16> to vector<128x128xbf16>
    %cst_184 = arith.constant dense<0.000000e+00> : vector<16x128xf32>
    %246 = tpu.matmul %243, %245, %cst_184 {dimension_numbers = #tpu.dot_dimension_numbers<[1], [0], [0], [1], [0, 0, 1, 1], [], []>} : vector<16x128xbf16>, vector<128x128xbf16>, vector<16x128xf32> -> vector<16x128xf32>
    %247 = arith.addf %241, %246 : vector<16x128xf32>
    %248 = vector.extract_strided_slice %216 {offsets = [5, 0], sizes = [16, 128], strides = [1, 1]} : vector<24x128xf32> to vector<16x128xf32>
    %249 = arith.truncf %248 : vector<16x128xf32> to vector<16x128xbf16>
    %c2_185 = arith.constant 2 : index
    %c5_186 = arith.constant 5 : index
    %c0_187 = arith.constant 0 : index
    %c0_188 = arith.constant 0 : index
    %250 = vector.load %arg3[%c2_185, %c5_186, %c0_187, %c0_188] : memref<7x9x128x128xbf16, #tpu.memory_space<vmem>>, vector<1x1x128x128xbf16>
    %251 = vector.shape_cast %250 : vector<1x1x128x128xbf16> to vector<128x128xbf16>
    %cst_189 = arith.constant dense<0.000000e+00> : vector<16x128xf32>
    %252 = tpu.matmul %249, %251, %cst_189 {dimension_numbers = #tpu.dot_dimension_numbers<[1], [0], [0], [1], [0, 0, 1, 1], [], []>} : vector<16x128xbf16>, vector<128x128xbf16>, vector<16x128xf32> -> vector<16x128xf32>
    %253 = arith.addf %247, %252 : vector<16x128xf32>
    %254 = vector.extract_strided_slice %216 {offsets = [6, 0], sizes = [16, 128], strides = [1, 1]} : vector<24x128xf32> to vector<16x128xf32>
    %255 = arith.truncf %254 : vector<16x128xf32> to vector<16x128xbf16>
    %c2_190 = arith.constant 2 : index
    %c6_191 = arith.constant 6 : index
    %c0_192 = arith.constant 0 : index
    %c0_193 = arith.constant 0 : index
    %256 = vector.load %arg3[%c2_190, %c6_191, %c0_192, %c0_193] : memref<7x9x128x128xbf16, #tpu.memory_space<vmem>>, vector<1x1x128x128xbf16>
    %257 = vector.shape_cast %256 : vector<1x1x128x128xbf16> to vector<128x128xbf16>
    %cst_194 = arith.constant dense<0.000000e+00> : vector<16x128xf32>
    %258 = tpu.matmul %255, %257, %cst_194 {dimension_numbers = #tpu.dot_dimension_numbers<[1], [0], [0], [1], [0, 0, 1, 1], [], []>} : vector<16x128xbf16>, vector<128x128xbf16>, vector<16x128xf32> -> vector<16x128xf32>
    %259 = arith.addf %253, %258 : vector<16x128xf32>
    %260 = vector.extract_strided_slice %216 {offsets = [7, 0], sizes = [16, 128], strides = [1, 1]} : vector<24x128xf32> to vector<16x128xf32>
    %261 = arith.truncf %260 : vector<16x128xf32> to vector<16x128xbf16>
    %c2_195 = arith.constant 2 : index
    %c7_196 = arith.constant 7 : index
    %c0_197 = arith.constant 0 : index
    %c0_198 = arith.constant 0 : index
    %262 = vector.load %arg3[%c2_195, %c7_196, %c0_197, %c0_198] : memref<7x9x128x128xbf16, #tpu.memory_space<vmem>>, vector<1x1x128x128xbf16>
    %263 = vector.shape_cast %262 : vector<1x1x128x128xbf16> to vector<128x128xbf16>
    %cst_199 = arith.constant dense<0.000000e+00> : vector<16x128xf32>
    %264 = tpu.matmul %261, %263, %cst_199 {dimension_numbers = #tpu.dot_dimension_numbers<[1], [0], [0], [1], [0, 0, 1, 1], [], []>} : vector<16x128xbf16>, vector<128x128xbf16>, vector<16x128xf32> -> vector<16x128xf32>
    %265 = arith.addf %259, %264 : vector<16x128xf32>
    %266 = vector.extract_strided_slice %216 {offsets = [8, 0], sizes = [16, 128], strides = [1, 1]} : vector<24x128xf32> to vector<16x128xf32>
    %267 = arith.truncf %266 : vector<16x128xf32> to vector<16x128xbf16>
    %c2_200 = arith.constant 2 : index
    %c8_201 = arith.constant 8 : index
    %c0_202 = arith.constant 0 : index
    %c0_203 = arith.constant 0 : index
    %268 = vector.load %arg3[%c2_200, %c8_201, %c0_202, %c0_203] : memref<7x9x128x128xbf16, #tpu.memory_space<vmem>>, vector<1x1x128x128xbf16>
    %269 = vector.shape_cast %268 : vector<1x1x128x128xbf16> to vector<128x128xbf16>
    %cst_204 = arith.constant dense<0.000000e+00> : vector<16x128xf32>
    %270 = tpu.matmul %267, %269, %cst_204 {dimension_numbers = #tpu.dot_dimension_numbers<[1], [0], [0], [1], [0, 0, 1, 1], [], []>} : vector<16x128xbf16>, vector<128x128xbf16>, vector<16x128xf32> -> vector<16x128xf32>
    %271 = arith.addf %265, %270 : vector<16x128xf32>
    %c2_205 = arith.constant 2 : index
    %c0_206 = arith.constant 0 : index
    %c0_207 = arith.constant 0 : index
    %272 = vector.load %arg5[%c2_205, %c0_206, %c0_207] : memref<7x1x128xf32, #tpu.memory_space<vmem>>, vector<1x1x128xf32>
    %273 = vector.shape_cast %272 : vector<1x1x128xf32> to vector<1x128xf32>
    %274 = vector.broadcast %273 : vector<1x128xf32> to vector<16x128xf32>
    %275 = arith.addf %271, %274 : vector<16x128xf32>
    %276 = arith.mulf %275, %275 : vector<16x128xf32>
    %cst_208 = arith.constant 0.000000e+00 : f32
    %277 = vector.broadcast %cst_208 : f32 to vector<16x128xf32>
    %278 = arith.subf %277, %276 : vector<16x128xf32>
    %279 = math.exp %278 : vector<16x128xf32>
    %280 = arith.mulf %279, %212 : vector<16x128xf32>
    %cst_209 = arith.constant 0.000000e+00 : f32
    %281 = vector.broadcast %cst_209 : f32 to vector<16x128xf32>
    %cst_210 = arith.constant 0.000000e+00 : f32
    %282 = vector.broadcast %cst_210 : f32 to vector<4x128xf32>
    %283 = tpu.concatenate %282, %280, %282 in 0 : vector<4x128xf32>, vector<16x128xf32>, vector<4x128xf32> -> vector<24x128xf32>
    %284 = vector.extract_strided_slice %283 {offsets = [0, 0], sizes = [16, 128], strides = [1, 1]} : vector<24x128xf32> to vector<16x128xf32>
    %285 = arith.truncf %284 : vector<16x128xf32> to vector<16x128xbf16>
    %c3_211 = arith.constant 3 : index
    %c0_212 = arith.constant 0 : index
    %c0_213 = arith.constant 0 : index
    %c0_214 = arith.constant 0 : index
    %286 = vector.load %arg2[%c3_211, %c0_212, %c0_213, %c0_214] : memref<10x3x128x128xbf16, #tpu.memory_space<vmem>>, vector<1x1x128x128xbf16>
    %287 = vector.shape_cast %286 : vector<1x1x128x128xbf16> to vector<128x128xbf16>
    %cst_215 = arith.constant dense<0.000000e+00> : vector<16x128xf32>
    %288 = tpu.matmul %285, %287, %cst_215 {dimension_numbers = #tpu.dot_dimension_numbers<[1], [0], [0], [1], [0, 0, 1, 1], [], []>} : vector<16x128xbf16>, vector<128x128xbf16>, vector<16x128xf32> -> vector<16x128xf32>
    %289 = arith.addf %281, %288 : vector<16x128xf32>
    %290 = vector.extract_strided_slice %283 {offsets = [4, 0], sizes = [16, 128], strides = [1, 1]} : vector<24x128xf32> to vector<16x128xf32>
    %291 = arith.truncf %290 : vector<16x128xf32> to vector<16x128xbf16>
    %c3_216 = arith.constant 3 : index
    %c1_217 = arith.constant 1 : index
    %c0_218 = arith.constant 0 : index
    %c0_219 = arith.constant 0 : index
    %292 = vector.load %arg2[%c3_216, %c1_217, %c0_218, %c0_219] : memref<10x3x128x128xbf16, #tpu.memory_space<vmem>>, vector<1x1x128x128xbf16>
    %293 = vector.shape_cast %292 : vector<1x1x128x128xbf16> to vector<128x128xbf16>
    %cst_220 = arith.constant dense<0.000000e+00> : vector<16x128xf32>
    %294 = tpu.matmul %291, %293, %cst_220 {dimension_numbers = #tpu.dot_dimension_numbers<[1], [0], [0], [1], [0, 0, 1, 1], [], []>} : vector<16x128xbf16>, vector<128x128xbf16>, vector<16x128xf32> -> vector<16x128xf32>
    %295 = arith.addf %289, %294 : vector<16x128xf32>
    %296 = vector.extract_strided_slice %283 {offsets = [8, 0], sizes = [16, 128], strides = [1, 1]} : vector<24x128xf32> to vector<16x128xf32>
    %297 = arith.truncf %296 : vector<16x128xf32> to vector<16x128xbf16>
    %c3_221 = arith.constant 3 : index
    %c2_222 = arith.constant 2 : index
    %c0_223 = arith.constant 0 : index
    %c0_224 = arith.constant 0 : index
    %298 = vector.load %arg2[%c3_221, %c2_222, %c0_223, %c0_224] : memref<10x3x128x128xbf16, #tpu.memory_space<vmem>>, vector<1x1x128x128xbf16>
    %299 = vector.shape_cast %298 : vector<1x1x128x128xbf16> to vector<128x128xbf16>
    %cst_225 = arith.constant dense<0.000000e+00> : vector<16x128xf32>
    %300 = tpu.matmul %297, %299, %cst_225 {dimension_numbers = #tpu.dot_dimension_numbers<[1], [0], [0], [1], [0, 0, 1, 1], [], []>} : vector<16x128xbf16>, vector<128x128xbf16>, vector<16x128xf32> -> vector<16x128xf32>
    %301 = arith.addf %295, %300 : vector<16x128xf32>
    %c3_226 = arith.constant 3 : index
    %c0_227 = arith.constant 0 : index
    %c0_228 = arith.constant 0 : index
    %302 = vector.load %arg4[%c3_226, %c0_227, %c0_228] : memref<7x1x128xf32, #tpu.memory_space<vmem>>, vector<1x1x128xf32>
    %303 = vector.shape_cast %302 : vector<1x1x128xf32> to vector<1x128xf32>
    %304 = vector.broadcast %303 : vector<1x128xf32> to vector<16x128xf32>
    %305 = arith.addf %301, %304 : vector<16x128xf32>
    %cst_229 = arith.constant 0.000000e+00 : f32
    %306 = vector.broadcast %cst_229 : f32 to vector<16x128xf32>
    %307 = arith.maximumf %305, %306 : vector<16x128xf32>
    %cst_230 = arith.constant 0.000000e+00 : f32
    %308 = vector.broadcast %cst_230 : f32 to vector<4x128xf32>
    %309 = tpu.concatenate %308, %307, %308 in 0 : vector<4x128xf32>, vector<16x128xf32>, vector<4x128xf32> -> vector<24x128xf32>
    %cst_231 = arith.constant 0.000000e+00 : f32
    %310 = vector.broadcast %cst_231 : f32 to vector<16x128xf32>
    %311 = vector.extract_strided_slice %309 {offsets = [0, 0], sizes = [16, 128], strides = [1, 1]} : vector<24x128xf32> to vector<16x128xf32>
    %312 = arith.truncf %311 : vector<16x128xf32> to vector<16x128xbf16>
    %c3_232 = arith.constant 3 : index
    %c0_233 = arith.constant 0 : index
    %c0_234 = arith.constant 0 : index
    %c0_235 = arith.constant 0 : index
    %313 = vector.load %arg3[%c3_232, %c0_233, %c0_234, %c0_235] : memref<7x9x128x128xbf16, #tpu.memory_space<vmem>>, vector<1x1x128x128xbf16>
    %314 = vector.shape_cast %313 : vector<1x1x128x128xbf16> to vector<128x128xbf16>
    %cst_236 = arith.constant dense<0.000000e+00> : vector<16x128xf32>
    %315 = tpu.matmul %312, %314, %cst_236 {dimension_numbers = #tpu.dot_dimension_numbers<[1], [0], [0], [1], [0, 0, 1, 1], [], []>} : vector<16x128xbf16>, vector<128x128xbf16>, vector<16x128xf32> -> vector<16x128xf32>
    %316 = arith.addf %310, %315 : vector<16x128xf32>
    %317 = vector.extract_strided_slice %309 {offsets = [1, 0], sizes = [16, 128], strides = [1, 1]} : vector<24x128xf32> to vector<16x128xf32>
    %318 = arith.truncf %317 : vector<16x128xf32> to vector<16x128xbf16>
    %c3_237 = arith.constant 3 : index
    %c1_238 = arith.constant 1 : index
    %c0_239 = arith.constant 0 : index
    %c0_240 = arith.constant 0 : index
    %319 = vector.load %arg3[%c3_237, %c1_238, %c0_239, %c0_240] : memref<7x9x128x128xbf16, #tpu.memory_space<vmem>>, vector<1x1x128x128xbf16>
    %320 = vector.shape_cast %319 : vector<1x1x128x128xbf16> to vector<128x128xbf16>
    %cst_241 = arith.constant dense<0.000000e+00> : vector<16x128xf32>
    %321 = tpu.matmul %318, %320, %cst_241 {dimension_numbers = #tpu.dot_dimension_numbers<[1], [0], [0], [1], [0, 0, 1, 1], [], []>} : vector<16x128xbf16>, vector<128x128xbf16>, vector<16x128xf32> -> vector<16x128xf32>
    %322 = arith.addf %316, %321 : vector<16x128xf32>
    %323 = vector.extract_strided_slice %309 {offsets = [2, 0], sizes = [16, 128], strides = [1, 1]} : vector<24x128xf32> to vector<16x128xf32>
    %324 = arith.truncf %323 : vector<16x128xf32> to vector<16x128xbf16>
    %c3_242 = arith.constant 3 : index
    %c2_243 = arith.constant 2 : index
    %c0_244 = arith.constant 0 : index
    %c0_245 = arith.constant 0 : index
    %325 = vector.load %arg3[%c3_242, %c2_243, %c0_244, %c0_245] : memref<7x9x128x128xbf16, #tpu.memory_space<vmem>>, vector<1x1x128x128xbf16>
    %326 = vector.shape_cast %325 : vector<1x1x128x128xbf16> to vector<128x128xbf16>
    %cst_246 = arith.constant dense<0.000000e+00> : vector<16x128xf32>
    %327 = tpu.matmul %324, %326, %cst_246 {dimension_numbers = #tpu.dot_dimension_numbers<[1], [0], [0], [1], [0, 0, 1, 1], [], []>} : vector<16x128xbf16>, vector<128x128xbf16>, vector<16x128xf32> -> vector<16x128xf32>
    %328 = arith.addf %322, %327 : vector<16x128xf32>
    %329 = vector.extract_strided_slice %309 {offsets = [3, 0], sizes = [16, 128], strides = [1, 1]} : vector<24x128xf32> to vector<16x128xf32>
    %330 = arith.truncf %329 : vector<16x128xf32> to vector<16x128xbf16>
    %c3_247 = arith.constant 3 : index
    %c3_248 = arith.constant 3 : index
    %c0_249 = arith.constant 0 : index
    %c0_250 = arith.constant 0 : index
    %331 = vector.load %arg3[%c3_247, %c3_248, %c0_249, %c0_250] : memref<7x9x128x128xbf16, #tpu.memory_space<vmem>>, vector<1x1x128x128xbf16>
    %332 = vector.shape_cast %331 : vector<1x1x128x128xbf16> to vector<128x128xbf16>
    %cst_251 = arith.constant dense<0.000000e+00> : vector<16x128xf32>
    %333 = tpu.matmul %330, %332, %cst_251 {dimension_numbers = #tpu.dot_dimension_numbers<[1], [0], [0], [1], [0, 0, 1, 1], [], []>} : vector<16x128xbf16>, vector<128x128xbf16>, vector<16x128xf32> -> vector<16x128xf32>
    %334 = arith.addf %328, %333 : vector<16x128xf32>
    %335 = vector.extract_strided_slice %309 {offsets = [4, 0], sizes = [16, 128], strides = [1, 1]} : vector<24x128xf32> to vector<16x128xf32>
    %336 = arith.truncf %335 : vector<16x128xf32> to vector<16x128xbf16>
    %c3_252 = arith.constant 3 : index
    %c4_253 = arith.constant 4 : index
    %c0_254 = arith.constant 0 : index
    %c0_255 = arith.constant 0 : index
    %337 = vector.load %arg3[%c3_252, %c4_253, %c0_254, %c0_255] : memref<7x9x128x128xbf16, #tpu.memory_space<vmem>>, vector<1x1x128x128xbf16>
    %338 = vector.shape_cast %337 : vector<1x1x128x128xbf16> to vector<128x128xbf16>
    %cst_256 = arith.constant dense<0.000000e+00> : vector<16x128xf32>
    %339 = tpu.matmul %336, %338, %cst_256 {dimension_numbers = #tpu.dot_dimension_numbers<[1], [0], [0], [1], [0, 0, 1, 1], [], []>} : vector<16x128xbf16>, vector<128x128xbf16>, vector<16x128xf32> -> vector<16x128xf32>
    %340 = arith.addf %334, %339 : vector<16x128xf32>
    %341 = vector.extract_strided_slice %309 {offsets = [5, 0], sizes = [16, 128], strides = [1, 1]} : vector<24x128xf32> to vector<16x128xf32>
    %342 = arith.truncf %341 : vector<16x128xf32> to vector<16x128xbf16>
    %c3_257 = arith.constant 3 : index
    %c5_258 = arith.constant 5 : index
    %c0_259 = arith.constant 0 : index
    %c0_260 = arith.constant 0 : index
    %343 = vector.load %arg3[%c3_257, %c5_258, %c0_259, %c0_260] : memref<7x9x128x128xbf16, #tpu.memory_space<vmem>>, vector<1x1x128x128xbf16>
    %344 = vector.shape_cast %343 : vector<1x1x128x128xbf16> to vector<128x128xbf16>
    %cst_261 = arith.constant dense<0.000000e+00> : vector<16x128xf32>
    %345 = tpu.matmul %342, %344, %cst_261 {dimension_numbers = #tpu.dot_dimension_numbers<[1], [0], [0], [1], [0, 0, 1, 1], [], []>} : vector<16x128xbf16>, vector<128x128xbf16>, vector<16x128xf32> -> vector<16x128xf32>
    %346 = arith.addf %340, %345 : vector<16x128xf32>
    %347 = vector.extract_strided_slice %309 {offsets = [6, 0], sizes = [16, 128], strides = [1, 1]} : vector<24x128xf32> to vector<16x128xf32>
    %348 = arith.truncf %347 : vector<16x128xf32> to vector<16x128xbf16>
    %c3_262 = arith.constant 3 : index
    %c6_263 = arith.constant 6 : index
    %c0_264 = arith.constant 0 : index
    %c0_265 = arith.constant 0 : index
    %349 = vector.load %arg3[%c3_262, %c6_263, %c0_264, %c0_265] : memref<7x9x128x128xbf16, #tpu.memory_space<vmem>>, vector<1x1x128x128xbf16>
    %350 = vector.shape_cast %349 : vector<1x1x128x128xbf16> to vector<128x128xbf16>
    %cst_266 = arith.constant dense<0.000000e+00> : vector<16x128xf32>
    %351 = tpu.matmul %348, %350, %cst_266 {dimension_numbers = #tpu.dot_dimension_numbers<[1], [0], [0], [1], [0, 0, 1, 1], [], []>} : vector<16x128xbf16>, vector<128x128xbf16>, vector<16x128xf32> -> vector<16x128xf32>
    %352 = arith.addf %346, %351 : vector<16x128xf32>
    %353 = vector.extract_strided_slice %309 {offsets = [7, 0], sizes = [16, 128], strides = [1, 1]} : vector<24x128xf32> to vector<16x128xf32>
    %354 = arith.truncf %353 : vector<16x128xf32> to vector<16x128xbf16>
    %c3_267 = arith.constant 3 : index
    %c7_268 = arith.constant 7 : index
    %c0_269 = arith.constant 0 : index
    %c0_270 = arith.constant 0 : index
    %355 = vector.load %arg3[%c3_267, %c7_268, %c0_269, %c0_270] : memref<7x9x128x128xbf16, #tpu.memory_space<vmem>>, vector<1x1x128x128xbf16>
    %356 = vector.shape_cast %355 : vector<1x1x128x128xbf16> to vector<128x128xbf16>
    %cst_271 = arith.constant dense<0.000000e+00> : vector<16x128xf32>
    %357 = tpu.matmul %354, %356, %cst_271 {dimension_numbers = #tpu.dot_dimension_numbers<[1], [0], [0], [1], [0, 0, 1, 1], [], []>} : vector<16x128xbf16>, vector<128x128xbf16>, vector<16x128xf32> -> vector<16x128xf32>
    %358 = arith.addf %352, %357 : vector<16x128xf32>
    %359 = vector.extract_strided_slice %309 {offsets = [8, 0], sizes = [16, 128], strides = [1, 1]} : vector<24x128xf32> to vector<16x128xf32>
    %360 = arith.truncf %359 : vector<16x128xf32> to vector<16x128xbf16>
    %c3_272 = arith.constant 3 : index
    %c8_273 = arith.constant 8 : index
    %c0_274 = arith.constant 0 : index
    %c0_275 = arith.constant 0 : index
    %361 = vector.load %arg3[%c3_272, %c8_273, %c0_274, %c0_275] : memref<7x9x128x128xbf16, #tpu.memory_space<vmem>>, vector<1x1x128x128xbf16>
    %362 = vector.shape_cast %361 : vector<1x1x128x128xbf16> to vector<128x128xbf16>
    %cst_276 = arith.constant dense<0.000000e+00> : vector<16x128xf32>
    %363 = tpu.matmul %360, %362, %cst_276 {dimension_numbers = #tpu.dot_dimension_numbers<[1], [0], [0], [1], [0, 0, 1, 1], [], []>} : vector<16x128xbf16>, vector<128x128xbf16>, vector<16x128xf32> -> vector<16x128xf32>
    %364 = arith.addf %358, %363 : vector<16x128xf32>
    %c3_277 = arith.constant 3 : index
    %c0_278 = arith.constant 0 : index
    %c0_279 = arith.constant 0 : index
    %365 = vector.load %arg5[%c3_277, %c0_278, %c0_279] : memref<7x1x128xf32, #tpu.memory_space<vmem>>, vector<1x1x128xf32>
    %366 = vector.shape_cast %365 : vector<1x1x128xf32> to vector<1x128xf32>
    %367 = vector.broadcast %366 : vector<1x128xf32> to vector<16x128xf32>
    %368 = arith.addf %364, %367 : vector<16x128xf32>
    %369 = arith.mulf %368, %368 : vector<16x128xf32>
    %cst_280 = arith.constant 0.000000e+00 : f32
    %370 = vector.broadcast %cst_280 : f32 to vector<16x128xf32>
    %371 = arith.subf %370, %369 : vector<16x128xf32>
    %372 = math.exp %371 : vector<16x128xf32>
    %373 = arith.mulf %372, %305 : vector<16x128xf32>
    %cst_281 = arith.constant 0.000000e+00 : f32
    %374 = vector.broadcast %cst_281 : f32 to vector<16x128xf32>
    %cst_282 = arith.constant 0.000000e+00 : f32
    %375 = vector.broadcast %cst_282 : f32 to vector<1x128xf32>
    %376 = tpu.concatenate %375, %373, %375 in 0 : vector<1x128xf32>, vector<16x128xf32>, vector<1x128xf32> -> vector<18x128xf32>
    %377 = vector.extract_strided_slice %376 {offsets = [0, 0], sizes = [16, 128], strides = [1, 1]} : vector<18x128xf32> to vector<16x128xf32>
    %378 = arith.truncf %377 : vector<16x128xf32> to vector<16x128xbf16>
    %c4_283 = arith.constant 4 : index
    %c0_284 = arith.constant 0 : index
    %c0_285 = arith.constant 0 : index
    %c0_286 = arith.constant 0 : index
    %379 = vector.load %arg2[%c4_283, %c0_284, %c0_285, %c0_286] : memref<10x3x128x128xbf16, #tpu.memory_space<vmem>>, vector<1x1x128x128xbf16>
    %380 = vector.shape_cast %379 : vector<1x1x128x128xbf16> to vector<128x128xbf16>
    %cst_287 = arith.constant dense<0.000000e+00> : vector<16x128xf32>
    %381 = tpu.matmul %378, %380, %cst_287 {dimension_numbers = #tpu.dot_dimension_numbers<[1], [0], [0], [1], [0, 0, 1, 1], [], []>} : vector<16x128xbf16>, vector<128x128xbf16>, vector<16x128xf32> -> vector<16x128xf32>
    %382 = arith.addf %374, %381 : vector<16x128xf32>
    %383 = vector.extract_strided_slice %376 {offsets = [1, 0], sizes = [16, 128], strides = [1, 1]} : vector<18x128xf32> to vector<16x128xf32>
    %384 = arith.truncf %383 : vector<16x128xf32> to vector<16x128xbf16>
    %c4_288 = arith.constant 4 : index
    %c1_289 = arith.constant 1 : index
    %c0_290 = arith.constant 0 : index
    %c0_291 = arith.constant 0 : index
    %385 = vector.load %arg2[%c4_288, %c1_289, %c0_290, %c0_291] : memref<10x3x128x128xbf16, #tpu.memory_space<vmem>>, vector<1x1x128x128xbf16>
    %386 = vector.shape_cast %385 : vector<1x1x128x128xbf16> to vector<128x128xbf16>
    %cst_292 = arith.constant dense<0.000000e+00> : vector<16x128xf32>
    %387 = tpu.matmul %384, %386, %cst_292 {dimension_numbers = #tpu.dot_dimension_numbers<[1], [0], [0], [1], [0, 0, 1, 1], [], []>} : vector<16x128xbf16>, vector<128x128xbf16>, vector<16x128xf32> -> vector<16x128xf32>
    %388 = arith.addf %382, %387 : vector<16x128xf32>
    %389 = vector.extract_strided_slice %376 {offsets = [2, 0], sizes = [16, 128], strides = [1, 1]} : vector<18x128xf32> to vector<16x128xf32>
    %390 = arith.truncf %389 : vector<16x128xf32> to vector<16x128xbf16>
    %c4_293 = arith.constant 4 : index
    %c2_294 = arith.constant 2 : index
    %c0_295 = arith.constant 0 : index
    %c0_296 = arith.constant 0 : index
    %391 = vector.load %arg2[%c4_293, %c2_294, %c0_295, %c0_296] : memref<10x3x128x128xbf16, #tpu.memory_space<vmem>>, vector<1x1x128x128xbf16>
    %392 = vector.shape_cast %391 : vector<1x1x128x128xbf16> to vector<128x128xbf16>
    %cst_297 = arith.constant dense<0.000000e+00> : vector<16x128xf32>
    %393 = tpu.matmul %390, %392, %cst_297 {dimension_numbers = #tpu.dot_dimension_numbers<[1], [0], [0], [1], [0, 0, 1, 1], [], []>} : vector<16x128xbf16>, vector<128x128xbf16>, vector<16x128xf32> -> vector<16x128xf32>
    %394 = arith.addf %388, %393 : vector<16x128xf32>
    %cst_298 = arith.constant 0.000000e+00 : f32
    %395 = vector.broadcast %cst_298 : f32 to vector<1x128xf32>
    %396 = tpu.concatenate %395, %280, %395 in 0 : vector<1x128xf32>, vector<16x128xf32>, vector<1x128xf32> -> vector<18x128xf32>
    %397 = vector.extract_strided_slice %396 {offsets = [0, 0], sizes = [16, 128], strides = [1, 1]} : vector<18x128xf32> to vector<16x128xf32>
    %398 = arith.truncf %397 : vector<16x128xf32> to vector<16x128xbf16>
    %c5_299 = arith.constant 5 : index
    %c0_300 = arith.constant 0 : index
    %c0_301 = arith.constant 0 : index
    %c0_302 = arith.constant 0 : index
    %399 = vector.load %arg2[%c5_299, %c0_300, %c0_301, %c0_302] : memref<10x3x128x128xbf16, #tpu.memory_space<vmem>>, vector<1x1x128x128xbf16>
    %400 = vector.shape_cast %399 : vector<1x1x128x128xbf16> to vector<128x128xbf16>
    %cst_303 = arith.constant dense<0.000000e+00> : vector<16x128xf32>
    %401 = tpu.matmul %398, %400, %cst_303 {dimension_numbers = #tpu.dot_dimension_numbers<[1], [0], [0], [1], [0, 0, 1, 1], [], []>} : vector<16x128xbf16>, vector<128x128xbf16>, vector<16x128xf32> -> vector<16x128xf32>
    %402 = arith.addf %394, %401 : vector<16x128xf32>
    %403 = vector.extract_strided_slice %396 {offsets = [1, 0], sizes = [16, 128], strides = [1, 1]} : vector<18x128xf32> to vector<16x128xf32>
    %404 = arith.truncf %403 : vector<16x128xf32> to vector<16x128xbf16>
    %c5_304 = arith.constant 5 : index
    %c1_305 = arith.constant 1 : index
    %c0_306 = arith.constant 0 : index
    %c0_307 = arith.constant 0 : index
    %405 = vector.load %arg2[%c5_304, %c1_305, %c0_306, %c0_307] : memref<10x3x128x128xbf16, #tpu.memory_space<vmem>>, vector<1x1x128x128xbf16>
    %406 = vector.shape_cast %405 : vector<1x1x128x128xbf16> to vector<128x128xbf16>
    %cst_308 = arith.constant dense<0.000000e+00> : vector<16x128xf32>
    %407 = tpu.matmul %404, %406, %cst_308 {dimension_numbers = #tpu.dot_dimension_numbers<[1], [0], [0], [1], [0, 0, 1, 1], [], []>} : vector<16x128xbf16>, vector<128x128xbf16>, vector<16x128xf32> -> vector<16x128xf32>
    %408 = arith.addf %402, %407 : vector<16x128xf32>
    %409 = vector.extract_strided_slice %396 {offsets = [2, 0], sizes = [16, 128], strides = [1, 1]} : vector<18x128xf32> to vector<16x128xf32>
    %410 = arith.truncf %409 : vector<16x128xf32> to vector<16x128xbf16>
    %c5_309 = arith.constant 5 : index
    %c2_310 = arith.constant 2 : index
    %c0_311 = arith.constant 0 : index
    %c0_312 = arith.constant 0 : index
    %411 = vector.load %arg2[%c5_309, %c2_310, %c0_311, %c0_312] : memref<10x3x128x128xbf16, #tpu.memory_space<vmem>>, vector<1x1x128x128xbf16>
    %412 = vector.shape_cast %411 : vector<1x1x128x128xbf16> to vector<128x128xbf16>
    %cst_313 = arith.constant dense<0.000000e+00> : vector<16x128xf32>
    %413 = tpu.matmul %410, %412, %cst_313 {dimension_numbers = #tpu.dot_dimension_numbers<[1], [0], [0], [1], [0, 0, 1, 1], [], []>} : vector<16x128xbf16>, vector<128x128xbf16>, vector<16x128xf32> -> vector<16x128xf32>
    %414 = arith.addf %408, %413 : vector<16x128xf32>
    %c4_314 = arith.constant 4 : index
    %c0_315 = arith.constant 0 : index
    %c0_316 = arith.constant 0 : index
    %415 = vector.load %arg4[%c4_314, %c0_315, %c0_316] : memref<7x1x128xf32, #tpu.memory_space<vmem>>, vector<1x1x128xf32>
    %416 = vector.shape_cast %415 : vector<1x1x128xf32> to vector<1x128xf32>
    %417 = vector.broadcast %416 : vector<1x128xf32> to vector<16x128xf32>
    %418 = arith.addf %414, %417 : vector<16x128xf32>
    %cst_317 = arith.constant 0.000000e+00 : f32
    %419 = vector.broadcast %cst_317 : f32 to vector<16x128xf32>
    %420 = arith.maximumf %418, %419 : vector<16x128xf32>
    %cst_318 = arith.constant 0.000000e+00 : f32
    %421 = vector.broadcast %cst_318 : f32 to vector<4x128xf32>
    %422 = tpu.concatenate %421, %420, %421 in 0 : vector<4x128xf32>, vector<16x128xf32>, vector<4x128xf32> -> vector<24x128xf32>
    %cst_319 = arith.constant 0.000000e+00 : f32
    %423 = vector.broadcast %cst_319 : f32 to vector<16x128xf32>
    %424 = vector.extract_strided_slice %422 {offsets = [0, 0], sizes = [16, 128], strides = [1, 1]} : vector<24x128xf32> to vector<16x128xf32>
    %425 = arith.truncf %424 : vector<16x128xf32> to vector<16x128xbf16>
    %c4_320 = arith.constant 4 : index
    %c0_321 = arith.constant 0 : index
    %c0_322 = arith.constant 0 : index
    %c0_323 = arith.constant 0 : index
    %426 = vector.load %arg3[%c4_320, %c0_321, %c0_322, %c0_323] : memref<7x9x128x128xbf16, #tpu.memory_space<vmem>>, vector<1x1x128x128xbf16>
    %427 = vector.shape_cast %426 : vector<1x1x128x128xbf16> to vector<128x128xbf16>
    %cst_324 = arith.constant dense<0.000000e+00> : vector<16x128xf32>
    %428 = tpu.matmul %425, %427, %cst_324 {dimension_numbers = #tpu.dot_dimension_numbers<[1], [0], [0], [1], [0, 0, 1, 1], [], []>} : vector<16x128xbf16>, vector<128x128xbf16>, vector<16x128xf32> -> vector<16x128xf32>
    %429 = arith.addf %423, %428 : vector<16x128xf32>
    %430 = vector.extract_strided_slice %422 {offsets = [1, 0], sizes = [16, 128], strides = [1, 1]} : vector<24x128xf32> to vector<16x128xf32>
    %431 = arith.truncf %430 : vector<16x128xf32> to vector<16x128xbf16>
    %c4_325 = arith.constant 4 : index
    %c1_326 = arith.constant 1 : index
    %c0_327 = arith.constant 0 : index
    %c0_328 = arith.constant 0 : index
    %432 = vector.load %arg3[%c4_325, %c1_326, %c0_327, %c0_328] : memref<7x9x128x128xbf16, #tpu.memory_space<vmem>>, vector<1x1x128x128xbf16>
    %433 = vector.shape_cast %432 : vector<1x1x128x128xbf16> to vector<128x128xbf16>
    %cst_329 = arith.constant dense<0.000000e+00> : vector<16x128xf32>
    %434 = tpu.matmul %431, %433, %cst_329 {dimension_numbers = #tpu.dot_dimension_numbers<[1], [0], [0], [1], [0, 0, 1, 1], [], []>} : vector<16x128xbf16>, vector<128x128xbf16>, vector<16x128xf32> -> vector<16x128xf32>
    %435 = arith.addf %429, %434 : vector<16x128xf32>
    %436 = vector.extract_strided_slice %422 {offsets = [2, 0], sizes = [16, 128], strides = [1, 1]} : vector<24x128xf32> to vector<16x128xf32>
    %437 = arith.truncf %436 : vector<16x128xf32> to vector<16x128xbf16>
    %c4_330 = arith.constant 4 : index
    %c2_331 = arith.constant 2 : index
    %c0_332 = arith.constant 0 : index
    %c0_333 = arith.constant 0 : index
    %438 = vector.load %arg3[%c4_330, %c2_331, %c0_332, %c0_333] : memref<7x9x128x128xbf16, #tpu.memory_space<vmem>>, vector<1x1x128x128xbf16>
    %439 = vector.shape_cast %438 : vector<1x1x128x128xbf16> to vector<128x128xbf16>
    %cst_334 = arith.constant dense<0.000000e+00> : vector<16x128xf32>
    %440 = tpu.matmul %437, %439, %cst_334 {dimension_numbers = #tpu.dot_dimension_numbers<[1], [0], [0], [1], [0, 0, 1, 1], [], []>} : vector<16x128xbf16>, vector<128x128xbf16>, vector<16x128xf32> -> vector<16x128xf32>
    %441 = arith.addf %435, %440 : vector<16x128xf32>
    %442 = vector.extract_strided_slice %422 {offsets = [3, 0], sizes = [16, 128], strides = [1, 1]} : vector<24x128xf32> to vector<16x128xf32>
    %443 = arith.truncf %442 : vector<16x128xf32> to vector<16x128xbf16>
    %c4_335 = arith.constant 4 : index
    %c3_336 = arith.constant 3 : index
    %c0_337 = arith.constant 0 : index
    %c0_338 = arith.constant 0 : index
    %444 = vector.load %arg3[%c4_335, %c3_336, %c0_337, %c0_338] : memref<7x9x128x128xbf16, #tpu.memory_space<vmem>>, vector<1x1x128x128xbf16>
    %445 = vector.shape_cast %444 : vector<1x1x128x128xbf16> to vector<128x128xbf16>
    %cst_339 = arith.constant dense<0.000000e+00> : vector<16x128xf32>
    %446 = tpu.matmul %443, %445, %cst_339 {dimension_numbers = #tpu.dot_dimension_numbers<[1], [0], [0], [1], [0, 0, 1, 1], [], []>} : vector<16x128xbf16>, vector<128x128xbf16>, vector<16x128xf32> -> vector<16x128xf32>
    %447 = arith.addf %441, %446 : vector<16x128xf32>
    %448 = vector.extract_strided_slice %422 {offsets = [4, 0], sizes = [16, 128], strides = [1, 1]} : vector<24x128xf32> to vector<16x128xf32>
    %449 = arith.truncf %448 : vector<16x128xf32> to vector<16x128xbf16>
    %c4_340 = arith.constant 4 : index
    %c4_341 = arith.constant 4 : index
    %c0_342 = arith.constant 0 : index
    %c0_343 = arith.constant 0 : index
    %450 = vector.load %arg3[%c4_340, %c4_341, %c0_342, %c0_343] : memref<7x9x128x128xbf16, #tpu.memory_space<vmem>>, vector<1x1x128x128xbf16>
    %451 = vector.shape_cast %450 : vector<1x1x128x128xbf16> to vector<128x128xbf16>
    %cst_344 = arith.constant dense<0.000000e+00> : vector<16x128xf32>
    %452 = tpu.matmul %449, %451, %cst_344 {dimension_numbers = #tpu.dot_dimension_numbers<[1], [0], [0], [1], [0, 0, 1, 1], [], []>} : vector<16x128xbf16>, vector<128x128xbf16>, vector<16x128xf32> -> vector<16x128xf32>
    %453 = arith.addf %447, %452 : vector<16x128xf32>
    %454 = vector.extract_strided_slice %422 {offsets = [5, 0], sizes = [16, 128], strides = [1, 1]} : vector<24x128xf32> to vector<16x128xf32>
    %455 = arith.truncf %454 : vector<16x128xf32> to vector<16x128xbf16>
    %c4_345 = arith.constant 4 : index
    %c5_346 = arith.constant 5 : index
    %c0_347 = arith.constant 0 : index
    %c0_348 = arith.constant 0 : index
    %456 = vector.load %arg3[%c4_345, %c5_346, %c0_347, %c0_348] : memref<7x9x128x128xbf16, #tpu.memory_space<vmem>>, vector<1x1x128x128xbf16>
    %457 = vector.shape_cast %456 : vector<1x1x128x128xbf16> to vector<128x128xbf16>
    %cst_349 = arith.constant dense<0.000000e+00> : vector<16x128xf32>
    %458 = tpu.matmul %455, %457, %cst_349 {dimension_numbers = #tpu.dot_dimension_numbers<[1], [0], [0], [1], [0, 0, 1, 1], [], []>} : vector<16x128xbf16>, vector<128x128xbf16>, vector<16x128xf32> -> vector<16x128xf32>
    %459 = arith.addf %453, %458 : vector<16x128xf32>
    %460 = vector.extract_strided_slice %422 {offsets = [6, 0], sizes = [16, 128], strides = [1, 1]} : vector<24x128xf32> to vector<16x128xf32>
    %461 = arith.truncf %460 : vector<16x128xf32> to vector<16x128xbf16>
    %c4_350 = arith.constant 4 : index
    %c6_351 = arith.constant 6 : index
    %c0_352 = arith.constant 0 : index
    %c0_353 = arith.constant 0 : index
    %462 = vector.load %arg3[%c4_350, %c6_351, %c0_352, %c0_353] : memref<7x9x128x128xbf16, #tpu.memory_space<vmem>>, vector<1x1x128x128xbf16>
    %463 = vector.shape_cast %462 : vector<1x1x128x128xbf16> to vector<128x128xbf16>
    %cst_354 = arith.constant dense<0.000000e+00> : vector<16x128xf32>
    %464 = tpu.matmul %461, %463, %cst_354 {dimension_numbers = #tpu.dot_dimension_numbers<[1], [0], [0], [1], [0, 0, 1, 1], [], []>} : vector<16x128xbf16>, vector<128x128xbf16>, vector<16x128xf32> -> vector<16x128xf32>
    %465 = arith.addf %459, %464 : vector<16x128xf32>
    %466 = vector.extract_strided_slice %422 {offsets = [7, 0], sizes = [16, 128], strides = [1, 1]} : vector<24x128xf32> to vector<16x128xf32>
    %467 = arith.truncf %466 : vector<16x128xf32> to vector<16x128xbf16>
    %c4_355 = arith.constant 4 : index
    %c7_356 = arith.constant 7 : index
    %c0_357 = arith.constant 0 : index
    %c0_358 = arith.constant 0 : index
    %468 = vector.load %arg3[%c4_355, %c7_356, %c0_357, %c0_358] : memref<7x9x128x128xbf16, #tpu.memory_space<vmem>>, vector<1x1x128x128xbf16>
    %469 = vector.shape_cast %468 : vector<1x1x128x128xbf16> to vector<128x128xbf16>
    %cst_359 = arith.constant dense<0.000000e+00> : vector<16x128xf32>
    %470 = tpu.matmul %467, %469, %cst_359 {dimension_numbers = #tpu.dot_dimension_numbers<[1], [0], [0], [1], [0, 0, 1, 1], [], []>} : vector<16x128xbf16>, vector<128x128xbf16>, vector<16x128xf32> -> vector<16x128xf32>
    %471 = arith.addf %465, %470 : vector<16x128xf32>
    %472 = vector.extract_strided_slice %422 {offsets = [8, 0], sizes = [16, 128], strides = [1, 1]} : vector<24x128xf32> to vector<16x128xf32>
    %473 = arith.truncf %472 : vector<16x128xf32> to vector<16x128xbf16>
    %c4_360 = arith.constant 4 : index
    %c8_361 = arith.constant 8 : index
    %c0_362 = arith.constant 0 : index
    %c0_363 = arith.constant 0 : index
    %474 = vector.load %arg3[%c4_360, %c8_361, %c0_362, %c0_363] : memref<7x9x128x128xbf16, #tpu.memory_space<vmem>>, vector<1x1x128x128xbf16>
    %475 = vector.shape_cast %474 : vector<1x1x128x128xbf16> to vector<128x128xbf16>
    %cst_364 = arith.constant dense<0.000000e+00> : vector<16x128xf32>
    %476 = tpu.matmul %473, %475, %cst_364 {dimension_numbers = #tpu.dot_dimension_numbers<[1], [0], [0], [1], [0, 0, 1, 1], [], []>} : vector<16x128xbf16>, vector<128x128xbf16>, vector<16x128xf32> -> vector<16x128xf32>
    %477 = arith.addf %471, %476 : vector<16x128xf32>
    %c4_365 = arith.constant 4 : index
    %c0_366 = arith.constant 0 : index
    %c0_367 = arith.constant 0 : index
    %478 = vector.load %arg5[%c4_365, %c0_366, %c0_367] : memref<7x1x128xf32, #tpu.memory_space<vmem>>, vector<1x1x128xf32>
    %479 = vector.shape_cast %478 : vector<1x1x128xf32> to vector<1x128xf32>
    %480 = vector.broadcast %479 : vector<1x128xf32> to vector<16x128xf32>
    %481 = arith.addf %477, %480 : vector<16x128xf32>
    %482 = arith.mulf %481, %481 : vector<16x128xf32>
    %cst_368 = arith.constant 0.000000e+00 : f32
    %483 = vector.broadcast %cst_368 : f32 to vector<16x128xf32>
    %484 = arith.subf %483, %482 : vector<16x128xf32>
    %485 = math.exp %484 : vector<16x128xf32>
    %486 = arith.mulf %485, %418 : vector<16x128xf32>
    %cst_369 = arith.constant 0.000000e+00 : f32
    %487 = vector.broadcast %cst_369 : f32 to vector<16x128xf32>
    %cst_370 = arith.constant 0.000000e+00 : f32
    %488 = vector.broadcast %cst_370 : f32 to vector<1x128xf32>
    %489 = tpu.concatenate %488, %486, %488 in 0 : vector<1x128xf32>, vector<16x128xf32>, vector<1x128xf32> -> vector<18x128xf32>
    %490 = vector.extract_strided_slice %489 {offsets = [0, 0], sizes = [16, 128], strides = [1, 1]} : vector<18x128xf32> to vector<16x128xf32>
    %491 = arith.truncf %490 : vector<16x128xf32> to vector<16x128xbf16>
    %c6_371 = arith.constant 6 : index
    %c0_372 = arith.constant 0 : index
    %c0_373 = arith.constant 0 : index
    %c0_374 = arith.constant 0 : index
    %492 = vector.load %arg2[%c6_371, %c0_372, %c0_373, %c0_374] : memref<10x3x128x128xbf16, #tpu.memory_space<vmem>>, vector<1x1x128x128xbf16>
    %493 = vector.shape_cast %492 : vector<1x1x128x128xbf16> to vector<128x128xbf16>
    %cst_375 = arith.constant dense<0.000000e+00> : vector<16x128xf32>
    %494 = tpu.matmul %491, %493, %cst_375 {dimension_numbers = #tpu.dot_dimension_numbers<[1], [0], [0], [1], [0, 0, 1, 1], [], []>} : vector<16x128xbf16>, vector<128x128xbf16>, vector<16x128xf32> -> vector<16x128xf32>
    %495 = arith.addf %487, %494 : vector<16x128xf32>
    %496 = vector.extract_strided_slice %489 {offsets = [1, 0], sizes = [16, 128], strides = [1, 1]} : vector<18x128xf32> to vector<16x128xf32>
    %497 = arith.truncf %496 : vector<16x128xf32> to vector<16x128xbf16>
    %c6_376 = arith.constant 6 : index
    %c1_377 = arith.constant 1 : index
    %c0_378 = arith.constant 0 : index
    %c0_379 = arith.constant 0 : index
    %498 = vector.load %arg2[%c6_376, %c1_377, %c0_378, %c0_379] : memref<10x3x128x128xbf16, #tpu.memory_space<vmem>>, vector<1x1x128x128xbf16>
    %499 = vector.shape_cast %498 : vector<1x1x128x128xbf16> to vector<128x128xbf16>
    %cst_380 = arith.constant dense<0.000000e+00> : vector<16x128xf32>
    %500 = tpu.matmul %497, %499, %cst_380 {dimension_numbers = #tpu.dot_dimension_numbers<[1], [0], [0], [1], [0, 0, 1, 1], [], []>} : vector<16x128xbf16>, vector<128x128xbf16>, vector<16x128xf32> -> vector<16x128xf32>
    %501 = arith.addf %495, %500 : vector<16x128xf32>
    %502 = vector.extract_strided_slice %489 {offsets = [2, 0], sizes = [16, 128], strides = [1, 1]} : vector<18x128xf32> to vector<16x128xf32>
    %503 = arith.truncf %502 : vector<16x128xf32> to vector<16x128xbf16>
    %c6_381 = arith.constant 6 : index
    %c2_382 = arith.constant 2 : index
    %c0_383 = arith.constant 0 : index
    %c0_384 = arith.constant 0 : index
    %504 = vector.load %arg2[%c6_381, %c2_382, %c0_383, %c0_384] : memref<10x3x128x128xbf16, #tpu.memory_space<vmem>>, vector<1x1x128x128xbf16>
    %505 = vector.shape_cast %504 : vector<1x1x128x128xbf16> to vector<128x128xbf16>
    %cst_385 = arith.constant dense<0.000000e+00> : vector<16x128xf32>
    %506 = tpu.matmul %503, %505, %cst_385 {dimension_numbers = #tpu.dot_dimension_numbers<[1], [0], [0], [1], [0, 0, 1, 1], [], []>} : vector<16x128xbf16>, vector<128x128xbf16>, vector<16x128xf32> -> vector<16x128xf32>
    %507 = arith.addf %501, %506 : vector<16x128xf32>
    %cst_386 = arith.constant 0.000000e+00 : f32
    %508 = vector.broadcast %cst_386 : f32 to vector<1x128xf32>
    %509 = tpu.concatenate %508, %187, %508 in 0 : vector<1x128xf32>, vector<16x128xf32>, vector<1x128xf32> -> vector<18x128xf32>
    %510 = vector.extract_strided_slice %509 {offsets = [0, 0], sizes = [16, 128], strides = [1, 1]} : vector<18x128xf32> to vector<16x128xf32>
    %511 = arith.truncf %510 : vector<16x128xf32> to vector<16x128xbf16>
    %c7_387 = arith.constant 7 : index
    %c0_388 = arith.constant 0 : index
    %c0_389 = arith.constant 0 : index
    %c0_390 = arith.constant 0 : index
    %512 = vector.load %arg2[%c7_387, %c0_388, %c0_389, %c0_390] : memref<10x3x128x128xbf16, #tpu.memory_space<vmem>>, vector<1x1x128x128xbf16>
    %513 = vector.shape_cast %512 : vector<1x1x128x128xbf16> to vector<128x128xbf16>
    %cst_391 = arith.constant dense<0.000000e+00> : vector<16x128xf32>
    %514 = tpu.matmul %511, %513, %cst_391 {dimension_numbers = #tpu.dot_dimension_numbers<[1], [0], [0], [1], [0, 0, 1, 1], [], []>} : vector<16x128xbf16>, vector<128x128xbf16>, vector<16x128xf32> -> vector<16x128xf32>
    %515 = arith.addf %507, %514 : vector<16x128xf32>
    %516 = vector.extract_strided_slice %509 {offsets = [1, 0], sizes = [16, 128], strides = [1, 1]} : vector<18x128xf32> to vector<16x128xf32>
    %517 = arith.truncf %516 : vector<16x128xf32> to vector<16x128xbf16>
    %c7_392 = arith.constant 7 : index
    %c1_393 = arith.constant 1 : index
    %c0_394 = arith.constant 0 : index
    %c0_395 = arith.constant 0 : index
    %518 = vector.load %arg2[%c7_392, %c1_393, %c0_394, %c0_395] : memref<10x3x128x128xbf16, #tpu.memory_space<vmem>>, vector<1x1x128x128xbf16>
    %519 = vector.shape_cast %518 : vector<1x1x128x128xbf16> to vector<128x128xbf16>
    %cst_396 = arith.constant dense<0.000000e+00> : vector<16x128xf32>
    %520 = tpu.matmul %517, %519, %cst_396 {dimension_numbers = #tpu.dot_dimension_numbers<[1], [0], [0], [1], [0, 0, 1, 1], [], []>} : vector<16x128xbf16>, vector<128x128xbf16>, vector<16x128xf32> -> vector<16x128xf32>
    %521 = arith.addf %515, %520 : vector<16x128xf32>
    %522 = vector.extract_strided_slice %509 {offsets = [2, 0], sizes = [16, 128], strides = [1, 1]} : vector<18x128xf32> to vector<16x128xf32>
    %523 = arith.truncf %522 : vector<16x128xf32> to vector<16x128xbf16>
    %c7_397 = arith.constant 7 : index
    %c2_398 = arith.constant 2 : index
    %c0_399 = arith.constant 0 : index
    %c0_400 = arith.constant 0 : index
    %524 = vector.load %arg2[%c7_397, %c2_398, %c0_399, %c0_400] : memref<10x3x128x128xbf16, #tpu.memory_space<vmem>>, vector<1x1x128x128xbf16>
    %525 = vector.shape_cast %524 : vector<1x1x128x128xbf16> to vector<128x128xbf16>
    %cst_401 = arith.constant dense<0.000000e+00> : vector<16x128xf32>
    %526 = tpu.matmul %523, %525, %cst_401 {dimension_numbers = #tpu.dot_dimension_numbers<[1], [0], [0], [1], [0, 0, 1, 1], [], []>} : vector<16x128xbf16>, vector<128x128xbf16>, vector<16x128xf32> -> vector<16x128xf32>
    %527 = arith.addf %521, %526 : vector<16x128xf32>
    %c5_402 = arith.constant 5 : index
    %c0_403 = arith.constant 0 : index
    %c0_404 = arith.constant 0 : index
    %528 = vector.load %arg4[%c5_402, %c0_403, %c0_404] : memref<7x1x128xf32, #tpu.memory_space<vmem>>, vector<1x1x128xf32>
    %529 = vector.shape_cast %528 : vector<1x1x128xf32> to vector<1x128xf32>
    %530 = vector.broadcast %529 : vector<1x128xf32> to vector<16x128xf32>
    %531 = arith.addf %527, %530 : vector<16x128xf32>
    %cst_405 = arith.constant 0.000000e+00 : f32
    %532 = vector.broadcast %cst_405 : f32 to vector<16x128xf32>
    %533 = arith.maximumf %531, %532 : vector<16x128xf32>
    %cst_406 = arith.constant 0.000000e+00 : f32
    %534 = vector.broadcast %cst_406 : f32 to vector<4x128xf32>
    %535 = tpu.concatenate %534, %533, %534 in 0 : vector<4x128xf32>, vector<16x128xf32>, vector<4x128xf32> -> vector<24x128xf32>
    %cst_407 = arith.constant 0.000000e+00 : f32
    %536 = vector.broadcast %cst_407 : f32 to vector<16x128xf32>
    %537 = vector.extract_strided_slice %535 {offsets = [0, 0], sizes = [16, 128], strides = [1, 1]} : vector<24x128xf32> to vector<16x128xf32>
    %538 = arith.truncf %537 : vector<16x128xf32> to vector<16x128xbf16>
    %c5_408 = arith.constant 5 : index
    %c0_409 = arith.constant 0 : index
    %c0_410 = arith.constant 0 : index
    %c0_411 = arith.constant 0 : index
    %539 = vector.load %arg3[%c5_408, %c0_409, %c0_410, %c0_411] : memref<7x9x128x128xbf16, #tpu.memory_space<vmem>>, vector<1x1x128x128xbf16>
    %540 = vector.shape_cast %539 : vector<1x1x128x128xbf16> to vector<128x128xbf16>
    %cst_412 = arith.constant dense<0.000000e+00> : vector<16x128xf32>
    %541 = tpu.matmul %538, %540, %cst_412 {dimension_numbers = #tpu.dot_dimension_numbers<[1], [0], [0], [1], [0, 0, 1, 1], [], []>} : vector<16x128xbf16>, vector<128x128xbf16>, vector<16x128xf32> -> vector<16x128xf32>
    %542 = arith.addf %536, %541 : vector<16x128xf32>
    %543 = vector.extract_strided_slice %535 {offsets = [1, 0], sizes = [16, 128], strides = [1, 1]} : vector<24x128xf32> to vector<16x128xf32>
    %544 = arith.truncf %543 : vector<16x128xf32> to vector<16x128xbf16>
    %c5_413 = arith.constant 5 : index
    %c1_414 = arith.constant 1 : index
    %c0_415 = arith.constant 0 : index
    %c0_416 = arith.constant 0 : index
    %545 = vector.load %arg3[%c5_413, %c1_414, %c0_415, %c0_416] : memref<7x9x128x128xbf16, #tpu.memory_space<vmem>>, vector<1x1x128x128xbf16>
    %546 = vector.shape_cast %545 : vector<1x1x128x128xbf16> to vector<128x128xbf16>
    %cst_417 = arith.constant dense<0.000000e+00> : vector<16x128xf32>
    %547 = tpu.matmul %544, %546, %cst_417 {dimension_numbers = #tpu.dot_dimension_numbers<[1], [0], [0], [1], [0, 0, 1, 1], [], []>} : vector<16x128xbf16>, vector<128x128xbf16>, vector<16x128xf32> -> vector<16x128xf32>
    %548 = arith.addf %542, %547 : vector<16x128xf32>
    %549 = vector.extract_strided_slice %535 {offsets = [2, 0], sizes = [16, 128], strides = [1, 1]} : vector<24x128xf32> to vector<16x128xf32>
    %550 = arith.truncf %549 : vector<16x128xf32> to vector<16x128xbf16>
    %c5_418 = arith.constant 5 : index
    %c2_419 = arith.constant 2 : index
    %c0_420 = arith.constant 0 : index
    %c0_421 = arith.constant 0 : index
    %551 = vector.load %arg3[%c5_418, %c2_419, %c0_420, %c0_421] : memref<7x9x128x128xbf16, #tpu.memory_space<vmem>>, vector<1x1x128x128xbf16>
    %552 = vector.shape_cast %551 : vector<1x1x128x128xbf16> to vector<128x128xbf16>
    %cst_422 = arith.constant dense<0.000000e+00> : vector<16x128xf32>
    %553 = tpu.matmul %550, %552, %cst_422 {dimension_numbers = #tpu.dot_dimension_numbers<[1], [0], [0], [1], [0, 0, 1, 1], [], []>} : vector<16x128xbf16>, vector<128x128xbf16>, vector<16x128xf32> -> vector<16x128xf32>
    %554 = arith.addf %548, %553 : vector<16x128xf32>
    %555 = vector.extract_strided_slice %535 {offsets = [3, 0], sizes = [16, 128], strides = [1, 1]} : vector<24x128xf32> to vector<16x128xf32>
    %556 = arith.truncf %555 : vector<16x128xf32> to vector<16x128xbf16>
    %c5_423 = arith.constant 5 : index
    %c3_424 = arith.constant 3 : index
    %c0_425 = arith.constant 0 : index
    %c0_426 = arith.constant 0 : index
    %557 = vector.load %arg3[%c5_423, %c3_424, %c0_425, %c0_426] : memref<7x9x128x128xbf16, #tpu.memory_space<vmem>>, vector<1x1x128x128xbf16>
    %558 = vector.shape_cast %557 : vector<1x1x128x128xbf16> to vector<128x128xbf16>
    %cst_427 = arith.constant dense<0.000000e+00> : vector<16x128xf32>
    %559 = tpu.matmul %556, %558, %cst_427 {dimension_numbers = #tpu.dot_dimension_numbers<[1], [0], [0], [1], [0, 0, 1, 1], [], []>} : vector<16x128xbf16>, vector<128x128xbf16>, vector<16x128xf32> -> vector<16x128xf32>
    %560 = arith.addf %554, %559 : vector<16x128xf32>
    %561 = vector.extract_strided_slice %535 {offsets = [4, 0], sizes = [16, 128], strides = [1, 1]} : vector<24x128xf32> to vector<16x128xf32>
    %562 = arith.truncf %561 : vector<16x128xf32> to vector<16x128xbf16>
    %c5_428 = arith.constant 5 : index
    %c4_429 = arith.constant 4 : index
    %c0_430 = arith.constant 0 : index
    %c0_431 = arith.constant 0 : index
    %563 = vector.load %arg3[%c5_428, %c4_429, %c0_430, %c0_431] : memref<7x9x128x128xbf16, #tpu.memory_space<vmem>>, vector<1x1x128x128xbf16>
    %564 = vector.shape_cast %563 : vector<1x1x128x128xbf16> to vector<128x128xbf16>
    %cst_432 = arith.constant dense<0.000000e+00> : vector<16x128xf32>
    %565 = tpu.matmul %562, %564, %cst_432 {dimension_numbers = #tpu.dot_dimension_numbers<[1], [0], [0], [1], [0, 0, 1, 1], [], []>} : vector<16x128xbf16>, vector<128x128xbf16>, vector<16x128xf32> -> vector<16x128xf32>
    %566 = arith.addf %560, %565 : vector<16x128xf32>
    %567 = vector.extract_strided_slice %535 {offsets = [5, 0], sizes = [16, 128], strides = [1, 1]} : vector<24x128xf32> to vector<16x128xf32>
    %568 = arith.truncf %567 : vector<16x128xf32> to vector<16x128xbf16>
    %c5_433 = arith.constant 5 : index
    %c5_434 = arith.constant 5 : index
    %c0_435 = arith.constant 0 : index
    %c0_436 = arith.constant 0 : index
    %569 = vector.load %arg3[%c5_433, %c5_434, %c0_435, %c0_436] : memref<7x9x128x128xbf16, #tpu.memory_space<vmem>>, vector<1x1x128x128xbf16>
    %570 = vector.shape_cast %569 : vector<1x1x128x128xbf16> to vector<128x128xbf16>
    %cst_437 = arith.constant dense<0.000000e+00> : vector<16x128xf32>
    %571 = tpu.matmul %568, %570, %cst_437 {dimension_numbers = #tpu.dot_dimension_numbers<[1], [0], [0], [1], [0, 0, 1, 1], [], []>} : vector<16x128xbf16>, vector<128x128xbf16>, vector<16x128xf32> -> vector<16x128xf32>
    %572 = arith.addf %566, %571 : vector<16x128xf32>
    %573 = vector.extract_strided_slice %535 {offsets = [6, 0], sizes = [16, 128], strides = [1, 1]} : vector<24x128xf32> to vector<16x128xf32>
    %574 = arith.truncf %573 : vector<16x128xf32> to vector<16x128xbf16>
    %c5_438 = arith.constant 5 : index
    %c6_439 = arith.constant 6 : index
    %c0_440 = arith.constant 0 : index
    %c0_441 = arith.constant 0 : index
    %575 = vector.load %arg3[%c5_438, %c6_439, %c0_440, %c0_441] : memref<7x9x128x128xbf16, #tpu.memory_space<vmem>>, vector<1x1x128x128xbf16>
    %576 = vector.shape_cast %575 : vector<1x1x128x128xbf16> to vector<128x128xbf16>
    %cst_442 = arith.constant dense<0.000000e+00> : vector<16x128xf32>
    %577 = tpu.matmul %574, %576, %cst_442 {dimension_numbers = #tpu.dot_dimension_numbers<[1], [0], [0], [1], [0, 0, 1, 1], [], []>} : vector<16x128xbf16>, vector<128x128xbf16>, vector<16x128xf32> -> vector<16x128xf32>
    %578 = arith.addf %572, %577 : vector<16x128xf32>
    %579 = vector.extract_strided_slice %535 {offsets = [7, 0], sizes = [16, 128], strides = [1, 1]} : vector<24x128xf32> to vector<16x128xf32>
    %580 = arith.truncf %579 : vector<16x128xf32> to vector<16x128xbf16>
    %c5_443 = arith.constant 5 : index
    %c7_444 = arith.constant 7 : index
    %c0_445 = arith.constant 0 : index
    %c0_446 = arith.constant 0 : index
    %581 = vector.load %arg3[%c5_443, %c7_444, %c0_445, %c0_446] : memref<7x9x128x128xbf16, #tpu.memory_space<vmem>>, vector<1x1x128x128xbf16>
    %582 = vector.shape_cast %581 : vector<1x1x128x128xbf16> to vector<128x128xbf16>
    %cst_447 = arith.constant dense<0.000000e+00> : vector<16x128xf32>
    %583 = tpu.matmul %580, %582, %cst_447 {dimension_numbers = #tpu.dot_dimension_numbers<[1], [0], [0], [1], [0, 0, 1, 1], [], []>} : vector<16x128xbf16>, vector<128x128xbf16>, vector<16x128xf32> -> vector<16x128xf32>
    %584 = arith.addf %578, %583 : vector<16x128xf32>
    %585 = vector.extract_strided_slice %535 {offsets = [8, 0], sizes = [16, 128], strides = [1, 1]} : vector<24x128xf32> to vector<16x128xf32>
    %586 = arith.truncf %585 : vector<16x128xf32> to vector<16x128xbf16>
    %c5_448 = arith.constant 5 : index
    %c8_449 = arith.constant 8 : index
    %c0_450 = arith.constant 0 : index
    %c0_451 = arith.constant 0 : index
    %587 = vector.load %arg3[%c5_448, %c8_449, %c0_450, %c0_451] : memref<7x9x128x128xbf16, #tpu.memory_space<vmem>>, vector<1x1x128x128xbf16>
    %588 = vector.shape_cast %587 : vector<1x1x128x128xbf16> to vector<128x128xbf16>
    %cst_452 = arith.constant dense<0.000000e+00> : vector<16x128xf32>
    %589 = tpu.matmul %586, %588, %cst_452 {dimension_numbers = #tpu.dot_dimension_numbers<[1], [0], [0], [1], [0, 0, 1, 1], [], []>} : vector<16x128xbf16>, vector<128x128xbf16>, vector<16x128xf32> -> vector<16x128xf32>
    %590 = arith.addf %584, %589 : vector<16x128xf32>
    %c5_453 = arith.constant 5 : index
    %c0_454 = arith.constant 0 : index
    %c0_455 = arith.constant 0 : index
    %591 = vector.load %arg5[%c5_453, %c0_454, %c0_455] : memref<7x1x128xf32, #tpu.memory_space<vmem>>, vector<1x1x128xf32>
    %592 = vector.shape_cast %591 : vector<1x1x128xf32> to vector<1x128xf32>
    %593 = vector.broadcast %592 : vector<1x128xf32> to vector<16x128xf32>
    %594 = arith.addf %590, %593 : vector<16x128xf32>
    %595 = arith.mulf %594, %594 : vector<16x128xf32>
    %cst_456 = arith.constant 0.000000e+00 : f32
    %596 = vector.broadcast %cst_456 : f32 to vector<16x128xf32>
    %597 = arith.subf %596, %595 : vector<16x128xf32>
    %598 = math.exp %597 : vector<16x128xf32>
    %599 = arith.mulf %598, %531 : vector<16x128xf32>
    %cst_457 = arith.constant 0.000000e+00 : f32
    %600 = vector.broadcast %cst_457 : f32 to vector<16x128xf32>
    %cst_458 = arith.constant 0.000000e+00 : f32
    %601 = vector.broadcast %cst_458 : f32 to vector<1x128xf32>
    %602 = tpu.concatenate %601, %599, %601 in 0 : vector<1x128xf32>, vector<16x128xf32>, vector<1x128xf32> -> vector<18x128xf32>
    %603 = vector.extract_strided_slice %602 {offsets = [0, 0], sizes = [16, 128], strides = [1, 1]} : vector<18x128xf32> to vector<16x128xf32>
    %604 = arith.truncf %603 : vector<16x128xf32> to vector<16x128xbf16>
    %c8_459 = arith.constant 8 : index
    %c0_460 = arith.constant 0 : index
    %c0_461 = arith.constant 0 : index
    %c0_462 = arith.constant 0 : index
    %605 = vector.load %arg2[%c8_459, %c0_460, %c0_461, %c0_462] : memref<10x3x128x128xbf16, #tpu.memory_space<vmem>>, vector<1x1x128x128xbf16>
    %606 = vector.shape_cast %605 : vector<1x1x128x128xbf16> to vector<128x128xbf16>
    %cst_463 = arith.constant dense<0.000000e+00> : vector<16x128xf32>
    %607 = tpu.matmul %604, %606, %cst_463 {dimension_numbers = #tpu.dot_dimension_numbers<[1], [0], [0], [1], [0, 0, 1, 1], [], []>} : vector<16x128xbf16>, vector<128x128xbf16>, vector<16x128xf32> -> vector<16x128xf32>
    %608 = arith.addf %600, %607 : vector<16x128xf32>
    %609 = vector.extract_strided_slice %602 {offsets = [1, 0], sizes = [16, 128], strides = [1, 1]} : vector<18x128xf32> to vector<16x128xf32>
    %610 = arith.truncf %609 : vector<16x128xf32> to vector<16x128xbf16>
    %c8_464 = arith.constant 8 : index
    %c1_465 = arith.constant 1 : index
    %c0_466 = arith.constant 0 : index
    %c0_467 = arith.constant 0 : index
    %611 = vector.load %arg2[%c8_464, %c1_465, %c0_466, %c0_467] : memref<10x3x128x128xbf16, #tpu.memory_space<vmem>>, vector<1x1x128x128xbf16>
    %612 = vector.shape_cast %611 : vector<1x1x128x128xbf16> to vector<128x128xbf16>
    %cst_468 = arith.constant dense<0.000000e+00> : vector<16x128xf32>
    %613 = tpu.matmul %610, %612, %cst_468 {dimension_numbers = #tpu.dot_dimension_numbers<[1], [0], [0], [1], [0, 0, 1, 1], [], []>} : vector<16x128xbf16>, vector<128x128xbf16>, vector<16x128xf32> -> vector<16x128xf32>
    %614 = arith.addf %608, %613 : vector<16x128xf32>
    %615 = vector.extract_strided_slice %602 {offsets = [2, 0], sizes = [16, 128], strides = [1, 1]} : vector<18x128xf32> to vector<16x128xf32>
    %616 = arith.truncf %615 : vector<16x128xf32> to vector<16x128xbf16>
    %c8_469 = arith.constant 8 : index
    %c2_470 = arith.constant 2 : index
    %c0_471 = arith.constant 0 : index
    %c0_472 = arith.constant 0 : index
    %617 = vector.load %arg2[%c8_469, %c2_470, %c0_471, %c0_472] : memref<10x3x128x128xbf16, #tpu.memory_space<vmem>>, vector<1x1x128x128xbf16>
    %618 = vector.shape_cast %617 : vector<1x1x128x128xbf16> to vector<128x128xbf16>
    %cst_473 = arith.constant dense<0.000000e+00> : vector<16x128xf32>
    %619 = tpu.matmul %616, %618, %cst_473 {dimension_numbers = #tpu.dot_dimension_numbers<[1], [0], [0], [1], [0, 0, 1, 1], [], []>} : vector<16x128xbf16>, vector<128x128xbf16>, vector<16x128xf32> -> vector<16x128xf32>
    %620 = arith.addf %614, %619 : vector<16x128xf32>
    %cst_474 = arith.constant 0.000000e+00 : f32
    %621 = vector.broadcast %cst_474 : f32 to vector<1x128xf32>
    %622 = tpu.concatenate %621, %94, %621 in 0 : vector<1x128xf32>, vector<16x128xf32>, vector<1x128xf32> -> vector<18x128xf32>
    %623 = vector.extract_strided_slice %622 {offsets = [0, 0], sizes = [16, 128], strides = [1, 1]} : vector<18x128xf32> to vector<16x128xf32>
    %624 = arith.truncf %623 : vector<16x128xf32> to vector<16x128xbf16>
    %c9 = arith.constant 9 : index
    %c0_475 = arith.constant 0 : index
    %c0_476 = arith.constant 0 : index
    %c0_477 = arith.constant 0 : index
    %625 = vector.load %arg2[%c9, %c0_475, %c0_476, %c0_477] : memref<10x3x128x128xbf16, #tpu.memory_space<vmem>>, vector<1x1x128x128xbf16>
    %626 = vector.shape_cast %625 : vector<1x1x128x128xbf16> to vector<128x128xbf16>
    %cst_478 = arith.constant dense<0.000000e+00> : vector<16x128xf32>
    %627 = tpu.matmul %624, %626, %cst_478 {dimension_numbers = #tpu.dot_dimension_numbers<[1], [0], [0], [1], [0, 0, 1, 1], [], []>} : vector<16x128xbf16>, vector<128x128xbf16>, vector<16x128xf32> -> vector<16x128xf32>
    %628 = arith.addf %620, %627 : vector<16x128xf32>
    %629 = vector.extract_strided_slice %622 {offsets = [1, 0], sizes = [16, 128], strides = [1, 1]} : vector<18x128xf32> to vector<16x128xf32>
    %630 = arith.truncf %629 : vector<16x128xf32> to vector<16x128xbf16>
    %c9_479 = arith.constant 9 : index
    %c1_480 = arith.constant 1 : index
    %c0_481 = arith.constant 0 : index
    %c0_482 = arith.constant 0 : index
    %631 = vector.load %arg2[%c9_479, %c1_480, %c0_481, %c0_482] : memref<10x3x128x128xbf16, #tpu.memory_space<vmem>>, vector<1x1x128x128xbf16>
    %632 = vector.shape_cast %631 : vector<1x1x128x128xbf16> to vector<128x128xbf16>
    %cst_483 = arith.constant dense<0.000000e+00> : vector<16x128xf32>
    %633 = tpu.matmul %630, %632, %cst_483 {dimension_numbers = #tpu.dot_dimension_numbers<[1], [0], [0], [1], [0, 0, 1, 1], [], []>} : vector<16x128xbf16>, vector<128x128xbf16>, vector<16x128xf32> -> vector<16x128xf32>
    %634 = arith.addf %628, %633 : vector<16x128xf32>
    %635 = vector.extract_strided_slice %622 {offsets = [2, 0], sizes = [16, 128], strides = [1, 1]} : vector<18x128xf32> to vector<16x128xf32>
    %636 = arith.truncf %635 : vector<16x128xf32> to vector<16x128xbf16>
    %c9_484 = arith.constant 9 : index
    %c2_485 = arith.constant 2 : index
    %c0_486 = arith.constant 0 : index
    %c0_487 = arith.constant 0 : index
    %637 = vector.load %arg2[%c9_484, %c2_485, %c0_486, %c0_487] : memref<10x3x128x128xbf16, #tpu.memory_space<vmem>>, vector<1x1x128x128xbf16>
    %638 = vector.shape_cast %637 : vector<1x1x128x128xbf16> to vector<128x128xbf16>
    %cst_488 = arith.constant dense<0.000000e+00> : vector<16x128xf32>
    %639 = tpu.matmul %636, %638, %cst_488 {dimension_numbers = #tpu.dot_dimension_numbers<[1], [0], [0], [1], [0, 0, 1, 1], [], []>} : vector<16x128xbf16>, vector<128x128xbf16>, vector<16x128xf32> -> vector<16x128xf32>
    %640 = arith.addf %634, %639 : vector<16x128xf32>
    %c6_489 = arith.constant 6 : index
    %c0_490 = arith.constant 0 : index
    %c0_491 = arith.constant 0 : index
    %641 = vector.load %arg4[%c6_489, %c0_490, %c0_491] : memref<7x1x128xf32, #tpu.memory_space<vmem>>, vector<1x1x128xf32>
    %642 = vector.shape_cast %641 : vector<1x1x128xf32> to vector<1x128xf32>
    %643 = vector.broadcast %642 : vector<1x128xf32> to vector<16x128xf32>
    %644 = arith.addf %640, %643 : vector<16x128xf32>
    %cst_492 = arith.constant 0.000000e+00 : f32
    %645 = vector.broadcast %cst_492 : f32 to vector<16x128xf32>
    %646 = arith.maximumf %644, %645 : vector<16x128xf32>
    %cst_493 = arith.constant 0.000000e+00 : f32
    %647 = vector.broadcast %cst_493 : f32 to vector<4x128xf32>
    %648 = tpu.concatenate %647, %646, %647 in 0 : vector<4x128xf32>, vector<16x128xf32>, vector<4x128xf32> -> vector<24x128xf32>
    %cst_494 = arith.constant 0.000000e+00 : f32
    %649 = vector.broadcast %cst_494 : f32 to vector<16x128xf32>
    %650 = vector.extract_strided_slice %648 {offsets = [0, 0], sizes = [16, 128], strides = [1, 1]} : vector<24x128xf32> to vector<16x128xf32>
    %651 = arith.truncf %650 : vector<16x128xf32> to vector<16x128xbf16>
    %c6_495 = arith.constant 6 : index
    %c0_496 = arith.constant 0 : index
    %c0_497 = arith.constant 0 : index
    %c0_498 = arith.constant 0 : index
    %652 = vector.load %arg3[%c6_495, %c0_496, %c0_497, %c0_498] : memref<7x9x128x128xbf16, #tpu.memory_space<vmem>>, vector<1x1x128x128xbf16>
    %653 = vector.shape_cast %652 : vector<1x1x128x128xbf16> to vector<128x128xbf16>
    %cst_499 = arith.constant dense<0.000000e+00> : vector<16x128xf32>
    %654 = tpu.matmul %651, %653, %cst_499 {dimension_numbers = #tpu.dot_dimension_numbers<[1], [0], [0], [1], [0, 0, 1, 1], [], []>} : vector<16x128xbf16>, vector<128x128xbf16>, vector<16x128xf32> -> vector<16x128xf32>
    %655 = arith.addf %649, %654 : vector<16x128xf32>
    %656 = vector.extract_strided_slice %648 {offsets = [1, 0], sizes = [16, 128], strides = [1, 1]} : vector<24x128xf32> to vector<16x128xf32>
    %657 = arith.truncf %656 : vector<16x128xf32> to vector<16x128xbf16>
    %c6_500 = arith.constant 6 : index
    %c1_501 = arith.constant 1 : index
    %c0_502 = arith.constant 0 : index
    %c0_503 = arith.constant 0 : index
    %658 = vector.load %arg3[%c6_500, %c1_501, %c0_502, %c0_503] : memref<7x9x128x128xbf16, #tpu.memory_space<vmem>>, vector<1x1x128x128xbf16>
    %659 = vector.shape_cast %658 : vector<1x1x128x128xbf16> to vector<128x128xbf16>
    %cst_504 = arith.constant dense<0.000000e+00> : vector<16x128xf32>
    %660 = tpu.matmul %657, %659, %cst_504 {dimension_numbers = #tpu.dot_dimension_numbers<[1], [0], [0], [1], [0, 0, 1, 1], [], []>} : vector<16x128xbf16>, vector<128x128xbf16>, vector<16x128xf32> -> vector<16x128xf32>
    %661 = arith.addf %655, %660 : vector<16x128xf32>
    %662 = vector.extract_strided_slice %648 {offsets = [2, 0], sizes = [16, 128], strides = [1, 1]} : vector<24x128xf32> to vector<16x128xf32>
    %663 = arith.truncf %662 : vector<16x128xf32> to vector<16x128xbf16>
    %c6_505 = arith.constant 6 : index
    %c2_506 = arith.constant 2 : index
    %c0_507 = arith.constant 0 : index
    %c0_508 = arith.constant 0 : index
    %664 = vector.load %arg3[%c6_505, %c2_506, %c0_507, %c0_508] : memref<7x9x128x128xbf16, #tpu.memory_space<vmem>>, vector<1x1x128x128xbf16>
    %665 = vector.shape_cast %664 : vector<1x1x128x128xbf16> to vector<128x128xbf16>
    %cst_509 = arith.constant dense<0.000000e+00> : vector<16x128xf32>
    %666 = tpu.matmul %663, %665, %cst_509 {dimension_numbers = #tpu.dot_dimension_numbers<[1], [0], [0], [1], [0, 0, 1, 1], [], []>} : vector<16x128xbf16>, vector<128x128xbf16>, vector<16x128xf32> -> vector<16x128xf32>
    %667 = arith.addf %661, %666 : vector<16x128xf32>
    %668 = vector.extract_strided_slice %648 {offsets = [3, 0], sizes = [16, 128], strides = [1, 1]} : vector<24x128xf32> to vector<16x128xf32>
    %669 = arith.truncf %668 : vector<16x128xf32> to vector<16x128xbf16>
    %c6_510 = arith.constant 6 : index
    %c3_511 = arith.constant 3 : index
    %c0_512 = arith.constant 0 : index
    %c0_513 = arith.constant 0 : index
    %670 = vector.load %arg3[%c6_510, %c3_511, %c0_512, %c0_513] : memref<7x9x128x128xbf16, #tpu.memory_space<vmem>>, vector<1x1x128x128xbf16>
    %671 = vector.shape_cast %670 : vector<1x1x128x128xbf16> to vector<128x128xbf16>
    %cst_514 = arith.constant dense<0.000000e+00> : vector<16x128xf32>
    %672 = tpu.matmul %669, %671, %cst_514 {dimension_numbers = #tpu.dot_dimension_numbers<[1], [0], [0], [1], [0, 0, 1, 1], [], []>} : vector<16x128xbf16>, vector<128x128xbf16>, vector<16x128xf32> -> vector<16x128xf32>
    %673 = arith.addf %667, %672 : vector<16x128xf32>
    %674 = vector.extract_strided_slice %648 {offsets = [4, 0], sizes = [16, 128], strides = [1, 1]} : vector<24x128xf32> to vector<16x128xf32>
    %675 = arith.truncf %674 : vector<16x128xf32> to vector<16x128xbf16>
    %c6_515 = arith.constant 6 : index
    %c4_516 = arith.constant 4 : index
    %c0_517 = arith.constant 0 : index
    %c0_518 = arith.constant 0 : index
    %676 = vector.load %arg3[%c6_515, %c4_516, %c0_517, %c0_518] : memref<7x9x128x128xbf16, #tpu.memory_space<vmem>>, vector<1x1x128x128xbf16>
    %677 = vector.shape_cast %676 : vector<1x1x128x128xbf16> to vector<128x128xbf16>
    %cst_519 = arith.constant dense<0.000000e+00> : vector<16x128xf32>
    %678 = tpu.matmul %675, %677, %cst_519 {dimension_numbers = #tpu.dot_dimension_numbers<[1], [0], [0], [1], [0, 0, 1, 1], [], []>} : vector<16x128xbf16>, vector<128x128xbf16>, vector<16x128xf32> -> vector<16x128xf32>
    %679 = arith.addf %673, %678 : vector<16x128xf32>
    %680 = vector.extract_strided_slice %648 {offsets = [5, 0], sizes = [16, 128], strides = [1, 1]} : vector<24x128xf32> to vector<16x128xf32>
    %681 = arith.truncf %680 : vector<16x128xf32> to vector<16x128xbf16>
    %c6_520 = arith.constant 6 : index
    %c5_521 = arith.constant 5 : index
    %c0_522 = arith.constant 0 : index
    %c0_523 = arith.constant 0 : index
    %682 = vector.load %arg3[%c6_520, %c5_521, %c0_522, %c0_523] : memref<7x9x128x128xbf16, #tpu.memory_space<vmem>>, vector<1x1x128x128xbf16>
    %683 = vector.shape_cast %682 : vector<1x1x128x128xbf16> to vector<128x128xbf16>
    %cst_524 = arith.constant dense<0.000000e+00> : vector<16x128xf32>
    %684 = tpu.matmul %681, %683, %cst_524 {dimension_numbers = #tpu.dot_dimension_numbers<[1], [0], [0], [1], [0, 0, 1, 1], [], []>} : vector<16x128xbf16>, vector<128x128xbf16>, vector<16x128xf32> -> vector<16x128xf32>
    %685 = arith.addf %679, %684 : vector<16x128xf32>
    %686 = vector.extract_strided_slice %648 {offsets = [6, 0], sizes = [16, 128], strides = [1, 1]} : vector<24x128xf32> to vector<16x128xf32>
    %687 = arith.truncf %686 : vector<16x128xf32> to vector<16x128xbf16>
    %c6_525 = arith.constant 6 : index
    %c6_526 = arith.constant 6 : index
    %c0_527 = arith.constant 0 : index
    %c0_528 = arith.constant 0 : index
    %688 = vector.load %arg3[%c6_525, %c6_526, %c0_527, %c0_528] : memref<7x9x128x128xbf16, #tpu.memory_space<vmem>>, vector<1x1x128x128xbf16>
    %689 = vector.shape_cast %688 : vector<1x1x128x128xbf16> to vector<128x128xbf16>
    %cst_529 = arith.constant dense<0.000000e+00> : vector<16x128xf32>
    %690 = tpu.matmul %687, %689, %cst_529 {dimension_numbers = #tpu.dot_dimension_numbers<[1], [0], [0], [1], [0, 0, 1, 1], [], []>} : vector<16x128xbf16>, vector<128x128xbf16>, vector<16x128xf32> -> vector<16x128xf32>
    %691 = arith.addf %685, %690 : vector<16x128xf32>
    %692 = vector.extract_strided_slice %648 {offsets = [7, 0], sizes = [16, 128], strides = [1, 1]} : vector<24x128xf32> to vector<16x128xf32>
    %693 = arith.truncf %692 : vector<16x128xf32> to vector<16x128xbf16>
    %c6_530 = arith.constant 6 : index
    %c7_531 = arith.constant 7 : index
    %c0_532 = arith.constant 0 : index
    %c0_533 = arith.constant 0 : index
    %694 = vector.load %arg3[%c6_530, %c7_531, %c0_532, %c0_533] : memref<7x9x128x128xbf16, #tpu.memory_space<vmem>>, vector<1x1x128x128xbf16>
    %695 = vector.shape_cast %694 : vector<1x1x128x128xbf16> to vector<128x128xbf16>
    %cst_534 = arith.constant dense<0.000000e+00> : vector<16x128xf32>
    %696 = tpu.matmul %693, %695, %cst_534 {dimension_numbers = #tpu.dot_dimension_numbers<[1], [0], [0], [1], [0, 0, 1, 1], [], []>} : vector<16x128xbf16>, vector<128x128xbf16>, vector<16x128xf32> -> vector<16x128xf32>
    %697 = arith.addf %691, %696 : vector<16x128xf32>
    %698 = vector.extract_strided_slice %648 {offsets = [8, 0], sizes = [16, 128], strides = [1, 1]} : vector<24x128xf32> to vector<16x128xf32>
    %699 = arith.truncf %698 : vector<16x128xf32> to vector<16x128xbf16>
    %c6_535 = arith.constant 6 : index
    %c8_536 = arith.constant 8 : index
    %c0_537 = arith.constant 0 : index
    %c0_538 = arith.constant 0 : index
    %700 = vector.load %arg3[%c6_535, %c8_536, %c0_537, %c0_538] : memref<7x9x128x128xbf16, #tpu.memory_space<vmem>>, vector<1x1x128x128xbf16>
    %701 = vector.shape_cast %700 : vector<1x1x128x128xbf16> to vector<128x128xbf16>
    %cst_539 = arith.constant dense<0.000000e+00> : vector<16x128xf32>
    %702 = tpu.matmul %699, %701, %cst_539 {dimension_numbers = #tpu.dot_dimension_numbers<[1], [0], [0], [1], [0, 0, 1, 1], [], []>} : vector<16x128xbf16>, vector<128x128xbf16>, vector<16x128xf32> -> vector<16x128xf32>
    %703 = arith.addf %697, %702 : vector<16x128xf32>
    %c6_540 = arith.constant 6 : index
    %c0_541 = arith.constant 0 : index
    %c0_542 = arith.constant 0 : index
    %704 = vector.load %arg5[%c6_540, %c0_541, %c0_542] : memref<7x1x128xf32, #tpu.memory_space<vmem>>, vector<1x1x128xf32>
    %705 = vector.shape_cast %704 : vector<1x1x128xf32> to vector<1x128xf32>
    %706 = vector.broadcast %705 : vector<1x128xf32> to vector<16x128xf32>
    %707 = arith.addf %703, %706 : vector<16x128xf32>
    %708 = arith.mulf %707, %707 : vector<16x128xf32>
    %cst_543 = arith.constant 0.000000e+00 : f32
    %709 = vector.broadcast %cst_543 : f32 to vector<16x128xf32>
    %710 = arith.subf %709, %708 : vector<16x128xf32>
    %711 = math.exp %710 : vector<16x128xf32>
    %712 = arith.mulf %711, %644 : vector<16x128xf32>
    %c0_544 = arith.constant 0 : index
    %c0_545 = arith.constant 0 : index
    %c0_546 = arith.constant 0 : index
    %713 = vector.load %arg6[%c0_544, %c0_545, %c0_546] : memref<1x16x128xf32, #tpu.memory_space<vmem>>, vector<1x16x128xf32>
    %714 = vector.shape_cast %713 : vector<1x16x128xf32> to vector<16x128xf32>
    %715 = vector.shape_cast %712 : vector<16x128xf32> to vector<1x16x128xf32>
    tpu.vector_store %arg6[%c0_544, %c0_545, %c0_546], %715 {strides = array<i32>} : memref<1x16x128xf32, #tpu.memory_space<vmem>>, vector<1x16x128xf32>,
    return
  }
  func.func @transform_0(%arg0: i32) -> (i32, i32, i32) {
    %c0_i32 = arith.constant 0 : i32
    %c0_i32_0 = arith.constant 0 : i32
    %c0_i32_1 = arith.constant 0 : i32
    return %arg0, %c0_i32, %c0_i32_0 : i32, i32, i32
  }
  func.func @transform_1(%arg0: i32) -> (i32, i32, i32, i32) {
    %c0_i32 = arith.constant 0 : i32
    %c0_i32_0 = arith.constant 0 : i32
    %c0_i32_1 = arith.constant 0 : i32
    %c0_i32_2 = arith.constant 0 : i32
    %c0_i32_3 = arith.constant 0 : i32
    return %c0_i32, %c0_i32_0, %c0_i32_1, %c0_i32_2 : i32, i32, i32, i32
  }
  func.func @transform_2(%arg0: i32) -> (i32, i32, i32, i32) {
    %c0_i32 = arith.constant 0 : i32
    %c0_i32_0 = arith.constant 0 : i32
    %c0_i32_1 = arith.constant 0 : i32
    %c0_i32_2 = arith.constant 0 : i32
    %c0_i32_3 = arith.constant 0 : i32
    return %c0_i32, %c0_i32_0, %c0_i32_1, %c0_i32_2 : i32, i32, i32, i32
  }
  func.func @transform_3(%arg0: i32) -> (i32, i32, i32) {
    %c0_i32 = arith.constant 0 : i32
    %c0_i32_0 = arith.constant 0 : i32
    %c0_i32_1 = arith.constant 0 : i32
    %c0_i32_2 = arith.constant 0 : i32
    return %c0_i32, %c0_i32_0, %c0_i32_1 : i32, i32, i32
  }
  func.func @transform_4(%arg0: i32) -> (i32, i32, i32) {
    %c0_i32 = arith.constant 0 : i32
    %c0_i32_0 = arith.constant 0 : i32
    %c0_i32_1 = arith.constant 0 : i32
    %c0_i32_2 = arith.constant 0 : i32
    return %c0_i32, %c0_i32_0, %c0_i32_1 : i32, i32, i32
  }
  func.func @transform_5(%arg0: i32) -> (i32, i32, i32) {
    %c0_i32 = arith.constant 0 : i32
    %c0_i32_0 = arith.constant 0 : i32
    %c0_i32_1 = arith.constant 0 : i32
    return %arg0, %c0_i32, %c0_i32_0 : i32, i32, i32
  }
}

</mosaic_0001>

<llo_original>
// kernel: tile.81
$region0: #{tile.81}
  #allocation0 [shape = 's32[1]{0}', space=sflag, size = 0x4, scoped, tag = 'scoped memory for tile.81']
  %s0 = inlined_call_operand.vmem [shape: f32[8], index: 0, kind: input, shape index: {}]
  %s1 = inlined_call_operand.vmem [shape: f32[16,8], index: 1, kind: output, shape index: {}]
  // Predicated region
  $region2: #{tile.81} parent=0 // pred_check
    _
  $region3: #{tile.81} parent=0 // pred_check_branch
    %3 = sbr.rel (0) target = $region5
  $region4: #{tile.81} parent=0 // pred_region
    _
  $region5: #{tile.81} parent=0 // pred_fallthru
    _
  %v4 = vld [vmem:[%s0] ss:$0 sm:$0xff]
  %5 = vst [vmem:[%s1] sm:$0xff] %v4
  %s6 = scalar_lea.vmem %s1, 8
  %7 = vst [vmem:[%s6] sm:$0xff] %v4

// kernel: tile.100
$region0: #{tile.100}
  %s0 = inlined_call_operand.vmem [shape: f32[16,8], index: 0, kind: input, shape index: {}]
  %s1 = inlined_call_operand.vmem [shape: f32[1,128], index: 1, kind: output, shape index: {}]
  $region1: #{tile.100} parent=0
    #allocation0 [shape = 'u8[4096]{0}', space=vmem, size = 0x1000, scoped, tag = 'scoped mem for output reshape']
    %v2 = vld [vmem:[%s0] sm:$0x1]
    %vm3 = vcmask 64512
    %4 = vst.msk [vmem:[#allocation0] sm:$0x1] %vm3, %v2
    %s5 = scalar_lea.vmem %s0, 15
    %v6 = vld [vmem:[%s5] sm:$0x1]
    %7 = vrot.lane.b32.xlu0 %v6, 120
    %v8 = vpop.permute.xlu0 %7
    %vm9 = vcmask 1048512
    %10 = vst.msk [vmem:[#allocation0] sm:$0x1] %vm9, %v8
    %s11 = scalar_lea.vmem %s0, 14
    %v12 = vld [vmem:[%s11] sm:$0x1]
    %13 = vrot.lane.b32.xlu0 %v12, 112
    %v14 = vpop.permute.xlu0 %13
    %vm15 = vcmask 982912
    %16 = vst.msk [vmem:[#allocation0] sm:$0x1] %vm15, %v14
    %s17 = scalar_lea.vmem %s0, 13
    %v18 = vld [vmem:[%s17] sm:$0x1]
    %19 = vrot.lane.b32.xlu0 %v18, 104
    %v20 = vpop.permute.xlu0 %19
    %vm21 = vcmask 917312
    %22 = vst.msk [vmem:[#allocation0] sm:$0x1] %vm21, %v20
    %s23 = scalar_lea.vmem %s0, 12
    %v24 = vld [vmem:[%s23] sm:$0x1]
    %25 = vrot.lane.b32.xlu0 %v24, 96
    %v26 = vpop.permute.xlu0 %25
    %vm27 = vcmask 851712
    %28 = vst.msk [vmem:[#allocation0] sm:$0x1] %vm27, %v26
    %s29 = scalar_lea.vmem %s0, 11
    %v30 = vld [vmem:[%s29] sm:$0x1]
    %31 = vrot.lane.b32.xlu0 %v30, 88
    %v32 = vpop.permute.xlu0 %31
    %vm33 = vcmask 786112
    %34 = vst.msk [vmem:[#allocation0] sm:$0x1] %vm33, %v32
    %s35 = scalar_lea.vmem %s0, 10
    %v36 = vld [vmem:[%s35] sm:$0x1]
    %37 = vrot.lane.b32.xlu0 %v36, 80
    %v38 = vpop.permute.xlu0 %37
    %vm39 = vcmask 720512
    %40 = vst.msk [vmem:[#allocation0] sm:$0x1] %vm39, %v38
    %s41 = scalar_lea.vmem %s0, 9
    %v42 = vld [vmem:[%s41] sm:$0x1]
    %43 = vrot.lane.b32.xlu0 %v42, 72
    %v44 = vpop.permute.xlu0 %43
    %vm45 = vcmask 654912
    %46 = vst.msk [vmem:[#allocation0] sm:$0x1] %vm45, %v44
    %s47 = scalar_lea.vmem %s0, 8
    %v48 = vld [vmem:[%s47] sm:$0x1]
    %49 = vrot.lane.b32.xlu0 %v48, 64
    %v50 = vpop.permute.xlu0 %49
    %vm51 = vcmask 589312
    %52 = vst.msk [vmem:[#allocation0] sm:$0x1] %vm51, %v50
    %s53 = scalar_lea.vmem %s0, 7
    %v54 = vld [vmem:[%s53] sm:$0x1]
    %55 = vrot.lane.b32.xlu0 %v54, 56
    %v56 = vpop.permute.xlu0 %55
    %vm57 = vcmask 523712
    %58 = vst.msk [vmem:[#allocation0] sm:$0x1] %vm57, %v56
    %s59 = scalar_lea.vmem %s0, 6
    %v60 = vld [vmem:[%s59] sm:$0x1]
    %61 = vrot.lane.b32.xlu0 %v60, 48
    %v62 = vpop.permute.xlu0 %61
    %vm63 = vcmask 458112
    %64 = vst.msk [vmem:[#allocation0] sm:$0x1] %vm63, %v62
    %s65 = scalar_lea.vmem %s0, 5
    %v66 = vld [vmem:[%s65] sm:$0x1]
    %67 = vrot.lane.b32.xlu0 %v66, 40
    %v68 = vpop.permute.xlu0 %67
    %vm69 = vcmask 392512
    %70 = vst.msk [vmem:[#allocation0] sm:$0x1] %vm69, %v68
    %s71 = scalar_lea.vmem %s0, 4
    %v72 = vld [vmem:[%s71] sm:$0x1]
    %73 = vrot.lane.b32.xlu0 %v72, 32
    %v74 = vpop.permute.xlu0 %73
    %vm75 = vcmask 326912
    %76 = vst.msk [vmem:[#allocation0] sm:$0x1] %vm75, %v74
    %s77 = scalar_lea.vmem %s0, 3
    %v78 = vld [vmem:[%s77] sm:$0x1]
    %79 = vrot.lane.b32.xlu0 %v78, 24
    %v80 = vpop.permute.xlu0 %79
    %vm81 = vcmask 261312
    %82 = vst.msk [vmem:[#allocation0] sm:$0x1] %vm81, %v80
    %s83 = scalar_lea.vmem %s0, 2
    %v84 = vld [vmem:[%s83] sm:$0x1]
    %85 = vrot.lane.b32.xlu0 %v84, 16
    %v86 = vpop.permute.xlu0 %85
    %vm87 = vcmask 195712
    %88 = vst.msk [vmem:[#allocation0] sm:$0x1] %vm87, %v86
    %s89 = scalar_lea.vmem %s0, 1
    %v90 = vld [vmem:[%s89] sm:$0x1]
    %91 = vrot.lane.b32.xlu0 %v90, 8
    %v92 = vpop.permute.xlu0 %91
    %vm93 = vcmask 130112
    %94 = vst.msk [vmem:[#allocation0] sm:$0x1] %vm93, %v92
    %s96 = sshllo.u32 0, 1
    %v98 = vld [vmem:[#allocation0] sm:%s96]
    %s99 = sshllo.u32 0, 1
    %100 = vst [vmem:[%s1] sm:%s99] %v98

// kernel: encoder_block_apply.1
$region0: #{encoder_block_apply.1}
  #allocation0 [shape = 'u32[]', space=smem, size = 0x4, offset = 0x4, fixed_abs, tag = 'smem constant byte address 0x4 - core index']
  #allocation1 [shape = 'u32[144,128]{1,0:T(1,128)}', space=vmem, size = 0x12000, scoped, tag = 'internal scratch']
  %s0 = inlined_call_operand.vmem [shape: f32[2,16,128], index: 0, kind: input, shape index: {}]
  %s1 = inlined_call_operand.vmem [shape: bf16[10,3,128,128], index: 1, kind: input, shape index: {}]
  %s2 = inlined_call_operand.vmem [shape: bf16[7,9,128,128], index: 2, kind: input, shape index: {}]
  %s3 = inlined_call_operand.vmem [shape: f32[7,1,128], index: 3, kind: input, shape index: {}]
  %s4 = inlined_call_operand.vmem [shape: f32[7,1,128], index: 4, kind: input, shape index: {}]
  %s5 = inlined_call_operand.vmem [shape: f32[2,16,128], index: 5, kind: output, shape index: {}]
  %s6 = sld [smem:[#allocation0]]
  $region53: #{encoder_block_apply.1} parent=0
    _
  %s8 = ssub.s32 1, %s6
  %s9 = scalar_select 0, %s8, %s6
  loop: start=0, step=1, limit=4
  $region2: #{encoder_block_apply.1} parent=0 // loop_pre_header
    _
  $region3: #{encoder_block_apply.1} parent=0 // loop_header
    %s11 = sphi 0, %s15
    %p12 = scmp.ge.s32.totalorder %s11, 4
    %s21 = sphi 0, %s23
    %s24 = sphi 0, %s21
    %s25 = sphi 0, %s24
    %s41 = sphi 0, %s25
    %s45 = sphi 0, %s45
    %s47 = sphi 0, %s45
    %s48 = sphi 0, %s47
    %s62 = sphi 0, %s48
    %s66 = sphi 0, %s66
    %s68 = sphi 0, %s66
    %s69 = sphi 0, %s68
    %s83 = sphi 0, %s69
    %s87 = sphi 0, %s87
    %s89 = sphi 0, %s87
    %s90 = sphi 0, %s89
    %s104 = sphi 0, %s90
    %s108 = sphi 0, %s108
    %s110 = sphi 0, %s108
    %s111 = sphi 0, %s110
    %s125 = sphi 0, %s111
    %s131 = sphi 0, %s133
    %s134 = sphi 0, %s131
    %s135 = sphi 0, %s134
    %s151 = sphi 0, %s135
  $region4: #{encoder_block_apply.1} parent=0 // loop_header_branch
    %14 = sbr.rel (%p12) target = $region8
  $region5: #{encoder_block_apply.1} parent=0 // loop_body
    %s16 = ssub.s32 %s11, 1
    %s17 = ssub.s32 %s11, 2
    %s18 = sadd.s32 %s11, 1
    %s19 = ssub.s32 %s11, %s18
    %p20 = scmp.eq.s32.totalorder %s19, 0
    %s22 = sadd.s32 %s21, 1
    %s23 = scalar_select %p20, %s21, %s22
    %p26 = pneg %p20
    %p27 = scmp.eq.s32.totalorder %s11, 1
    %p28 = por %p26, %p27
    %p29 = scmp.ne.s32.totalorder %s21, %s24
    %p30 = scmp.eq.s32.totalorder %s11, 0
    %p31 = por %p29, %p30
    %p32 = scmp.ne.s32.totalorder %s21, %s24
    %p33 = scmp.eq.s32.totalorder %s16, 1
    %p34 = por %p32, %p33
    %p35 = scmp.ne.s32.totalorder %s24, %s25
    %p36 = scmp.eq.s32.totalorder %s16, 0
    %p37 = por %p35, %p36
    %p38 = scmp.ne.s32.totalorder %s24, %s25
    %p39 = scmp.eq.s32.totalorder %s17, 1
    %p40 = por %p38, %p39
    %p42 = scmp.ne.s32.totalorder %s25, %s41
    %p43 = scmp.eq.s32.totalorder %s17, 0
    %p44 = por %p42, %p43
    %s46 = sadd.s32 %s45, 1
    %p49 = scmp.eq.s32.totalorder %s11, 1
    %p50 = scmp.ne.s32.totalorder %s45, %s47
    %p51 = scmp.eq.s32.totalorder %s11, 0
    %p52 = por %p50, %p51
    %p53 = scmp.ne.s32.totalorder %s45, %s47
    %p54 = scmp.eq.s32.totalorder %s16, 1
    %p55 = por %p53, %p54
    %p56 = scmp.ne.s32.totalorder %s47, %s48
    %p57 = scmp.eq.s32.totalorder %s16, 0
    %p58 = por %p56, %p57
    %p59 = scmp.ne.s32.totalorder %s47, %s48
    %p60 = scmp.eq.s32.totalorder %s17, 1
    %p61 = por %p59, %p60
    %p63 = scmp.ne.s32.totalorder %s48, %s62
    %p64 = scmp.eq.s32.totalorder %s17, 0
    %p65 = por %p63, %p64
    %s67 = sadd.s32 %s66, 1
    %p70 = scmp.eq.s32.totalorder %s11, 1
    %p71 = scmp.ne.s32.totalorder %s66, %s68
    %p72 = scmp.eq.s32.totalorder %s11, 0
    %p73 = por %p71, %p72
    %p74 = scmp.ne.s32.totalorder %s66, %s68
    %p75 = scmp.eq.s32.totalorder %s16, 1
    %p76 = por %p74, %p75
    %p77 = scmp.ne.s32.totalorder %s68, %s69
    %p78 = scmp.eq.s32.totalorder %s16, 0
    %p79 = por %p77, %p78
    %p80 = scmp.ne.s32.totalorder %s68, %s69
    %p81 = scmp.eq.s32.totalorder %s17, 1
    %p82 = por %p80, %p81
    %p84 = scmp.ne.s32.totalorder %s69, %s83
    %p85 = scmp.eq.s32.totalorder %s17, 0
    %p86 = por %p84, %p85
    %s88 = sadd.s32 %s87, 1
    %p91 = scmp.eq.s32.totalorder %s11, 1
    %p92 = scmp.ne.s32.totalorder %s87, %s89
    %p93 = scmp.eq.s32.totalorder %s11, 0
    %p94 = por %p92, %p93
    %p95 = scmp.ne.s32.totalorder %s87, %s89
    %p96 = scmp.eq.s32.totalorder %s16, 1
    %p97 = por %p95, %p96
    %p98 = scmp.ne.s32.totalorder %s89, %s90
    %p99 = scmp.eq.s32.totalorder %s16, 0
    %p100 = por %p98, %p99
    %p101 = scmp.ne.s32.totalorder %s89, %s90
    %p102 = scmp.eq.s32.totalorder %s17, 1
    %p103 = por %p101, %p102
    %p105 = scmp.ne.s32.totalorder %s90, %s104
    %p106 = scmp.eq.s32.totalorder %s17, 0
    %p107 = por %p105, %p106
    %s109 = sadd.s32 %s108, 1
    %p112 = scmp.eq.s32.totalorder %s11, 1
    %p113 = scmp.ne.s32.totalorder %s108, %s110
    %p114 = scmp.eq.s32.totalorder %s11, 0
    %p115 = por %p113, %p114
    %p116 = scmp.ne.s32.totalorder %s108, %s110
    %p117 = scmp.eq.s32.totalorder %s16, 1
    %p118 = por %p116, %p117
    %p119 = scmp.ne.s32.totalorder %s110, %s111
    %p120 = scmp.eq.s32.totalorder %s16, 0
    %p121 = por %p119, %p120
    %p122 = scmp.ne.s32.totalorder %s110, %s111
    %p123 = scmp.eq.s32.totalorder %s17, 1
    %p124 = por %p122, %p123
    %p126 = scmp.ne.s32.totalorder %s111, %s125
    %p127 = scmp.eq.s32.totalorder %s17, 0
    %p128 = por %p126, %p127
    %s129 = ssub.s32 %s11, %s18
    %p130 = scmp.eq.s32.totalorder %s129, 0
    %s132 = sadd.s32 %s131, 1
    %s133 = scalar_select %p130, %s131, %s132
    %p136 = pneg %p130
    %p137 = scmp.eq.s32.totalorder %s11, 1
    %p138 = por %p136, %p137
    %p139 = scmp.ne.s32.totalorder %s131, %s134
    %p140 = scmp.eq.s32.totalorder %s11, 0
    %p141 = por %p139, %p140
    %p142 = scmp.ne.s32.totalorder %s131, %s134
    %p143 = scmp.eq.s32.totalorder %s16, 1
    %p144 = por %p142, %p143
    %p145 = scmp.ne.s32.totalorder %s134, %s135
    %p146 = scmp.eq.s32.totalorder %s16, 0
    %p147 = por %p145, %p146
    %p148 = scmp.ne.s32.totalorder %s134, %s135
    %p149 = scmp.eq.s32.totalorder %s17, 1
    %p150 = por %p148, %p149
    %p152 = scmp.ne.s32.totalorder %s135, %s151
    %p153 = scmp.eq.s32.totalorder %s17, 0
    %p154 = por %p152, %p153
    %p155 = scmp.le.s32.totalorder 1, %s11
    %p156 = scmp.lt.s32.totalorder %s11, 3
    %p157 = pnand %p155, %p156
    %p158 = pneg %p157
    // Predicated region
    $region9: #{encoder_block_apply.1} parent=5 // pred_check
      _
    $region10: #{encoder_block_apply.1} parent=5 // pred_check_branch
      %160 = sbr.rel (%p157) target = $region12
    $region11: #{encoder_block_apply.1} parent=5 // pred_region
      %s161 = ssub.s32 %s11, 1
      // Predicated region
      $region13: #{encoder_block_apply.1} parent=11 // pred_check
        %p162 = pneg %p58
      $region14: #{encoder_block_apply.1} parent=11 // pred_check_branch
        %164 = sbr.rel (%p162) target = $region16
      $region15: #{encoder_block_apply.1} parent=11 // pred_region
        _
      $region16: #{encoder_block_apply.1} parent=11 // pred_fallthru
        _
      // Predicated region
      $region17: #{encoder_block_apply.1} parent=11 // pred_check
        %p165 = pneg %p79
      $region18: #{encoder_block_apply.1} parent=11 // pred_check_branch
        %167 = sbr.rel (%p165) target = $region20
      $region19: #{encoder_block_apply.1} parent=11 // pred_region
        _
      $region20: #{encoder_block_apply.1} parent=11 // pred_fallthru
        _
      // Predicated region
      $region21: #{encoder_block_apply.1} parent=11 // pred_check
        %p168 = pneg %p100
      $region22: #{encoder_block_apply.1} parent=11 // pred_check_branch
        %170 = sbr.rel (%p168) target = $region24
      $region23: #{encoder_block_apply.1} parent=11 // pred_region
        _
      $region24: #{encoder_block_apply.1} parent=11 // pred_fallthru
        _
      // Predicated region
      $region25: #{encoder_block_apply.1} parent=11 // pred_check
        %p171 = pneg %p121
      $region26: #{encoder_block_apply.1} parent=11 // pred_check_branch
        %173 = sbr.rel (%p171) target = $region28
      $region27: #{encoder_block_apply.1} parent=11 // pred_region
        _
      $region28: #{encoder_block_apply.1} parent=11 // pred_fallthru
        _
    $region12: #{encoder_block_apply.1} parent=5 // pred_fallthru
      _
    %p174 = scmp.lt.s32.totalorder %s11, 2
    // Predicated region
    $region29: #{encoder_block_apply.1} parent=5 // pred_check
      %p175 = pneg %p174
    $region30: #{encoder_block_apply.1} parent=5 // pred_check_branch
      %177 = sbr.rel (%p175) target = $region32
    $region31: #{encoder_block_apply.1} parent=5 // pred_region
      // Predicated region
      $region33: #{encoder_block_apply.1} parent=31 // pred_check
        %p178 = pneg %p31
      $region34: #{encoder_block_apply.1} parent=31 // pred_check_branch
        %180 = sbr.rel (%p178) target = $region36
      $region35: #{encoder_block_apply.1} parent=31 // pred_region
        %p181 = scmp.lt.s32.totalorder %s11, 1
        %s182 = scalar_select %p181, %s11, 1
        %s183 = smul.addr %s182, 2
        %s184 = smul.addr %s183, 8
        %s185 = scalar_lea.vmem %s0, %s184
      $region36: #{encoder_block_apply.1} parent=31 // pred_fallthru
        _
    $region32: #{encoder_block_apply.1} parent=5 // pred_fallthru
      _
    %p186 = scmp.le.s32.totalorder 1, %s11
    %p187 = scmp.lt.s32.totalorder %s11, 3
    %p188 = pnand %p186, %p187
    %p189 = pneg %p188
    // Predicated region
    $region37: #{encoder_block_apply.1} parent=5 // pred_check
      _
    $region38: #{encoder_block_apply.1} parent=5 // pred_check_branch
      %191 = sbr.rel (%p188) target = $region40
    $region39: #{encoder_block_apply.1} parent=5 // pred_region
      %s192 = ssub.s32 %s11, 1
      %p193 = scmp.lt.s32.totalorder %s16, 1
      %s194 = scalar_select %p193, %s16, 1
      %s195 = smul.addr %s194, 2
      %s196 = smul.addr %s195, 8
      %s197 = scalar_lea.vmem %s0, %s196
      %p198 = pneg %p37
      %p199 = pneg %p34
      %p200 = pneg %p58
      %p201 = pneg %p55
      %p202 = pneg %p79
      %p203 = pneg %p76
      %p204 = pneg %p100
      %p205 = pneg %p97
      %p206 = pneg %p121
      %p207 = pneg %p118
      %p208 = pneg %p147
      %p209 = pneg %p144
      %p210 = scmp.lt.s32.totalorder %s16, 1
      %s211 = scalar_select %p210, %s16, 1
      %s212 = smul.addr %s211, 2
      %s213 = smul.addr %s212, 8
      %s214 = scalar_lea.vmem %s5, %s213
      %p215 = scmp.lt.s32.totalorder %s16, 1
      %s216 = scalar_select %p215, %s16, 1
      %s217 = smul.addr %s216, 2
      %s218 = smul.addr %s217, 8
      %s219 = scalar_lea.vmem %s0, %s218
      %p220 = scmp.lt.s32.totalorder %s16, 1
      %s221 = scalar_select %p220, %s16, 1
      %s222 = smul.addr %s221, 2
      %s223 = smul.addr %s222, 8
      %s224 = scalar_lea.vmem %s5, %s223
      %v226 = vld [vmem:[%s219] sm:$0xff]
      %v227 = vld [vmem:[%s219 + $0x8] sm:$0xff]
      %vm230 = vcmask 1040384
      %v231 = vrot.slane %v226, 7
      %v232 = vrot.slane %v227, 7
      %v233 = vsel %vm230, %v231, %v232
      %v237 = vsel %vm230, 0.0, %v231
      %v238 = vsel %vm230, %v232, 0.0
      %v239 = vpack.c.bf16 %v233, %v237
      %v240 = vld [vmem:[%s1] sm:$0xf]
      %v241 = vld [vmem:[%s1 + $0x4] sm:$0xf]
      %v242 = vld [vmem:[%s1 + $0x8] sm:$0xf]
      %v243 = vld [vmem:[%s1 + $0xc] sm:$0xf]
      %v244 = vld [vmem:[%s1 + $0x10] sm:$0xf]
      %v245 = vld [vmem:[%s1 + $0x14] sm:$0xf]
      %v246 = vld [vmem:[%s1 + $0x18] sm:$0xf]
      %v247 = vld [vmem:[%s1 + $0x1c] sm:$0xf]
      %v248 = vld [vmem:[%s1 + $0x20] sm:$0xf]
      %v249 = vld [vmem:[%s1 + $0x24] sm:$0xf]
      %v250 = vld [vmem:[%s1 + $0x28] sm:$0xf]
      %v251 = vld [vmem:[%s1 + $0x2c] sm:$0xf]
      %v252 = vld [vmem:[%s1 + $0x30] sm:$0xf]
      %v253 = vld [vmem:[%s1 + $0x34] sm:$0xf]
      %v254 = vld [vmem:[%s1 + $0x38] sm:$0xf]
      %v255 = vld [vmem:[%s1 + $0x3c] sm:$0xf]
      %v256 = vpack.c.bf16 %v238, %v238
      %s257 = scalar_lea.vmem %s1, 64
      %v258 = vld [vmem:[%s257] sm:$0xf]
      %v259 = vld [vmem:[%s257 + $0x4] sm:$0xf]
      %v260 = vld [vmem:[%s257 + $0x8] sm:$0xf]
      %v261 = vld [vmem:[%s257 + $0xc] sm:$0xf]
      %v262 = vld [vmem:[%s257 + $0x10] sm:$0xf]
      %v263 = vld [vmem:[%s257 + $0x14] sm:$0xf]
      %v264 = vld [vmem:[%s257 + $0x18] sm:$0xf]
      %v265 = vld [vmem:[%s257 + $0x1c] sm:$0xf]
      %v266 = vld [vmem:[%s257 + $0x20] sm:$0xf]
      %v267 = vld [vmem:[%s257 + $0x24] sm:$0xf]
      %v268 = vld [vmem:[%s257 + $0x28] sm:$0xf]
      %v269 = vld [vmem:[%s257 + $0x2c] sm:$0xf]
      %v270 = vld [vmem:[%s257 + $0x30] sm:$0xf]
      %v271 = vld [vmem:[%s257 + $0x34] sm:$0xf]
      %v272 = vld [vmem:[%s257 + $0x38] sm:$0xf]
      %v273 = vld [vmem:[%s257 + $0x3c] sm:$0xf]
      %vm274 = vsmask.f32 7424
      %v276 = vshrl.u32 %v239, 16
      %v278 = vshll.u32 %v239, 16
      %v280 = vrot.slane %v278, 1
      %v281 = vor.u32 %v276, %v280
      %v283 = vshll.u32 %v256, 16
      %v285 = vrot.slane %v283, 1
      %v286 = vsel %vm274, %v281, %v285
      %v304 = vunpack.c.l.b16 %v258
      %v305 = vunpack.c.l.b16 %v259
      %v306 = vunpack.c.l.b16 %v260
      %v307 = vunpack.c.l.b16 %v261
      %v308 = vunpack.c.l.b16 %v262
      %v309 = vunpack.c.l.b16 %v263
      %v310 = vunpack.c.l.b16 %v264
      %v311 = vunpack.c.l.b16 %v265
      %v312 = vunpack.c.l.b16 %v266
      %v313 = vunpack.c.l.b16 %v267
      %v314 = vunpack.c.l.b16 %v268
      %v315 = vunpack.c.l.b16 %v269
      %v316 = vunpack.c.l.b16 %v270
      %v317 = vunpack.c.l.b16 %v271
      %v318 = vunpack.c.l.b16 %v272
      %v319 = vunpack.c.l.b16 %v273
      %v320 = vpack.c.b16 %v305, %v304
      %v321 = vpack.c.b16 %v307, %v306
      %v322 = vpack.c.b16 %v309, %v308
      %v323 = vpack.c.b16 %v311, %v310
      %v324 = vpack.c.b16 %v313, %v312
      %v325 = vpack.c.b16 %v315, %v314
      %v326 = vpack.c.b16 %v317, %v316
      %v327 = vpack.c.b16 %v319, %v318
      %336 = vmatprep.subr.bf16.mxu0 0
      %337 = vmatpush1.bf16.msra.mxu0 %v320
      %338 = vmatprep.subr.bf16.mxu0 0
      %339 = vmatpush1.bf16.msra.mxu0 %v321
      %340 = vmatprep.subr.bf16.mxu0 0
      %341 = vmatpush1.bf16.msra.mxu0 %v322
      %342 = vmatprep.subr.bf16.mxu0 0
      %343 = vmatpush1.bf16.msra.mxu0 %v323
      %344 = vmatprep.subr.bf16.mxu0 0
      %345 = vmatpush1.bf16.msra.mxu0 %v324
      %346 = vmatprep.subr.bf16.mxu0 0
      %347 = vmatpush1.bf16.msra.mxu0 %v325
      %348 = vmatprep.subr.bf16.mxu0 0
      %349 = vmatpush1.bf16.msra.mxu0 %v326
      %350 = vmatprep.subr.bf16.mxu0 0
      %351 = vmatpush1.bf16.msra.mxu0 %v327
      %352 = vmatprep.subr.bf16.mxu0 0
      %353 = vmatpush1.bf16.msra.mxu0 0
      %354 = vmatprep.subr.bf16.mxu0 0
      %355 = vmatpush1.bf16.msra.mxu0 0
      %356 = vmatprep.subr.bf16.mxu0 0
      %357 = vmatpush1.bf16.msra.mxu0 0
      %358 = vmatprep.subr.bf16.mxu0 0
      %359 = vmatpush1.bf16.msra.mxu0 0
      %360 = vmatprep.subr.bf16.mxu0 0
      %361 = vmatpush1.bf16.msra.mxu0 0
      %362 = vmatprep.subr.bf16.mxu0 0
      %363 = vmatpush1.bf16.msra.mxu0 0
      %364 = vmatprep.subr.bf16.mxu0 0
      %365 = vmatpush1.bf16.msra.mxu0 0
      %366 = vmatprep.subr.bf16.mxu0 0
      %367 = vmatpush1.bf16.msra.mxu0 0
      %368 = vmatprep.mubr.bf16.mxu0 0
      %369 = vmatmul.mubr.bf16.gmra.mrb[0].mxu0 %v286
      %v370 = vpop.f32.mrb[0].mxu0
      %v371 = vadd.f32 0.0, %v370
      %v372 = vpop.f32.mrb[0].mxu0
      %v373 = vpop.f32.mrb[0].mxu0
      %v374 = vadd.f32 0.0, %v373
      %v375 = vpop.f32.mrb[0].mxu0
      %376 = vdwg.mxu0
      %v393 = vunpack.c.l.b16 %v240
      %v394 = vunpack.c.l.b16 %v241
      %v395 = vunpack.c.l.b16 %v242
      %v396 = vunpack.c.l.b16 %v243
      %v397 = vunpack.c.l.b16 %v244
      %v398 = vunpack.c.l.b16 %v245
      %v399 = vunpack.c.l.b16 %v246
      %v400 = vunpack.c.l.b16 %v247
      %v401 = vunpack.c.l.b16 %v248
      %v402 = vunpack.c.l.b16 %v249
      %v403 = vunpack.c.l.b16 %v250
      %v404 = vunpack.c.l.b16 %v251
      %v405 = vunpack.c.l.b16 %v252
      %v406 = vunpack.c.l.b16 %v253
      %v407 = vunpack.c.l.b16 %v254
      %v408 = vunpack.c.l.b16 %v255
      %v409 = vpack.c.b16 %v394, %v393
      %v410 = vpack.c.b16 %v396, %v395
      %v411 = vpack.c.b16 %v398, %v397
      %v412 = vpack.c.b16 %v400, %v399
      %v413 = vpack.c.b16 %v402, %v401
      %v414 = vpack.c.b16 %v404, %v403
      %v415 = vpack.c.b16 %v406, %v405
      %v416 = vpack.c.b16 %v408, %v407
      %425 = vmatprep.subr.bf16.mxu0 0
      %426 = vmatpush1.bf16.msra.mxu0 %v409
      %427 = vmatprep.subr.bf16.mxu0 0
      %428 = vmatpush1.bf16.msra.mxu0 %v410
      %429 = vmatprep.subr.bf16.mxu0 0
      %430 = vmatpush1.bf16.msra.mxu0 %v411
      %431 = vmatprep.subr.bf16.mxu0 0
      %432 = vmatpush1.bf16.msra.mxu0 %v412
      %433 = vmatprep.subr.bf16.mxu0 0
      %434 = vmatpush1.bf16.msra.mxu0 %v413
      %435 = vmatprep.subr.bf16.mxu0 0
      %436 = vmatpush1.bf16.msra.mxu0 %v414
      %437 = vmatprep.subr.bf16.mxu0 0
      %438 = vmatpush1.bf16.msra.mxu0 %v415
      %439 = vmatprep.subr.bf16.mxu0 0
      %440 = vmatpush1.bf16.msra.mxu0 %v416
      %441 = vmatprep.subr.bf16.mxu0 0
      %442 = vmatpush1.bf16.msra.mxu0 0
      %443 = vmatprep.subr.bf16.mxu0 0
      %444 = vmatpush1.bf16.msra.mxu0 0
      %445 = vmatprep.subr.bf16.mxu0 0
      %446 = vmatpush1.bf16.msra.mxu0 0
      %447 = vmatprep.subr.bf16.mxu0 0
      %448 = vmatpush1.bf16.msra.mxu0 0
      %449 = vmatprep.subr.bf16.mxu0 0
      %450 = vmatpush1.bf16.msra.mxu0 0
      %451 = vmatprep.subr.bf16.mxu0 0
      %452 = vmatpush1.bf16.msra.mxu0 0
      %453 = vmatprep.subr.bf16.mxu0 0
      %454 = vmatpush1.bf16.msra.mxu0 0
      %455 = vmatprep.subr.bf16.mxu0 0
      %456 = vmatpush1.bf16.msra.mxu0 0
      %457 = vmatprep.mubr.bf16.mxu0 0
      %458 = vmatmul.mubr.bf16.gmra.mrb[0].mxu0 %v239
      %v459 = vpop.f32.mrb[0].mxu0
      %v460 = vadd.f32 %v371, %v459
      %v461 = vpop.f32.mrb[0].mxu0
      %v462 = vpop.f32.mrb[0].mxu0
      %v463 = vadd.f32 %v374, %v462
      %v464 = vpop.f32.mrb[0].mxu0
      %465 = vdwg.mxu0
      %s466 = scalar_lea.vmem %s1, 128
      %v467 = vld [vmem:[%s466] sm:$0xf]
      %v468 = vld [vmem:[%s466 + $0x4] sm:$0xf]
      %v469 = vld [vmem:[%s466 + $0x8] sm:$0xf]
      %v470 = vld [vmem:[%s466 + $0xc] sm:$0xf]
      %v471 = vld [vmem:[%s466 + $0x10] sm:$0xf]
      %v472 = vld [vmem:[%s466 + $0x14] sm:$0xf]
      %v473 = vld [vmem:[%s466 + $0x18] sm:$0xf]
      %v474 = vld [vmem:[%s466 + $0x1c] sm:$0xf]
      %v475 = vld [vmem:[%s466 + $0x20] sm:$0xf]
      %v476 = vld [vmem:[%s466 + $0x24] sm:$0xf]
      %v477 = vld [vmem:[%s466 + $0x28] sm:$0xf]
      %v478 = vld [vmem:[%s466 + $0x2c] sm:$0xf]
      %v479 = vld [vmem:[%s466 + $0x30] sm:$0xf]
      %v480 = vld [vmem:[%s466 + $0x34] sm:$0xf]
      %v481 = vld [vmem:[%s466 + $0x38] sm:$0xf]
      %v482 = vld [vmem:[%s466 + $0x3c] sm:$0xf]
      %vm485 = vcmask 1046528
      %v486 = vrot.slane %v239, 1
      %v487 = vrot.slane %v256, 1
      %v488 = vsel %vm485, %v486, %v487
      %v506 = vunpack.c.l.b16 %v467
      %v507 = vunpack.c.l.b16 %v468
      %v508 = vunpack.c.l.b16 %v469
      %v509 = vunpack.c.l.b16 %v470
      %v510 = vunpack.c.l.b16 %v471
      %v511 = vunpack.c.l.b16 %v472
      %v512 = vunpack.c.l.b16 %v473
      %v513 = vunpack.c.l.b16 %v474
      %v514 = vunpack.c.l.b16 %v475
      %v515 = vunpack.c.l.b16 %v476
      %v516 = vunpack.c.l.b16 %v477
      %v517 = vunpack.c.l.b16 %v478
      %v518 = vunpack.c.l.b16 %v479
      %v519 = vunpack.c.l.b16 %v480
      %v520 = vunpack.c.l.b16 %v481
      %v521 = vunpack.c.l.b16 %v482
      %v522 = vpack.c.b16 %v507, %v506
      %v523 = vpack.c.b16 %v509, %v508
      %v524 = vpack.c.b16 %v511, %v510
      %v525 = vpack.c.b16 %v513, %v512
      %v526 = vpack.c.b16 %v515, %v514
      %v527 = vpack.c.b16 %v517, %v516
      %v528 = vpack.c.b16 %v519, %v518
      %v529 = vpack.c.b16 %v521, %v520
      %538 = vmatprep.subr.bf16.mxu0 0
      %539 = vmatpush1.bf16.msra.mxu0 %v522
      %540 = vmatprep.subr.bf16.mxu0 0
      %541 = vmatpush1.bf16.msra.mxu0 %v523
      %542 = vmatprep.subr.bf16.mxu0 0
      %543 = vmatpush1.bf16.msra.mxu0 %v524
      %544 = vmatprep.subr.bf16.mxu0 0
      %545 = vmatpush1.bf16.msra.mxu0 %v525
      %546 = vmatprep.subr.bf16.mxu0 0
      %547 = vmatpush1.bf16.msra.mxu0 %v526
      %548 = vmatprep.subr.bf16.mxu0 0
      %549 = vmatpush1.bf16.msra.mxu0 %v527
      %550 = vmatprep.subr.bf16.mxu0 0
      %551 = vmatpush1.bf16.msra.mxu0 %v528
      %552 = vmatprep.subr.bf16.mxu0 0
      %553 = vmatpush1.bf16.msra.mxu0 %v529
      %554 = vmatprep.subr.bf16.mxu0 0
      %555 = vmatpush1.bf16.msra.mxu0 0
      %556 = vmatprep.subr.bf16.mxu0 0
      %557 = vmatpush1.bf16.msra.mxu0 0
      %558 = vmatprep.subr.bf16.mxu0 0
      %559 = vmatpush1.bf16.msra.mxu0 0
      %560 = vmatprep.subr.bf16.mxu0 0
      %561 = vmatpush1.bf16.msra.mxu0 0
      %562 = vmatprep.subr.bf16.mxu0 0
      %563 = vmatpush1.bf16.msra.mxu0 0
      %564 = vmatprep.subr.bf16.mxu0 0
      %565 = vmatpush1.bf16.msra.mxu0 0
      %566 = vmatprep.subr.bf16.mxu0 0
      %567 = vmatpush1.bf16.msra.mxu0 0
      %568 = vmatprep.subr.bf16.mxu0 0
      %569 = vmatpush1.bf16.msra.mxu0 0
      %570 = vmatprep.mubr.bf16.mxu0 0
      %571 = vmatmul.mubr.bf16.gmra.mrb[0].mxu0 %v488
      %v572 = vpop.f32.mrb[0].mxu0
      %v573 = vadd.f32 0.0, %v572
      %v574 = vpop.f32.mrb[0].mxu0
      %v575 = vpop.f32.mrb[0].mxu0
      %v576 = vadd.f32 0.0, %v575
      %v577 = vpop.f32.mrb[0].mxu0
      %578 = vdwg.mxu0
      %v579 = vadd.f32 %v460, %v573
      %v580 = vadd.f32 %v463, %v576
      %v581 = vld [vmem:[%s3] sm:$0x1]
      %v583 = vlaneseq
      %v584 = vshrl.u32 %v583, 7
      %v585 = vsub.s32 0, %v584
      %v586 = vrot.slane %v581, %v585
      %v588 = vadd.f32 %v579, %v586
      %v589 = vadd.f32 %v580, %v586
      %v590 = vmax.f32 %v588, 0.0
      %v591 = vmax.f32 %v589, 0.0
      %vm594 = vcmask 1043456
      %v595 = vrot.slane %v590, 4
      %v596 = vrot.slane %v591, 4
      %v597 = vsel %vm594, %v595, %v596
      %v601 = vsel %vm594, 0.0, %v595
      %v602 = vsel %vm594, %v596, 0.0
      %v603 = vpack.c.bf16 %v597, %v601
      %v604 = vld [vmem:[%s2] sm:$0xf]
      %v605 = vld [vmem:[%s2 + $0x4] sm:$0xf]
      %v606 = vld [vmem:[%s2 + $0x8] sm:$0xf]
      %v607 = vld [vmem:[%s2 + $0xc] sm:$0xf]
      %v608 = vld [vmem:[%s2 + $0x10] sm:$0xf]
      %v609 = vld [vmem:[%s2 + $0x14] sm:$0xf]
      %v610 = vld [vmem:[%s2 + $0x18] sm:$0xf]
      %v611 = vld [vmem:[%s2 + $0x1c] sm:$0xf]
      %v612 = vld [vmem:[%s2 + $0x20] sm:$0xf]
      %v613 = vld [vmem:[%s2 + $0x24] sm:$0xf]
      %v614 = vld [vmem:[%s2 + $0x28] sm:$0xf]
      %v615 = vld [vmem:[%s2 + $0x2c] sm:$0xf]
      %v616 = vld [vmem:[%s2 + $0x30] sm:$0xf]
      %v617 = vld [vmem:[%s2 + $0x34] sm:$0xf]
      %v618 = vld [vmem:[%s2 + $0x38] sm:$0xf]
      %v619 = vld [vmem:[%s2 + $0x3c] sm:$0xf]
      %v620 = vpack.c.bf16 %v602, %v602
      %s621 = scalar_lea.vmem %s2, 64
      %v622 = vld [vmem:[%s621] sm:$0xf]
      %v623 = vld [vmem:[%s621 + $0x4] sm:$0xf]
      %v624 = vld [vmem:[%s621 + $0x8] sm:$0xf]
      %v625 = vld [vmem:[%s621 + $0xc] sm:$0xf]
      %v626 = vld [vmem:[%s621 + $0x10] sm:$0xf]
      %v627 = vld [vmem:[%s621 + $0x14] sm:$0xf]
      %v628 = vld [vmem:[%s621 + $0x18] sm:$0xf]
      %v629 = vld [vmem:[%s621 + $0x1c] sm:$0xf]
      %v630 = vld [vmem:[%s621 + $0x20] sm:$0xf]
      %v631 = vld [vmem:[%s621 + $0x24] sm:$0xf]
      %v632 = vld [vmem:[%s621 + $0x28] sm:$0xf]
      %v633 = vld [vmem:[%s621 + $0x2c] sm:$0xf]
      %v634 = vld [vmem:[%s621 + $0x30] sm:$0xf]
      %v635 = vld [vmem:[%s621 + $0x34] sm:$0xf]
      %v636 = vld [vmem:[%s621 + $0x38] sm:$0xf]
      %v637 = vld [vmem:[%s621 + $0x3c] sm:$0xf]
      %v639 = vshrl.u32 %v603, 16
      %v641 = vshll.u32 %v603, 16
      %v643 = vrot.slane %v641, 1
      %v644 = vor.u32 %v639, %v643
      %v646 = vshll.u32 %v620, 16
      %v648 = vrot.slane %v646, 1
      %v649 = vsel %vm274, %v644, %v648
      %v667 = vunpack.c.l.b16 %v622
      %v668 = vunpack.c.l.b16 %v623
      %v669 = vunpack.c.l.b16 %v624
      %v670 = vunpack.c.l.b16 %v625
      %v671 = vunpack.c.l.b16 %v626
      %v672 = vunpack.c.l.b16 %v627
      %v673 = vunpack.c.l.b16 %v628
      %v674 = vunpack.c.l.b16 %v629
      %v675 = vunpack.c.l.b16 %v630
      %v676 = vunpack.c.l.b16 %v631
      %v677 = vunpack.c.l.b16 %v632
      %v678 = vunpack.c.l.b16 %v633
      %v679 = vunpack.c.l.b16 %v634
      %v680 = vunpack.c.l.b16 %v635
      %v681 = vunpack.c.l.b16 %v636
      %v682 = vunpack.c.l.b16 %v637
      %v683 = vpack.c.b16 %v668, %v667
      %v684 = vpack.c.b16 %v670, %v669
      %v685 = vpack.c.b16 %v672, %v671
      %v686 = vpack.c.b16 %v674, %v673
      %v687 = vpack.c.b16 %v676, %v675
      %v688 = vpack.c.b16 %v678, %v677
      %v689 = vpack.c.b16 %v680, %v679
      %v690 = vpack.c.b16 %v682, %v681
      %699 = vmatprep.subr.bf16.mxu0 0
      %700 = vmatpush1.bf16.msra.mxu0 %v683
      %701 = vmatprep.subr.bf16.mxu0 0
      %702 = vmatpush1.bf16.msra.mxu0 %v684
      %703 = vmatprep.subr.bf16.mxu0 0
      %704 = vmatpush1.bf16.msra.mxu0 %v685
      %705 = vmatprep.subr.bf16.mxu0 0
      %706 = vmatpush1.bf16.msra.mxu0 %v686
      %707 = vmatprep.subr.bf16.mxu0 0
      %708 = vmatpush1.bf16.msra.mxu0 %v687
      %709 = vmatprep.subr.bf16.mxu0 0
      %710 = vmatpush1.bf16.msra.mxu0 %v688
      %711 = vmatprep.subr.bf16.mxu0 0
      %712 = vmatpush1.bf16.msra.mxu0 %v689
      %713 = vmatprep.subr.bf16.mxu0 0
      %714 = vmatpush1.bf16.msra.mxu0 %v690
      %715 = vmatprep.subr.bf16.mxu0 0
      %716 = vmatpush1.bf16.msra.mxu0 0
      %717 = vmatprep.subr.bf16.mxu0 0
      %718 = vmatpush1.bf16.msra.mxu0 0
      %719 = vmatprep.subr.bf16.mxu0 0
      %720 = vmatpush1.bf16.msra.mxu0 0
      %721 = vmatprep.subr.bf16.mxu0 0
      %722 = vmatpush1.bf16.msra.mxu0 0
      %723 = vmatprep.subr.bf16.mxu0 0
      %724 = vmatpush1.bf16.msra.mxu0 0
      %725 = vmatprep.subr.bf16.mxu0 0
      %726 = vmatpush1.bf16.msra.mxu0 0
      %727 = vmatprep.subr.bf16.mxu0 0
      %728 = vmatpush1.bf16.msra.mxu0 0
      %729 = vmatprep.subr.bf16.mxu0 0
      %730 = vmatpush1.bf16.msra.mxu0 0
      %731 = vmatprep.mubr.bf16.mxu0 0
      %732 = vmatmul.mubr.bf16.gmra.mrb[0].mxu0 %v649
      %v733 = vpop.f32.mrb[0].mxu0
      %v734 = vadd.f32 0.0, %v733
      %v735 = vpop.f32.mrb[0].mxu0
      %v736 = vpop.f32.mrb[0].mxu0
      %v737 = vadd.f32 0.0, %v736
      %v738 = vpop.f32.mrb[0].mxu0
      %739 = vdwg.mxu0
      %v756 = vunpack.c.l.b16 %v604
      %v757 = vunpack.c.l.b16 %v605
      %v758 = vunpack.c.l.b16 %v606
      %v759 = vunpack.c.l.b16 %v607
      %v760 = vunpack.c.l.b16 %v608
      %v761 = vunpack.c.l.b16 %v609
      %v762 = vunpack.c.l.b16 %v610
      %v763 = vunpack.c.l.b16 %v611
      %v764 = vunpack.c.l.b16 %v612
      %v765 = vunpack.c.l.b16 %v613
      %v766 = vunpack.c.l.b16 %v614
      %v767 = vunpack.c.l.b16 %v615
      %v768 = vunpack.c.l.b16 %v616
      %v769 = vunpack.c.l.b16 %v617
      %v770 = vunpack.c.l.b16 %v618
      %v771 = vunpack.c.l.b16 %v619
      %v772 = vpack.c.b16 %v757, %v756
      %v773 = vpack.c.b16 %v759, %v758
      %v774 = vpack.c.b16 %v761, %v760
      %v775 = vpack.c.b16 %v763, %v762
      %v776 = vpack.c.b16 %v765, %v764
      %v777 = vpack.c.b16 %v767, %v766
      %v778 = vpack.c.b16 %v769, %v768
      %v779 = vpack.c.b16 %v771, %v770
      %788 = vmatprep.subr.bf16.mxu0 0
      %789 = vmatpush1.bf16.msra.mxu0 %v772
      %790 = vmatprep.subr.bf16.mxu0 0
      %791 = vmatpush1.bf16.msra.mxu0 %v773
      %792 = vmatprep.subr.bf16.mxu0 0
      %793 = vmatpush1.bf16.msra.mxu0 %v774
      %794 = vmatprep.subr.bf16.mxu0 0
      %795 = vmatpush1.bf16.msra.mxu0 %v775
      %796 = vmatprep.subr.bf16.mxu0 0
      %797 = vmatpush1.bf16.msra.mxu0 %v776
      %798 = vmatprep.subr.bf16.mxu0 0
      %799 = vmatpush1.bf16.msra.mxu0 %v777
      %800 = vmatprep.subr.bf16.mxu0 0
      %801 = vmatpush1.bf16.msra.mxu0 %v778
      %802 = vmatprep.subr.bf16.mxu0 0
      %803 = vmatpush1.bf16.msra.mxu0 %v779
      %804 = vmatprep.subr.bf16.mxu0 0
      %805 = vmatpush1.bf16.msra.mxu0 0
      %806 = vmatprep.subr.bf16.mxu0 0
      %807 = vmatpush1.bf16.msra.mxu0 0
      %808 = vmatprep.subr.bf16.mxu0 0
      %809 = vmatpush1.bf16.msra.mxu0 0
      %810 = vmatprep.subr.bf16.mxu0 0
      %811 = vmatpush1.bf16.msra.mxu0 0
      %812 = vmatprep.subr.bf16.mxu0 0
      %813 = vmatpush1.bf16.msra.mxu0 0
      %814 = vmatprep.subr.bf16.mxu0 0
      %815 = vmatpush1.bf16.msra.mxu0 0
      %816 = vmatprep.subr.bf16.mxu0 0
      %817 = vmatpush1.bf16.msra.mxu0 0
      %818 = vmatprep.subr.bf16.mxu0 0
      %819 = vmatpush1.bf16.msra.mxu0 0
      %820 = vmatprep.mubr.bf16.mxu0 0
      %821 = vmatmul.mubr.bf16.gmra.mrb[0].mxu0 %v603
      %v822 = vpop.f32.mrb[0].mxu0
      %v823 = vadd.f32 %v734, %v822
      %v824 = vpop.f32.mrb[0].mxu0
      %v825 = vpop.f32.mrb[0].mxu0
      %v826 = vadd.f32 %v737, %v825
      %v827 = vpop.f32.mrb[0].mxu0
      %828 = vdwg.mxu0
      %s829 = scalar_lea.vmem %s2, 128
      %v830 = vld [vmem:[%s829] sm:$0xf]
      %v831 = vld [vmem:[%s829 + $0x4] sm:$0xf]
      %v832 = vld [vmem:[%s829 + $0x8] sm:$0xf]
      %v833 = vld [vmem:[%s829 + $0xc] sm:$0xf]
      %v834 = vld [vmem:[%s829 + $0x10] sm:$0xf]
      %v835 = vld [vmem:[%s829 + $0x14] sm:$0xf]
      %v836 = vld [vmem:[%s829 + $0x18] sm:$0xf]
      %v837 = vld [vmem:[%s829 + $0x1c] sm:$0xf]
      %v838 = vld [vmem:[%s829 + $0x20] sm:$0xf]
      %v839 = vld [vmem:[%s829 + $0x24] sm:$0xf]
      %v840 = vld [vmem:[%s829 + $0x28] sm:$0xf]
      %v841 = vld [vmem:[%s829 + $0x2c] sm:$0xf]
      %v842 = vld [vmem:[%s829 + $0x30] sm:$0xf]
      %v843 = vld [vmem:[%s829 + $0x34] sm:$0xf]
      %v844 = vld [vmem:[%s829 + $0x38] sm:$0xf]
      %v845 = vld [vmem:[%s829 + $0x3c] sm:$0xf]
      %v848 = vrot.slane %v603, 1
      %v849 = vrot.slane %v620, 1
      %v850 = vsel %vm485, %v848, %v849
      %v868 = vunpack.c.l.b16 %v830
      %v869 = vunpack.c.l.b16 %v831
      %v870 = vunpack.c.l.b16 %v832
      %v871 = vunpack.c.l.b16 %v833
      %v872 = vunpack.c.l.b16 %v834
      %v873 = vunpack.c.l.b16 %v835
      %v874 = vunpack.c.l.b16 %v836
      %v875 = vunpack.c.l.b16 %v837
      %v876 = vunpack.c.l.b16 %v838
      %v877 = vunpack.c.l.b16 %v839
      %v878 = vunpack.c.l.b16 %v840
      %v879 = vunpack.c.l.b16 %v841
      %v880 = vunpack.c.l.b16 %v842
      %v881 = vunpack.c.l.b16 %v843
      %v882 = vunpack.c.l.b16 %v844
      %v883 = vunpack.c.l.b16 %v845
      %v884 = vpack.c.b16 %v869, %v868
      %v885 = vpack.c.b16 %v871, %v870
      %v886 = vpack.c.b16 %v873, %v872
      %v887 = vpack.c.b16 %v875, %v874
      %v888 = vpack.c.b16 %v877, %v876
      %v889 = vpack.c.b16 %v879, %v878
      %v890 = vpack.c.b16 %v881, %v880
      %v891 = vpack.c.b16 %v883, %v882
      %900 = vmatprep.subr.bf16.mxu0 0
      %901 = vmatpush1.bf16.msra.mxu0 %v884
      %902 = vmatprep.subr.bf16.mxu0 0
      %903 = vmatpush1.bf16.msra.mxu0 %v885
      %904 = vmatprep.subr.bf16.mxu0 0
      %905 = vmatpush1.bf16.msra.mxu0 %v886
      %906 = vmatprep.subr.bf16.mxu0 0
      %907 = vmatpush1.bf16.msra.mxu0 %v887
      %908 = vmatprep.subr.bf16.mxu0 0
      %909 = vmatpush1.bf16.msra.mxu0 %v888
      %910 = vmatprep.subr.bf16.mxu0 0
      %911 = vmatpush1.bf16.msra.mxu0 %v889
      %912 = vmatprep.subr.bf16.mxu0 0
      %913 = vmatpush1.bf16.msra.mxu0 %v890
      %914 = vmatprep.subr.bf16.mxu0 0
      %915 = vmatpush1.bf16.msra.mxu0 %v891
      %916 = vmatprep.subr.bf16.mxu0 0
      %917 = vmatpush1.bf16.msra.mxu0 0
      %918 = vmatprep.subr.bf16.mxu0 0
      %919 = vmatpush1.bf16.msra.mxu0 0
      %920 = vmatprep.subr.bf16.mxu0 0
      %921 = vmatpush1.bf16.msra.mxu0 0
      %922 = vmatprep.subr.bf16.mxu0 0
      %923 = vmatpush1.bf16.msra.mxu0 0
      %924 = vmatprep.subr.bf16.mxu0 0
      %925 = vmatpush1.bf16.msra.mxu0 0
      %926 = vmatprep.subr.bf16.mxu0 0
      %927 = vmatpush1.bf16.msra.mxu0 0
      %928 = vmatprep.subr.bf16.mxu0 0
      %929 = vmatpush1.bf16.msra.mxu0 0
      %930 = vmatprep.subr.bf16.mxu0 0
      %931 = vmatpush1.bf16.msra.mxu0 0
      %932 = vmatprep.mubr.bf16.mxu0 0
      %933 = vmatmul.mubr.bf16.gmra.mrb[0].mxu0 %v850
      %v934 = vpop.f32.mrb[0].mxu0
      %v935 = vadd.f32 0.0, %v934
      %v936 = vpop.f32.mrb[0].mxu0
      %v937 = vpop.f32.mrb[0].mxu0
      %v938 = vadd.f32 0.0, %v937
      %v939 = vpop.f32.mrb[0].mxu0
      %940 = vdwg.mxu0
      %v941 = vadd.f32 %v823, %v935
      %v942 = vadd.f32 %v826, %v938
      %s943 = scalar_lea.vmem %s2, 192
      %v944 = vld [vmem:[%s943] sm:$0xf]
      %v945 = vld [vmem:[%s943 + $0x4] sm:$0xf]
      %v946 = vld [vmem:[%s943 + $0x8] sm:$0xf]
      %v947 = vld [vmem:[%s943 + $0xc] sm:$0xf]
      %v948 = vld [vmem:[%s943 + $0x10] sm:$0xf]
      %v949 = vld [vmem:[%s943 + $0x14] sm:$0xf]
      %v950 = vld [vmem:[%s943 + $0x18] sm:$0xf]
      %v951 = vld [vmem:[%s943 + $0x1c] sm:$0xf]
      %v952 = vld [vmem:[%s943 + $0x20] sm:$0xf]
      %v953 = vld [vmem:[%s943 + $0x24] sm:$0xf]
      %v954 = vld [vmem:[%s943 + $0x28] sm:$0xf]
      %v955 = vld [vmem:[%s943 + $0x2c] sm:$0xf]
      %v956 = vld [vmem:[%s943 + $0x30] sm:$0xf]
      %v957 = vld [vmem:[%s943 + $0x34] sm:$0xf]
      %v958 = vld [vmem:[%s943 + $0x38] sm:$0xf]
      %v959 = vld [vmem:[%s943 + $0x3c] sm:$0xf]
      %vm960 = vsmask.f32 6400
      %v961 = vrot.slane %v639, 1
      %v962 = vrot.slane %v641, 2
      %v963 = vor.u32 %v961, %v962
      %v964 = vshrl.u32 %v620, 16
      %v966 = vrot.slane %v964, 1
      %v967 = vrot.slane %v646, 2
      %v968 = vor.u32 %v966, %v967
      %v969 = vsel %vm960, %v963, %v968
      %v987 = vunpack.c.l.b16 %v944
      %v988 = vunpack.c.l.b16 %v945
      %v989 = vunpack.c.l.b16 %v946
      %v990 = vunpack.c.l.b16 %v947
      %v991 = vunpack.c.l.b16 %v948
      %v992 = vunpack.c.l.b16 %v949
      %v993 = vunpack.c.l.b16 %v950
      %v994 = vunpack.c.l.b16 %v951
      %v995 = vunpack.c.l.b16 %v952
      %v996 = vunpack.c.l.b16 %v953
      %v997 = vunpack.c.l.b16 %v954
      %v998 = vunpack.c.l.b16 %v955
      %v999 = vunpack.c.l.b16 %v956
      %v1000 = vunpack.c.l.b16 %v957
      %v1001 = vunpack.c.l.b16 %v958
      %v1002 = vunpack.c.l.b16 %v959
      %v1003 = vpack.c.b16 %v988, %v987
      %v1004 = vpack.c.b16 %v990, %v989
      %v1005 = vpack.c.b16 %v992, %v991
      %v1006 = vpack.c.b16 %v994, %v993
      %v1007 = vpack.c.b16 %v996, %v995
      %v1008 = vpack.c.b16 %v998, %v997
      %v1009 = vpack.c.b16 %v1000, %v999
      %v1010 = vpack.c.b16 %v1002, %v1001
      %1019 = vmatprep.subr.bf16.mxu0 0
      %1020 = vmatpush1.bf16.msra.mxu0 %v1003
      %1021 = vmatprep.subr.bf16.mxu0 0
      %1022 = vmatpush1.bf16.msra.mxu0 %v1004
      %1023 = vmatprep.subr.bf16.mxu0 0
      %1024 = vmatpush1.bf16.msra.mxu0 %v1005
      %1025 = vmatprep.subr.bf16.mxu0 0
      %1026 = vmatpush1.bf16.msra.mxu0 %v1006
      %1027 = vmatprep.subr.bf16.mxu0 0
      %1028 = vmatpush1.bf16.msra.mxu0 %v1007
      %1029 = vmatprep.subr.bf16.mxu0 0
      %1030 = vmatpush1.bf16.msra.mxu0 %v1008
      %1031 = vmatprep.subr.bf16.mxu0 0
      %1032 = vmatpush1.bf16.msra.mxu0 %v1009
      %1033 = vmatprep.subr.bf16.mxu0 0
      %1034 = vmatpush1.bf16.msra.mxu0 %v1010
      %1035 = vmatprep.subr.bf16.mxu0 0
      %1036 = vmatpush1.bf16.msra.mxu0 0
      %1037 = vmatprep.subr.bf16.mxu0 0
      %1038 = vmatpush1.bf16.msra.mxu0 0
      %1039 = vmatprep.subr.bf16.mxu0 0
      %1040 = vmatpush1.bf16.msra.mxu0 0
      %1041 = vmatprep.subr.bf16.mxu0 0
      %1042 = vmatpush1.bf16.msra.mxu0 0
      %1043 = vmatprep.subr.bf16.mxu0 0
      %1044 = vmatpush1.bf16.msra.mxu0 0
      %1045 = vmatprep.subr.bf16.mxu0 0
      %1046 = vmatpush1.bf16.msra.mxu0 0
      %1047 = vmatprep.subr.bf16.mxu0 0
      %1048 = vmatpush1.bf16.msra.mxu0 0
      %1049 = vmatprep.subr.bf16.mxu0 0
      %1050 = vmatpush1.bf16.msra.mxu0 0
      %1051 = vmatprep.mubr.bf16.mxu0 0
      %1052 = vmatmul.mubr.bf16.gmra.mrb[0].mxu0 %v969
      %v1053 = vpop.f32.mrb[0].mxu0
      %v1054 = vadd.f32 0.0, %v1053
      %v1055 = vpop.f32.mrb[0].mxu0
      %v1056 = vpop.f32.mrb[0].mxu0
      %v1057 = vadd.f32 0.0, %v1056
      %v1058 = vpop.f32.mrb[0].mxu0
      %1059 = vdwg.mxu0
      %v1060 = vadd.f32 %v941, %v1054
      %v1061 = vadd.f32 %v942, %v1057
      %s1062 = scalar_lea.vmem %s2, 256
      %v1063 = vld [vmem:[%s1062] sm:$0xf]
      %v1064 = vld [vmem:[%s1062 + $0x4] sm:$0xf]
      %v1065 = vld [vmem:[%s1062 + $0x8] sm:$0xf]
      %v1066 = vld [vmem:[%s1062 + $0xc] sm:$0xf]
      %v1067 = vld [vmem:[%s1062 + $0x10] sm:$0xf]
      %v1068 = vld [vmem:[%s1062 + $0x14] sm:$0xf]
      %v1069 = vld [vmem:[%s1062 + $0x18] sm:$0xf]
      %v1070 = vld [vmem:[%s1062 + $0x1c] sm:$0xf]
      %v1071 = vld [vmem:[%s1062 + $0x20] sm:$0xf]
      %v1072 = vld [vmem:[%s1062 + $0x24] sm:$0xf]
      %v1073 = vld [vmem:[%s1062 + $0x28] sm:$0xf]
      %v1074 = vld [vmem:[%s1062 + $0x2c] sm:$0xf]
      %v1075 = vld [vmem:[%s1062 + $0x30] sm:$0xf]
      %v1076 = vld [vmem:[%s1062 + $0x34] sm:$0xf]
      %v1077 = vld [vmem:[%s1062 + $0x38] sm:$0xf]
      %v1078 = vld [vmem:[%s1062 + $0x3c] sm:$0xf]
      %vm1079 = vcmask 1045504
      %v1080 = vrot.slane %v603, 2
      %v1081 = vrot.slane %v620, 2
      %v1082 = vsel %vm1079, %v1080, %v1081
      %v1100 = vunpack.c.l.b16 %v1063
      %v1101 = vunpack.c.l.b16 %v1064
      %v1102 = vunpack.c.l.b16 %v1065
      %v1103 = vunpack.c.l.b16 %v1066
      %v1104 = vunpack.c.l.b16 %v1067
      %v1105 = vunpack.c.l.b16 %v1068
      %v1106 = vunpack.c.l.b16 %v1069
      %v1107 = vunpack.c.l.b16 %v1070
      %v1108 = vunpack.c.l.b16 %v1071
      %v1109 = vunpack.c.l.b16 %v1072
      %v1110 = vunpack.c.l.b16 %v1073
      %v1111 = vunpack.c.l.b16 %v1074
      %v1112 = vunpack.c.l.b16 %v1075
      %v1113 = vunpack.c.l.b16 %v1076
      %v1114 = vunpack.c.l.b16 %v1077
      %v1115 = vunpack.c.l.b16 %v1078
      %v1116 = vpack.c.b16 %v1101, %v1100
      %v1117 = vpack.c.b16 %v1103, %v1102
      %v1118 = vpack.c.b16 %v1105, %v1104
      %v1119 = vpack.c.b16 %v1107, %v1106
      %v1120 = vpack.c.b16 %v1109, %v1108
      %v1121 = vpack.c.b16 %v1111, %v1110
      %v1122 = vpack.c.b16 %v1113, %v1112
      %v1123 = vpack.c.b16 %v1115, %v1114
      %1132 = vmatprep.subr.bf16.mxu0 0
      %1133 = vmatpush1.bf16.msra.mxu0 %v1116
      %1134 = vmatprep.subr.bf16.mxu0 0
      %1135 = vmatpush1.bf16.msra.mxu0 %v1117
      %1136 = vmatprep.subr.bf16.mxu0 0
      %1137 = vmatpush1.bf16.msra.mxu0 %v1118
      %1138 = vmatprep.subr.bf16.mxu0 0
      %1139 = vmatpush1.bf16.msra.mxu0 %v1119
      %1140 = vmatprep.subr.bf16.mxu0 0
      %1141 = vmatpush1.bf16.msra.mxu0 %v1120
      %1142 = vmatprep.subr.bf16.mxu0 0
      %1143 = vmatpush1.bf16.msra.mxu0 %v1121
      %1144 = vmatprep.subr.bf16.mxu0 0
      %1145 = vmatpush1.bf16.msra.mxu0 %v1122
      %1146 = vmatprep.subr.bf16.mxu0 0
      %1147 = vmatpush1.bf16.msra.mxu0 %v1123
      %1148 = vmatprep.subr.bf16.mxu0 0
      %1149 = vmatpush1.bf16.msra.mxu0 0
      %1150 = vmatprep.subr.bf16.mxu0 0
      %1151 = vmatpush1.bf16.msra.mxu0 0
      %1152 = vmatprep.subr.bf16.mxu0 0
      %1153 = vmatpush1.bf16.msra.mxu0 0
      %1154 = vmatprep.subr.bf16.mxu0 0
      %1155 = vmatpush1.bf16.msra.mxu0 0
      %1156 = vmatprep.subr.bf16.mxu0 0
      %1157 = vmatpush1.bf16.msra.mxu0 0
      %1158 = vmatprep.subr.bf16.mxu0 0
      %1159 = vmatpush1.bf16.msra.mxu0 0
      %1160 = vmatprep.subr.bf16.mxu0 0
      %1161 = vmatpush1.bf16.msra.mxu0 0
      %1162 = vmatprep.subr.bf16.mxu0 0
      %1163 = vmatpush1.bf16.msra.mxu0 0
      %1164 = vmatprep.mubr.bf16.mxu0 0
      %1165 = vmatmul.mubr.bf16.gmra.mrb[0].mxu0 %v1082
      %v1166 = vpop.f32.mrb[0].mxu0
      %v1167 = vadd.f32 0.0, %v1166
      %v1168 = vpop.f32.mrb[0].mxu0
      %v1169 = vpop.f32.mrb[0].mxu0
      %v1170 = vadd.f32 0.0, %v1169
      %v1171 = vpop.f32.mrb[0].mxu0
      %1172 = vdwg.mxu0
      %v1173 = vadd.f32 %v1060, %v1167
      %v1174 = vadd.f32 %v1061, %v1170
      %s1175 = scalar_lea.vmem %s2, 320
      %v1176 = vld [vmem:[%s1175] sm:$0xf]
      %v1177 = vld [vmem:[%s1175 + $0x4] sm:$0xf]
      %v1178 = vld [vmem:[%s1175 + $0x8] sm:$0xf]
      %v1179 = vld [vmem:[%s1175 + $0xc] sm:$0xf]
      %v1180 = vld [vmem:[%s1175 + $0x10] sm:$0xf]
      %v1181 = vld [vmem:[%s1175 + $0x14] sm:$0xf]
      %v1182 = vld [vmem:[%s1175 + $0x18] sm:$0xf]
      %v1183 = vld [vmem:[%s1175 + $0x1c] sm:$0xf]
      %v1184 = vld [vmem:[%s1175 + $0x20] sm:$0xf]
      %v1185 = vld [vmem:[%s1175 + $0x24] sm:$0xf]
      %v1186 = vld [vmem:[%s1175 + $0x28] sm:$0xf]
      %v1187 = vld [vmem:[%s1175 + $0x2c] sm:$0xf]
      %v1188 = vld [vmem:[%s1175 + $0x30] sm:$0xf]
      %v1189 = vld [vmem:[%s1175 + $0x34] sm:$0xf]
      %v1190 = vld [vmem:[%s1175 + $0x38] sm:$0xf]
      %v1191 = vld [vmem:[%s1175 + $0x3c] sm:$0xf]
      %vm1192 = vsmask.f32 5376
      %v1193 = vrot.slane %v639, 2
      %v1194 = vrot.slane %v641, 3
      %v1195 = vor.u32 %v1193, %v1194
      %v1196 = vrot.slane %v964, 2
      %v1197 = vrot.slane %v646, 3
      %v1198 = vor.u32 %v1196, %v1197
      %v1199 = vsel %vm1192, %v1195, %v1198
      %v1217 = vunpack.c.l.b16 %v1176
      %v1218 = vunpack.c.l.b16 %v1177
      %v1219 = vunpack.c.l.b16 %v1178
      %v1220 = vunpack.c.l.b16 %v1179
      %v1221 = vunpack.c.l.b16 %v1180
      %v1222 = vunpack.c.l.b16 %v1181
      %v1223 = vunpack.c.l.b16 %v1182
      %v1224 = vunpack.c.l.b16 %v1183
      %v1225 = vunpack.c.l.b16 %v1184
      %v1226 = vunpack.c.l.b16 %v1185
      %v1227 = vunpack.c.l.b16 %v1186
      %v1228 = vunpack.c.l.b16 %v1187
      %v1229 = vunpack.c.l.b16 %v1188
      %v1230 = vunpack.c.l.b16 %v1189
      %v1231 = vunpack.c.l.b16 %v1190
      %v1232 = vunpack.c.l.b16 %v1191
      %v1233 = vpack.c.b16 %v1218, %v1217
      %v1234 = vpack.c.b16 %v1220, %v1219
      %v1235 = vpack.c.b16 %v1222, %v1221
      %v1236 = vpack.c.b16 %v1224, %v1223
      %v1237 = vpack.c.b16 %v1226, %v1225
      %v1238 = vpack.c.b16 %v1228, %v1227
      %v1239 = vpack.c.b16 %v1230, %v1229
      %v1240 = vpack.c.b16 %v1232, %v1231
      %1249 = vmatprep.subr.bf16.mxu0 0
      %1250 = vmatpush1.bf16.msra.mxu0 %v1233
      %1251 = vmatprep.subr.bf16.mxu0 0
      %1252 = vmatpush1.bf16.msra.mxu0 %v1234
      %1253 = vmatprep.subr.bf16.mxu0 0
      %1254 = vmatpush1.bf16.msra.mxu0 %v1235
      %1255 = vmatprep.subr.bf16.mxu0 0
      %1256 = vmatpush1.bf16.msra.mxu0 %v1236
      %1257 = vmatprep.subr.bf16.mxu0 0
      %1258 = vmatpush1.bf16.msra.mxu0 %v1237
      %1259 = vmatprep.subr.bf16.mxu0 0
      %1260 = vmatpush1.bf16.msra.mxu0 %v1238
      %1261 = vmatprep.subr.bf16.mxu0 0
      %1262 = vmatpush1.bf16.msra.mxu0 %v1239
      %1263 = vmatprep.subr.bf16.mxu0 0
      %1264 = vmatpush1.bf16.msra.mxu0 %v1240
      %1265 = vmatprep.subr.bf16.mxu0 0
      %1266 = vmatpush1.bf16.msra.mxu0 0
      %1267 = vmatprep.subr.bf16.mxu0 0
      %1268 = vmatpush1.bf16.msra.mxu0 0
      %1269 = vmatprep.subr.bf16.mxu0 0
      %1270 = vmatpush1.bf16.msra.mxu0 0
      %1271 = vmatprep.subr.bf16.mxu0 0
      %1272 = vmatpush1.bf16.msra.mxu0 0
      %1273 = vmatprep.subr.bf16.mxu0 0
      %1274 = vmatpush1.bf16.msra.mxu0 0
      %1275 = vmatprep.subr.bf16.mxu0 0
      %1276 = vmatpush1.bf16.msra.mxu0 0
      %1277 = vmatprep.subr.bf16.mxu0 0
      %1278 = vmatpush1.bf16.msra.mxu0 0
      %1279 = vmatprep.subr.bf16.mxu0 0
      %1280 = vmatpush1.bf16.msra.mxu0 0
      %1281 = vmatprep.mubr.bf16.mxu0 0
      %1282 = vmatmul.mubr.bf16.gmra.mrb[0].mxu0 %v1199
      %v1283 = vpop.f32.mrb[0].mxu0
      %v1284 = vadd.f32 0.0, %v1283
      %v1285 = vpop.f32.mrb[0].mxu0
      %v1286 = vpop.f32.mrb[0].mxu0
      %v1287 = vadd.f32 0.0, %v1286
      %v1288 = vpop.f32.mrb[0].mxu0
      %1289 = vdwg.mxu0
      %v1290 = vadd.f32 %v1173, %v1284
      %v1291 = vadd.f32 %v1174, %v1287
      %s1292 = scalar_lea.vmem %s2, 384
      %v1293 = vld [vmem:[%s1292] sm:$0xf]
      %v1294 = vld [vmem:[%s1292 + $0x4] sm:$0xf]
      %v1295 = vld [vmem:[%s1292 + $0x8] sm:$0xf]
      %v1296 = vld [vmem:[%s1292 + $0xc] sm:$0xf]
      %v1297 = vld [vmem:[%s1292 + $0x10] sm:$0xf]
      %v1298 = vld [vmem:[%s1292 + $0x14] sm:$0xf]
      %v1299 = vld [vmem:[%s1292 + $0x18] sm:$0xf]
      %v1300 = vld [vmem:[%s1292 + $0x1c] sm:$0xf]
      %v1301 = vld [vmem:[%s1292 + $0x20] sm:$0xf]
      %v1302 = vld [vmem:[%s1292 + $0x24] sm:$0xf]
      %v1303 = vld [vmem:[%s1292 + $0x28] sm:$0xf]
      %v1304 = vld [vmem:[%s1292 + $0x2c] sm:$0xf]
      %v1305 = vld [vmem:[%s1292 + $0x30] sm:$0xf]
      %v1306 = vld [vmem:[%s1292 + $0x34] sm:$0xf]
      %v1307 = vld [vmem:[%s1292 + $0x38] sm:$0xf]
      %v1308 = vld [vmem:[%s1292 + $0x3c] sm:$0xf]
      %vm1309 = vcmask 1044480
      %v1310 = vrot.slane %v603, 3
      %v1311 = vrot.slane %v620, 3
      %v1312 = vsel %vm1309, %v1310, %v1311
      %v1330 = vunpack.c.l.b16 %v1293
      %v1331 = vunpack.c.l.b16 %v1294
      %v1332 = vunpack.c.l.b16 %v1295
      %v1333 = vunpack.c.l.b16 %v1296
      %v1334 = vunpack.c.l.b16 %v1297
      %v1335 = vunpack.c.l.b16 %v1298
      %v1336 = vunpack.c.l.b16 %v1299
      %v1337 = vunpack.c.l.b16 %v1300
      %v1338 = vunpack.c.l.b16 %v1301
      %v1339 = vunpack.c.l.b16 %v1302
      %v1340 = vunpack.c.l.b16 %v1303
      %v1341 = vunpack.c.l.b16 %v1304
      %v1342 = vunpack.c.l.b16 %v1305
      %v1343 = vunpack.c.l.b16 %v1306
      %v1344 = vunpack.c.l.b16 %v1307
      %v1345 = vunpack.c.l.b16 %v1308
      %v1346 = vpack.c.b16 %v1331, %v1330
      %v1347 = vpack.c.b16 %v1333, %v1332
      %v1348 = vpack.c.b16 %v1335, %v1334
      %v1349 = vpack.c.b16 %v1337, %v1336
      %v1350 = vpack.c.b16 %v1339, %v1338
      %v1351 = vpack.c.b16 %v1341, %v1340
      %v1352 = vpack.c.b16 %v1343, %v1342
      %v1353 = vpack.c.b16 %v1345, %v1344
      %1362 = vmatprep.subr.bf16.mxu0 0
      %1363 = vmatpush1.bf16.msra.mxu0 %v1346
      %1364 = vmatprep.subr.bf16.mxu0 0
      %1365 = vmatpush1.bf16.msra.mxu0 %v1347
      %1366 = vmatprep.subr.bf16.mxu0 0
      %1367 = vmatpush1.bf16.msra.mxu0 %v1348
      %1368 = vmatprep.subr.bf16.mxu0 0
      %1369 = vmatpush1.bf16.msra.mxu0 %v1349
      %1370 = vmatprep.subr.bf16.mxu0 0
      %1371 = vmatpush1.bf16.msra.mxu0 %v1350
      %1372 = vmatprep.subr.bf16.mxu0 0
      %1373 = vmatpush1.bf16.msra.mxu0 %v1351
      %1374 = vmatprep.subr.bf16.mxu0 0
      %1375 = vmatpush1.bf16.msra.mxu0 %v1352
      %1376 = vmatprep.subr.bf16.mxu0 0
      %1377 = vmatpush1.bf16.msra.mxu0 %v1353
      %1378 = vmatprep.subr.bf16.mxu0 0
      %1379 = vmatpush1.bf16.msra.mxu0 0
      %1380 = vmatprep.subr.bf16.mxu0 0
      %1381 = vmatpush1.bf16.msra.mxu0 0
      %1382 = vmatprep.subr.bf16.mxu0 0
      %1383 = vmatpush1.bf16.msra.mxu0 0
      %1384 = vmatprep.subr.bf16.mxu0 0
      %1385 = vmatpush1.bf16.msra.mxu0 0
      %1386 = vmatprep.subr.bf16.mxu0 0
      %1387 = vmatpush1.bf16.msra.mxu0 0
      %1388 = vmatprep.subr.bf16.mxu0 0
      %1389 = vmatpush1.bf16.msra.mxu0 0
      %1390 = vmatprep.subr.bf16.mxu0 0
      %1391 = vmatpush1.bf16.msra.mxu0 0
      %1392 = vmatprep.subr.bf16.mxu0 0
      %1393 = vmatpush1.bf16.msra.mxu0 0
      %1394 = vmatprep.mubr.bf16.mxu0 0
      %1395 = vmatmul.mubr.bf16.gmra.mrb[0].mxu0 %v1312
      %v1396 = vpop.f32.mrb[0].mxu0
      %v1397 = vadd.f32 0.0, %v1396
      %v1398 = vpop.f32.mrb[0].mxu0
      %v1399 = vpop.f32.mrb[0].mxu0
      %v1400 = vadd.f32 0.0, %v1399
      %v1401 = vpop.f32.mrb[0].mxu0
      %1402 = vdwg.mxu0
      %v1403 = vadd.f32 %v1290, %v1397
      %v1404 = vadd.f32 %v1291, %v1400
      %s1405 = scalar_lea.vmem %s2, 448
      %v1406 = vld [vmem:[%s1405] sm:$0xf]
      %v1407 = vld [vmem:[%s1405 + $0x4] sm:$0xf]
      %v1408 = vld [vmem:[%s1405 + $0x8] sm:$0xf]
      %v1409 = vld [vmem:[%s1405 + $0xc] sm:$0xf]
      %v1410 = vld [vmem:[%s1405 + $0x10] sm:$0xf]
      %v1411 = vld [vmem:[%s1405 + $0x14] sm:$0xf]
      %v1412 = vld [vmem:[%s1405 + $0x18] sm:$0xf]
      %v1413 = vld [vmem:[%s1405 + $0x1c] sm:$0xf]
      %v1414 = vld [vmem:[%s1405 + $0x20] sm:$0xf]
      %v1415 = vld [vmem:[%s1405 + $0x24] sm:$0xf]
      %v1416 = vld [vmem:[%s1405 + $0x28] sm:$0xf]
      %v1417 = vld [vmem:[%s1405 + $0x2c] sm:$0xf]
      %v1418 = vld [vmem:[%s1405 + $0x30] sm:$0xf]
      %v1419 = vld [vmem:[%s1405 + $0x34] sm:$0xf]
      %v1420 = vld [vmem:[%s1405 + $0x38] sm:$0xf]
      %v1421 = vld [vmem:[%s1405 + $0x3c] sm:$0xf]
      %vm1422 = vsmask.f32 4352
      %v1423 = vrot.slane %v639, 3
      %v1424 = vrot.slane %v641, 4
      %v1425 = vor.u32 %v1423, %v1424
      %v1426 = vrot.slane %v964, 3
      %v1427 = vrot.slane %v646, 4
      %v1428 = vor.u32 %v1426, %v1427
      %v1429 = vsel %vm1422, %v1425, %v1428
      %v1447 = vunpack.c.l.b16 %v1406
      %v1448 = vunpack.c.l.b16 %v1407
      %v1449 = vunpack.c.l.b16 %v1408
      %v1450 = vunpack.c.l.b16 %v1409
      %v1451 = vunpack.c.l.b16 %v1410
      %v1452 = vunpack.c.l.b16 %v1411
      %v1453 = vunpack.c.l.b16 %v1412
      %v1454 = vunpack.c.l.b16 %v1413
      %v1455 = vunpack.c.l.b16 %v1414
      %v1456 = vunpack.c.l.b16 %v1415
      %v1457 = vunpack.c.l.b16 %v1416
      %v1458 = vunpack.c.l.b16 %v1417
      %v1459 = vunpack.c.l.b16 %v1418
      %v1460 = vunpack.c.l.b16 %v1419
      %v1461 = vunpack.c.l.b16 %v1420
      %v1462 = vunpack.c.l.b16 %v1421
      %v1463 = vpack.c.b16 %v1448, %v1447
      %v1464 = vpack.c.b16 %v1450, %v1449
      %v1465 = vpack.c.b16 %v1452, %v1451
      %v1466 = vpack.c.b16 %v1454, %v1453
      %v1467 = vpack.c.b16 %v1456, %v1455
      %v1468 = vpack.c.b16 %v1458, %v1457
      %v1469 = vpack.c.b16 %v1460, %v1459
      %v1470 = vpack.c.b16 %v1462, %v1461
      %1479 = vmatprep.subr.bf16.mxu0 0
      %1480 = vmatpush1.bf16.msra.mxu0 %v1463
      %1481 = vmatprep.subr.bf16.mxu0 0
      %1482 = vmatpush1.bf16.msra.mxu0 %v1464
      %1483 = vmatprep.subr.bf16.mxu0 0
      %1484 = vmatpush1.bf16.msra.mxu0 %v1465
      %1485 = vmatprep.subr.bf16.mxu0 0
      %1486 = vmatpush1.bf16.msra.mxu0 %v1466
      %1487 = vmatprep.subr.bf16.mxu0 0
      %1488 = vmatpush1.bf16.msra.mxu0 %v1467
      %1489 = vmatprep.subr.bf16.mxu0 0
      %1490 = vmatpush1.bf16.msra.mxu0 %v1468
      %1491 = vmatprep.subr.bf16.mxu0 0
      %1492 = vmatpush1.bf16.msra.mxu0 %v1469
      %1493 = vmatprep.subr.bf16.mxu0 0
      %1494 = vmatpush1.bf16.msra.mxu0 %v1470
      %1495 = vmatprep.subr.bf16.mxu0 0
      %1496 = vmatpush1.bf16.msra.mxu0 0
      %1497 = vmatprep.subr.bf16.mxu0 0
      %1498 = vmatpush1.bf16.msra.mxu0 0
      %1499 = vmatprep.subr.bf16.mxu0 0
      %1500 = vmatpush1.bf16.msra.mxu0 0
      %1501 = vmatprep.subr.bf16.mxu0 0
      %1502 = vmatpush1.bf16.msra.mxu0 0
      %1503 = vmatprep.subr.bf16.mxu0 0
      %1504 = vmatpush1.bf16.msra.mxu0 0
      %1505 = vmatprep.subr.bf16.mxu0 0
      %1506 = vmatpush1.bf16.msra.mxu0 0
      %1507 = vmatprep.subr.bf16.mxu0 0
      %1508 = vmatpush1.bf16.msra.mxu0 0
      %1509 = vmatprep.subr.bf16.mxu0 0
      %1510 = vmatpush1.bf16.msra.mxu0 0
      %1511 = vmatprep.mubr.bf16.mxu0 0
      %1512 = vmatmul.mubr.bf16.gmra.mrb[0].mxu0 %v1429
      %v1513 = vpop.f32.mrb[0].mxu0
      %v1514 = vadd.f32 0.0, %v1513
      %v1515 = vpop.f32.mrb[0].mxu0
      %v1516 = vpop.f32.mrb[0].mxu0
      %v1517 = vadd.f32 0.0, %v1516
      %v1518 = vpop.f32.mrb[0].mxu0
      %1519 = vdwg.mxu0
      %v1520 = vadd.f32 %v1403, %v1514
      %v1521 = vadd.f32 %v1404, %v1517
      %v1522 = vpack.c.bf16 %v602, %v597
      %s1523 = scalar_lea.vmem %s2, 512
      %v1524 = vld [vmem:[%s1523] sm:$0xf]
      %v1525 = vld [vmem:[%s1523 + $0x4] sm:$0xf]
      %v1526 = vld [vmem:[%s1523 + $0x8] sm:$0xf]
      %v1527 = vld [vmem:[%s1523 + $0xc] sm:$0xf]
      %v1528 = vld [vmem:[%s1523 + $0x10] sm:$0xf]
      %v1529 = vld [vmem:[%s1523 + $0x14] sm:$0xf]
      %v1530 = vld [vmem:[%s1523 + $0x18] sm:$0xf]
      %v1531 = vld [vmem:[%s1523 + $0x1c] sm:$0xf]
      %v1532 = vld [vmem:[%s1523 + $0x20] sm:$0xf]
      %v1533 = vld [vmem:[%s1523 + $0x24] sm:$0xf]
      %v1534 = vld [vmem:[%s1523 + $0x28] sm:$0xf]
      %v1535 = vld [vmem:[%s1523 + $0x2c] sm:$0xf]
      %v1536 = vld [vmem:[%s1523 + $0x30] sm:$0xf]
      %v1537 = vld [vmem:[%s1523 + $0x34] sm:$0xf]
      %v1538 = vld [vmem:[%s1523 + $0x38] sm:$0xf]
      %v1539 = vld [vmem:[%s1523 + $0x3c] sm:$0xf]
      %v1556 = vunpack.c.l.b16 %v1524
      %v1557 = vunpack.c.l.b16 %v1525
      %v1558 = vunpack.c.l.b16 %v1526
      %v1559 = vunpack.c.l.b16 %v1527
      %v1560 = vunpack.c.l.b16 %v1528
      %v1561 = vunpack.c.l.b16 %v1529
      %v1562 = vunpack.c.l.b16 %v1530
      %v1563 = vunpack.c.l.b16 %v1531
      %v1564 = vunpack.c.l.b16 %v1532
      %v1565 = vunpack.c.l.b16 %v1533
      %v1566 = vunpack.c.l.b16 %v1534
      %v1567 = vunpack.c.l.b16 %v1535
      %v1568 = vunpack.c.l.b16 %v1536
      %v1569 = vunpack.c.l.b16 %v1537
      %v1570 = vunpack.c.l.b16 %v1538
      %v1571 = vunpack.c.l.b16 %v1539
      %v1572 = vpack.c.b16 %v1557, %v1556
      %v1573 = vpack.c.b16 %v1559, %v1558
      %v1574 = vpack.c.b16 %v1561, %v1560
      %v1575 = vpack.c.b16 %v1563, %v1562
      %v1576 = vpack.c.b16 %v1565, %v1564
      %v1577 = vpack.c.b16 %v1567, %v1566
      %v1578 = vpack.c.b16 %v1569, %v1568
      %v1579 = vpack.c.b16 %v1571, %v1570
      %1588 = vmatprep.subr.bf16.mxu0 0
      %1589 = vmatpush1.bf16.msra.mxu0 %v1572
      %1590 = vmatprep.subr.bf16.mxu0 0
      %1591 = vmatpush1.bf16.msra.mxu0 %v1573
      %1592 = vmatprep.subr.bf16.mxu0 0
      %1593 = vmatpush1.bf16.msra.mxu0 %v1574
      %1594 = vmatprep.subr.bf16.mxu0 0
      %1595 = vmatpush1.bf16.msra.mxu0 %v1575
      %1596 = vmatprep.subr.bf16.mxu0 0
      %1597 = vmatpush1.bf16.msra.mxu0 %v1576
      %1598 = vmatprep.subr.bf16.mxu0 0
      %1599 = vmatpush1.bf16.msra.mxu0 %v1577
      %1600 = vmatprep.subr.bf16.mxu0 0
      %1601 = vmatpush1.bf16.msra.mxu0 %v1578
      %1602 = vmatprep.subr.bf16.mxu0 0
      %1603 = vmatpush1.bf16.msra.mxu0 %v1579
      %1604 = vmatprep.subr.bf16.mxu0 0
      %1605 = vmatpush1.bf16.msra.mxu0 0
      %1606 = vmatprep.subr.bf16.mxu0 0
      %1607 = vmatpush1.bf16.msra.mxu0 0
      %1608 = vmatprep.subr.bf16.mxu0 0
      %1609 = vmatpush1.bf16.msra.mxu0 0
      %1610 = vmatprep.subr.bf16.mxu0 0
      %1611 = vmatpush1.bf16.msra.mxu0 0
      %1612 = vmatprep.subr.bf16.mxu0 0
      %1613 = vmatpush1.bf16.msra.mxu0 0
      %1614 = vmatprep.subr.bf16.mxu0 0
      %1615 = vmatpush1.bf16.msra.mxu0 0
      %1616 = vmatprep.subr.bf16.mxu0 0
      %1617 = vmatpush1.bf16.msra.mxu0 0
      %1618 = vmatprep.subr.bf16.mxu0 0
      %1619 = vmatpush1.bf16.msra.mxu0 0
      %1620 = vmatprep.mubr.bf16.mxu0 0
      %1621 = vmatmul.mubr.bf16.gmra.mrb[0].mxu0 %v1522
      %v1622 = vpop.f32.mrb[0].mxu0
      %v1623 = vadd.f32 0.0, %v1622
      %v1624 = vpop.f32.mrb[0].mxu0
      %v1625 = vpop.f32.mrb[0].mxu0
      %v1626 = vadd.f32 0.0, %v1625
      %v1627 = vpop.f32.mrb[0].mxu0
      %1628 = vdwg.mxu0
      %v1629 = vadd.f32 %v1520, %v1623
      %v1630 = vadd.f32 %v1521, %v1626
      %v1631 = vld [vmem:[%s4] sm:$0x1]
      %v1633 = vlaneseq
      %v1634 = vshrl.u32 %v1633, 7
      %v1635 = vsub.s32 0, %v1634
      %v1636 = vrot.slane %v1631, %v1635
      %v1638 = vadd.f32 %v1629, %v1636
      %v1639 = vadd.f32 %v1630, %v1636
      %v1640 = vmul.f32 %v1638, %v1638
      %v1641 = vmul.f32 %v1639, %v1639
      %v1642 = vsub.f32 0.0, %v1640
      %v1643 = vsub.f32 0.0, %v1641
      %v1644 = vmul.f32 %v1642, 1.442695
      %v1645 = vpow.pop %v1644
      %v1646 = vmul.f32 %v1643, 1.442695
      %v1647 = vpow.pop %v1646
      %v1648 = vmul.f32 %v1645, %v588
      %v1649 = vmul.f32 %v1647, %v589
      %v1652 = vrot.slane %v1648, 7
      %v1653 = vrot.slane %v1649, 7
      %v1654 = vsel %vm230, %v1652, %v1653
      %v1658 = vsel %vm230, 0.0, %v1652
      %v1659 = vsel %vm230, %v1653, 0.0
      %v1660 = vpack.c.bf16 %v1654, %v1658
      %s1661 = scalar_lea.vmem %s1, 192
      %v1662 = vld [vmem:[%s1661] sm:$0xf]
      %v1663 = vld [vmem:[%s1661 + $0x4] sm:$0xf]
      %v1664 = vld [vmem:[%s1661 + $0x8] sm:$0xf]
      %v1665 = vld [vmem:[%s1661 + $0xc] sm:$0xf]
      %v1666 = vld [vmem:[%s1661 + $0x10] sm:$0xf]
      %v1667 = vld [vmem:[%s1661 + $0x14] sm:$0xf]
      %v1668 = vld [vmem:[%s1661 + $0x18] sm:$0xf]
      %v1669 = vld [vmem:[%s1661 + $0x1c] sm:$0xf]
      %v1670 = vld [vmem:[%s1661 + $0x20] sm:$0xf]
      %v1671 = vld [vmem:[%s1661 + $0x24] sm:$0xf]
      %v1672 = vld [vmem:[%s1661 + $0x28] sm:$0xf]
      %v1673 = vld [vmem:[%s1661 + $0x2c] sm:$0xf]
      %v1674 = vld [vmem:[%s1661 + $0x30] sm:$0xf]
      %v1675 = vld [vmem:[%s1661 + $0x34] sm:$0xf]
      %v1676 = vld [vmem:[%s1661 + $0x38] sm:$0xf]
      %v1677 = vld [vmem:[%s1661 + $0x3c] sm:$0xf]
      %v1678 = vpack.c.bf16 %v1659, %v1659
      %s1679 = scalar_lea.vmem %s1, 256
      %v1680 = vld [vmem:[%s1679] sm:$0xf]
      %v1681 = vld [vmem:[%s1679 + $0x4] sm:$0xf]
      %v1682 = vld [vmem:[%s1679 + $0x8] sm:$0xf]
      %v1683 = vld [vmem:[%s1679 + $0xc] sm:$0xf]
      %v1684 = vld [vmem:[%s1679 + $0x10] sm:$0xf]
      %v1685 = vld [vmem:[%s1679 + $0x14] sm:$0xf]
      %v1686 = vld [vmem:[%s1679 + $0x18] sm:$0xf]
      %v1687 = vld [vmem:[%s1679 + $0x1c] sm:$0xf]
      %v1688 = vld [vmem:[%s1679 + $0x20] sm:$0xf]
      %v1689 = vld [vmem:[%s1679 + $0x24] sm:$0xf]
      %v1690 = vld [vmem:[%s1679 + $0x28] sm:$0xf]
      %v1691 = vld [vmem:[%s1679 + $0x2c] sm:$0xf]
      %v1692 = vld [vmem:[%s1679 + $0x30] sm:$0xf]
      %v1693 = vld [vmem:[%s1679 + $0x34] sm:$0xf]
      %v1694 = vld [vmem:[%s1679 + $0x38] sm:$0xf]
      %v1695 = vld [vmem:[%s1679 + $0x3c] sm:$0xf]
      %v1697 = vshrl.u32 %v1660, 16
      %v1699 = vshll.u32 %v1660, 16
      %v1701 = vrot.slane %v1699, 1
      %v1702 = vor.u32 %v1697, %v1701
      %v1704 = vshll.u32 %v1678, 16
      %v1706 = vrot.slane %v1704, 1
      %v1707 = vsel %vm274, %v1702, %v1706
      %v1725 = vunpack.c.l.b16 %v1680
      %v1726 = vunpack.c.l.b16 %v1681
      %v1727 = vunpack.c.l.b16 %v1682
      %v1728 = vunpack.c.l.b16 %v1683
      %v1729 = vunpack.c.l.b16 %v1684
      %v1730 = vunpack.c.l.b16 %v1685
      %v1731 = vunpack.c.l.b16 %v1686
      %v1732 = vunpack.c.l.b16 %v1687
      %v1733 = vunpack.c.l.b16 %v1688
      %v1734 = vunpack.c.l.b16 %v1689
      %v1735 = vunpack.c.l.b16 %v1690
      %v1736 = vunpack.c.l.b16 %v1691
      %v1737 = vunpack.c.l.b16 %v1692
      %v1738 = vunpack.c.l.b16 %v1693
      %v1739 = vunpack.c.l.b16 %v1694
      %v1740 = vunpack.c.l.b16 %v1695
      %v1741 = vpack.c.b16 %v1726, %v1725
      %v1742 = vpack.c.b16 %v1728, %v1727
      %v1743 = vpack.c.b16 %v1730, %v1729
      %v1744 = vpack.c.b16 %v1732, %v1731
      %v1745 = vpack.c.b16 %v1734, %v1733
      %v1746 = vpack.c.b16 %v1736, %v1735
      %v1747 = vpack.c.b16 %v1738, %v1737
      %v1748 = vpack.c.b16 %v1740, %v1739
      %1757 = vmatprep.subr.bf16.mxu0 0
      %1758 = vmatpush1.bf16.msra.mxu0 %v1741
      %1759 = vmatprep.subr.bf16.mxu0 0
      %1760 = vmatpush1.bf16.msra.mxu0 %v1742
      %1761 = vmatprep.subr.bf16.mxu0 0
      %1762 = vmatpush1.bf16.msra.mxu0 %v1743
      %1763 = vmatprep.subr.bf16.mxu0 0
      %1764 = vmatpush1.bf16.msra.mxu0 %v1744
      %1765 = vmatprep.subr.bf16.mxu0 0
      %1766 = vmatpush1.bf16.msra.mxu0 %v1745
      %1767 = vmatprep.subr.bf16.mxu0 0
      %1768 = vmatpush1.bf16.msra.mxu0 %v1746
      %1769 = vmatprep.subr.bf16.mxu0 0
      %1770 = vmatpush1.bf16.msra.mxu0 %v1747
      %1771 = vmatprep.subr.bf16.mxu0 0
      %1772 = vmatpush1.bf16.msra.mxu0 %v1748
      %1773 = vmatprep.subr.bf16.mxu0 0
      %1774 = vmatpush1.bf16.msra.mxu0 0
      %1775 = vmatprep.subr.bf16.mxu0 0
      %1776 = vmatpush1.bf16.msra.mxu0 0
      %1777 = vmatprep.subr.bf16.mxu0 0
      %1778 = vmatpush1.bf16.msra.mxu0 0
      %1779 = vmatprep.subr.bf16.mxu0 0
      %1780 = vmatpush1.bf16.msra.mxu0 0
      %1781 = vmatprep.subr.bf16.mxu0 0
      %1782 = vmatpush1.bf16.msra.mxu0 0
      %1783 = vmatprep.subr.bf16.mxu0 0
      %1784 = vmatpush1.bf16.msra.mxu0 0
      %1785 = vmatprep.subr.bf16.mxu0 0
      %1786 = vmatpush1.bf16.msra.mxu0 0
      %1787 = vmatprep.subr.bf16.mxu0 0
      %1788 = vmatpush1.bf16.msra.mxu0 0
      %1789 = vmatprep.mubr.bf16.mxu0 0
      %1790 = vmatmul.mubr.bf16.gmra.mrb[0].mxu0 %v1707
      %v1791 = vpop.f32.mrb[0].mxu0
      %v1792 = vadd.f32 0.0, %v1791
      %v1793 = vpop.f32.mrb[0].mxu0
      %v1794 = vpop.f32.mrb[0].mxu0
      %v1795 = vadd.f32 0.0, %v1794
      %v1796 = vpop.f32.mrb[0].mxu0
      %1797 = vdwg.mxu0
      %v1814 = vunpack.c.l.b16 %v1662
      %v1815 = vunpack.c.l.b16 %v1663
      %v1816 = vunpack.c.l.b16 %v1664
      %v1817 = vunpack.c.l.b16 %v1665
      %v1818 = vunpack.c.l.b16 %v1666
      %v1819 = vunpack.c.l.b16 %v1667
      %v1820 = vunpack.c.l.b16 %v1668
      %v1821 = vunpack.c.l.b16 %v1669
      %v1822 = vunpack.c.l.b16 %v1670
      %v1823 = vunpack.c.l.b16 %v1671
      %v1824 = vunpack.c.l.b16 %v1672
      %v1825 = vunpack.c.l.b16 %v1673
      %v1826 = vunpack.c.l.b16 %v1674
      %v1827 = vunpack.c.l.b16 %v1675
      %v1828 = vunpack.c.l.b16 %v1676
      %v1829 = vunpack.c.l.b16 %v1677
      %v1830 = vpack.c.b16 %v1815, %v1814
      %v1831 = vpack.c.b16 %v1817, %v1816
      %v1832 = vpack.c.b16 %v1819, %v1818
      %v1833 = vpack.c.b16 %v1821, %v1820
      %v1834 = vpack.c.b16 %v1823, %v1822
      %v1835 = vpack.c.b16 %v1825, %v1824
      %v1836 = vpack.c.b16 %v1827, %v1826
      %v1837 = vpack.c.b16 %v1829, %v1828
      %1846 = vmatprep.subr.bf16.mxu0 0
      %1847 = vmatpush1.bf16.msra.mxu0 %v1830
      %1848 = vmatprep.subr.bf16.mxu0 0
      %1849 = vmatpush1.bf16.msra.mxu0 %v1831
      %1850 = vmatprep.subr.bf16.mxu0 0
      %1851 = vmatpush1.bf16.msra.mxu0 %v1832
      %1852 = vmatprep.subr.bf16.mxu0 0
      %1853 = vmatpush1.bf16.msra.mxu0 %v1833
      %1854 = vmatprep.subr.bf16.mxu0 0
      %1855 = vmatpush1.bf16.msra.mxu0 %v1834
      %1856 = vmatprep.subr.bf16.mxu0 0
      %1857 = vmatpush1.bf16.msra.mxu0 %v1835
      %1858 = vmatprep.subr.bf16.mxu0 0
      %1859 = vmatpush1.bf16.msra.mxu0 %v1836
      %1860 = vmatprep.subr.bf16.mxu0 0
      %1861 = vmatpush1.bf16.msra.mxu0 %v1837
      %1862 = vmatprep.subr.bf16.mxu0 0
      %1863 = vmatpush1.bf16.msra.mxu0 0
      %1864 = vmatprep.subr.bf16.mxu0 0
      %1865 = vmatpush1.bf16.msra.mxu0 0
      %1866 = vmatprep.subr.bf16.mxu0 0
      %1867 = vmatpush1.bf16.msra.mxu0 0
      %1868 = vmatprep.subr.bf16.mxu0 0
      %1869 = vmatpush1.bf16.msra.mxu0 0
      %1870 = vmatprep.subr.bf16.mxu0 0
      %1871 = vmatpush1.bf16.msra.mxu0 0
      %1872 = vmatprep.subr.bf16.mxu0 0
      %1873 = vmatpush1.bf16.msra.mxu0 0
      %1874 = vmatprep.subr.bf16.mxu0 0
      %1875 = vmatpush1.bf16.msra.mxu0 0
      %1876 = vmatprep.subr.bf16.mxu0 0
      %1877 = vmatpush1.bf16.msra.mxu0 0
      %1878 = vmatprep.mubr.bf16.mxu0 0
      %1879 = vmatmul.mubr.bf16.gmra.mrb[0].mxu0 %v1660
      %v1880 = vpop.f32.mrb[0].mxu0
      %v1881 = vadd.f32 %v1792, %v1880
      %v1882 = vpop.f32.mrb[0].mxu0
      %v1883 = vpop.f32.mrb[0].mxu0
      %v1884 = vadd.f32 %v1795, %v1883
      %v1885 = vpop.f32.mrb[0].mxu0
      %1886 = vdwg.mxu0
      %s1887 = scalar_lea.vmem %s1, 320
      %v1888 = vld [vmem:[%s1887] sm:$0xf]
      %v1889 = vld [vmem:[%s1887 + $0x4] sm:$0xf]
      %v1890 = vld [vmem:[%s1887 + $0x8] sm:$0xf]
      %v1891 = vld [vmem:[%s1887 + $0xc] sm:$0xf]
      %v1892 = vld [vmem:[%s1887 + $0x10] sm:$0xf]
      %v1893 = vld [vmem:[%s1887 + $0x14] sm:$0xf]
      %v1894 = vld [vmem:[%s1887 + $0x18] sm:$0xf]
      %v1895 = vld [vmem:[%s1887 + $0x1c] sm:$0xf]
      %v1896 = vld [vmem:[%s1887 + $0x20] sm:$0xf]
      %v1897 = vld [vmem:[%s1887 + $0x24] sm:$0xf]
      %v1898 = vld [vmem:[%s1887 + $0x28] sm:$0xf]
      %v1899 = vld [vmem:[%s1887 + $0x2c] sm:$0xf]
      %v1900 = vld [vmem:[%s1887 + $0x30] sm:$0xf]
      %v1901 = vld [vmem:[%s1887 + $0x34] sm:$0xf]
      %v1902 = vld [vmem:[%s1887 + $0x38] sm:$0xf]
      %v1903 = vld [vmem:[%s1887 + $0x3c] sm:$0xf]
      %v1906 = vrot.slane %v1660, 1
      %v1907 = vrot.slane %v1678, 1
      %v1908 = vsel %vm485, %v1906, %v1907
      %v1926 = vunpack.c.l.b16 %v1888
      %v1927 = vunpack.c.l.b16 %v1889
      %v1928 = vunpack.c.l.b16 %v1890
      %v1929 = vunpack.c.l.b16 %v1891
      %v1930 = vunpack.c.l.b16 %v1892
      %v1931 = vunpack.c.l.b16 %v1893
      %v1932 = vunpack.c.l.b16 %v1894
      %v1933 = vunpack.c.l.b16 %v1895
      %v1934 = vunpack.c.l.b16 %v1896
      %v1935 = vunpack.c.l.b16 %v1897
      %v1936 = vunpack.c.l.b16 %v1898
      %v1937 = vunpack.c.l.b16 %v1899
      %v1938 = vunpack.c.l.b16 %v1900
      %v1939 = vunpack.c.l.b16 %v1901
      %v1940 = vunpack.c.l.b16 %v1902
      %v1941 = vunpack.c.l.b16 %v1903
      %v1942 = vpack.c.b16 %v1927, %v1926
      %v1943 = vpack.c.b16 %v1929, %v1928
      %v1944 = vpack.c.b16 %v1931, %v1930
      %v1945 = vpack.c.b16 %v1933, %v1932
      %v1946 = vpack.c.b16 %v1935, %v1934
      %v1947 = vpack.c.b16 %v1937, %v1936
      %v1948 = vpack.c.b16 %v1939, %v1938
      %v1949 = vpack.c.b16 %v1941, %v1940
      %1958 = vmatprep.subr.bf16.mxu0 0
      %1959 = vmatpush1.bf16.msra.mxu0 %v1942
      %1960 = vmatprep.subr.bf16.mxu0 0
      %1961 = vmatpush1.bf16.msra.mxu0 %v1943
      %1962 = vmatprep.subr.bf16.mxu0 0
      %1963 = vmatpush1.bf16.msra.mxu0 %v1944
      %1964 = vmatprep.subr.bf16.mxu0 0
      %1965 = vmatpush1.bf16.msra.mxu0 %v1945
      %1966 = vmatprep.subr.bf16.mxu0 0
      %1967 = vmatpush1.bf16.msra.mxu0 %v1946
      %1968 = vmatprep.subr.bf16.mxu0 0
      %1969 = vmatpush1.bf16.msra.mxu0 %v1947
      %1970 = vmatprep.subr.bf16.mxu0 0
      %1971 = vmatpush1.bf16.msra.mxu0 %v1948
      %1972 = vmatprep.subr.bf16.mxu0 0
      %1973 = vmatpush1.bf16.msra.mxu0 %v1949
      %1974 = vmatprep.subr.bf16.mxu0 0
      %1975 = vmatpush1.bf16.msra.mxu0 0
      %1976 = vmatprep.subr.bf16.mxu0 0
      %1977 = vmatpush1.bf16.msra.mxu0 0
      %1978 = vmatprep.subr.bf16.mxu0 0
      %1979 = vmatpush1.bf16.msra.mxu0 0
      %1980 = vmatprep.subr.bf16.mxu0 0
      %1981 = vmatpush1.bf16.msra.mxu0 0
      %1982 = vmatprep.subr.bf16.mxu0 0
      %1983 = vmatpush1.bf16.msra.mxu0 0
      %1984 = vmatprep.subr.bf16.mxu0 0
      %1985 = vmatpush1.bf16.msra.mxu0 0
      %1986 = vmatprep.subr.bf16.mxu0 0
      %1987 = vmatpush1.bf16.msra.mxu0 0
      %1988 = vmatprep.subr.bf16.mxu0 0
      %1989 = vmatpush1.bf16.msra.mxu0 0
      %1990 = vmatprep.mubr.bf16.mxu0 0
      %1991 = vmatmul.mubr.bf16.gmra.mrb[0].mxu0 %v1908
      %v1992 = vpop.f32.mrb[0].mxu0
      %v1993 = vadd.f32 0.0, %v1992
      %v1994 = vpop.f32.mrb[0].mxu0
      %v1995 = vpop.f32.mrb[0].mxu0
      %v1996 = vadd.f32 0.0, %v1995
      %v1997 = vpop.f32.mrb[0].mxu0
      %1998 = vdwg.mxu0
      %v1999 = vadd.f32 %v1881, %v1993
      %v2000 = vadd.f32 %v1884, %v1996
      %s2001 = scalar_lea.vmem %s3, 1
      %v2002 = vld [vmem:[%s2001] sm:$0x1]
      %v2004 = vlaneseq
      %v2005 = vshrl.u32 %v2004, 7
      %v2006 = vsub.s32 0, %v2005
      %v2007 = vrot.slane %v2002, %v2006
      %v2009 = vadd.f32 %v1999, %v2007
      %v2010 = vadd.f32 %v2000, %v2007
      %v2011 = vmax.f32 %v2009, 0.0
      %v2012 = vmax.f32 %v2010, 0.0
      %v2015 = vrot.slane %v2011, 4
      %v2016 = vrot.slane %v2012, 4
      %v2017 = vsel %vm594, %v2015, %v2016
      %v2021 = vsel %vm594, 0.0, %v2015
      %v2022 = vsel %vm594, %v2016, 0.0
      %v2023 = vpack.c.bf16 %v2017, %v2021
      %s2024 = scalar_lea.vmem %s2, 576
      %v2025 = vld [vmem:[%s2024] sm:$0xf]
      %v2026 = vld [vmem:[%s2024 + $0x4] sm:$0xf]
      %v2027 = vld [vmem:[%s2024 + $0x8] sm:$0xf]
      %v2028 = vld [vmem:[%s2024 + $0xc] sm:$0xf]
      %v2029 = vld [vmem:[%s2024 + $0x10] sm:$0xf]
      %v2030 = vld [vmem:[%s2024 + $0x14] sm:$0xf]
      %v2031 = vld [vmem:[%s2024 + $0x18] sm:$0xf]
      %v2032 = vld [vmem:[%s2024 + $0x1c] sm:$0xf]
      %v2033 = vld [vmem:[%s2024 + $0x20] sm:$0xf]
      %v2034 = vld [vmem:[%s2024 + $0x24] sm:$0xf]
      %v2035 = vld [vmem:[%s2024 + $0x28] sm:$0xf]
      %v2036 = vld [vmem:[%s2024 + $0x2c] sm:$0xf]
      %v2037 = vld [vmem:[%s2024 + $0x30] sm:$0xf]
      %v2038 = vld [vmem:[%s2024 + $0x34] sm:$0xf]
      %v2039 = vld [vmem:[%s2024 + $0x38] sm:$0xf]
      %v2040 = vld [vmem:[%s2024 + $0x3c] sm:$0xf]
      %v2041 = vpack.c.bf16 %v2022, %v2022
      %s2042 = scalar_lea.vmem %s2, 640
      %v2043 = vld [vmem:[%s2042] sm:$0xf]
      %v2044 = vld [vmem:[%s2042 + $0x4] sm:$0xf]
      %v2045 = vld [vmem:[%s2042 + $0x8] sm:$0xf]
      %v2046 = vld [vmem:[%s2042 + $0xc] sm:$0xf]
      %v2047 = vld [vmem:[%s2042 + $0x10] sm:$0xf]
      %v2048 = vld [vmem:[%s2042 + $0x14] sm:$0xf]
      %v2049 = vld [vmem:[%s2042 + $0x18] sm:$0xf]
      %v2050 = vld [vmem:[%s2042 + $0x1c] sm:$0xf]
      %v2051 = vld [vmem:[%s2042 + $0x20] sm:$0xf]
      %v2052 = vld [vmem:[%s2042 + $0x24] sm:$0xf]
      %v2053 = vld [vmem:[%s2042 + $0x28] sm:$0xf]
      %v2054 = vld [vmem:[%s2042 + $0x2c] sm:$0xf]
      %v2055 = vld [vmem:[%s2042 + $0x30] sm:$0xf]
      %v2056 = vld [vmem:[%s2042 + $0x34] sm:$0xf]
      %v2057 = vld [vmem:[%s2042 + $0x38] sm:$0xf]
      %v2058 = vld [vmem:[%s2042 + $0x3c] sm:$0xf]
      %v2060 = vshrl.u32 %v2023, 16
      %v2062 = vshll.u32 %v2023, 16
      %v2064 = vrot.slane %v2062, 1
      %v2065 = vor.u32 %v2060, %v2064
      %v2067 = vshll.u32 %v2041, 16
      %v2069 = vrot.slane %v2067, 1
      %v2070 = vsel %vm274, %v2065, %v2069
      %v2088 = vunpack.c.l.b16 %v2043
      %v2089 = vunpack.c.l.b16 %v2044
      %v2090 = vunpack.c.l.b16 %v2045
      %v2091 = vunpack.c.l.b16 %v2046
      %v2092 = vunpack.c.l.b16 %v2047
      %v2093 = vunpack.c.l.b16 %v2048
      %v2094 = vunpack.c.l.b16 %v2049
      %v2095 = vunpack.c.l.b16 %v2050
      %v2096 = vunpack.c.l.b16 %v2051
      %v2097 = vunpack.c.l.b16 %v2052
      %v2098 = vunpack.c.l.b16 %v2053
      %v2099 = vunpack.c.l.b16 %v2054
      %v2100 = vunpack.c.l.b16 %v2055
      %v2101 = vunpack.c.l.b16 %v2056
      %v2102 = vunpack.c.l.b16 %v2057
      %v2103 = vunpack.c.l.b16 %v2058
      %v2104 = vpack.c.b16 %v2089, %v2088
      %v2105 = vpack.c.b16 %v2091, %v2090
      %v2106 = vpack.c.b16 %v2093, %v2092
      %v2107 = vpack.c.b16 %v2095, %v2094
      %v2108 = vpack.c.b16 %v2097, %v2096
      %v2109 = vpack.c.b16 %v2099, %v2098
      %v2110 = vpack.c.b16 %v2101, %v2100
      %v2111 = vpack.c.b16 %v2103, %v2102
      %2120 = vmatprep.subr.bf16.mxu0 0
      %2121 = vmatpush1.bf16.msra.mxu0 %v2104
      %2122 = vmatprep.subr.bf16.mxu0 0
      %2123 = vmatpush1.bf16.msra.mxu0 %v2105
      %2124 = vmatprep.subr.bf16.mxu0 0
      %2125 = vmatpush1.bf16.msra.mxu0 %v2106
      %2126 = vmatprep.subr.bf16.mxu0 0
      %2127 = vmatpush1.bf16.msra.mxu0 %v2107
      %2128 = vmatprep.subr.bf16.mxu0 0
      %2129 = vmatpush1.bf16.msra.mxu0 %v2108
      %2130 = vmatprep.subr.bf16.mxu0 0
      %2131 = vmatpush1.bf16.msra.mxu0 %v2109
      %2132 = vmatprep.subr.bf16.mxu0 0
      %2133 = vmatpush1.bf16.msra.mxu0 %v2110
      %2134 = vmatprep.subr.bf16.mxu0 0
      %2135 = vmatpush1.bf16.msra.mxu0 %v2111
      %2136 = vmatprep.subr.bf16.mxu0 0
      %2137 = vmatpush1.bf16.msra.mxu0 0
      %2138 = vmatprep.subr.bf16.mxu0 0
      %2139 = vmatpush1.bf16.msra.mxu0 0
      %2140 = vmatprep.subr.bf16.mxu0 0
      %2141 = vmatpush1.bf16.msra.mxu0 0
      %2142 = vmatprep.subr.bf16.mxu0 0
      %2143 = vmatpush1.bf16.msra.mxu0 0
      %2144 = vmatprep.subr.bf16.mxu0 0
      %2145 = vmatpush1.bf16.msra.mxu0 0
      %2146 = vmatprep.subr.bf16.mxu0 0
      %2147 = vmatpush1.bf16.msra.mxu0 0
      %2148 = vmatprep.subr.bf16.mxu0 0
      %2149 = vmatpush1.bf16.msra.mxu0 0
      %2150 = vmatprep.subr.bf16.mxu0 0
      %2151 = vmatpush1.bf16.msra.mxu0 0
      %2152 = vmatprep.mubr.bf16.mxu0 0
      %2153 = vmatmul.mubr.bf16.gmra.mrb[0].mxu0 %v2070
      %v2154 = vpop.f32.mrb[0].mxu0
      %v2155 = vadd.f32 0.0, %v2154
      %v2156 = vpop.f32.mrb[0].mxu0
      %v2157 = vpop.f32.mrb[0].mxu0
      %v2158 = vadd.f32 0.0, %v2157
      %v2159 = vpop.f32.mrb[0].mxu0
      %2160 = vdwg.mxu0
      %v2177 = vunpack.c.l.b16 %v2025
      %v2178 = vunpack.c.l.b16 %v2026
      %v2179 = vunpack.c.l.b16 %v2027
      %v2180 = vunpack.c.l.b16 %v2028
      %v2181 = vunpack.c.l.b16 %v2029
      %v2182 = vunpack.c.l.b16 %v2030
      %v2183 = vunpack.c.l.b16 %v2031
      %v2184 = vunpack.c.l.b16 %v2032
      %v2185 = vunpack.c.l.b16 %v2033
      %v2186 = vunpack.c.l.b16 %v2034
      %v2187 = vunpack.c.l.b16 %v2035
      %v2188 = vunpack.c.l.b16 %v2036
      %v2189 = vunpack.c.l.b16 %v2037
      %v2190 = vunpack.c.l.b16 %v2038
      %v2191 = vunpack.c.l.b16 %v2039
      %v2192 = vunpack.c.l.b16 %v2040
      %v2193 = vpack.c.b16 %v2178, %v2177
      %v2194 = vpack.c.b16 %v2180, %v2179
      %v2195 = vpack.c.b16 %v2182, %v2181
      %v2196 = vpack.c.b16 %v2184, %v2183
      %v2197 = vpack.c.b16 %v2186, %v2185
      %v2198 = vpack.c.b16 %v2188, %v2187
      %v2199 = vpack.c.b16 %v2190, %v2189
      %v2200 = vpack.c.b16 %v2192, %v2191
      %2209 = vmatprep.subr.bf16.mxu0 0
      %2210 = vmatpush1.bf16.msra.mxu0 %v2193
      %2211 = vmatprep.subr.bf16.mxu0 0
      %2212 = vmatpush1.bf16.msra.mxu0 %v2194
      %2213 = vmatprep.subr.bf16.mxu0 0
      %2214 = vmatpush1.bf16.msra.mxu0 %v2195
      %2215 = vmatprep.subr.bf16.mxu0 0
      %2216 = vmatpush1.bf16.msra.mxu0 %v2196
      %2217 = vmatprep.subr.bf16.mxu0 0
      %2218 = vmatpush1.bf16.msra.mxu0 %v2197
      %2219 = vmatprep.subr.bf16.mxu0 0
      %2220 = vmatpush1.bf16.msra.mxu0 %v2198
      %2221 = vmatprep.subr.bf16.mxu0 0
      %2222 = vmatpush1.bf16.msra.mxu0 %v2199
      %2223 = vmatprep.subr.bf16.mxu0 0
      %2224 = vmatpush1.bf16.msra.mxu0 %v2200
      %2225 = vmatprep.subr.bf16.mxu0 0
      %2226 = vmatpush1.bf16.msra.mxu0 0
      %2227 = vmatprep.subr.bf16.mxu0 0
      %2228 = vmatpush1.bf16.msra.mxu0 0
      %2229 = vmatprep.subr.bf16.mxu0 0
      %2230 = vmatpush1.bf16.msra.mxu0 0
      %2231 = vmatprep.subr.bf16.mxu0 0
      %2232 = vmatpush1.bf16.msra.mxu0 0
      %2233 = vmatprep.subr.bf16.mxu0 0
      %2234 = vmatpush1.bf16.msra.mxu0 0
      %2235 = vmatprep.subr.bf16.mxu0 0
      %2236 = vmatpush1.bf16.msra.mxu0 0
      %2237 = vmatprep.subr.bf16.mxu0 0
      %2238 = vmatpush1.bf16.msra.mxu0 0
      %2239 = vmatprep.subr.bf16.mxu0 0
      %2240 = vmatpush1.bf16.msra.mxu0 0
      %2241 = vmatprep.mubr.bf16.mxu0 0
      %2242 = vmatmul.mubr.bf16.gmra.mrb[0].mxu0 %v2023
      %v2243 = vpop.f32.mrb[0].mxu0
      %v2244 = vadd.f32 %v2155, %v2243
      %v2245 = vpop.f32.mrb[0].mxu0
      %v2246 = vpop.f32.mrb[0].mxu0
      %v2247 = vadd.f32 %v2158, %v2246
      %v2248 = vpop.f32.mrb[0].mxu0
      %2249 = vdwg.mxu0
      %s2250 = scalar_lea.vmem %s2, 704
      %v2251 = vld [vmem:[%s2250] sm:$0xf]
      %v2252 = vld [vmem:[%s2250 + $0x4] sm:$0xf]
      %v2253 = vld [vmem:[%s2250 + $0x8] sm:$0xf]
      %v2254 = vld [vmem:[%s2250 + $0xc] sm:$0xf]
      %v2255 = vld [vmem:[%s2250 + $0x10] sm:$0xf]
      %v2256 = vld [vmem:[%s2250 + $0x14] sm:$0xf]
      %v2257 = vld [vmem:[%s2250 + $0x18] sm:$0xf]
      %v2258 = vld [vmem:[%s2250 + $0x1c] sm:$0xf]
      %v2259 = vld [vmem:[%s2250 + $0x20] sm:$0xf]
      %v2260 = vld [vmem:[%s2250 + $0x24] sm:$0xf]
      %v2261 = vld [vmem:[%s2250 + $0x28] sm:$0xf]
      %v2262 = vld [vmem:[%s2250 + $0x2c] sm:$0xf]
      %v2263 = vld [vmem:[%s2250 + $0x30] sm:$0xf]
      %v2264 = vld [vmem:[%s2250 + $0x34] sm:$0xf]
      %v2265 = vld [vmem:[%s2250 + $0x38] sm:$0xf]
      %v2266 = vld [vmem:[%s2250 + $0x3c] sm:$0xf]
      %v2269 = vrot.slane %v2023, 1
      %v2270 = vrot.slane %v2041, 1
      %v2271 = vsel %vm485, %v2269, %v2270
      %v2289 = vunpack.c.l.b16 %v2251
      %v2290 = vunpack.c.l.b16 %v2252
      %v2291 = vunpack.c.l.b16 %v2253
      %v2292 = vunpack.c.l.b16 %v2254
      %v2293 = vunpack.c.l.b16 %v2255
      %v2294 = vunpack.c.l.b16 %v2256
      %v2295 = vunpack.c.l.b16 %v2257
      %v2296 = vunpack.c.l.b16 %v2258
      %v2297 = vunpack.c.l.b16 %v2259
      %v2298 = vunpack.c.l.b16 %v2260
      %v2299 = vunpack.c.l.b16 %v2261
      %v2300 = vunpack.c.l.b16 %v2262
      %v2301 = vunpack.c.l.b16 %v2263
      %v2302 = vunpack.c.l.b16 %v2264
      %v2303 = vunpack.c.l.b16 %v2265
      %v2304 = vunpack.c.l.b16 %v2266
      %v2305 = vpack.c.b16 %v2290, %v2289
      %v2306 = vpack.c.b16 %v2292, %v2291
      %v2307 = vpack.c.b16 %v2294, %v2293
      %v2308 = vpack.c.b16 %v2296, %v2295
      %v2309 = vpack.c.b16 %v2298, %v2297
      %v2310 = vpack.c.b16 %v2300, %v2299
      %v2311 = vpack.c.b16 %v2302, %v2301
      %v2312 = vpack.c.b16 %v2304, %v2303
      %2321 = vmatprep.subr.bf16.mxu0 0
      %2322 = vmatpush1.bf16.msra.mxu0 %v2305
      %2323 = vmatprep.subr.bf16.mxu0 0
      %2324 = vmatpush1.bf16.msra.mxu0 %v2306
      %2325 = vmatprep.subr.bf16.mxu0 0
      %2326 = vmatpush1.bf16.msra.mxu0 %v2307
      %2327 = vmatprep.subr.bf16.mxu0 0
      %2328 = vmatpush1.bf16.msra.mxu0 %v2308
      %2329 = vmatprep.subr.bf16.mxu0 0
      %2330 = vmatpush1.bf16.msra.mxu0 %v2309
      %2331 = vmatprep.subr.bf16.mxu0 0
      %2332 = vmatpush1.bf16.msra.mxu0 %v2310
      %2333 = vmatprep.subr.bf16.mxu0 0
      %2334 = vmatpush1.bf16.msra.mxu0 %v2311
      %2335 = vmatprep.subr.bf16.mxu0 0
      %2336 = vmatpush1.bf16.msra.mxu0 %v2312
      %2337 = vmatprep.subr.bf16.mxu0 0
      %2338 = vmatpush1.bf16.msra.mxu0 0
      %2339 = vmatprep.subr.bf16.mxu0 0
      %2340 = vmatpush1.bf16.msra.mxu0 0
      %2341 = vmatprep.subr.bf16.mxu0 0
      %2342 = vmatpush1.bf16.msra.mxu0 0
      %2343 = vmatprep.subr.bf16.mxu0 0
      %2344 = vmatpush1.bf16.msra.mxu0 0
      %2345 = vmatprep.subr.bf16.mxu0 0
      %2346 = vmatpush1.bf16.msra.mxu0 0
      %2347 = vmatprep.subr.bf16.mxu0 0
      %2348 = vmatpush1.bf16.msra.mxu0 0
      %2349 = vmatprep.subr.bf16.mxu0 0
      %2350 = vmatpush1.bf16.msra.mxu0 0
      %2351 = vmatprep.subr.bf16.mxu0 0
      %2352 = vmatpush1.bf16.msra.mxu0 0
      %2353 = vmatprep.mubr.bf16.mxu0 0
      %2354 = vmatmul.mubr.bf16.gmra.mrb[0].mxu0 %v2271
      %v2355 = vpop.f32.mrb[0].mxu0
      %v2356 = vadd.f32 0.0, %v2355
      %v2357 = vpop.f32.mrb[0].mxu0
      %v2358 = vpop.f32.mrb[0].mxu0
      %v2359 = vadd.f32 0.0, %v2358
      %v2360 = vpop.f32.mrb[0].mxu0
      %2361 = vdwg.mxu0
      %v2362 = vadd.f32 %v2244, %v2356
      %v2363 = vadd.f32 %v2247, %v2359
      %s2364 = scalar_lea.vmem %s2, 768
      %v2365 = vld [vmem:[%s2364] sm:$0xf]
      %v2366 = vld [vmem:[%s2364 + $0x4] sm:$0xf]
      %v2367 = vld [vmem:[%s2364 + $0x8] sm:$0xf]
      %v2368 = vld [vmem:[%s2364 + $0xc] sm:$0xf]
      %v2369 = vld [vmem:[%s2364 + $0x10] sm:$0xf]
      %v2370 = vld [vmem:[%s2364 + $0x14] sm:$0xf]
      %v2371 = vld [vmem:[%s2364 + $0x18] sm:$0xf]
      %v2372 = vld [vmem:[%s2364 + $0x1c] sm:$0xf]
      %v2373 = vld [vmem:[%s2364 + $0x20] sm:$0xf]
      %v2374 = vld [vmem:[%s2364 + $0x24] sm:$0xf]
      %v2375 = vld [vmem:[%s2364 + $0x28] sm:$0xf]
      %v2376 = vld [vmem:[%s2364 + $0x2c] sm:$0xf]
      %v2377 = vld [vmem:[%s2364 + $0x30] sm:$0xf]
      %v2378 = vld [vmem:[%s2364 + $0x34] sm:$0xf]
      %v2379 = vld [vmem:[%s2364 + $0x38] sm:$0xf]
      %v2380 = vld [vmem:[%s2364 + $0x3c] sm:$0xf]
      %v2381 = vrot.slane %v2060, 1
      %v2382 = vrot.slane %v2062, 2
      %v2383 = vor.u32 %v2381, %v2382
      %v2384 = vshrl.u32 %v2041, 16
      %v2386 = vrot.slane %v2384, 1
      %v2387 = vrot.slane %v2067, 2
      %v2388 = vor.u32 %v2386, %v2387
      %v2389 = vsel %vm960, %v2383, %v2388
      %v2407 = vunpack.c.l.b16 %v2365
      %v2408 = vunpack.c.l.b16 %v2366
      %v2409 = vunpack.c.l.b16 %v2367
      %v2410 = vunpack.c.l.b16 %v2368
      %v2411 = vunpack.c.l.b16 %v2369
      %v2412 = vunpack.c.l.b16 %v2370
      %v2413 = vunpack.c.l.b16 %v2371
      %v2414 = vunpack.c.l.b16 %v2372
      %v2415 = vunpack.c.l.b16 %v2373
      %v2416 = vunpack.c.l.b16 %v2374
      %v2417 = vunpack.c.l.b16 %v2375
      %v2418 = vunpack.c.l.b16 %v2376
      %v2419 = vunpack.c.l.b16 %v2377
      %v2420 = vunpack.c.l.b16 %v2378
      %v2421 = vunpack.c.l.b16 %v2379
      %v2422 = vunpack.c.l.b16 %v2380
      %v2423 = vpack.c.b16 %v2408, %v2407
      %v2424 = vpack.c.b16 %v2410, %v2409
      %v2425 = vpack.c.b16 %v2412, %v2411
      %v2426 = vpack.c.b16 %v2414, %v2413
      %v2427 = vpack.c.b16 %v2416, %v2415
      %v2428 = vpack.c.b16 %v2418, %v2417
      %v2429 = vpack.c.b16 %v2420, %v2419
      %v2430 = vpack.c.b16 %v2422, %v2421
      %2439 = vmatprep.subr.bf16.mxu0 0
      %2440 = vmatpush1.bf16.msra.mxu0 %v2423
      %2441 = vmatprep.subr.bf16.mxu0 0
      %2442 = vmatpush1.bf16.msra.mxu0 %v2424
      %2443 = vmatprep.subr.bf16.mxu0 0
      %2444 = vmatpush1.bf16.msra.mxu0 %v2425
      %2445 = vmatprep.subr.bf16.mxu0 0
      %2446 = vmatpush1.bf16.msra.mxu0 %v2426
      %2447 = vmatprep.subr.bf16.mxu0 0
      %2448 = vmatpush1.bf16.msra.mxu0 %v2427
      %2449 = vmatprep.subr.bf16.mxu0 0
      %2450 = vmatpush1.bf16.msra.mxu0 %v2428
      %2451 = vmatprep.subr.bf16.mxu0 0
      %2452 = vmatpush1.bf16.msra.mxu0 %v2429
      %2453 = vmatprep.subr.bf16.mxu0 0
      %2454 = vmatpush1.bf16.msra.mxu0 %v2430
      %2455 = vmatprep.subr.bf16.mxu0 0
      %2456 = vmatpush1.bf16.msra.mxu0 0
      %2457 = vmatprep.subr.bf16.mxu0 0
      %2458 = vmatpush1.bf16.msra.mxu0 0
      %2459 = vmatprep.subr.bf16.mxu0 0
      %2460 = vmatpush1.bf16.msra.mxu0 0
      %2461 = vmatprep.subr.bf16.mxu0 0
      %2462 = vmatpush1.bf16.msra.mxu0 0
      %2463 = vmatprep.subr.bf16.mxu0 0
      %2464 = vmatpush1.bf16.msra.mxu0 0
      %2465 = vmatprep.subr.bf16.mxu0 0
      %2466 = vmatpush1.bf16.msra.mxu0 0
      %2467 = vmatprep.subr.bf16.mxu0 0
      %2468 = vmatpush1.bf16.msra.mxu0 0
      %2469 = vmatprep.subr.bf16.mxu0 0
      %2470 = vmatpush1.bf16.msra.mxu0 0
      %2471 = vmatprep.mubr.bf16.mxu0 0
      %2472 = vmatmul.mubr.bf16.gmra.mrb[0].mxu0 %v2389
      %v2473 = vpop.f32.mrb[0].mxu0
      %v2474 = vadd.f32 0.0, %v2473
      %v2475 = vpop.f32.mrb[0].mxu0
      %v2476 = vpop.f32.mrb[0].mxu0
      %v2477 = vadd.f32 0.0, %v2476
      %v2478 = vpop.f32.mrb[0].mxu0
      %2479 = vdwg.mxu0
      %v2480 = vadd.f32 %v2362, %v2474
      %v2481 = vadd.f32 %v2363, %v2477
      %s2482 = scalar_lea.vmem %s2, 832
      %v2483 = vld [vmem:[%s2482] sm:$0xf]
      %v2484 = vld [vmem:[%s2482 + $0x4] sm:$0xf]
      %v2485 = vld [vmem:[%s2482 + $0x8] sm:$0xf]
      %v2486 = vld [vmem:[%s2482 + $0xc] sm:$0xf]
      %v2487 = vld [vmem:[%s2482 + $0x10] sm:$0xf]
      %v2488 = vld [vmem:[%s2482 + $0x14] sm:$0xf]
      %v2489 = vld [vmem:[%s2482 + $0x18] sm:$0xf]
      %v2490 = vld [vmem:[%s2482 + $0x1c] sm:$0xf]
      %v2491 = vld [vmem:[%s2482 + $0x20] sm:$0xf]
      %v2492 = vld [vmem:[%s2482 + $0x24] sm:$0xf]
      %v2493 = vld [vmem:[%s2482 + $0x28] sm:$0xf]
      %v2494 = vld [vmem:[%s2482 + $0x2c] sm:$0xf]
      %v2495 = vld [vmem:[%s2482 + $0x30] sm:$0xf]
      %v2496 = vld [vmem:[%s2482 + $0x34] sm:$0xf]
      %v2497 = vld [vmem:[%s2482 + $0x38] sm:$0xf]
      %v2498 = vld [vmem:[%s2482 + $0x3c] sm:$0xf]
      %v2499 = vrot.slane %v2023, 2
      %v2500 = vrot.slane %v2041, 2
      %v2501 = vsel %vm1079, %v2499, %v2500
      %v2519 = vunpack.c.l.b16 %v2483
      %v2520 = vunpack.c.l.b16 %v2484
      %v2521 = vunpack.c.l.b16 %v2485
      %v2522 = vunpack.c.l.b16 %v2486
      %v2523 = vunpack.c.l.b16 %v2487
      %v2524 = vunpack.c.l.b16 %v2488
      %v2525 = vunpack.c.l.b16 %v2489
      %v2526 = vunpack.c.l.b16 %v2490
      %v2527 = vunpack.c.l.b16 %v2491
      %v2528 = vunpack.c.l.b16 %v2492
      %v2529 = vunpack.c.l.b16 %v2493
      %v2530 = vunpack.c.l.b16 %v2494
      %v2531 = vunpack.c.l.b16 %v2495
      %v2532 = vunpack.c.l.b16 %v2496
      %v2533 = vunpack.c.l.b16 %v2497
      %v2534 = vunpack.c.l.b16 %v2498
      %v2535 = vpack.c.b16 %v2520, %v2519
      %v2536 = vpack.c.b16 %v2522, %v2521
      %v2537 = vpack.c.b16 %v2524, %v2523
      %v2538 = vpack.c.b16 %v2526, %v2525
      %v2539 = vpack.c.b16 %v2528, %v2527
      %v2540 = vpack.c.b16 %v2530, %v2529
      %v2541 = vpack.c.b16 %v2532, %v2531
      %v2542 = vpack.c.b16 %v2534, %v2533
      %2551 = vmatprep.subr.bf16.mxu0 0
      %2552 = vmatpush1.bf16.msra.mxu0 %v2535
      %2553 = vmatprep.subr.bf16.mxu0 0
      %2554 = vmatpush1.bf16.msra.mxu0 %v2536
      %2555 = vmatprep.subr.bf16.mxu0 0
      %2556 = vmatpush1.bf16.msra.mxu0 %v2537
      %2557 = vmatprep.subr.bf16.mxu0 0
      %2558 = vmatpush1.bf16.msra.mxu0 %v2538
      %2559 = vmatprep.subr.bf16.mxu0 0
      %2560 = vmatpush1.bf16.msra.mxu0 %v2539
      %2561 = vmatprep.subr.bf16.mxu0 0
      %2562 = vmatpush1.bf16.msra.mxu0 %v2540
      %2563 = vmatprep.subr.bf16.mxu0 0
      %2564 = vmatpush1.bf16.msra.mxu0 %v2541
      %2565 = vmatprep.subr.bf16.mxu0 0
      %2566 = vmatpush1.bf16.msra.mxu0 %v2542
      %2567 = vmatprep.subr.bf16.mxu0 0
      %2568 = vmatpush1.bf16.msra.mxu0 0
      %2569 = vmatprep.subr.bf16.mxu0 0
      %2570 = vmatpush1.bf16.msra.mxu0 0
      %2571 = vmatprep.subr.bf16.mxu0 0
      %2572 = vmatpush1.bf16.msra.mxu0 0
      %2573 = vmatprep.subr.bf16.mxu0 0
      %2574 = vmatpush1.bf16.msra.mxu0 0
      %2575 = vmatprep.subr.bf16.mxu0 0
      %2576 = vmatpush1.bf16.msra.mxu0 0
      %2577 = vmatprep.subr.bf16.mxu0 0
      %2578 = vmatpush1.bf16.msra.mxu0 0
      %2579 = vmatprep.subr.bf16.mxu0 0
      %2580 = vmatpush1.bf16.msra.mxu0 0
      %2581 = vmatprep.subr.bf16.mxu0 0
      %2582 = vmatpush1.bf16.msra.mxu0 0
      %2583 = vmatprep.mubr.bf16.mxu0 0
      %2584 = vmatmul.mubr.bf16.gmra.mrb[0].mxu0 %v2501
      %v2585 = vpop.f32.mrb[0].mxu0
      %v2586 = vadd.f32 0.0, %v2585
      %v2587 = vpop.f32.mrb[0].mxu0
      %v2588 = vpop.f32.mrb[0].mxu0
      %v2589 = vadd.f32 0.0, %v2588
      %v2590 = vpop.f32.mrb[0].mxu0
      %2591 = vdwg.mxu0
      %v2592 = vadd.f32 %v2480, %v2586
      %v2593 = vadd.f32 %v2481, %v2589
      %s2594 = scalar_lea.vmem %s2, 896
      %v2595 = vld [vmem:[%s2594] sm:$0xf]
      %v2596 = vld [vmem:[%s2594 + $0x4] sm:$0xf]
      %v2597 = vld [vmem:[%s2594 + $0x8] sm:$0xf]
      %v2598 = vld [vmem:[%s2594 + $0xc] sm:$0xf]
      %v2599 = vld [vmem:[%s2594 + $0x10] sm:$0xf]
      %v2600 = vld [vmem:[%s2594 + $0x14] sm:$0xf]
      %v2601 = vld [vmem:[%s2594 + $0x18] sm:$0xf]
      %v2602 = vld [vmem:[%s2594 + $0x1c] sm:$0xf]
      %v2603 = vld [vmem:[%s2594 + $0x20] sm:$0xf]
      %v2604 = vld [vmem:[%s2594 + $0x24] sm:$0xf]
      %v2605 = vld [vmem:[%s2594 + $0x28] sm:$0xf]
      %v2606 = vld [vmem:[%s2594 + $0x2c] sm:$0xf]
      %v2607 = vld [vmem:[%s2594 + $0x30] sm:$0xf]
      %v2608 = vld [vmem:[%s2594 + $0x34] sm:$0xf]
      %v2609 = vld [vmem:[%s2594 + $0x38] sm:$0xf]
      %v2610 = vld [vmem:[%s2594 + $0x3c] sm:$0xf]
      %v2611 = vrot.slane %v2060, 2
      %v2612 = vrot.slane %v2062, 3
      %v2613 = vor.u32 %v2611, %v2612
      %v2614 = vrot.slane %v2384, 2
      %v2615 = vrot.slane %v2067, 3
      %v2616 = vor.u32 %v2614, %v2615
      %v2617 = vsel %vm1192, %v2613, %v2616
      %v2635 = vunpack.c.l.b16 %v2595
      %v2636 = vunpack.c.l.b16 %v2596
      %v2637 = vunpack.c.l.b16 %v2597
      %v2638 = vunpack.c.l.b16 %v2598
      %v2639 = vunpack.c.l.b16 %v2599
      %v2640 = vunpack.c.l.b16 %v2600
      %v2641 = vunpack.c.l.b16 %v2601
      %v2642 = vunpack.c.l.b16 %v2602
      %v2643 = vunpack.c.l.b16 %v2603
      %v2644 = vunpack.c.l.b16 %v2604
      %v2645 = vunpack.c.l.b16 %v2605
      %v2646 = vunpack.c.l.b16 %v2606
      %v2647 = vunpack.c.l.b16 %v2607
      %v2648 = vunpack.c.l.b16 %v2608
      %v2649 = vunpack.c.l.b16 %v2609
      %v2650 = vunpack.c.l.b16 %v2610
      %v2651 = vpack.c.b16 %v2636, %v2635
      %v2652 = vpack.c.b16 %v2638, %v2637
      %v2653 = vpack.c.b16 %v2640, %v2639
      %v2654 = vpack.c.b16 %v2642, %v2641
      %v2655 = vpack.c.b16 %v2644, %v2643
      %v2656 = vpack.c.b16 %v2646, %v2645
      %v2657 = vpack.c.b16 %v2648, %v2647
      %v2658 = vpack.c.b16 %v2650, %v2649
      %2667 = vmatprep.subr.bf16.mxu0 0
      %2668 = vmatpush1.bf16.msra.mxu0 %v2651
      %2669 = vmatprep.subr.bf16.mxu0 0
      %2670 = vmatpush1.bf16.msra.mxu0 %v2652
      %2671 = vmatprep.subr.bf16.mxu0 0
      %2672 = vmatpush1.bf16.msra.mxu0 %v2653
      %2673 = vmatprep.subr.bf16.mxu0 0
      %2674 = vmatpush1.bf16.msra.mxu0 %v2654
      %2675 = vmatprep.subr.bf16.mxu0 0
      %2676 = vmatpush1.bf16.msra.mxu0 %v2655
      %2677 = vmatprep.subr.bf16.mxu0 0
      %2678 = vmatpush1.bf16.msra.mxu0 %v2656
      %2679 = vmatprep.subr.bf16.mxu0 0
      %2680 = vmatpush1.bf16.msra.mxu0 %v2657
      %2681 = vmatprep.subr.bf16.mxu0 0
      %2682 = vmatpush1.bf16.msra.mxu0 %v2658
      %2683 = vmatprep.subr.bf16.mxu0 0
      %2684 = vmatpush1.bf16.msra.mxu0 0
      %2685 = vmatprep.subr.bf16.mxu0 0
      %2686 = vmatpush1.bf16.msra.mxu0 0
      %2687 = vmatprep.subr.bf16.mxu0 0
      %2688 = vmatpush1.bf16.msra.mxu0 0
      %2689 = vmatprep.subr.bf16.mxu0 0
      %2690 = vmatpush1.bf16.msra.mxu0 0
      %2691 = vmatprep.subr.bf16.mxu0 0
      %2692 = vmatpush1.bf16.msra.mxu0 0
      %2693 = vmatprep.subr.bf16.mxu0 0
      %2694 = vmatpush1.bf16.msra.mxu0 0
      %2695 = vmatprep.subr.bf16.mxu0 0
      %2696 = vmatpush1.bf16.msra.mxu0 0
      %2697 = vmatprep.subr.bf16.mxu0 0
      %2698 = vmatpush1.bf16.msra.mxu0 0
      %2699 = vmatprep.mubr.bf16.mxu0 0
      %2700 = vmatmul.mubr.bf16.gmra.mrb[0].mxu0 %v2617
      %v2701 = vpop.f32.mrb[0].mxu0
      %v2702 = vadd.f32 0.0, %v2701
      %v2703 = vpop.f32.mrb[0].mxu0
      %v2704 = vpop.f32.mrb[0].mxu0
      %v2705 = vadd.f32 0.0, %v2704
      %v2706 = vpop.f32.mrb[0].mxu0
      %2707 = vdwg.mxu0
      %v2708 = vadd.f32 %v2592, %v2702
      %v2709 = vadd.f32 %v2593, %v2705
      %s2710 = scalar_lea.vmem %s2, 960
      %v2711 = vld [vmem:[%s2710] sm:$0xf]
      %v2712 = vld [vmem:[%s2710 + $0x4] sm:$0xf]
      %v2713 = vld [vmem:[%s2710 + $0x8] sm:$0xf]
      %v2714 = vld [vmem:[%s2710 + $0xc] sm:$0xf]
      %v2715 = vld [vmem:[%s2710 + $0x10] sm:$0xf]
      %v2716 = vld [vmem:[%s2710 + $0x14] sm:$0xf]
      %v2717 = vld [vmem:[%s2710 + $0x18] sm:$0xf]
      %v2718 = vld [vmem:[%s2710 + $0x1c] sm:$0xf]
      %v2719 = vld [vmem:[%s2710 + $0x20] sm:$0xf]
      %v2720 = vld [vmem:[%s2710 + $0x24] sm:$0xf]
      %v2721 = vld [vmem:[%s2710 + $0x28] sm:$0xf]
      %v2722 = vld [vmem:[%s2710 + $0x2c] sm:$0xf]
      %v2723 = vld [vmem:[%s2710 + $0x30] sm:$0xf]
      %v2724 = vld [vmem:[%s2710 + $0x34] sm:$0xf]
      %v2725 = vld [vmem:[%s2710 + $0x38] sm:$0xf]
      %v2726 = vld [vmem:[%s2710 + $0x3c] sm:$0xf]
      %v2727 = vrot.slane %v2023, 3
      %v2728 = vrot.slane %v2041, 3
      %v2729 = vsel %vm1309, %v2727, %v2728
      %v2747 = vunpack.c.l.b16 %v2711
      %v2748 = vunpack.c.l.b16 %v2712
      %v2749 = vunpack.c.l.b16 %v2713
      %v2750 = vunpack.c.l.b16 %v2714
      %v2751 = vunpack.c.l.b16 %v2715
      %v2752 = vunpack.c.l.b16 %v2716
      %v2753 = vunpack.c.l.b16 %v2717
      %v2754 = vunpack.c.l.b16 %v2718
      %v2755 = vunpack.c.l.b16 %v2719
      %v2756 = vunpack.c.l.b16 %v2720
      %v2757 = vunpack.c.l.b16 %v2721
      %v2758 = vunpack.c.l.b16 %v2722
      %v2759 = vunpack.c.l.b16 %v2723
      %v2760 = vunpack.c.l.b16 %v2724
      %v2761 = vunpack.c.l.b16 %v2725
      %v2762 = vunpack.c.l.b16 %v2726
      %v2763 = vpack.c.b16 %v2748, %v2747
      %v2764 = vpack.c.b16 %v2750, %v2749
      %v2765 = vpack.c.b16 %v2752, %v2751
      %v2766 = vpack.c.b16 %v2754, %v2753
      %v2767 = vpack.c.b16 %v2756, %v2755
      %v2768 = vpack.c.b16 %v2758, %v2757
      %v2769 = vpack.c.b16 %v2760, %v2759
      %v2770 = vpack.c.b16 %v2762, %v2761
      %2779 = vmatprep.subr.bf16.mxu0 0
      %2780 = vmatpush1.bf16.msra.mxu0 %v2763
      %2781 = vmatprep.subr.bf16.mxu0 0
      %2782 = vmatpush1.bf16.msra.mxu0 %v2764
      %2783 = vmatprep.subr.bf16.mxu0 0
      %2784 = vmatpush1.bf16.msra.mxu0 %v2765
      %2785 = vmatprep.subr.bf16.mxu0 0
      %2786 = vmatpush1.bf16.msra.mxu0 %v2766
      %2787 = vmatprep.subr.bf16.mxu0 0
      %2788 = vmatpush1.bf16.msra.mxu0 %v2767
      %2789 = vmatprep.subr.bf16.mxu0 0
      %2790 = vmatpush1.bf16.msra.mxu0 %v2768
      %2791 = vmatprep.subr.bf16.mxu0 0
      %2792 = vmatpush1.bf16.msra.mxu0 %v2769
      %2793 = vmatprep.subr.bf16.mxu0 0
      %2794 = vmatpush1.bf16.msra.mxu0 %v2770
      %2795 = vmatprep.subr.bf16.mxu0 0
      %2796 = vmatpush1.bf16.msra.mxu0 0
      %2797 = vmatprep.subr.bf16.mxu0 0
      %2798 = vmatpush1.bf16.msra.mxu0 0
      %2799 = vmatprep.subr.bf16.mxu0 0
      %2800 = vmatpush1.bf16.msra.mxu0 0
      %2801 = vmatprep.subr.bf16.mxu0 0
      %2802 = vmatpush1.bf16.msra.mxu0 0
      %2803 = vmatprep.subr.bf16.mxu0 0
      %2804 = vmatpush1.bf16.msra.mxu0 0
      %2805 = vmatprep.subr.bf16.mxu0 0
      %2806 = vmatpush1.bf16.msra.mxu0 0
      %2807 = vmatprep.subr.bf16.mxu0 0
      %2808 = vmatpush1.bf16.msra.mxu0 0
      %2809 = vmatprep.subr.bf16.mxu0 0
      %2810 = vmatpush1.bf16.msra.mxu0 0
      %2811 = vmatprep.mubr.bf16.mxu0 0
      %2812 = vmatmul.mubr.bf16.gmra.mrb[0].mxu0 %v2729
      %v2813 = vpop.f32.mrb[0].mxu0
      %v2814 = vadd.f32 0.0, %v2813
      %v2815 = vpop.f32.mrb[0].mxu0
      %v2816 = vpop.f32.mrb[0].mxu0
      %v2817 = vadd.f32 0.0, %v2816
      %v2818 = vpop.f32.mrb[0].mxu0
      %2819 = vdwg.mxu0
      %v2820 = vadd.f32 %v2708, %v2814
      %v2821 = vadd.f32 %v2709, %v2817
      %s2822 = scalar_lea.vmem %s2, 1024
      %v2823 = vld [vmem:[%s2822] sm:$0xf]
      %v2824 = vld [vmem:[%s2822 + $0x4] sm:$0xf]
      %v2825 = vld [vmem:[%s2822 + $0x8] sm:$0xf]
      %v2826 = vld [vmem:[%s2822 + $0xc] sm:$0xf]
      %v2827 = vld [vmem:[%s2822 + $0x10] sm:$0xf]
      %v2828 = vld [vmem:[%s2822 + $0x14] sm:$0xf]
      %v2829 = vld [vmem:[%s2822 + $0x18] sm:$0xf]
      %v2830 = vld [vmem:[%s2822 + $0x1c] sm:$0xf]
      %v2831 = vld [vmem:[%s2822 + $0x20] sm:$0xf]
      %v2832 = vld [vmem:[%s2822 + $0x24] sm:$0xf]
      %v2833 = vld [vmem:[%s2822 + $0x28] sm:$0xf]
      %v2834 = vld [vmem:[%s2822 + $0x2c] sm:$0xf]
      %v2835 = vld [vmem:[%s2822 + $0x30] sm:$0xf]
      %v2836 = vld [vmem:[%s2822 + $0x34] sm:$0xf]
      %v2837 = vld [vmem:[%s2822 + $0x38] sm:$0xf]
      %v2838 = vld [vmem:[%s2822 + $0x3c] sm:$0xf]
      %v2839 = vrot.slane %v2060, 3
      %v2840 = vrot.slane %v2062, 4
      %v2841 = vor.u32 %v2839, %v2840
      %v2842 = vrot.slane %v2384, 3
      %v2843 = vrot.slane %v2067, 4
      %v2844 = vor.u32 %v2842, %v2843
      %v2845 = vsel %vm1422, %v2841, %v2844
      %v2863 = vunpack.c.l.b16 %v2823
      %v2864 = vunpack.c.l.b16 %v2824
      %v2865 = vunpack.c.l.b16 %v2825
      %v2866 = vunpack.c.l.b16 %v2826
      %v2867 = vunpack.c.l.b16 %v2827
      %v2868 = vunpack.c.l.b16 %v2828
      %v2869 = vunpack.c.l.b16 %v2829
      %v2870 = vunpack.c.l.b16 %v2830
      %v2871 = vunpack.c.l.b16 %v2831
      %v2872 = vunpack.c.l.b16 %v2832
      %v2873 = vunpack.c.l.b16 %v2833
      %v2874 = vunpack.c.l.b16 %v2834
      %v2875 = vunpack.c.l.b16 %v2835
      %v2876 = vunpack.c.l.b16 %v2836
      %v2877 = vunpack.c.l.b16 %v2837
      %v2878 = vunpack.c.l.b16 %v2838
      %v2879 = vpack.c.b16 %v2864, %v2863
      %v2880 = vpack.c.b16 %v2866, %v2865
      %v2881 = vpack.c.b16 %v2868, %v2867
      %v2882 = vpack.c.b16 %v2870, %v2869
      %v2883 = vpack.c.b16 %v2872, %v2871
      %v2884 = vpack.c.b16 %v2874, %v2873
      %v2885 = vpack.c.b16 %v2876, %v2875
      %v2886 = vpack.c.b16 %v2878, %v2877
      %2895 = vmatprep.subr.bf16.mxu0 0
      %2896 = vmatpush1.bf16.msra.mxu0 %v2879
      %2897 = vmatprep.subr.bf16.mxu0 0
      %2898 = vmatpush1.bf16.msra.mxu0 %v2880
      %2899 = vmatprep.subr.bf16.mxu0 0
      %2900 = vmatpush1.bf16.msra.mxu0 %v2881
      %2901 = vmatprep.subr.bf16.mxu0 0
      %2902 = vmatpush1.bf16.msra.mxu0 %v2882
      %2903 = vmatprep.subr.bf16.mxu0 0
      %2904 = vmatpush1.bf16.msra.mxu0 %v2883
      %2905 = vmatprep.subr.bf16.mxu0 0
      %2906 = vmatpush1.bf16.msra.mxu0 %v2884
      %2907 = vmatprep.subr.bf16.mxu0 0
      %2908 = vmatpush1.bf16.msra.mxu0 %v2885
      %2909 = vmatprep.subr.bf16.mxu0 0
      %2910 = vmatpush1.bf16.msra.mxu0 %v2886
      %2911 = vmatprep.subr.bf16.mxu0 0
      %2912 = vmatpush1.bf16.msra.mxu0 0
      %2913 = vmatprep.subr.bf16.mxu0 0
      %2914 = vmatpush1.bf16.msra.mxu0 0
      %2915 = vmatprep.subr.bf16.mxu0 0
      %2916 = vmatpush1.bf16.msra.mxu0 0
      %2917 = vmatprep.subr.bf16.mxu0 0
      %2918 = vmatpush1.bf16.msra.mxu0 0
      %2919 = vmatprep.subr.bf16.mxu0 0
      %2920 = vmatpush1.bf16.msra.mxu0 0
      %2921 = vmatprep.subr.bf16.mxu0 0
      %2922 = vmatpush1.bf16.msra.mxu0 0
      %2923 = vmatprep.subr.bf16.mxu0 0
      %2924 = vmatpush1.bf16.msra.mxu0 0
      %2925 = vmatprep.subr.bf16.mxu0 0
      %2926 = vmatpush1.bf16.msra.mxu0 0
      %2927 = vmatprep.mubr.bf16.mxu0 0
      %2928 = vmatmul.mubr.bf16.gmra.mrb[0].mxu0 %v2845
      %v2929 = vpop.f32.mrb[0].mxu0
      %v2930 = vadd.f32 0.0, %v2929
      %v2931 = vpop.f32.mrb[0].mxu0
      %v2932 = vpop.f32.mrb[0].mxu0
      %v2933 = vadd.f32 0.0, %v2932
      %v2934 = vpop.f32.mrb[0].mxu0
      %2935 = vdwg.mxu0
      %v2936 = vadd.f32 %v2820, %v2930
      %v2937 = vadd.f32 %v2821, %v2933
      %v2938 = vpack.c.bf16 %v2022, %v2017
      %s2939 = scalar_lea.vmem %s2, 1088
      %v2940 = vld [vmem:[%s2939] sm:$0xf]
      %v2941 = vld [vmem:[%s2939 + $0x4] sm:$0xf]
      %v2942 = vld [vmem:[%s2939 + $0x8] sm:$0xf]
      %v2943 = vld [vmem:[%s2939 + $0xc] sm:$0xf]
      %v2944 = vld [vmem:[%s2939 + $0x10] sm:$0xf]
      %v2945 = vld [vmem:[%s2939 + $0x14] sm:$0xf]
      %v2946 = vld [vmem:[%s2939 + $0x18] sm:$0xf]
      %v2947 = vld [vmem:[%s2939 + $0x1c] sm:$0xf]
      %v2948 = vld [vmem:[%s2939 + $0x20] sm:$0xf]
      %v2949 = vld [vmem:[%s2939 + $0x24] sm:$0xf]
      %v2950 = vld [vmem:[%s2939 + $0x28] sm:$0xf]
      %v2951 = vld [vmem:[%s2939 + $0x2c] sm:$0xf]
      %v2952 = vld [vmem:[%s2939 + $0x30] sm:$0xf]
      %v2953 = vld [vmem:[%s2939 + $0x34] sm:$0xf]
      %v2954 = vld [vmem:[%s2939 + $0x38] sm:$0xf]
      %v2955 = vld [vmem:[%s2939 + $0x3c] sm:$0xf]
      %v2972 = vunpack.c.l.b16 %v2940
      %v2973 = vunpack.c.l.b16 %v2941
      %v2974 = vunpack.c.l.b16 %v2942
      %v2975 = vunpack.c.l.b16 %v2943
      %v2976 = vunpack.c.l.b16 %v2944
      %v2977 = vunpack.c.l.b16 %v2945
      %v2978 = vunpack.c.l.b16 %v2946
      %v2979 = vunpack.c.l.b16 %v2947
      %v2980 = vunpack.c.l.b16 %v2948
      %v2981 = vunpack.c.l.b16 %v2949
      %v2982 = vunpack.c.l.b16 %v2950
      %v2983 = vunpack.c.l.b16 %v2951
      %v2984 = vunpack.c.l.b16 %v2952
      %v2985 = vunpack.c.l.b16 %v2953
      %v2986 = vunpack.c.l.b16 %v2954
      %v2987 = vunpack.c.l.b16 %v2955
      %v2988 = vpack.c.b16 %v2973, %v2972
      %v2989 = vpack.c.b16 %v2975, %v2974
      %v2990 = vpack.c.b16 %v2977, %v2976
      %v2991 = vpack.c.b16 %v2979, %v2978
      %v2992 = vpack.c.b16 %v2981, %v2980
      %v2993 = vpack.c.b16 %v2983, %v2982
      %v2994 = vpack.c.b16 %v2985, %v2984
      %v2995 = vpack.c.b16 %v2987, %v2986
      %3004 = vmatprep.subr.bf16.mxu0 0
      %3005 = vmatpush1.bf16.msra.mxu0 %v2988
      %3006 = vmatprep.subr.bf16.mxu0 0
      %3007 = vmatpush1.bf16.msra.mxu0 %v2989
      %3008 = vmatprep.subr.bf16.mxu0 0
      %3009 = vmatpush1.bf16.msra.mxu0 %v2990
      %3010 = vmatprep.subr.bf16.mxu0 0
      %3011 = vmatpush1.bf16.msra.mxu0 %v2991
      %3012 = vmatprep.subr.bf16.mxu0 0
      %3013 = vmatpush1.bf16.msra.mxu0 %v2992
      %3014 = vmatprep.subr.bf16.mxu0 0
      %3015 = vmatpush1.bf16.msra.mxu0 %v2993
      %3016 = vmatprep.subr.bf16.mxu0 0
      %3017 = vmatpush1.bf16.msra.mxu0 %v2994
      %3018 = vmatprep.subr.bf16.mxu0 0
      %3019 = vmatpush1.bf16.msra.mxu0 %v2995
      %3020 = vmatprep.subr.bf16.mxu0 0
      %3021 = vmatpush1.bf16.msra.mxu0 0
      %3022 = vmatprep.subr.bf16.mxu0 0
      %3023 = vmatpush1.bf16.msra.mxu0 0
      %3024 = vmatprep.subr.bf16.mxu0 0
      %3025 = vmatpush1.bf16.msra.mxu0 0
      %3026 = vmatprep.subr.bf16.mxu0 0
      %3027 = vmatpush1.bf16.msra.mxu0 0
      %3028 = vmatprep.subr.bf16.mxu0 0
      %3029 = vmatpush1.bf16.msra.mxu0 0
      %3030 = vmatprep.subr.bf16.mxu0 0
      %3031 = vmatpush1.bf16.msra.mxu0 0
      %3032 = vmatprep.subr.bf16.mxu0 0
      %3033 = vmatpush1.bf16.msra.mxu0 0
      %3034 = vmatprep.subr.bf16.mxu0 0
      %3035 = vmatpush1.bf16.msra.mxu0 0
      %3036 = vmatprep.mubr.bf16.mxu0 0
      %3037 = vmatmul.mubr.bf16.gmra.mrb[0].mxu0 %v2938
      %v3038 = vpop.f32.mrb[0].mxu0
      %v3039 = vadd.f32 0.0, %v3038
      %v3040 = vpop.f32.mrb[0].mxu0
      %v3041 = vpop.f32.mrb[0].mxu0
      %v3042 = vadd.f32 0.0, %v3041
      %v3043 = vpop.f32.mrb[0].mxu0
      %3044 = vdwg.mxu0
      %v3045 = vadd.f32 %v2936, %v3039
      %v3046 = vadd.f32 %v2937, %v3042
      %s3047 = scalar_lea.vmem %s4, 1
      %v3048 = vld [vmem:[%s3047] sm:$0x1]
      %v3050 = vlaneseq
      %v3051 = vshrl.u32 %v3050, 7
      %v3052 = vsub.s32 0, %v3051
      %v3053 = vrot.slane %v3048, %v3052
      %v3055 = vadd.f32 %v3045, %v3053
      %v3056 = vadd.f32 %v3046, %v3053
      %v3057 = vmul.f32 %v3055, %v3055
      %v3058 = vmul.f32 %v3056, %v3056
      %v3059 = vsub.f32 0.0, %v3057
      %v3060 = vsub.f32 0.0, %v3058
      %v3061 = vmul.f32 %v3059, 1.442695
      %v3062 = vpow.pop %v3061
      %v3063 = vmul.f32 %v3060, 1.442695
      %v3064 = vpow.pop %v3063
      %v3065 = vmul.f32 %v3062, %v2009
      %v3066 = vmul.f32 %v3064, %v2010
      %v3069 = vrot.slane %v3065, 7
      %v3070 = vrot.slane %v3066, 7
      %v3071 = vsel %vm230, %v3069, %v3070
      %v3075 = vsel %vm230, 0.0, %v3069
      %v3076 = vsel %vm230, %v3070, 0.0
      %v3077 = vpack.c.bf16 %v3071, %v3075
      %s3078 = scalar_lea.vmem %s1, 384
      %v3079 = vld [vmem:[%s3078] sm:$0xf]
      %v3080 = vld [vmem:[%s3078 + $0x4] sm:$0xf]
      %v3081 = vld [vmem:[%s3078 + $0x8] sm:$0xf]
      %v3082 = vld [vmem:[%s3078 + $0xc] sm:$0xf]
      %v3083 = vld [vmem:[%s3078 + $0x10] sm:$0xf]
      %v3084 = vld [vmem:[%s3078 + $0x14] sm:$0xf]
      %v3085 = vld [vmem:[%s3078 + $0x18] sm:$0xf]
      %v3086 = vld [vmem:[%s3078 + $0x1c] sm:$0xf]
      %v3087 = vld [vmem:[%s3078 + $0x20] sm:$0xf]
      %v3088 = vld [vmem:[%s3078 + $0x24] sm:$0xf]
      %v3089 = vld [vmem:[%s3078 + $0x28] sm:$0xf]
      %v3090 = vld [vmem:[%s3078 + $0x2c] sm:$0xf]
      %v3091 = vld [vmem:[%s3078 + $0x30] sm:$0xf]
      %v3092 = vld [vmem:[%s3078 + $0x34] sm:$0xf]
      %v3093 = vld [vmem:[%s3078 + $0x38] sm:$0xf]
      %v3094 = vld [vmem:[%s3078 + $0x3c] sm:$0xf]
      %v3095 = vpack.c.bf16 %v3076, %v3076
      %s3096 = scalar_lea.vmem %s1, 448
      %v3097 = vld [vmem:[%s3096] sm:$0xf]
      %v3098 = vld [vmem:[%s3096 + $0x4] sm:$0xf]
      %v3099 = vld [vmem:[%s3096 + $0x8] sm:$0xf]
      %v3100 = vld [vmem:[%s3096 + $0xc] sm:$0xf]
      %v3101 = vld [vmem:[%s3096 + $0x10] sm:$0xf]
      %v3102 = vld [vmem:[%s3096 + $0x14] sm:$0xf]
      %v3103 = vld [vmem:[%s3096 + $0x18] sm:$0xf]
      %v3104 = vld [vmem:[%s3096 + $0x1c] sm:$0xf]
      %v3105 = vld [vmem:[%s3096 + $0x20] sm:$0xf]
      %v3106 = vld [vmem:[%s3096 + $0x24] sm:$0xf]
      %v3107 = vld [vmem:[%s3096 + $0x28] sm:$0xf]
      %v3108 = vld [vmem:[%s3096 + $0x2c] sm:$0xf]
      %v3109 = vld [vmem:[%s3096 + $0x30] sm:$0xf]
      %v3110 = vld [vmem:[%s3096 + $0x34] sm:$0xf]
      %v3111 = vld [vmem:[%s3096 + $0x38] sm:$0xf]
      %v3112 = vld [vmem:[%s3096 + $0x3c] sm:$0xf]
      %v3114 = vshrl.u32 %v3077, 16
      %v3116 = vshll.u32 %v3077, 16
      %v3118 = vrot.slane %v3116, 1
      %v3119 = vor.u32 %v3114, %v3118
      %v3121 = vshll.u32 %v3095, 16
      %v3123 = vrot.slane %v3121, 1
      %v3124 = vsel %vm274, %v3119, %v3123
      %v3142 = vunpack.c.l.b16 %v3097
      %v3143 = vunpack.c.l.b16 %v3098
      %v3144 = vunpack.c.l.b16 %v3099
      %v3145 = vunpack.c.l.b16 %v3100
      %v3146 = vunpack.c.l.b16 %v3101
      %v3147 = vunpack.c.l.b16 %v3102
      %v3148 = vunpack.c.l.b16 %v3103
      %v3149 = vunpack.c.l.b16 %v3104
      %v3150 = vunpack.c.l.b16 %v3105
      %v3151 = vunpack.c.l.b16 %v3106
      %v3152 = vunpack.c.l.b16 %v3107
      %v3153 = vunpack.c.l.b16 %v3108
      %v3154 = vunpack.c.l.b16 %v3109
      %v3155 = vunpack.c.l.b16 %v3110
      %v3156 = vunpack.c.l.b16 %v3111
      %v3157 = vunpack.c.l.b16 %v3112
      %v3158 = vpack.c.b16 %v3143, %v3142
      %v3159 = vpack.c.b16 %v3145, %v3144
      %v3160 = vpack.c.b16 %v3147, %v3146
      %v3161 = vpack.c.b16 %v3149, %v3148
      %v3162 = vpack.c.b16 %v3151, %v3150
      %v3163 = vpack.c.b16 %v3153, %v3152
      %v3164 = vpack.c.b16 %v3155, %v3154
      %v3165 = vpack.c.b16 %v3157, %v3156
      %3174 = vmatprep.subr.bf16.mxu0 0
      %3175 = vmatpush1.bf16.msra.mxu0 %v3158
      %3176 = vmatprep.subr.bf16.mxu0 0
      %3177 = vmatpush1.bf16.msra.mxu0 %v3159
      %3178 = vmatprep.subr.bf16.mxu0 0
      %3179 = vmatpush1.bf16.msra.mxu0 %v3160
      %3180 = vmatprep.subr.bf16.mxu0 0
      %3181 = vmatpush1.bf16.msra.mxu0 %v3161
      %3182 = vmatprep.subr.bf16.mxu0 0
      %3183 = vmatpush1.bf16.msra.mxu0 %v3162
      %3184 = vmatprep.subr.bf16.mxu0 0
      %3185 = vmatpush1.bf16.msra.mxu0 %v3163
      %3186 = vmatprep.subr.bf16.mxu0 0
      %3187 = vmatpush1.bf16.msra.mxu0 %v3164
      %3188 = vmatprep.subr.bf16.mxu0 0
      %3189 = vmatpush1.bf16.msra.mxu0 %v3165
      %3190 = vmatprep.subr.bf16.mxu0 0
      %3191 = vmatpush1.bf16.msra.mxu0 0
      %3192 = vmatprep.subr.bf16.mxu0 0
      %3193 = vmatpush1.bf16.msra.mxu0 0
      %3194 = vmatprep.subr.bf16.mxu0 0
      %3195 = vmatpush1.bf16.msra.mxu0 0
      %3196 = vmatprep.subr.bf16.mxu0 0
      %3197 = vmatpush1.bf16.msra.mxu0 0
      %3198 = vmatprep.subr.bf16.mxu0 0
      %3199 = vmatpush1.bf16.msra.mxu0 0
      %3200 = vmatprep.subr.bf16.mxu0 0
      %3201 = vmatpush1.bf16.msra.mxu0 0
      %3202 = vmatprep.subr.bf16.mxu0 0
      %3203 = vmatpush1.bf16.msra.mxu0 0
      %3204 = vmatprep.subr.bf16.mxu0 0
      %3205 = vmatpush1.bf16.msra.mxu0 0
      %3206 = vmatprep.mubr.bf16.mxu0 0
      %3207 = vmatmul.mubr.bf16.gmra.mrb[0].mxu0 %v3124
      %v3208 = vpop.f32.mrb[0].mxu0
      %v3209 = vadd.f32 0.0, %v3208
      %v3210 = vpop.f32.mrb[0].mxu0
      %v3211 = vpop.f32.mrb[0].mxu0
      %v3212 = vadd.f32 0.0, %v3211
      %v3213 = vpop.f32.mrb[0].mxu0
      %3214 = vdwg.mxu0
      %v3231 = vunpack.c.l.b16 %v3079
      %v3232 = vunpack.c.l.b16 %v3080
      %v3233 = vunpack.c.l.b16 %v3081
      %v3234 = vunpack.c.l.b16 %v3082
      %v3235 = vunpack.c.l.b16 %v3083
      %v3236 = vunpack.c.l.b16 %v3084
      %v3237 = vunpack.c.l.b16 %v3085
      %v3238 = vunpack.c.l.b16 %v3086
      %v3239 = vunpack.c.l.b16 %v3087
      %v3240 = vunpack.c.l.b16 %v3088
      %v3241 = vunpack.c.l.b16 %v3089
      %v3242 = vunpack.c.l.b16 %v3090
      %v3243 = vunpack.c.l.b16 %v3091
      %v3244 = vunpack.c.l.b16 %v3092
      %v3245 = vunpack.c.l.b16 %v3093
      %v3246 = vunpack.c.l.b16 %v3094
      %v3247 = vpack.c.b16 %v3232, %v3231
      %v3248 = vpack.c.b16 %v3234, %v3233
      %v3249 = vpack.c.b16 %v3236, %v3235
      %v3250 = vpack.c.b16 %v3238, %v3237
      %v3251 = vpack.c.b16 %v3240, %v3239
      %v3252 = vpack.c.b16 %v3242, %v3241
      %v3253 = vpack.c.b16 %v3244, %v3243
      %v3254 = vpack.c.b16 %v3246, %v3245
      %3263 = vmatprep.subr.bf16.mxu0 0
      %3264 = vmatpush1.bf16.msra.mxu0 %v3247
      %3265 = vmatprep.subr.bf16.mxu0 0
      %3266 = vmatpush1.bf16.msra.mxu0 %v3248
      %3267 = vmatprep.subr.bf16.mxu0 0
      %3268 = vmatpush1.bf16.msra.mxu0 %v3249
      %3269 = vmatprep.subr.bf16.mxu0 0
      %3270 = vmatpush1.bf16.msra.mxu0 %v3250
      %3271 = vmatprep.subr.bf16.mxu0 0
      %3272 = vmatpush1.bf16.msra.mxu0 %v3251
      %3273 = vmatprep.subr.bf16.mxu0 0
      %3274 = vmatpush1.bf16.msra.mxu0 %v3252
      %3275 = vmatprep.subr.bf16.mxu0 0
      %3276 = vmatpush1.bf16.msra.mxu0 %v3253
      %3277 = vmatprep.subr.bf16.mxu0 0
      %3278 = vmatpush1.bf16.msra.mxu0 %v3254
      %3279 = vmatprep.subr.bf16.mxu0 0
      %3280 = vmatpush1.bf16.msra.mxu0 0
      %3281 = vmatprep.subr.bf16.mxu0 0
      %3282 = vmatpush1.bf16.msra.mxu0 0
      %3283 = vmatprep.subr.bf16.mxu0 0
      %3284 = vmatpush1.bf16.msra.mxu0 0
      %3285 = vmatprep.subr.bf16.mxu0 0
      %3286 = vmatpush1.bf16.msra.mxu0 0
      %3287 = vmatprep.subr.bf16.mxu0 0
      %3288 = vmatpush1.bf16.msra.mxu0 0
      %3289 = vmatprep.subr.bf16.mxu0 0
      %3290 = vmatpush1.bf16.msra.mxu0 0
      %3291 = vmatprep.subr.bf16.mxu0 0
      %3292 = vmatpush1.bf16.msra.mxu0 0
      %3293 = vmatprep.subr.bf16.mxu0 0
      %3294 = vmatpush1.bf16.msra.mxu0 0
      %3295 = vmatprep.mubr.bf16.mxu0 0
      %3296 = vmatmul.mubr.bf16.gmra.mrb[0].mxu0 %v3077
      %v3297 = vpop.f32.mrb[0].mxu0
      %v3298 = vadd.f32 %v3209, %v3297
      %v3299 = vpop.f32.mrb[0].mxu0
      %v3300 = vpop.f32.mrb[0].mxu0
      %v3301 = vadd.f32 %v3212, %v3300
      %v3302 = vpop.f32.mrb[0].mxu0
      %3303 = vdwg.mxu0
      %s3304 = scalar_lea.vmem %s1, 512
      %v3305 = vld [vmem:[%s3304] sm:$0xf]
      %v3306 = vld [vmem:[%s3304 + $0x4] sm:$0xf]
      %v3307 = vld [vmem:[%s3304 + $0x8] sm:$0xf]
      %v3308 = vld [vmem:[%s3304 + $0xc] sm:$0xf]
      %v3309 = vld [vmem:[%s3304 + $0x10] sm:$0xf]
      %v3310 = vld [vmem:[%s3304 + $0x14] sm:$0xf]
      %v3311 = vld [vmem:[%s3304 + $0x18] sm:$0xf]
      %v3312 = vld [vmem:[%s3304 + $0x1c] sm:$0xf]
      %v3313 = vld [vmem:[%s3304 + $0x20] sm:$0xf]
      %v3314 = vld [vmem:[%s3304 + $0x24] sm:$0xf]
      %v3315 = vld [vmem:[%s3304 + $0x28] sm:$0xf]
      %v3316 = vld [vmem:[%s3304 + $0x2c] sm:$0xf]
      %v3317 = vld [vmem:[%s3304 + $0x30] sm:$0xf]
      %v3318 = vld [vmem:[%s3304 + $0x34] sm:$0xf]
      %v3319 = vld [vmem:[%s3304 + $0x38] sm:$0xf]
      %v3320 = vld [vmem:[%s3304 + $0x3c] sm:$0xf]
      %v3323 = vrot.slane %v3077, 1
      %v3324 = vrot.slane %v3095, 1
      %v3325 = vsel %vm485, %v3323, %v3324
      %v3343 = vunpack.c.l.b16 %v3305
      %v3344 = vunpack.c.l.b16 %v3306
      %v3345 = vunpack.c.l.b16 %v3307
      %v3346 = vunpack.c.l.b16 %v3308
      %v3347 = vunpack.c.l.b16 %v3309
      %v3348 = vunpack.c.l.b16 %v3310
      %v3349 = vunpack.c.l.b16 %v3311
      %v3350 = vunpack.c.l.b16 %v3312
      %v3351 = vunpack.c.l.b16 %v3313
      %v3352 = vunpack.c.l.b16 %v3314
      %v3353 = vunpack.c.l.b16 %v3315
      %v3354 = vunpack.c.l.b16 %v3316
      %v3355 = vunpack.c.l.b16 %v3317
      %v3356 = vunpack.c.l.b16 %v3318
      %v3357 = vunpack.c.l.b16 %v3319
      %v3358 = vunpack.c.l.b16 %v3320
      %v3359 = vpack.c.b16 %v3344, %v3343
      %v3360 = vpack.c.b16 %v3346, %v3345
      %v3361 = vpack.c.b16 %v3348, %v3347
      %v3362 = vpack.c.b16 %v3350, %v3349
      %v3363 = vpack.c.b16 %v3352, %v3351
      %v3364 = vpack.c.b16 %v3354, %v3353
      %v3365 = vpack.c.b16 %v3356, %v3355
      %v3366 = vpack.c.b16 %v3358, %v3357
      %3375 = vmatprep.subr.bf16.mxu0 0
      %3376 = vmatpush1.bf16.msra.mxu0 %v3359
      %3377 = vmatprep.subr.bf16.mxu0 0
      %3378 = vmatpush1.bf16.msra.mxu0 %v3360
      %3379 = vmatprep.subr.bf16.mxu0 0
      %3380 = vmatpush1.bf16.msra.mxu0 %v3361
      %3381 = vmatprep.subr.bf16.mxu0 0
      %3382 = vmatpush1.bf16.msra.mxu0 %v3362
      %3383 = vmatprep.subr.bf16.mxu0 0
      %3384 = vmatpush1.bf16.msra.mxu0 %v3363
      %3385 = vmatprep.subr.bf16.mxu0 0
      %3386 = vmatpush1.bf16.msra.mxu0 %v3364
      %3387 = vmatprep.subr.bf16.mxu0 0
      %3388 = vmatpush1.bf16.msra.mxu0 %v3365
      %3389 = vmatprep.subr.bf16.mxu0 0
      %3390 = vmatpush1.bf16.msra.mxu0 %v3366
      %3391 = vmatprep.subr.bf16.mxu0 0
      %3392 = vmatpush1.bf16.msra.mxu0 0
      %3393 = vmatprep.subr.bf16.mxu0 0
      %3394 = vmatpush1.bf16.msra.mxu0 0
      %3395 = vmatprep.subr.bf16.mxu0 0
      %3396 = vmatpush1.bf16.msra.mxu0 0
      %3397 = vmatprep.subr.bf16.mxu0 0
      %3398 = vmatpush1.bf16.msra.mxu0 0
      %3399 = vmatprep.subr.bf16.mxu0 0
      %3400 = vmatpush1.bf16.msra.mxu0 0
      %3401 = vmatprep.subr.bf16.mxu0 0
      %3402 = vmatpush1.bf16.msra.mxu0 0
      %3403 = vmatprep.subr.bf16.mxu0 0
      %3404 = vmatpush1.bf16.msra.mxu0 0
      %3405 = vmatprep.subr.bf16.mxu0 0
      %3406 = vmatpush1.bf16.msra.mxu0 0
      %3407 = vmatprep.mubr.bf16.mxu0 0
      %3408 = vmatmul.mubr.bf16.gmra.mrb[0].mxu0 %v3325
      %v3409 = vpop.f32.mrb[0].mxu0
      %v3410 = vadd.f32 0.0, %v3409
      %v3411 = vpop.f32.mrb[0].mxu0
      %v3412 = vpop.f32.mrb[0].mxu0
      %v3413 = vadd.f32 0.0, %v3412
      %v3414 = vpop.f32.mrb[0].mxu0
      %3415 = vdwg.mxu0
      %v3416 = vadd.f32 %v3298, %v3410
      %v3417 = vadd.f32 %v3301, %v3413
      %s3418 = scalar_lea.vmem %s3, 2
      %v3419 = vld [vmem:[%s3418] sm:$0x1]
      %v3421 = vlaneseq
      %v3422 = vshrl.u32 %v3421, 7
      %v3423 = vsub.s32 0, %v3422
      %v3424 = vrot.slane %v3419, %v3423
      %v3426 = vadd.f32 %v3416, %v3424
      %v3427 = vadd.f32 %v3417, %v3424
      %v3428 = vmax.f32 %v3426, 0.0
      %v3429 = vmax.f32 %v3427, 0.0
      %v3432 = vrot.slane %v3428, 4
      %v3433 = vrot.slane %v3429, 4
      %v3434 = vsel %vm594, %v3432, %v3433
      %v3438 = vsel %vm594, 0.0, %v3432
      %v3439 = vsel %vm594, %v3433, 0.0
      %v3440 = vpack.c.bf16 %v3434, %v3438
      %s3441 = scalar_lea.vmem %s2, 1152
      %v3442 = vld [vmem:[%s3441] sm:$0xf]
      %v3443 = vld [vmem:[%s3441 + $0x4] sm:$0xf]
      %v3444 = vld [vmem:[%s3441 + $0x8] sm:$0xf]
      %v3445 = vld [vmem:[%s3441 + $0xc] sm:$0xf]
      %v3446 = vld [vmem:[%s3441 + $0x10] sm:$0xf]
      %v3447 = vld [vmem:[%s3441 + $0x14] sm:$0xf]
      %v3448 = vld [vmem:[%s3441 + $0x18] sm:$0xf]
      %v3449 = vld [vmem:[%s3441 + $0x1c] sm:$0xf]
      %v3450 = vld [vmem:[%s3441 + $0x20] sm:$0xf]
      %v3451 = vld [vmem:[%s3441 + $0x24] sm:$0xf]
      %v3452 = vld [vmem:[%s3441 + $0x28] sm:$0xf]
      %v3453 = vld [vmem:[%s3441 + $0x2c] sm:$0xf]
      %v3454 = vld [vmem:[%s3441 + $0x30] sm:$0xf]
      %v3455 = vld [vmem:[%s3441 + $0x34] sm:$0xf]
      %v3456 = vld [vmem:[%s3441 + $0x38] sm:$0xf]
      %v3457 = vld [vmem:[%s3441 + $0x3c] sm:$0xf]
      %v3458 = vpack.c.bf16 %v3439, %v3439
      %s3459 = scalar_lea.vmem %s2, 1216
      %v3460 = vld [vmem:[%s3459] sm:$0xf]
      %v3461 = vld [vmem:[%s3459 + $0x4] sm:$0xf]
      %v3462 = vld [vmem:[%s3459 + $0x8] sm:$0xf]
      %v3463 = vld [vmem:[%s3459 + $0xc] sm:$0xf]
      %v3464 = vld [vmem:[%s3459 + $0x10] sm:$0xf]
      %v3465 = vld [vmem:[%s3459 + $0x14] sm:$0xf]
      %v3466 = vld [vmem:[%s3459 + $0x18] sm:$0xf]
      %v3467 = vld [vmem:[%s3459 + $0x1c] sm:$0xf]
      %v3468 = vld [vmem:[%s3459 + $0x20] sm:$0xf]
      %v3469 = vld [vmem:[%s3459 + $0x24] sm:$0xf]
      %v3470 = vld [vmem:[%s3459 + $0x28] sm:$0xf]
      %v3471 = vld [vmem:[%s3459 + $0x2c] sm:$0xf]
      %v3472 = vld [vmem:[%s3459 + $0x30] sm:$0xf]
      %v3473 = vld [vmem:[%s3459 + $0x34] sm:$0xf]
      %v3474 = vld [vmem:[%s3459 + $0x38] sm:$0xf]
      %v3475 = vld [vmem:[%s3459 + $0x3c] sm:$0xf]
      %v3477 = vshrl.u32 %v3440, 16
      %v3479 = vshll.u32 %v3440, 16
      %v3481 = vrot.slane %v3479, 1
      %v3482 = vor.u32 %v3477, %v3481
      %v3484 = vshll.u32 %v3458, 16
      %v3486 = vrot.slane %v3484, 1
      %v3487 = vsel %vm274, %v3482, %v3486
      %v3505 = vunpack.c.l.b16 %v3460
      %v3506 = vunpack.c.l.b16 %v3461
      %v3507 = vunpack.c.l.b16 %v3462
      %v3508 = vunpack.c.l.b16 %v3463
      %v3509 = vunpack.c.l.b16 %v3464
      %v3510 = vunpack.c.l.b16 %v3465
      %v3511 = vunpack.c.l.b16 %v3466
      %v3512 = vunpack.c.l.b16 %v3467
      %v3513 = vunpack.c.l.b16 %v3468
      %v3514 = vunpack.c.l.b16 %v3469
      %v3515 = vunpack.c.l.b16 %v3470
      %v3516 = vunpack.c.l.b16 %v3471
      %v3517 = vunpack.c.l.b16 %v3472
      %v3518 = vunpack.c.l.b16 %v3473
      %v3519 = vunpack.c.l.b16 %v3474
      %v3520 = vunpack.c.l.b16 %v3475
      %v3521 = vpack.c.b16 %v3506, %v3505
      %v3522 = vpack.c.b16 %v3508, %v3507
      %v3523 = vpack.c.b16 %v3510, %v3509
      %v3524 = vpack.c.b16 %v3512, %v3511
      %v3525 = vpack.c.b16 %v3514, %v3513
      %v3526 = vpack.c.b16 %v3516, %v3515
      %v3527 = vpack.c.b16 %v3518, %v3517
      %v3528 = vpack.c.b16 %v3520, %v3519
      %3537 = vmatprep.subr.bf16.mxu0 0
      %3538 = vmatpush1.bf16.msra.mxu0 %v3521
      %3539 = vmatprep.subr.bf16.mxu0 0
      %3540 = vmatpush1.bf16.msra.mxu0 %v3522
      %3541 = vmatprep.subr.bf16.mxu0 0
      %3542 = vmatpush1.bf16.msra.mxu0 %v3523
      %3543 = vmatprep.subr.bf16.mxu0 0
      %3544 = vmatpush1.bf16.msra.mxu0 %v3524
      %3545 = vmatprep.subr.bf16.mxu0 0
      %3546 = vmatpush1.bf16.msra.mxu0 %v3525
      %3547 = vmatprep.subr.bf16.mxu0 0
      %3548 = vmatpush1.bf16.msra.mxu0 %v3526
      %3549 = vmatprep.subr.bf16.mxu0 0
      %3550 = vmatpush1.bf16.msra.mxu0 %v3527
      %3551 = vmatprep.subr.bf16.mxu0 0
      %3552 = vmatpush1.bf16.msra.mxu0 %v3528
      %3553 = vmatprep.subr.bf16.mxu0 0
      %3554 = vmatpush1.bf16.msra.mxu0 0
      %3555 = vmatprep.subr.bf16.mxu0 0
      %3556 = vmatpush1.bf16.msra.mxu0 0
      %3557 = vmatprep.subr.bf16.mxu0 0
      %3558 = vmatpush1.bf16.msra.mxu0 0
      %3559 = vmatprep.subr.bf16.mxu0 0
      %3560 = vmatpush1.bf16.msra.mxu0 0
      %3561 = vmatprep.subr.bf16.mxu0 0
      %3562 = vmatpush1.bf16.msra.mxu0 0
      %3563 = vmatprep.subr.bf16.mxu0 0
      %3564 = vmatpush1.bf16.msra.mxu0 0
      %3565 = vmatprep.subr.bf16.mxu0 0
      %3566 = vmatpush1.bf16.msra.mxu0 0
      %3567 = vmatprep.subr.bf16.mxu0 0
      %3568 = vmatpush1.bf16.msra.mxu0 0
      %3569 = vmatprep.mubr.bf16.mxu0 0
      %3570 = vmatmul.mubr.bf16.gmra.mrb[0].mxu0 %v3487
      %v3571 = vpop.f32.mrb[0].mxu0
      %v3572 = vadd.f32 0.0, %v3571
      %v3573 = vpop.f32.mrb[0].mxu0
      %v3574 = vpop.f32.mrb[0].mxu0
      %v3575 = vadd.f32 0.0, %v3574
      %v3576 = vpop.f32.mrb[0].mxu0
      %3577 = vdwg.mxu0
      %v3594 = vunpack.c.l.b16 %v3442
      %v3595 = vunpack.c.l.b16 %v3443
      %v3596 = vunpack.c.l.b16 %v3444
      %v3597 = vunpack.c.l.b16 %v3445
      %v3598 = vunpack.c.l.b16 %v3446
      %v3599 = vunpack.c.l.b16 %v3447
      %v3600 = vunpack.c.l.b16 %v3448
      %v3601 = vunpack.c.l.b16 %v3449
      %v3602 = vunpack.c.l.b16 %v3450
      %v3603 = vunpack.c.l.b16 %v3451
      %v3604 = vunpack.c.l.b16 %v3452
      %v3605 = vunpack.c.l.b16 %v3453
      %v3606 = vunpack.c.l.b16 %v3454
      %v3607 = vunpack.c.l.b16 %v3455
      %v3608 = vunpack.c.l.b16 %v3456
      %v3609 = vunpack.c.l.b16 %v3457
      %v3610 = vpack.c.b16 %v3595, %v3594
      %v3611 = vpack.c.b16 %v3597, %v3596
      %v3612 = vpack.c.b16 %v3599, %v3598
      %v3613 = vpack.c.b16 %v3601, %v3600
      %v3614 = vpack.c.b16 %v3603, %v3602
      %v3615 = vpack.c.b16 %v3605, %v3604
      %v3616 = vpack.c.b16 %v3607, %v3606
      %v3617 = vpack.c.b16 %v3609, %v3608
      %3626 = vmatprep.subr.bf16.mxu0 0
      %3627 = vmatpush1.bf16.msra.mxu0 %v3610
      %3628 = vmatprep.subr.bf16.mxu0 0
      %3629 = vmatpush1.bf16.msra.mxu0 %v3611
      %3630 = vmatprep.subr.bf16.mxu0 0
      %3631 = vmatpush1.bf16.msra.mxu0 %v3612
      %3632 = vmatprep.subr.bf16.mxu0 0
      %3633 = vmatpush1.bf16.msra.mxu0 %v3613
      %3634 = vmatprep.subr.bf16.mxu0 0
      %3635 = vmatpush1.bf16.msra.mxu0 %v3614
      %3636 = vmatprep.subr.bf16.mxu0 0
      %3637 = vmatpush1.bf16.msra.mxu0 %v3615
      %3638 = vmatprep.subr.bf16.mxu0 0
      %3639 = vmatpush1.bf16.msra.mxu0 %v3616
      %3640 = vmatprep.subr.bf16.mxu0 0
      %3641 = vmatpush1.bf16.msra.mxu0 %v3617
      %3642 = vmatprep.subr.bf16.mxu0 0
      %3643 = vmatpush1.bf16.msra.mxu0 0
      %3644 = vmatprep.subr.bf16.mxu0 0
      %3645 = vmatpush1.bf16.msra.mxu0 0
      %3646 = vmatprep.subr.bf16.mxu0 0
      %3647 = vmatpush1.bf16.msra.mxu0 0
      %3648 = vmatprep.subr.bf16.mxu0 0
      %3649 = vmatpush1.bf16.msra.mxu0 0
      %3650 = vmatprep.subr.bf16.mxu0 0
      %3651 = vmatpush1.bf16.msra.mxu0 0
      %3652 = vmatprep.subr.bf16.mxu0 0
      %3653 = vmatpush1.bf16.msra.mxu0 0
      %3654 = vmatprep.subr.bf16.mxu0 0
      %3655 = vmatpush1.bf16.msra.mxu0 0
      %3656 = vmatprep.subr.bf16.mxu0 0
      %3657 = vmatpush1.bf16.msra.mxu0 0
      %3658 = vmatprep.mubr.bf16.mxu0 0
      %3659 = vmatmul.mubr.bf16.gmra.mrb[0].mxu0 %v3440
      %v3660 = vpop.f32.mrb[0].mxu0
      %v3661 = vadd.f32 %v3572, %v3660
      %v3662 = vpop.f32.mrb[0].mxu0
      %v3663 = vpop.f32.mrb[0].mxu0
      %v3664 = vadd.f32 %v3575, %v3663
      %v3665 = vpop.f32.mrb[0].mxu0
      %3666 = vdwg.mxu0
      %s3667 = scalar_lea.vmem %s2, 1280
      %v3668 = vld [vmem:[%s3667] sm:$0xf]
      %v3669 = vld [vmem:[%s3667 + $0x4] sm:$0xf]
      %v3670 = vld [vmem:[%s3667 + $0x8] sm:$0xf]
      %v3671 = vld [vmem:[%s3667 + $0xc] sm:$0xf]
      %v3672 = vld [vmem:[%s3667 + $0x10] sm:$0xf]
      %v3673 = vld [vmem:[%s3667 + $0x14] sm:$0xf]
      %v3674 = vld [vmem:[%s3667 + $0x18] sm:$0xf]
      %v3675 = vld [vmem:[%s3667 + $0x1c] sm:$0xf]
      %v3676 = vld [vmem:[%s3667 + $0x20] sm:$0xf]
      %v3677 = vld [vmem:[%s3667 + $0x24] sm:$0xf]
      %v3678 = vld [vmem:[%s3667 + $0x28] sm:$0xf]
      %v3679 = vld [vmem:[%s3667 + $0x2c] sm:$0xf]
      %v3680 = vld [vmem:[%s3667 + $0x30] sm:$0xf]
      %v3681 = vld [vmem:[%s3667 + $0x34] sm:$0xf]
      %v3682 = vld [vmem:[%s3667 + $0x38] sm:$0xf]
      %v3683 = vld [vmem:[%s3667 + $0x3c] sm:$0xf]
      %v3686 = vrot.slane %v3440, 1
      %v3687 = vrot.slane %v3458, 1
      %v3688 = vsel %vm485, %v3686, %v3687
      %v3706 = vunpack.c.l.b16 %v3668
      %v3707 = vunpack.c.l.b16 %v3669
      %v3708 = vunpack.c.l.b16 %v3670
      %v3709 = vunpack.c.l.b16 %v3671
      %v3710 = vunpack.c.l.b16 %v3672
      %v3711 = vunpack.c.l.b16 %v3673
      %v3712 = vunpack.c.l.b16 %v3674
      %v3713 = vunpack.c.l.b16 %v3675
      %v3714 = vunpack.c.l.b16 %v3676
      %v3715 = vunpack.c.l.b16 %v3677
      %v3716 = vunpack.c.l.b16 %v3678
      %v3717 = vunpack.c.l.b16 %v3679
      %v3718 = vunpack.c.l.b16 %v3680
      %v3719 = vunpack.c.l.b16 %v3681
      %v3720 = vunpack.c.l.b16 %v3682
      %v3721 = vunpack.c.l.b16 %v3683
      %v3722 = vpack.c.b16 %v3707, %v3706
      %v3723 = vpack.c.b16 %v3709, %v3708
      %v3724 = vpack.c.b16 %v3711, %v3710
      %v3725 = vpack.c.b16 %v3713, %v3712
      %v3726 = vpack.c.b16 %v3715, %v3714
      %v3727 = vpack.c.b16 %v3717, %v3716
      %v3728 = vpack.c.b16 %v3719, %v3718
      %v3729 = vpack.c.b16 %v3721, %v3720
      %3738 = vmatprep.subr.bf16.mxu0 0
      %3739 = vmatpush1.bf16.msra.mxu0 %v3722
      %3740 = vmatprep.subr.bf16.mxu0 0
      %3741 = vmatpush1.bf16.msra.mxu0 %v3723
      %3742 = vmatprep.subr.bf16.mxu0 0
      %3743 = vmatpush1.bf16.msra.mxu0 %v3724
      %3744 = vmatprep.subr.bf16.mxu0 0
      %3745 = vmatpush1.bf16.msra.mxu0 %v3725
      %3746 = vmatprep.subr.bf16.mxu0 0
      %3747 = vmatpush1.bf16.msra.mxu0 %v3726
      %3748 = vmatprep.subr.bf16.mxu0 0
      %3749 = vmatpush1.bf16.msra.mxu0 %v3727
      %3750 = vmatprep.subr.bf16.mxu0 0
      %3751 = vmatpush1.bf16.msra.mxu0 %v3728
      %3752 = vmatprep.subr.bf16.mxu0 0
      %3753 = vmatpush1.bf16.msra.mxu0 %v3729
      %3754 = vmatprep.subr.bf16.mxu0 0
      %3755 = vmatpush1.bf16.msra.mxu0 0
      %3756 = vmatprep.subr.bf16.mxu0 0
      %3757 = vmatpush1.bf16.msra.mxu0 0
      %3758 = vmatprep.subr.bf16.mxu0 0
      %3759 = vmatpush1.bf16.msra.mxu0 0
      %3760 = vmatprep.subr.bf16.mxu0 0
      %3761 = vmatpush1.bf16.msra.mxu0 0
      %3762 = vmatprep.subr.bf16.mxu0 0
      %3763 = vmatpush1.bf16.msra.mxu0 0
      %3764 = vmatprep.subr.bf16.mxu0 0
      %3765 = vmatpush1.bf16.msra.mxu0 0
      %3766 = vmatprep.subr.bf16.mxu0 0
      %3767 = vmatpush1.bf16.msra.mxu0 0
      %3768 = vmatprep.subr.bf16.mxu0 0
      %3769 = vmatpush1.bf16.msra.mxu0 0
      %3770 = vmatprep.mubr.bf16.mxu0 0
      %3771 = vmatmul.mubr.bf16.gmra.mrb[0].mxu0 %v3688
      %v3772 = vpop.f32.mrb[0].mxu0
      %v3773 = vadd.f32 0.0, %v3772
      %v3774 = vpop.f32.mrb[0].mxu0
      %v3775 = vpop.f32.mrb[0].mxu0
      %v3776 = vadd.f32 0.0, %v3775
      %v3777 = vpop.f32.mrb[0].mxu0
      %3778 = vdwg.mxu0
      %v3779 = vadd.f32 %v3661, %v3773
      %v3780 = vadd.f32 %v3664, %v3776
      %s3781 = scalar_lea.vmem %s2, 1344
      %v3782 = vld [vmem:[%s3781] sm:$0xf]
      %v3783 = vld [vmem:[%s3781 + $0x4] sm:$0xf]
      %v3784 = vld [vmem:[%s3781 + $0x8] sm:$0xf]
      %v3785 = vld [vmem:[%s3781 + $0xc] sm:$0xf]
      %v3786 = vld [vmem:[%s3781 + $0x10] sm:$0xf]
      %v3787 = vld [vmem:[%s3781 + $0x14] sm:$0xf]
      %v3788 = vld [vmem:[%s3781 + $0x18] sm:$0xf]
      %v3789 = vld [vmem:[%s3781 + $0x1c] sm:$0xf]
      %v3790 = vld [vmem:[%s3781 + $0x20] sm:$0xf]
      %v3791 = vld [vmem:[%s3781 + $0x24] sm:$0xf]
      %v3792 = vld [vmem:[%s3781 + $0x28] sm:$0xf]
      %v3793 = vld [vmem:[%s3781 + $0x2c] sm:$0xf]
      %v3794 = vld [vmem:[%s3781 + $0x30] sm:$0xf]
      %v3795 = vld [vmem:[%s3781 + $0x34] sm:$0xf]
      %v3796 = vld [vmem:[%s3781 + $0x38] sm:$0xf]
      %v3797 = vld [vmem:[%s3781 + $0x3c] sm:$0xf]
      %v3798 = vrot.slane %v3477, 1
      %v3799 = vrot.slane %v3479, 2
      %v3800 = vor.u32 %v3798, %v3799
      %v3801 = vshrl.u32 %v3458, 16
      %v3803 = vrot.slane %v3801, 1
      %v3804 = vrot.slane %v3484, 2
      %v3805 = vor.u32 %v3803, %v3804
      %v3806 = vsel %vm960, %v3800, %v3805
      %v3824 = vunpack.c.l.b16 %v3782
      %v3825 = vunpack.c.l.b16 %v3783
      %v3826 = vunpack.c.l.b16 %v3784
      %v3827 = vunpack.c.l.b16 %v3785
      %v3828 = vunpack.c.l.b16 %v3786
      %v3829 = vunpack.c.l.b16 %v3787
      %v3830 = vunpack.c.l.b16 %v3788
      %v3831 = vunpack.c.l.b16 %v3789
      %v3832 = vunpack.c.l.b16 %v3790
      %v3833 = vunpack.c.l.b16 %v3791
      %v3834 = vunpack.c.l.b16 %v3792
      %v3835 = vunpack.c.l.b16 %v3793
      %v3836 = vunpack.c.l.b16 %v3794
      %v3837 = vunpack.c.l.b16 %v3795
      %v3838 = vunpack.c.l.b16 %v3796
      %v3839 = vunpack.c.l.b16 %v3797
      %v3840 = vpack.c.b16 %v3825, %v3824
      %v3841 = vpack.c.b16 %v3827, %v3826
      %v3842 = vpack.c.b16 %v3829, %v3828
      %v3843 = vpack.c.b16 %v3831, %v3830
      %v3844 = vpack.c.b16 %v3833, %v3832
      %v3845 = vpack.c.b16 %v3835, %v3834
      %v3846 = vpack.c.b16 %v3837, %v3836
      %v3847 = vpack.c.b16 %v3839, %v3838
      %3856 = vmatprep.subr.bf16.mxu0 0
      %3857 = vmatpush1.bf16.msra.mxu0 %v3840
      %3858 = vmatprep.subr.bf16.mxu0 0
      %3859 = vmatpush1.bf16.msra.mxu0 %v3841
      %3860 = vmatprep.subr.bf16.mxu0 0
      %3861 = vmatpush1.bf16.msra.mxu0 %v3842
      %3862 = vmatprep.subr.bf16.mxu0 0
      %3863 = vmatpush1.bf16.msra.mxu0 %v3843
      %3864 = vmatprep.subr.bf16.mxu0 0
      %3865 = vmatpush1.bf16.msra.mxu0 %v3844
      %3866 = vmatprep.subr.bf16.mxu0 0
      %3867 = vmatpush1.bf16.msra.mxu0 %v3845
      %3868 = vmatprep.subr.bf16.mxu0 0
      %3869 = vmatpush1.bf16.msra.mxu0 %v3846
      %3870 = vmatprep.subr.bf16.mxu0 0
      %3871 = vmatpush1.bf16.msra.mxu0 %v3847
      %3872 = vmatprep.subr.bf16.mxu0 0
      %3873 = vmatpush1.bf16.msra.mxu0 0
      %3874 = vmatprep.subr.bf16.mxu0 0
      %3875 = vmatpush1.bf16.msra.mxu0 0
      %3876 = vmatprep.subr.bf16.mxu0 0
      %3877 = vmatpush1.bf16.msra.mxu0 0
      %3878 = vmatprep.subr.bf16.mxu0 0
      %3879 = vmatpush1.bf16.msra.mxu0 0
      %3880 = vmatprep.subr.bf16.mxu0 0
      %3881 = vmatpush1.bf16.msra.mxu0 0
      %3882 = vmatprep.subr.bf16.mxu0 0
      %3883 = vmatpush1.bf16.msra.mxu0 0
      %3884 = vmatprep.subr.bf16.mxu0 0
      %3885 = vmatpush1.bf16.msra.mxu0 0
      %3886 = vmatprep.subr.bf16.mxu0 0
      %3887 = vmatpush1.bf16.msra.mxu0 0
      %3888 = vmatprep.mubr.bf16.mxu0 0
      %3889 = vmatmul.mubr.bf16.gmra.mrb[0].mxu0 %v3806
      %v3890 = vpop.f32.mrb[0].mxu0
      %v3891 = vadd.f32 0.0, %v3890
      %v3892 = vpop.f32.mrb[0].mxu0
      %v3893 = vpop.f32.mrb[0].mxu0
      %v3894 = vadd.f32 0.0, %v3893
      %v3895 = vpop.f32.mrb[0].mxu0
      %3896 = vdwg.mxu0
      %v3897 = vadd.f32 %v3779, %v3891
      %v3898 = vadd.f32 %v3780, %v3894
      %s3899 = scalar_lea.vmem %s2, 1408
      %v3900 = vld [vmem:[%s3899] sm:$0xf]
      %v3901 = vld [vmem:[%s3899 + $0x4] sm:$0xf]
      %v3902 = vld [vmem:[%s3899 + $0x8] sm:$0xf]
      %v3903 = vld [vmem:[%s3899 + $0xc] sm:$0xf]
      %v3904 = vld [vmem:[%s3899 + $0x10] sm:$0xf]
      %v3905 = vld [vmem:[%s3899 + $0x14] sm:$0xf]
      %v3906 = vld [vmem:[%s3899 + $0x18] sm:$0xf]
      %v3907 = vld [vmem:[%s3899 + $0x1c] sm:$0xf]
      %v3908 = vld [vmem:[%s3899 + $0x20] sm:$0xf]
      %v3909 = vld [vmem:[%s3899 + $0x24] sm:$0xf]
      %v3910 = vld [vmem:[%s3899 + $0x28] sm:$0xf]
      %v3911 = vld [vmem:[%s3899 + $0x2c] sm:$0xf]
      %v3912 = vld [vmem:[%s3899 + $0x30] sm:$0xf]
      %v3913 = vld [vmem:[%s3899 + $0x34] sm:$0xf]
      %v3914 = vld [vmem:[%s3899 + $0x38] sm:$0xf]
      %v3915 = vld [vmem:[%s3899 + $0x3c] sm:$0xf]
      %v3916 = vrot.slane %v3440, 2
      %v3917 = vrot.slane %v3458, 2
      %v3918 = vsel %vm1079, %v3916, %v3917
      %v3936 = vunpack.c.l.b16 %v3900
      %v3937 = vunpack.c.l.b16 %v3901
      %v3938 = vunpack.c.l.b16 %v3902
      %v3939 = vunpack.c.l.b16 %v3903
      %v3940 = vunpack.c.l.b16 %v3904
      %v3941 = vunpack.c.l.b16 %v3905
      %v3942 = vunpack.c.l.b16 %v3906
      %v3943 = vunpack.c.l.b16 %v3907
      %v3944 = vunpack.c.l.b16 %v3908
      %v3945 = vunpack.c.l.b16 %v3909
      %v3946 = vunpack.c.l.b16 %v3910
      %v3947 = vunpack.c.l.b16 %v3911
      %v3948 = vunpack.c.l.b16 %v3912
      %v3949 = vunpack.c.l.b16 %v3913
      %v3950 = vunpack.c.l.b16 %v3914
      %v3951 = vunpack.c.l.b16 %v3915
      %v3952 = vpack.c.b16 %v3937, %v3936
      %v3953 = vpack.c.b16 %v3939, %v3938
      %v3954 = vpack.c.b16 %v3941, %v3940
      %v3955 = vpack.c.b16 %v3943, %v3942
      %v3956 = vpack.c.b16 %v3945, %v3944
      %v3957 = vpack.c.b16 %v3947, %v3946
      %v3958 = vpack.c.b16 %v3949, %v3948
      %v3959 = vpack.c.b16 %v3951, %v3950
      %3968 = vmatprep.subr.bf16.mxu0 0
      %3969 = vmatpush1.bf16.msra.mxu0 %v3952
      %3970 = vmatprep.subr.bf16.mxu0 0
      %3971 = vmatpush1.bf16.msra.mxu0 %v3953
      %3972 = vmatprep.subr.bf16.mxu0 0
      %3973 = vmatpush1.bf16.msra.mxu0 %v3954
      %3974 = vmatprep.subr.bf16.mxu0 0
      %3975 = vmatpush1.bf16.msra.mxu0 %v3955
      %3976 = vmatprep.subr.bf16.mxu0 0
      %3977 = vmatpush1.bf16.msra.mxu0 %v3956
      %3978 = vmatprep.subr.bf16.mxu0 0
      %3979 = vmatpush1.bf16.msra.mxu0 %v3957
      %3980 = vmatprep.subr.bf16.mxu0 0
      %3981 = vmatpush1.bf16.msra.mxu0 %v3958
      %3982 = vmatprep.subr.bf16.mxu0 0
      %3983 = vmatpush1.bf16.msra.mxu0 %v3959
      %3984 = vmatprep.subr.bf16.mxu0 0
      %3985 = vmatpush1.bf16.msra.mxu0 0
      %3986 = vmatprep.subr.bf16.mxu0 0
      %3987 = vmatpush1.bf16.msra.mxu0 0
      %3988 = vmatprep.subr.bf16.mxu0 0
      %3989 = vmatpush1.bf16.msra.mxu0 0
      %3990 = vmatprep.subr.bf16.mxu0 0
      %3991 = vmatpush1.bf16.msra.mxu0 0
      %3992 = vmatprep.subr.bf16.mxu0 0
      %3993 = vmatpush1.bf16.msra.mxu0 0
      %3994 = vmatprep.subr.bf16.mxu0 0
      %3995 = vmatpush1.bf16.msra.mxu0 0
      %3996 = vmatprep.subr.bf16.mxu0 0
      %3997 = vmatpush1.bf16.msra.mxu0 0
      %3998 = vmatprep.subr.bf16.mxu0 0
      %3999 = vmatpush1.bf16.msra.mxu0 0
      %4000 = vmatprep.mubr.bf16.mxu0 0
      %4001 = vmatmul.mubr.bf16.gmra.mrb[0].mxu0 %v3918
      %v4002 = vpop.f32.mrb[0].mxu0
      %v4003 = vadd.f32 0.0, %v4002
      %v4004 = vpop.f32.mrb[0].mxu0
      %v4005 = vpop.f32.mrb[0].mxu0
      %v4006 = vadd.f32 0.0, %v4005
      %v4007 = vpop.f32.mrb[0].mxu0
      %4008 = vdwg.mxu0
      %v4009 = vadd.f32 %v3897, %v4003
      %v4010 = vadd.f32 %v3898, %v4006
      %s4011 = scalar_lea.vmem %s2, 1472
      %v4012 = vld [vmem:[%s4011] sm:$0xf]
      %v4013 = vld [vmem:[%s4011 + $0x4] sm:$0xf]
      %v4014 = vld [vmem:[%s4011 + $0x8] sm:$0xf]
      %v4015 = vld [vmem:[%s4011 + $0xc] sm:$0xf]
      %v4016 = vld [vmem:[%s4011 + $0x10] sm:$0xf]
      %v4017 = vld [vmem:[%s4011 + $0x14] sm:$0xf]
      %v4018 = vld [vmem:[%s4011 + $0x18] sm:$0xf]
      %v4019 = vld [vmem:[%s4011 + $0x1c] sm:$0xf]
      %v4020 = vld [vmem:[%s4011 + $0x20] sm:$0xf]
      %v4021 = vld [vmem:[%s4011 + $0x24] sm:$0xf]
      %v4022 = vld [vmem:[%s4011 + $0x28] sm:$0xf]
      %v4023 = vld [vmem:[%s4011 + $0x2c] sm:$0xf]
      %v4024 = vld [vmem:[%s4011 + $0x30] sm:$0xf]
      %v4025 = vld [vmem:[%s4011 + $0x34] sm:$0xf]
      %v4026 = vld [vmem:[%s4011 + $0x38] sm:$0xf]
      %v4027 = vld [vmem:[%s4011 + $0x3c] sm:$0xf]
      %v4028 = vrot.slane %v3477, 2
      %v4029 = vrot.slane %v3479, 3
      %v4030 = vor.u32 %v4028, %v4029
      %v4031 = vrot.slane %v3801, 2
      %v4032 = vrot.slane %v3484, 3
      %v4033 = vor.u32 %v4031, %v4032
      %v4034 = vsel %vm1192, %v4030, %v4033
      %v4052 = vunpack.c.l.b16 %v4012
      %v4053 = vunpack.c.l.b16 %v4013
      %v4054 = vunpack.c.l.b16 %v4014
      %v4055 = vunpack.c.l.b16 %v4015
      %v4056 = vunpack.c.l.b16 %v4016
      %v4057 = vunpack.c.l.b16 %v4017
      %v4058 = vunpack.c.l.b16 %v4018
      %v4059 = vunpack.c.l.b16 %v4019
      %v4060 = vunpack.c.l.b16 %v4020
      %v4061 = vunpack.c.l.b16 %v4021
      %v4062 = vunpack.c.l.b16 %v4022
      %v4063 = vunpack.c.l.b16 %v4023
      %v4064 = vunpack.c.l.b16 %v4024
      %v4065 = vunpack.c.l.b16 %v4025
      %v4066 = vunpack.c.l.b16 %v4026
      %v4067 = vunpack.c.l.b16 %v4027
      %v4068 = vpack.c.b16 %v4053, %v4052
      %v4069 = vpack.c.b16 %v4055, %v4054
      %v4070 = vpack.c.b16 %v4057, %v4056
      %v4071 = vpack.c.b16 %v4059, %v4058
      %v4072 = vpack.c.b16 %v4061, %v4060
      %v4073 = vpack.c.b16 %v4063, %v4062
      %v4074 = vpack.c.b16 %v4065, %v4064
      %v4075 = vpack.c.b16 %v4067, %v4066
      %4084 = vmatprep.subr.bf16.mxu0 0
      %4085 = vmatpush1.bf16.msra.mxu0 %v4068
      %4086 = vmatprep.subr.bf16.mxu0 0
      %4087 = vmatpush1.bf16.msra.mxu0 %v4069
      %4088 = vmatprep.subr.bf16.mxu0 0
      %4089 = vmatpush1.bf16.msra.mxu0 %v4070
      %4090 = vmatprep.subr.bf16.mxu0 0
      %4091 = vmatpush1.bf16.msra.mxu0 %v4071
      %4092 = vmatprep.subr.bf16.mxu0 0
      %4093 = vmatpush1.bf16.msra.mxu0 %v4072
      %4094 = vmatprep.subr.bf16.mxu0 0
      %4095 = vmatpush1.bf16.msra.mxu0 %v4073
      %4096 = vmatprep.subr.bf16.mxu0 0
      %4097 = vmatpush1.bf16.msra.mxu0 %v4074
      %4098 = vmatprep.subr.bf16.mxu0 0
      %4099 = vmatpush1.bf16.msra.mxu0 %v4075
      %4100 = vmatprep.subr.bf16.mxu0 0
      %4101 = vmatpush1.bf16.msra.mxu0 0
      %4102 = vmatprep.subr.bf16.mxu0 0
      %4103 = vmatpush1.bf16.msra.mxu0 0
      %4104 = vmatprep.subr.bf16.mxu0 0
      %4105 = vmatpush1.bf16.msra.mxu0 0
      %4106 = vmatprep.subr.bf16.mxu0 0
      %4107 = vmatpush1.bf16.msra.mxu0 0
      %4108 = vmatprep.subr.bf16.mxu0 0
      %4109 = vmatpush1.bf16.msra.mxu0 0
      %4110 = vmatprep.subr.bf16.mxu0 0
      %4111 = vmatpush1.bf16.msra.mxu0 0
      %4112 = vmatprep.subr.bf16.mxu0 0
      %4113 = vmatpush1.bf16.msra.mxu0 0
      %4114 = vmatprep.subr.bf16.mxu0 0
      %4115 = vmatpush1.bf16.msra.mxu0 0
      %4116 = vmatprep.mubr.bf16.mxu0 0
      %4117 = vmatmul.mubr.bf16.gmra.mrb[0].mxu0 %v4034
      %v4118 = vpop.f32.mrb[0].mxu0
      %v4119 = vadd.f32 0.0, %v4118
      %v4120 = vpop.f32.mrb[0].mxu0
      %v4121 = vpop.f32.mrb[0].mxu0
      %v4122 = vadd.f32 0.0, %v4121
      %v4123 = vpop.f32.mrb[0].mxu0
      %4124 = vdwg.mxu0
      %v4125 = vadd.f32 %v4009, %v4119
      %v4126 = vadd.f32 %v4010, %v4122
      %s4127 = scalar_lea.vmem %s2, 1536
      %v4128 = vld [vmem:[%s4127] sm:$0xf]
      %v4129 = vld [vmem:[%s4127 + $0x4] sm:$0xf]
      %v4130 = vld [vmem:[%s4127 + $0x8] sm:$0xf]
      %v4131 = vld [vmem:[%s4127 + $0xc] sm:$0xf]
      %v4132 = vld [vmem:[%s4127 + $0x10] sm:$0xf]
      %v4133 = vld [vmem:[%s4127 + $0x14] sm:$0xf]
      %v4134 = vld [vmem:[%s4127 + $0x18] sm:$0xf]
      %v4135 = vld [vmem:[%s4127 + $0x1c] sm:$0xf]
      %v4136 = vld [vmem:[%s4127 + $0x20] sm:$0xf]
      %v4137 = vld [vmem:[%s4127 + $0x24] sm:$0xf]
      %v4138 = vld [vmem:[%s4127 + $0x28] sm:$0xf]
      %v4139 = vld [vmem:[%s4127 + $0x2c] sm:$0xf]
      %v4140 = vld [vmem:[%s4127 + $0x30] sm:$0xf]
      %v4141 = vld [vmem:[%s4127 + $0x34] sm:$0xf]
      %v4142 = vld [vmem:[%s4127 + $0x38] sm:$0xf]
      %v4143 = vld [vmem:[%s4127 + $0x3c] sm:$0xf]
      %v4144 = vrot.slane %v3440, 3
      %v4145 = vrot.slane %v3458, 3
      %v4146 = vsel %vm1309, %v4144, %v4145
      %v4164 = vunpack.c.l.b16 %v4128
      %v4165 = vunpack.c.l.b16 %v4129
      %v4166 = vunpack.c.l.b16 %v4130
      %v4167 = vunpack.c.l.b16 %v4131
      %v4168 = vunpack.c.l.b16 %v4132
      %v4169 = vunpack.c.l.b16 %v4133
      %v4170 = vunpack.c.l.b16 %v4134
      %v4171 = vunpack.c.l.b16 %v4135
      %v4172 = vunpack.c.l.b16 %v4136
      %v4173 = vunpack.c.l.b16 %v4137
      %v4174 = vunpack.c.l.b16 %v4138
      %v4175 = vunpack.c.l.b16 %v4139
      %v4176 = vunpack.c.l.b16 %v4140
      %v4177 = vunpack.c.l.b16 %v4141
      %v4178 = vunpack.c.l.b16 %v4142
      %v4179 = vunpack.c.l.b16 %v4143
      %v4180 = vpack.c.b16 %v4165, %v4164
      %v4181 = vpack.c.b16 %v4167, %v4166
      %v4182 = vpack.c.b16 %v4169, %v4168
      %v4183 = vpack.c.b16 %v4171, %v4170
      %v4184 = vpack.c.b16 %v4173, %v4172
      %v4185 = vpack.c.b16 %v4175, %v4174
      %v4186 = vpack.c.b16 %v4177, %v4176
      %v4187 = vpack.c.b16 %v4179, %v4178
      %4196 = vmatprep.subr.bf16.mxu0 0
      %4197 = vmatpush1.bf16.msra.mxu0 %v4180
      %4198 = vmatprep.subr.bf16.mxu0 0
      %4199 = vmatpush1.bf16.msra.mxu0 %v4181
      %4200 = vmatprep.subr.bf16.mxu0 0
      %4201 = vmatpush1.bf16.msra.mxu0 %v4182
      %4202 = vmatprep.subr.bf16.mxu0 0
      %4203 = vmatpush1.bf16.msra.mxu0 %v4183
      %4204 = vmatprep.subr.bf16.mxu0 0
      %4205 = vmatpush1.bf16.msra.mxu0 %v4184
      %4206 = vmatprep.subr.bf16.mxu0 0
      %4207 = vmatpush1.bf16.msra.mxu0 %v4185
      %4208 = vmatprep.subr.bf16.mxu0 0
      %4209 = vmatpush1.bf16.msra.mxu0 %v4186
      %4210 = vmatprep.subr.bf16.mxu0 0
      %4211 = vmatpush1.bf16.msra.mxu0 %v4187
      %4212 = vmatprep.subr.bf16.mxu0 0
      %4213 = vmatpush1.bf16.msra.mxu0 0
      %4214 = vmatprep.subr.bf16.mxu0 0
      %4215 = vmatpush1.bf16.msra.mxu0 0
      %4216 = vmatprep.subr.bf16.mxu0 0
      %4217 = vmatpush1.bf16.msra.mxu0 0
      %4218 = vmatprep.subr.bf16.mxu0 0
      %4219 = vmatpush1.bf16.msra.mxu0 0
      %4220 = vmatprep.subr.bf16.mxu0 0
      %4221 = vmatpush1.bf16.msra.mxu0 0
      %4222 = vmatprep.subr.bf16.mxu0 0
      %4223 = vmatpush1.bf16.msra.mxu0 0
      %4224 = vmatprep.subr.bf16.mxu0 0
      %4225 = vmatpush1.bf16.msra.mxu0 0
      %4226 = vmatprep.subr.bf16.mxu0 0
      %4227 = vmatpush1.bf16.msra.mxu0 0
      %4228 = vmatprep.mubr.bf16.mxu0 0
      %4229 = vmatmul.mubr.bf16.gmra.mrb[0].mxu0 %v4146
      %v4230 = vpop.f32.mrb[0].mxu0
      %v4231 = vadd.f32 0.0, %v4230
      %v4232 = vpop.f32.mrb[0].mxu0
      %v4233 = vpop.f32.mrb[0].mxu0
      %v4234 = vadd.f32 0.0, %v4233
      %v4235 = vpop.f32.mrb[0].mxu0
      %4236 = vdwg.mxu0
      %v4237 = vadd.f32 %v4125, %v4231
      %v4238 = vadd.f32 %v4126, %v4234
      %s4239 = scalar_lea.vmem %s2, 1600
      %v4240 = vld [vmem:[%s4239] sm:$0xf]
      %v4241 = vld [vmem:[%s4239 + $0x4] sm:$0xf]
      %v4242 = vld [vmem:[%s4239 + $0x8] sm:$0xf]
      %v4243 = vld [vmem:[%s4239 + $0xc] sm:$0xf]
      %v4244 = vld [vmem:[%s4239 + $0x10] sm:$0xf]
      %v4245 = vld [vmem:[%s4239 + $0x14] sm:$0xf]
      %v4246 = vld [vmem:[%s4239 + $0x18] sm:$0xf]
      %v4247 = vld [vmem:[%s4239 + $0x1c] sm:$0xf]
      %v4248 = vld [vmem:[%s4239 + $0x20] sm:$0xf]
      %v4249 = vld [vmem:[%s4239 + $0x24] sm:$0xf]
      %v4250 = vld [vmem:[%s4239 + $0x28] sm:$0xf]
      %v4251 = vld [vmem:[%s4239 + $0x2c] sm:$0xf]
      %v4252 = vld [vmem:[%s4239 + $0x30] sm:$0xf]
      %v4253 = vld [vmem:[%s4239 + $0x34] sm:$0xf]
      %v4254 = vld [vmem:[%s4239 + $0x38] sm:$0xf]
      %v4255 = vld [vmem:[%s4239 + $0x3c] sm:$0xf]
      %v4256 = vrot.slane %v3477, 3
      %v4257 = vrot.slane %v3479, 4
      %v4258 = vor.u32 %v4256, %v4257
      %v4259 = vrot.slane %v3801, 3
      %v4260 = vrot.slane %v3484, 4
      %v4261 = vor.u32 %v4259, %v4260
      %v4262 = vsel %vm1422, %v4258, %v4261
      %v4280 = vunpack.c.l.b16 %v4240
      %v4281 = vunpack.c.l.b16 %v4241
      %v4282 = vunpack.c.l.b16 %v4242
      %v4283 = vunpack.c.l.b16 %v4243
      %v4284 = vunpack.c.l.b16 %v4244
      %v4285 = vunpack.c.l.b16 %v4245
      %v4286 = vunpack.c.l.b16 %v4246
      %v4287 = vunpack.c.l.b16 %v4247
      %v4288 = vunpack.c.l.b16 %v4248
      %v4289 = vunpack.c.l.b16 %v4249
      %v4290 = vunpack.c.l.b16 %v4250
      %v4291 = vunpack.c.l.b16 %v4251
      %v4292 = vunpack.c.l.b16 %v4252
      %v4293 = vunpack.c.l.b16 %v4253
      %v4294 = vunpack.c.l.b16 %v4254
      %v4295 = vunpack.c.l.b16 %v4255
      %v4296 = vpack.c.b16 %v4281, %v4280
      %v4297 = vpack.c.b16 %v4283, %v4282
      %v4298 = vpack.c.b16 %v4285, %v4284
      %v4299 = vpack.c.b16 %v4287, %v4286
      %v4300 = vpack.c.b16 %v4289, %v4288
      %v4301 = vpack.c.b16 %v4291, %v4290
      %v4302 = vpack.c.b16 %v4293, %v4292
      %v4303 = vpack.c.b16 %v4295, %v4294
      %4312 = vmatprep.subr.bf16.mxu0 0
      %4313 = vmatpush1.bf16.msra.mxu0 %v4296
      %4314 = vmatprep.subr.bf16.mxu0 0
      %4315 = vmatpush1.bf16.msra.mxu0 %v4297
      %4316 = vmatprep.subr.bf16.mxu0 0
      %4317 = vmatpush1.bf16.msra.mxu0 %v4298
      %4318 = vmatprep.subr.bf16.mxu0 0
      %4319 = vmatpush1.bf16.msra.mxu0 %v4299
      %4320 = vmatprep.subr.bf16.mxu0 0
      %4321 = vmatpush1.bf16.msra.mxu0 %v4300
      %4322 = vmatprep.subr.bf16.mxu0 0
      %4323 = vmatpush1.bf16.msra.mxu0 %v4301
      %4324 = vmatprep.subr.bf16.mxu0 0
      %4325 = vmatpush1.bf16.msra.mxu0 %v4302
      %4326 = vmatprep.subr.bf16.mxu0 0
      %4327 = vmatpush1.bf16.msra.mxu0 %v4303
      %4328 = vmatprep.subr.bf16.mxu0 0
      %4329 = vmatpush1.bf16.msra.mxu0 0
      %4330 = vmatprep.subr.bf16.mxu0 0
      %4331 = vmatpush1.bf16.msra.mxu0 0
      %4332 = vmatprep.subr.bf16.mxu0 0
      %4333 = vmatpush1.bf16.msra.mxu0 0
      %4334 = vmatprep.subr.bf16.mxu0 0
      %4335 = vmatpush1.bf16.msra.mxu0 0
      %4336 = vmatprep.subr.bf16.mxu0 0
      %4337 = vmatpush1.bf16.msra.mxu0 0
      %4338 = vmatprep.subr.bf16.mxu0 0
      %4339 = vmatpush1.bf16.msra.mxu0 0
      %4340 = vmatprep.subr.bf16.mxu0 0
      %4341 = vmatpush1.bf16.msra.mxu0 0
      %4342 = vmatprep.subr.bf16.mxu0 0
      %4343 = vmatpush1.bf16.msra.mxu0 0
      %4344 = vmatprep.mubr.bf16.mxu0 0
      %4345 = vmatmul.mubr.bf16.gmra.mrb[0].mxu0 %v4262
      %v4346 = vpop.f32.mrb[0].mxu0
      %v4347 = vadd.f32 0.0, %v4346
      %v4348 = vpop.f32.mrb[0].mxu0
      %v4349 = vpop.f32.mrb[0].mxu0
      %v4350 = vadd.f32 0.0, %v4349
      %v4351 = vpop.f32.mrb[0].mxu0
      %4352 = vdwg.mxu0
      %v4353 = vadd.f32 %v4237, %v4347
      %v4354 = vadd.f32 %v4238, %v4350
      %v4355 = vpack.c.bf16 %v3439, %v3434
      %s4356 = scalar_lea.vmem %s2, 1664
      %v4357 = vld [vmem:[%s4356] sm:$0xf]
      %v4358 = vld [vmem:[%s4356 + $0x4] sm:$0xf]
      %v4359 = vld [vmem:[%s4356 + $0x8] sm:$0xf]
      %v4360 = vld [vmem:[%s4356 + $0xc] sm:$0xf]
      %v4361 = vld [vmem:[%s4356 + $0x10] sm:$0xf]
      %v4362 = vld [vmem:[%s4356 + $0x14] sm:$0xf]
      %v4363 = vld [vmem:[%s4356 + $0x18] sm:$0xf]
      %v4364 = vld [vmem:[%s4356 + $0x1c] sm:$0xf]
      %v4365 = vld [vmem:[%s4356 + $0x20] sm:$0xf]
      %v4366 = vld [vmem:[%s4356 + $0x24] sm:$0xf]
      %v4367 = vld [vmem:[%s4356 + $0x28] sm:$0xf]
      %v4368 = vld [vmem:[%s4356 + $0x2c] sm:$0xf]
      %v4369 = vld [vmem:[%s4356 + $0x30] sm:$0xf]
      %v4370 = vld [vmem:[%s4356 + $0x34] sm:$0xf]
      %v4371 = vld [vmem:[%s4356 + $0x38] sm:$0xf]
      %v4372 = vld [vmem:[%s4356 + $0x3c] sm:$0xf]
      %v4389 = vunpack.c.l.b16 %v4357
      %v4390 = vunpack.c.l.b16 %v4358
      %v4391 = vunpack.c.l.b16 %v4359
      %v4392 = vunpack.c.l.b16 %v4360
      %v4393 = vunpack.c.l.b16 %v4361
      %v4394 = vunpack.c.l.b16 %v4362
      %v4395 = vunpack.c.l.b16 %v4363
      %v4396 = vunpack.c.l.b16 %v4364
      %v4397 = vunpack.c.l.b16 %v4365
      %v4398 = vunpack.c.l.b16 %v4366
      %v4399 = vunpack.c.l.b16 %v4367
      %v4400 = vunpack.c.l.b16 %v4368
      %v4401 = vunpack.c.l.b16 %v4369
      %v4402 = vunpack.c.l.b16 %v4370
      %v4403 = vunpack.c.l.b16 %v4371
      %v4404 = vunpack.c.l.b16 %v4372
      %v4405 = vpack.c.b16 %v4390, %v4389
      %v4406 = vpack.c.b16 %v4392, %v4391
      %v4407 = vpack.c.b16 %v4394, %v4393
      %v4408 = vpack.c.b16 %v4396, %v4395
      %v4409 = vpack.c.b16 %v4398, %v4397
      %v4410 = vpack.c.b16 %v4400, %v4399
      %v4411 = vpack.c.b16 %v4402, %v4401
      %v4412 = vpack.c.b16 %v4404, %v4403
      %4421 = vmatprep.subr.bf16.mxu0 0
      %4422 = vmatpush1.bf16.msra.mxu0 %v4405
      %4423 = vmatprep.subr.bf16.mxu0 0
      %4424 = vmatpush1.bf16.msra.mxu0 %v4406
      %4425 = vmatprep.subr.bf16.mxu0 0
      %4426 = vmatpush1.bf16.msra.mxu0 %v4407
      %4427 = vmatprep.subr.bf16.mxu0 0
      %4428 = vmatpush1.bf16.msra.mxu0 %v4408
      %4429 = vmatprep.subr.bf16.mxu0 0
      %4430 = vmatpush1.bf16.msra.mxu0 %v4409
      %4431 = vmatprep.subr.bf16.mxu0 0
      %4432 = vmatpush1.bf16.msra.mxu0 %v4410
      %4433 = vmatprep.subr.bf16.mxu0 0
      %4434 = vmatpush1.bf16.msra.mxu0 %v4411
      %4435 = vmatprep.subr.bf16.mxu0 0
      %4436 = vmatpush1.bf16.msra.mxu0 %v4412
      %4437 = vmatprep.subr.bf16.mxu0 0
      %4438 = vmatpush1.bf16.msra.mxu0 0
      %4439 = vmatprep.subr.bf16.mxu0 0
      %4440 = vmatpush1.bf16.msra.mxu0 0
      %4441 = vmatprep.subr.bf16.mxu0 0
      %4442 = vmatpush1.bf16.msra.mxu0 0
      %4443 = vmatprep.subr.bf16.mxu0 0
      %4444 = vmatpush1.bf16.msra.mxu0 0
      %4445 = vmatprep.subr.bf16.mxu0 0
      %4446 = vmatpush1.bf16.msra.mxu0 0
      %4447 = vmatprep.subr.bf16.mxu0 0
      %4448 = vmatpush1.bf16.msra.mxu0 0
      %4449 = vmatprep.subr.bf16.mxu0 0
      %4450 = vmatpush1.bf16.msra.mxu0 0
      %4451 = vmatprep.subr.bf16.mxu0 0
      %4452 = vmatpush1.bf16.msra.mxu0 0
      %4453 = vmatprep.mubr.bf16.mxu0 0
      %4454 = vmatmul.mubr.bf16.gmra.mrb[0].mxu0 %v4355
      %v4455 = vpop.f32.mrb[0].mxu0
      %v4456 = vadd.f32 0.0, %v4455
      %v4457 = vpop.f32.mrb[0].mxu0
      %v4458 = vpop.f32.mrb[0].mxu0
      %v4459 = vadd.f32 0.0, %v4458
      %v4460 = vpop.f32.mrb[0].mxu0
      %4461 = vdwg.mxu0
      %v4462 = vadd.f32 %v4353, %v4456
      %v4463 = vadd.f32 %v4354, %v4459
      %s4464 = scalar_lea.vmem %s4, 2
      %v4465 = vld [vmem:[%s4464] sm:$0x1]
      %v4467 = vlaneseq
      %v4468 = vshrl.u32 %v4467, 7
      %v4469 = vsub.s32 0, %v4468
      %v4470 = vrot.slane %v4465, %v4469
      %v4472 = vadd.f32 %v4462, %v4470
      %v4473 = vadd.f32 %v4463, %v4470
      %v4474 = vmul.f32 %v4472, %v4472
      %v4475 = vmul.f32 %v4473, %v4473
      %v4476 = vsub.f32 0.0, %v4474
      %v4477 = vsub.f32 0.0, %v4475
      %v4478 = vmul.f32 %v4476, 1.442695
      %v4479 = vpow.pop %v4478
      %v4480 = vmul.f32 %v4477, 1.442695
      %v4481 = vpow.pop %v4480
      %v4482 = vmul.f32 %v4479, %v3426
      %v4483 = vmul.f32 %v4481, %v3427
      %v4486 = vrot.slane %v4482, 4
      %v4487 = vrot.slane %v4483, 4
      %v4488 = vsel %vm594, %v4486, %v4487
      %v4492 = vsel %vm594, 0.0, %v4486
      %v4493 = vsel %vm594, %v4487, 0.0
      %v4494 = vpack.c.bf16 %v4488, %v4492
      %s4495 = scalar_lea.vmem %s1, 576
      %v4496 = vld [vmem:[%s4495] sm:$0xf]
      %v4497 = vld [vmem:[%s4495 + $0x4] sm:$0xf]
      %v4498 = vld [vmem:[%s4495 + $0x8] sm:$0xf]
      %v4499 = vld [vmem:[%s4495 + $0xc] sm:$0xf]
      %v4500 = vld [vmem:[%s4495 + $0x10] sm:$0xf]
      %v4501 = vld [vmem:[%s4495 + $0x14] sm:$0xf]
      %v4502 = vld [vmem:[%s4495 + $0x18] sm:$0xf]
      %v4503 = vld [vmem:[%s4495 + $0x1c] sm:$0xf]
      %v4504 = vld [vmem:[%s4495 + $0x20] sm:$0xf]
      %v4505 = vld [vmem:[%s4495 + $0x24] sm:$0xf]
      %v4506 = vld [vmem:[%s4495 + $0x28] sm:$0xf]
      %v4507 = vld [vmem:[%s4495 + $0x2c] sm:$0xf]
      %v4508 = vld [vmem:[%s4495 + $0x30] sm:$0xf]
      %v4509 = vld [vmem:[%s4495 + $0x34] sm:$0xf]
      %v4510 = vld [vmem:[%s4495 + $0x38] sm:$0xf]
      %v4511 = vld [vmem:[%s4495 + $0x3c] sm:$0xf]
      %v4512 = vpack.c.bf16 %v4493, %v4493
      %s4513 = scalar_lea.vmem %s1, 640
      %v4514 = vld [vmem:[%s4513] sm:$0xf]
      %v4515 = vld [vmem:[%s4513 + $0x4] sm:$0xf]
      %v4516 = vld [vmem:[%s4513 + $0x8] sm:$0xf]
      %v4517 = vld [vmem:[%s4513 + $0xc] sm:$0xf]
      %v4518 = vld [vmem:[%s4513 + $0x10] sm:$0xf]
      %v4519 = vld [vmem:[%s4513 + $0x14] sm:$0xf]
      %v4520 = vld [vmem:[%s4513 + $0x18] sm:$0xf]
      %v4521 = vld [vmem:[%s4513 + $0x1c] sm:$0xf]
      %v4522 = vld [vmem:[%s4513 + $0x20] sm:$0xf]
      %v4523 = vld [vmem:[%s4513 + $0x24] sm:$0xf]
      %v4524 = vld [vmem:[%s4513 + $0x28] sm:$0xf]
      %v4525 = vld [vmem:[%s4513 + $0x2c] sm:$0xf]
      %v4526 = vld [vmem:[%s4513 + $0x30] sm:$0xf]
      %v4527 = vld [vmem:[%s4513 + $0x34] sm:$0xf]
      %v4528 = vld [vmem:[%s4513 + $0x38] sm:$0xf]
      %v4529 = vld [vmem:[%s4513 + $0x3c] sm:$0xf]
      %v4532 = vrot.slane %v4494, 2
      %v4533 = vrot.slane %v4512, 2
      %v4534 = vsel %vm1079, %v4532, %v4533
      %v4552 = vunpack.c.l.b16 %v4514
      %v4553 = vunpack.c.l.b16 %v4515
      %v4554 = vunpack.c.l.b16 %v4516
      %v4555 = vunpack.c.l.b16 %v4517
      %v4556 = vunpack.c.l.b16 %v4518
      %v4557 = vunpack.c.l.b16 %v4519
      %v4558 = vunpack.c.l.b16 %v4520
      %v4559 = vunpack.c.l.b16 %v4521
      %v4560 = vunpack.c.l.b16 %v4522
      %v4561 = vunpack.c.l.b16 %v4523
      %v4562 = vunpack.c.l.b16 %v4524
      %v4563 = vunpack.c.l.b16 %v4525
      %v4564 = vunpack.c.l.b16 %v4526
      %v4565 = vunpack.c.l.b16 %v4527
      %v4566 = vunpack.c.l.b16 %v4528
      %v4567 = vunpack.c.l.b16 %v4529
      %v4568 = vpack.c.b16 %v4553, %v4552
      %v4569 = vpack.c.b16 %v4555, %v4554
      %v4570 = vpack.c.b16 %v4557, %v4556
      %v4571 = vpack.c.b16 %v4559, %v4558
      %v4572 = vpack.c.b16 %v4561, %v4560
      %v4573 = vpack.c.b16 %v4563, %v4562
      %v4574 = vpack.c.b16 %v4565, %v4564
      %v4575 = vpack.c.b16 %v4567, %v4566
      %4584 = vmatprep.subr.bf16.mxu0 0
      %4585 = vmatpush1.bf16.msra.mxu0 %v4568
      %4586 = vmatprep.subr.bf16.mxu0 0
      %4587 = vmatpush1.bf16.msra.mxu0 %v4569
      %4588 = vmatprep.subr.bf16.mxu0 0
      %4589 = vmatpush1.bf16.msra.mxu0 %v4570
      %4590 = vmatprep.subr.bf16.mxu0 0
      %4591 = vmatpush1.bf16.msra.mxu0 %v4571
      %4592 = vmatprep.subr.bf16.mxu0 0
      %4593 = vmatpush1.bf16.msra.mxu0 %v4572
      %4594 = vmatprep.subr.bf16.mxu0 0
      %4595 = vmatpush1.bf16.msra.mxu0 %v4573
      %4596 = vmatprep.subr.bf16.mxu0 0
      %4597 = vmatpush1.bf16.msra.mxu0 %v4574
      %4598 = vmatprep.subr.bf16.mxu0 0
      %4599 = vmatpush1.bf16.msra.mxu0 %v4575
      %4600 = vmatprep.subr.bf16.mxu0 0
      %4601 = vmatpush1.bf16.msra.mxu0 0
      %4602 = vmatprep.subr.bf16.mxu0 0
      %4603 = vmatpush1.bf16.msra.mxu0 0
      %4604 = vmatprep.subr.bf16.mxu0 0
      %4605 = vmatpush1.bf16.msra.mxu0 0
      %4606 = vmatprep.subr.bf16.mxu0 0
      %4607 = vmatpush1.bf16.msra.mxu0 0
      %4608 = vmatprep.subr.bf16.mxu0 0
      %4609 = vmatpush1.bf16.msra.mxu0 0
      %4610 = vmatprep.subr.bf16.mxu0 0
      %4611 = vmatpush1.bf16.msra.mxu0 0
      %4612 = vmatprep.subr.bf16.mxu0 0
      %4613 = vmatpush1.bf16.msra.mxu0 0
      %4614 = vmatprep.subr.bf16.mxu0 0
      %4615 = vmatpush1.bf16.msra.mxu0 0
      %4616 = vmatprep.mubr.bf16.mxu0 0
      %4617 = vmatmul.mubr.bf16.gmra.mrb[0].mxu0 %v4534
      %v4618 = vpop.f32.mrb[0].mxu0
      %v4619 = vadd.f32 0.0, %v4618
      %v4620 = vpop.f32.mrb[0].mxu0
      %v4621 = vpop.f32.mrb[0].mxu0
      %v4622 = vadd.f32 0.0, %v4621
      %v4623 = vpop.f32.mrb[0].mxu0
      %4624 = vdwg.mxu0
      %v4641 = vunpack.c.l.b16 %v4496
      %v4642 = vunpack.c.l.b16 %v4497
      %v4643 = vunpack.c.l.b16 %v4498
      %v4644 = vunpack.c.l.b16 %v4499
      %v4645 = vunpack.c.l.b16 %v4500
      %v4646 = vunpack.c.l.b16 %v4501
      %v4647 = vunpack.c.l.b16 %v4502
      %v4648 = vunpack.c.l.b16 %v4503
      %v4649 = vunpack.c.l.b16 %v4504
      %v4650 = vunpack.c.l.b16 %v4505
      %v4651 = vunpack.c.l.b16 %v4506
      %v4652 = vunpack.c.l.b16 %v4507
      %v4653 = vunpack.c.l.b16 %v4508
      %v4654 = vunpack.c.l.b16 %v4509
      %v4655 = vunpack.c.l.b16 %v4510
      %v4656 = vunpack.c.l.b16 %v4511
      %v4657 = vpack.c.b16 %v4642, %v4641
      %v4658 = vpack.c.b16 %v4644, %v4643
      %v4659 = vpack.c.b16 %v4646, %v4645
      %v4660 = vpack.c.b16 %v4648, %v4647
      %v4661 = vpack.c.b16 %v4650, %v4649
      %v4662 = vpack.c.b16 %v4652, %v4651
      %v4663 = vpack.c.b16 %v4654, %v4653
      %v4664 = vpack.c.b16 %v4656, %v4655
      %4673 = vmatprep.subr.bf16.mxu0 0
      %4674 = vmatpush1.bf16.msra.mxu0 %v4657
      %4675 = vmatprep.subr.bf16.mxu0 0
      %4676 = vmatpush1.bf16.msra.mxu0 %v4658
      %4677 = vmatprep.subr.bf16.mxu0 0
      %4678 = vmatpush1.bf16.msra.mxu0 %v4659
      %4679 = vmatprep.subr.bf16.mxu0 0
      %4680 = vmatpush1.bf16.msra.mxu0 %v4660
      %4681 = vmatprep.subr.bf16.mxu0 0
      %4682 = vmatpush1.bf16.msra.mxu0 %v4661
      %4683 = vmatprep.subr.bf16.mxu0 0
      %4684 = vmatpush1.bf16.msra.mxu0 %v4662
      %4685 = vmatprep.subr.bf16.mxu0 0
      %4686 = vmatpush1.bf16.msra.mxu0 %v4663
      %4687 = vmatprep.subr.bf16.mxu0 0
      %4688 = vmatpush1.bf16.msra.mxu0 %v4664
      %4689 = vmatprep.subr.bf16.mxu0 0
      %4690 = vmatpush1.bf16.msra.mxu0 0
      %4691 = vmatprep.subr.bf16.mxu0 0
      %4692 = vmatpush1.bf16.msra.mxu0 0
      %4693 = vmatprep.subr.bf16.mxu0 0
      %4694 = vmatpush1.bf16.msra.mxu0 0
      %4695 = vmatprep.subr.bf16.mxu0 0
      %4696 = vmatpush1.bf16.msra.mxu0 0
      %4697 = vmatprep.subr.bf16.mxu0 0
      %4698 = vmatpush1.bf16.msra.mxu0 0
      %4699 = vmatprep.subr.bf16.mxu0 0
      %4700 = vmatpush1.bf16.msra.mxu0 0
      %4701 = vmatprep.subr.bf16.mxu0 0
      %4702 = vmatpush1.bf16.msra.mxu0 0
      %4703 = vmatprep.subr.bf16.mxu0 0
      %4704 = vmatpush1.bf16.msra.mxu0 0
      %4705 = vmatprep.mubr.bf16.mxu0 0
      %4706 = vmatmul.mubr.bf16.gmra.mrb[0].mxu0 %v4494
      %v4707 = vpop.f32.mrb[0].mxu0
      %v4708 = vadd.f32 %v4619, %v4707
      %v4709 = vpop.f32.mrb[0].mxu0
      %v4710 = vpop.f32.mrb[0].mxu0
      %v4711 = vadd.f32 %v4622, %v4710
      %v4712 = vpop.f32.mrb[0].mxu0
      %4713 = vdwg.mxu0
      %v4714 = vpack.c.bf16 %v4493, %v4488
      %s4715 = scalar_lea.vmem %s1, 704
      %v4716 = vld [vmem:[%s4715] sm:$0xf]
      %v4717 = vld [vmem:[%s4715 + $0x4] sm:$0xf]
      %v4718 = vld [vmem:[%s4715 + $0x8] sm:$0xf]
      %v4719 = vld [vmem:[%s4715 + $0xc] sm:$0xf]
      %v4720 = vld [vmem:[%s4715 + $0x10] sm:$0xf]
      %v4721 = vld [vmem:[%s4715 + $0x14] sm:$0xf]
      %v4722 = vld [vmem:[%s4715 + $0x18] sm:$0xf]
      %v4723 = vld [vmem:[%s4715 + $0x1c] sm:$0xf]
      %v4724 = vld [vmem:[%s4715 + $0x20] sm:$0xf]
      %v4725 = vld [vmem:[%s4715 + $0x24] sm:$0xf]
      %v4726 = vld [vmem:[%s4715 + $0x28] sm:$0xf]
      %v4727 = vld [vmem:[%s4715 + $0x2c] sm:$0xf]
      %v4728 = vld [vmem:[%s4715 + $0x30] sm:$0xf]
      %v4729 = vld [vmem:[%s4715 + $0x34] sm:$0xf]
      %v4730 = vld [vmem:[%s4715 + $0x38] sm:$0xf]
      %v4731 = vld [vmem:[%s4715 + $0x3c] sm:$0xf]
      %v4748 = vunpack.c.l.b16 %v4716
      %v4749 = vunpack.c.l.b16 %v4717
      %v4750 = vunpack.c.l.b16 %v4718
      %v4751 = vunpack.c.l.b16 %v4719
      %v4752 = vunpack.c.l.b16 %v4720
      %v4753 = vunpack.c.l.b16 %v4721
      %v4754 = vunpack.c.l.b16 %v4722
      %v4755 = vunpack.c.l.b16 %v4723
      %v4756 = vunpack.c.l.b16 %v4724
      %v4757 = vunpack.c.l.b16 %v4725
      %v4758 = vunpack.c.l.b16 %v4726
      %v4759 = vunpack.c.l.b16 %v4727
      %v4760 = vunpack.c.l.b16 %v4728
      %v4761 = vunpack.c.l.b16 %v4729
      %v4762 = vunpack.c.l.b16 %v4730
      %v4763 = vunpack.c.l.b16 %v4731
      %v4764 = vpack.c.b16 %v4749, %v4748
      %v4765 = vpack.c.b16 %v4751, %v4750
      %v4766 = vpack.c.b16 %v4753, %v4752
      %v4767 = vpack.c.b16 %v4755, %v4754
      %v4768 = vpack.c.b16 %v4757, %v4756
      %v4769 = vpack.c.b16 %v4759, %v4758
      %v4770 = vpack.c.b16 %v4761, %v4760
      %v4771 = vpack.c.b16 %v4763, %v4762
      %4780 = vmatprep.subr.bf16.mxu0 0
      %4781 = vmatpush1.bf16.msra.mxu0 %v4764
      %4782 = vmatprep.subr.bf16.mxu0 0
      %4783 = vmatpush1.bf16.msra.mxu0 %v4765
      %4784 = vmatprep.subr.bf16.mxu0 0
      %4785 = vmatpush1.bf16.msra.mxu0 %v4766
      %4786 = vmatprep.subr.bf16.mxu0 0
      %4787 = vmatpush1.bf16.msra.mxu0 %v4767
      %4788 = vmatprep.subr.bf16.mxu0 0
      %4789 = vmatpush1.bf16.msra.mxu0 %v4768
      %4790 = vmatprep.subr.bf16.mxu0 0
      %4791 = vmatpush1.bf16.msra.mxu0 %v4769
      %4792 = vmatprep.subr.bf16.mxu0 0
      %4793 = vmatpush1.bf16.msra.mxu0 %v4770
      %4794 = vmatprep.subr.bf16.mxu0 0
      %4795 = vmatpush1.bf16.msra.mxu0 %v4771
      %4796 = vmatprep.subr.bf16.mxu0 0
      %4797 = vmatpush1.bf16.msra.mxu0 0
      %4798 = vmatprep.subr.bf16.mxu0 0
      %4799 = vmatpush1.bf16.msra.mxu0 0
      %4800 = vmatprep.subr.bf16.mxu0 0
      %4801 = vmatpush1.bf16.msra.mxu0 0
      %4802 = vmatprep.subr.bf16.mxu0 0
      %4803 = vmatpush1.bf16.msra.mxu0 0
      %4804 = vmatprep.subr.bf16.mxu0 0
      %4805 = vmatpush1.bf16.msra.mxu0 0
      %4806 = vmatprep.subr.bf16.mxu0 0
      %4807 = vmatpush1.bf16.msra.mxu0 0
      %4808 = vmatprep.subr.bf16.mxu0 0
      %4809 = vmatpush1.bf16.msra.mxu0 0
      %4810 = vmatprep.subr.bf16.mxu0 0
      %4811 = vmatpush1.bf16.msra.mxu0 0
      %4812 = vmatprep.mubr.bf16.mxu0 0
      %4813 = vmatmul.mubr.bf16.gmra.mrb[0].mxu0 %v4714
      %v4814 = vpop.f32.mrb[0].mxu0
      %v4815 = vadd.f32 0.0, %v4814
      %v4816 = vpop.f32.mrb[0].mxu0
      %v4817 = vpop.f32.mrb[0].mxu0
      %v4818 = vadd.f32 0.0, %v4817
      %v4819 = vpop.f32.mrb[0].mxu0
      %4820 = vdwg.mxu0
      %v4821 = vadd.f32 %v4708, %v4815
      %v4822 = vadd.f32 %v4711, %v4818
      %s4823 = scalar_lea.vmem %s3, 3
      %v4824 = vld [vmem:[%s4823] sm:$0x1]
      %v4826 = vlaneseq
      %v4827 = vshrl.u32 %v4826, 7
      %v4828 = vsub.s32 0, %v4827
      %v4829 = vrot.slane %v4824, %v4828
      %v4831 = vadd.f32 %v4821, %v4829
      %v4832 = vadd.f32 %v4822, %v4829
      %v4833 = vmax.f32 %v4831, 0.0
      %v4834 = vmax.f32 %v4832, 0.0
      %v4837 = vrot.slane %v4833, 4
      %v4838 = vrot.slane %v4834, 4
      %v4839 = vsel %vm594, %v4837, %v4838
      %v4843 = vsel %vm594, 0.0, %v4837
      %v4844 = vsel %vm594, %v4838, 0.0
      %v4845 = vpack.c.bf16 %v4839, %v4843
      %s4846 = scalar_lea.vmem %s2, 1728
      %v4847 = vld [vmem:[%s4846] sm:$0xf]
      %v4848 = vld [vmem:[%s4846 + $0x4] sm:$0xf]
      %v4849 = vld [vmem:[%s4846 + $0x8] sm:$0xf]
      %v4850 = vld [vmem:[%s4846 + $0xc] sm:$0xf]
      %v4851 = vld [vmem:[%s4846 + $0x10] sm:$0xf]
      %v4852 = vld [vmem:[%s4846 + $0x14] sm:$0xf]
      %v4853 = vld [vmem:[%s4846 + $0x18] sm:$0xf]
      %v4854 = vld [vmem:[%s4846 + $0x1c] sm:$0xf]
      %v4855 = vld [vmem:[%s4846 + $0x20] sm:$0xf]
      %v4856 = vld [vmem:[%s4846 + $0x24] sm:$0xf]
      %v4857 = vld [vmem:[%s4846 + $0x28] sm:$0xf]
      %v4858 = vld [vmem:[%s4846 + $0x2c] sm:$0xf]
      %v4859 = vld [vmem:[%s4846 + $0x30] sm:$0xf]
      %v4860 = vld [vmem:[%s4846 + $0x34] sm:$0xf]
      %v4861 = vld [vmem:[%s4846 + $0x38] sm:$0xf]
      %v4862 = vld [vmem:[%s4846 + $0x3c] sm:$0xf]
      %v4863 = vpack.c.bf16 %v4844, %v4844
      %s4864 = scalar_lea.vmem %s2, 1792
      %v4865 = vld [vmem:[%s4864] sm:$0xf]
      %v4866 = vld [vmem:[%s4864 + $0x4] sm:$0xf]
      %v4867 = vld [vmem:[%s4864 + $0x8] sm:$0xf]
      %v4868 = vld [vmem:[%s4864 + $0xc] sm:$0xf]
      %v4869 = vld [vmem:[%s4864 + $0x10] sm:$0xf]
      %v4870 = vld [vmem:[%s4864 + $0x14] sm:$0xf]
      %v4871 = vld [vmem:[%s4864 + $0x18] sm:$0xf]
      %v4872 = vld [vmem:[%s4864 + $0x1c] sm:$0xf]
      %v4873 = vld [vmem:[%s4864 + $0x20] sm:$0xf]
      %v4874 = vld [vmem:[%s4864 + $0x24] sm:$0xf]
      %v4875 = vld [vmem:[%s4864 + $0x28] sm:$0xf]
      %v4876 = vld [vmem:[%s4864 + $0x2c] sm:$0xf]
      %v4877 = vld [vmem:[%s4864 + $0x30] sm:$0xf]
      %v4878 = vld [vmem:[%s4864 + $0x34] sm:$0xf]
      %v4879 = vld [vmem:[%s4864 + $0x38] sm:$0xf]
      %v4880 = vld [vmem:[%s4864 + $0x3c] sm:$0xf]
      %v4882 = vshrl.u32 %v4845, 16
      %v4884 = vshll.u32 %v4845, 16
      %v4886 = vrot.slane %v4884, 1
      %v4887 = vor.u32 %v4882, %v4886
      %v4889 = vshll.u32 %v4863, 16
      %v4891 = vrot.slane %v4889, 1
      %v4892 = vsel %vm274, %v4887, %v4891
      %v4910 = vunpack.c.l.b16 %v4865
      %v4911 = vunpack.c.l.b16 %v4866
      %v4912 = vunpack.c.l.b16 %v4867
      %v4913 = vunpack.c.l.b16 %v4868
      %v4914 = vunpack.c.l.b16 %v4869
      %v4915 = vunpack.c.l.b16 %v4870
      %v4916 = vunpack.c.l.b16 %v4871
      %v4917 = vunpack.c.l.b16 %v4872
      %v4918 = vunpack.c.l.b16 %v4873
      %v4919 = vunpack.c.l.b16 %v4874
      %v4920 = vunpack.c.l.b16 %v4875
      %v4921 = vunpack.c.l.b16 %v4876
      %v4922 = vunpack.c.l.b16 %v4877
      %v4923 = vunpack.c.l.b16 %v4878
      %v4924 = vunpack.c.l.b16 %v4879
      %v4925 = vunpack.c.l.b16 %v4880
      %v4926 = vpack.c.b16 %v4911, %v4910
      %v4927 = vpack.c.b16 %v4913, %v4912
      %v4928 = vpack.c.b16 %v4915, %v4914
      %v4929 = vpack.c.b16 %v4917, %v4916
      %v4930 = vpack.c.b16 %v4919, %v4918
      %v4931 = vpack.c.b16 %v4921, %v4920
      %v4932 = vpack.c.b16 %v4923, %v4922
      %v4933 = vpack.c.b16 %v4925, %v4924
      %4942 = vmatprep.subr.bf16.mxu0 0
      %4943 = vmatpush1.bf16.msra.mxu0 %v4926
      %4944 = vmatprep.subr.bf16.mxu0 0
      %4945 = vmatpush1.bf16.msra.mxu0 %v4927
      %4946 = vmatprep.subr.bf16.mxu0 0
      %4947 = vmatpush1.bf16.msra.mxu0 %v4928
      %4948 = vmatprep.subr.bf16.mxu0 0
      %4949 = vmatpush1.bf16.msra.mxu0 %v4929
      %4950 = vmatprep.subr.bf16.mxu0 0
      %4951 = vmatpush1.bf16.msra.mxu0 %v4930
      %4952 = vmatprep.subr.bf16.mxu0 0
      %4953 = vmatpush1.bf16.msra.mxu0 %v4931
      %4954 = vmatprep.subr.bf16.mxu0 0
      %4955 = vmatpush1.bf16.msra.mxu0 %v4932
      %4956 = vmatprep.subr.bf16.mxu0 0
      %4957 = vmatpush1.bf16.msra.mxu0 %v4933
      %4958 = vmatprep.subr.bf16.mxu0 0
      %4959 = vmatpush1.bf16.msra.mxu0 0
      %4960 = vmatprep.subr.bf16.mxu0 0
      %4961 = vmatpush1.bf16.msra.mxu0 0
      %4962 = vmatprep.subr.bf16.mxu0 0
      %4963 = vmatpush1.bf16.msra.mxu0 0
      %4964 = vmatprep.subr.bf16.mxu0 0
      %4965 = vmatpush1.bf16.msra.mxu0 0
      %4966 = vmatprep.subr.bf16.mxu0 0
      %4967 = vmatpush1.bf16.msra.mxu0 0
      %4968 = vmatprep.subr.bf16.mxu0 0
      %4969 = vmatpush1.bf16.msra.mxu0 0
      %4970 = vmatprep.subr.bf16.mxu0 0
      %4971 = vmatpush1.bf16.msra.mxu0 0
      %4972 = vmatprep.subr.bf16.mxu0 0
      %4973 = vmatpush1.bf16.msra.mxu0 0
      %4974 = vmatprep.mubr.bf16.mxu0 0
      %4975 = vmatmul.mubr.bf16.gmra.mrb[0].mxu0 %v4892
      %v4976 = vpop.f32.mrb[0].mxu0
      %v4977 = vadd.f32 0.0, %v4976
      %v4978 = vpop.f32.mrb[0].mxu0
      %v4979 = vpop.f32.mrb[0].mxu0
      %v4980 = vadd.f32 0.0, %v4979
      %v4981 = vpop.f32.mrb[0].mxu0
      %4982 = vdwg.mxu0
      %v4999 = vunpack.c.l.b16 %v4847
      %v5000 = vunpack.c.l.b16 %v4848
      %v5001 = vunpack.c.l.b16 %v4849
      %v5002 = vunpack.c.l.b16 %v4850
      %v5003 = vunpack.c.l.b16 %v4851
      %v5004 = vunpack.c.l.b16 %v4852
      %v5005 = vunpack.c.l.b16 %v4853
      %v5006 = vunpack.c.l.b16 %v4854
      %v5007 = vunpack.c.l.b16 %v4855
      %v5008 = vunpack.c.l.b16 %v4856
      %v5009 = vunpack.c.l.b16 %v4857
      %v5010 = vunpack.c.l.b16 %v4858
      %v5011 = vunpack.c.l.b16 %v4859
      %v5012 = vunpack.c.l.b16 %v4860
      %v5013 = vunpack.c.l.b16 %v4861
      %v5014 = vunpack.c.l.b16 %v4862
      %v5015 = vpack.c.b16 %v5000, %v4999
      %v5016 = vpack.c.b16 %v5002, %v5001
      %v5017 = vpack.c.b16 %v5004, %v5003
      %v5018 = vpack.c.b16 %v5006, %v5005
      %v5019 = vpack.c.b16 %v5008, %v5007
      %v5020 = vpack.c.b16 %v5010, %v5009
      %v5021 = vpack.c.b16 %v5012, %v5011
      %v5022 = vpack.c.b16 %v5014, %v5013
      %5031 = vmatprep.subr.bf16.mxu0 0
      %5032 = vmatpush1.bf16.msra.mxu0 %v5015
      %5033 = vmatprep.subr.bf16.mxu0 0
      %5034 = vmatpush1.bf16.msra.mxu0 %v5016
      %5035 = vmatprep.subr.bf16.mxu0 0
      %5036 = vmatpush1.bf16.msra.mxu0 %v5017
      %5037 = vmatprep.subr.bf16.mxu0 0
      %5038 = vmatpush1.bf16.msra.mxu0 %v5018
      %5039 = vmatprep.subr.bf16.mxu0 0
      %5040 = vmatpush1.bf16.msra.mxu0 %v5019
      %5041 = vmatprep.subr.bf16.mxu0 0
      %5042 = vmatpush1.bf16.msra.mxu0 %v5020
      %5043 = vmatprep.subr.bf16.mxu0 0
      %5044 = vmatpush1.bf16.msra.mxu0 %v5021
      %5045 = vmatprep.subr.bf16.mxu0 0
      %5046 = vmatpush1.bf16.msra.mxu0 %v5022
      %5047 = vmatprep.subr.bf16.mxu0 0
      %5048 = vmatpush1.bf16.msra.mxu0 0
      %5049 = vmatprep.subr.bf16.mxu0 0
      %5050 = vmatpush1.bf16.msra.mxu0 0
      %5051 = vmatprep.subr.bf16.mxu0 0
      %5052 = vmatpush1.bf16.msra.mxu0 0
      %5053 = vmatprep.subr.bf16.mxu0 0
      %5054 = vmatpush1.bf16.msra.mxu0 0
      %5055 = vmatprep.subr.bf16.mxu0 0
      %5056 = vmatpush1.bf16.msra.mxu0 0
      %5057 = vmatprep.subr.bf16.mxu0 0
      %5058 = vmatpush1.bf16.msra.mxu0 0
      %5059 = vmatprep.subr.bf16.mxu0 0
      %5060 = vmatpush1.bf16.msra.mxu0 0
      %5061 = vmatprep.subr.bf16.mxu0 0
      %5062 = vmatpush1.bf16.msra.mxu0 0
      %5063 = vmatprep.mubr.bf16.mxu0 0
      %5064 = vmatmul.mubr.bf16.gmra.mrb[0].mxu0 %v4845
      %v5065 = vpop.f32.mrb[0].mxu0
      %v5066 = vadd.f32 %v4977, %v5065
      %v5067 = vpop.f32.mrb[0].mxu0
      %v5068 = vpop.f32.mrb[0].mxu0
      %v5069 = vadd.f32 %v4980, %v5068
      %v5070 = vpop.f32.mrb[0].mxu0
      %5071 = vdwg.mxu0
      %s5072 = scalar_lea.vmem %s2, 1856
      %v5073 = vld [vmem:[%s5072] sm:$0xf]
      %v5074 = vld [vmem:[%s5072 + $0x4] sm:$0xf]
      %v5075 = vld [vmem:[%s5072 + $0x8] sm:$0xf]
      %v5076 = vld [vmem:[%s5072 + $0xc] sm:$0xf]
      %v5077 = vld [vmem:[%s5072 + $0x10] sm:$0xf]
      %v5078 = vld [vmem:[%s5072 + $0x14] sm:$0xf]
      %v5079 = vld [vmem:[%s5072 + $0x18] sm:$0xf]
      %v5080 = vld [vmem:[%s5072 + $0x1c] sm:$0xf]
      %v5081 = vld [vmem:[%s5072 + $0x20] sm:$0xf]
      %v5082 = vld [vmem:[%s5072 + $0x24] sm:$0xf]
      %v5083 = vld [vmem:[%s5072 + $0x28] sm:$0xf]
      %v5084 = vld [vmem:[%s5072 + $0x2c] sm:$0xf]
      %v5085 = vld [vmem:[%s5072 + $0x30] sm:$0xf]
      %v5086 = vld [vmem:[%s5072 + $0x34] sm:$0xf]
      %v5087 = vld [vmem:[%s5072 + $0x38] sm:$0xf]
      %v5088 = vld [vmem:[%s5072 + $0x3c] sm:$0xf]
      %v5091 = vrot.slane %v4845, 1
      %v5092 = vrot.slane %v4863, 1
      %v5093 = vsel %vm485, %v5091, %v5092
      %v5111 = vunpack.c.l.b16 %v5073
      %v5112 = vunpack.c.l.b16 %v5074
      %v5113 = vunpack.c.l.b16 %v5075
      %v5114 = vunpack.c.l.b16 %v5076
      %v5115 = vunpack.c.l.b16 %v5077
      %v5116 = vunpack.c.l.b16 %v5078
      %v5117 = vunpack.c.l.b16 %v5079
      %v5118 = vunpack.c.l.b16 %v5080
      %v5119 = vunpack.c.l.b16 %v5081
      %v5120 = vunpack.c.l.b16 %v5082
      %v5121 = vunpack.c.l.b16 %v5083
      %v5122 = vunpack.c.l.b16 %v5084
      %v5123 = vunpack.c.l.b16 %v5085
      %v5124 = vunpack.c.l.b16 %v5086
      %v5125 = vunpack.c.l.b16 %v5087
      %v5126 = vunpack.c.l.b16 %v5088
      %v5127 = vpack.c.b16 %v5112, %v5111
      %v5128 = vpack.c.b16 %v5114, %v5113
      %v5129 = vpack.c.b16 %v5116, %v5115
      %v5130 = vpack.c.b16 %v5118, %v5117
      %v5131 = vpack.c.b16 %v5120, %v5119
      %v5132 = vpack.c.b16 %v5122, %v5121
      %v5133 = vpack.c.b16 %v5124, %v5123
      %v5134 = vpack.c.b16 %v5126, %v5125
      %5143 = vmatprep.subr.bf16.mxu0 0
      %5144 = vmatpush1.bf16.msra.mxu0 %v5127
      %5145 = vmatprep.subr.bf16.mxu0 0
      %5146 = vmatpush1.bf16.msra.mxu0 %v5128
      %5147 = vmatprep.subr.bf16.mxu0 0
      %5148 = vmatpush1.bf16.msra.mxu0 %v5129
      %5149 = vmatprep.subr.bf16.mxu0 0
      %5150 = vmatpush1.bf16.msra.mxu0 %v5130
      %5151 = vmatprep.subr.bf16.mxu0 0
      %5152 = vmatpush1.bf16.msra.mxu0 %v5131
      %5153 = vmatprep.subr.bf16.mxu0 0
      %5154 = vmatpush1.bf16.msra.mxu0 %v5132
      %5155 = vmatprep.subr.bf16.mxu0 0
      %5156 = vmatpush1.bf16.msra.mxu0 %v5133
      %5157 = vmatprep.subr.bf16.mxu0 0
      %5158 = vmatpush1.bf16.msra.mxu0 %v5134
      %5159 = vmatprep.subr.bf16.mxu0 0
      %5160 = vmatpush1.bf16.msra.mxu0 0
      %5161 = vmatprep.subr.bf16.mxu0 0
      %5162 = vmatpush1.bf16.msra.mxu0 0
      %5163 = vmatprep.subr.bf16.mxu0 0
      %5164 = vmatpush1.bf16.msra.mxu0 0
      %5165 = vmatprep.subr.bf16.mxu0 0
      %5166 = vmatpush1.bf16.msra.mxu0 0
      %5167 = vmatprep.subr.bf16.mxu0 0
      %5168 = vmatpush1.bf16.msra.mxu0 0
      %5169 = vmatprep.subr.bf16.mxu0 0
      %5170 = vmatpush1.bf16.msra.mxu0 0
      %5171 = vmatprep.subr.bf16.mxu0 0
      %5172 = vmatpush1.bf16.msra.mxu0 0
      %5173 = vmatprep.subr.bf16.mxu0 0
      %5174 = vmatpush1.bf16.msra.mxu0 0
      %5175 = vmatprep.mubr.bf16.mxu0 0
      %5176 = vmatmul.mubr.bf16.gmra.mrb[0].mxu0 %v5093
      %v5177 = vpop.f32.mrb[0].mxu0
      %v5178 = vadd.f32 0.0, %v5177
      %v5179 = vpop.f32.mrb[0].mxu0
      %v5180 = vpop.f32.mrb[0].mxu0
      %v5181 = vadd.f32 0.0, %v5180
      %v5182 = vpop.f32.mrb[0].mxu0
      %5183 = vdwg.mxu0
      %v5184 = vadd.f32 %v5066, %v5178
      %v5185 = vadd.f32 %v5069, %v5181
      %s5186 = scalar_lea.vmem %s2, 1920
      %v5187 = vld [vmem:[%s5186] sm:$0xf]
      %v5188 = vld [vmem:[%s5186 + $0x4] sm:$0xf]
      %v5189 = vld [vmem:[%s5186 + $0x8] sm:$0xf]
      %v5190 = vld [vmem:[%s5186 + $0xc] sm:$0xf]
      %v5191 = vld [vmem:[%s5186 + $0x10] sm:$0xf]
      %v5192 = vld [vmem:[%s5186 + $0x14] sm:$0xf]
      %v5193 = vld [vmem:[%s5186 + $0x18] sm:$0xf]
      %v5194 = vld [vmem:[%s5186 + $0x1c] sm:$0xf]
      %v5195 = vld [vmem:[%s5186 + $0x20] sm:$0xf]
      %v5196 = vld [vmem:[%s5186 + $0x24] sm:$0xf]
      %v5197 = vld [vmem:[%s5186 + $0x28] sm:$0xf]
      %v5198 = vld [vmem:[%s5186 + $0x2c] sm:$0xf]
      %v5199 = vld [vmem:[%s5186 + $0x30] sm:$0xf]
      %v5200 = vld [vmem:[%s5186 + $0x34] sm:$0xf]
      %v5201 = vld [vmem:[%s5186 + $0x38] sm:$0xf]
      %v5202 = vld [vmem:[%s5186 + $0x3c] sm:$0xf]
      %v5203 = vrot.slane %v4882, 1
      %v5204 = vrot.slane %v4884, 2
      %v5205 = vor.u32 %v5203, %v5204
      %v5206 = vshrl.u32 %v4863, 16
      %v5208 = vrot.slane %v5206, 1
      %v5209 = vrot.slane %v4889, 2
      %v5210 = vor.u32 %v5208, %v5209
      %v5211 = vsel %vm960, %v5205, %v5210
      %v5229 = vunpack.c.l.b16 %v5187
      %v5230 = vunpack.c.l.b16 %v5188
      %v5231 = vunpack.c.l.b16 %v5189
      %v5232 = vunpack.c.l.b16 %v5190
      %v5233 = vunpack.c.l.b16 %v5191
      %v5234 = vunpack.c.l.b16 %v5192
      %v5235 = vunpack.c.l.b16 %v5193
      %v5236 = vunpack.c.l.b16 %v5194
      %v5237 = vunpack.c.l.b16 %v5195
      %v5238 = vunpack.c.l.b16 %v5196
      %v5239 = vunpack.c.l.b16 %v5197
      %v5240 = vunpack.c.l.b16 %v5198
      %v5241 = vunpack.c.l.b16 %v5199
      %v5242 = vunpack.c.l.b16 %v5200
      %v5243 = vunpack.c.l.b16 %v5201
      %v5244 = vunpack.c.l.b16 %v5202
      %v5245 = vpack.c.b16 %v5230, %v5229
      %v5246 = vpack.c.b16 %v5232, %v5231
      %v5247 = vpack.c.b16 %v5234, %v5233
      %v5248 = vpack.c.b16 %v5236, %v5235
      %v5249 = vpack.c.b16 %v5238, %v5237
      %v5250 = vpack.c.b16 %v5240, %v5239
      %v5251 = vpack.c.b16 %v5242, %v5241
      %v5252 = vpack.c.b16 %v5244, %v5243
      %5261 = vmatprep.subr.bf16.mxu0 0
      %5262 = vmatpush1.bf16.msra.mxu0 %v5245
      %5263 = vmatprep.subr.bf16.mxu0 0
      %5264 = vmatpush1.bf16.msra.mxu0 %v5246
      %5265 = vmatprep.subr.bf16.mxu0 0
      %5266 = vmatpush1.bf16.msra.mxu0 %v5247
      %5267 = vmatprep.subr.bf16.mxu0 0
      %5268 = vmatpush1.bf16.msra.mxu0 %v5248
      %5269 = vmatprep.subr.bf16.mxu0 0
      %5270 = vmatpush1.bf16.msra.mxu0 %v5249
      %5271 = vmatprep.subr.bf16.mxu0 0
      %5272 = vmatpush1.bf16.msra.mxu0 %v5250
      %5273 = vmatprep.subr.bf16.mxu0 0
      %5274 = vmatpush1.bf16.msra.mxu0 %v5251
      %5275 = vmatprep.subr.bf16.mxu0 0
      %5276 = vmatpush1.bf16.msra.mxu0 %v5252
      %5277 = vmatprep.subr.bf16.mxu0 0
      %5278 = vmatpush1.bf16.msra.mxu0 0
      %5279 = vmatprep.subr.bf16.mxu0 0
      %5280 = vmatpush1.bf16.msra.mxu0 0
      %5281 = vmatprep.subr.bf16.mxu0 0
      %5282 = vmatpush1.bf16.msra.mxu0 0
      %5283 = vmatprep.subr.bf16.mxu0 0
      %5284 = vmatpush1.bf16.msra.mxu0 0
      %5285 = vmatprep.subr.bf16.mxu0 0
      %5286 = vmatpush1.bf16.msra.mxu0 0
      %5287 = vmatprep.subr.bf16.mxu0 0
      %5288 = vmatpush1.bf16.msra.mxu0 0
      %5289 = vmatprep.subr.bf16.mxu0 0
      %5290 = vmatpush1.bf16.msra.mxu0 0
      %5291 = vmatprep.subr.bf16.mxu0 0
      %5292 = vmatpush1.bf16.msra.mxu0 0
      %5293 = vmatprep.mubr.bf16.mxu0 0
      %5294 = vmatmul.mubr.bf16.gmra.mrb[0].mxu0 %v5211
      %v5295 = vpop.f32.mrb[0].mxu0
      %v5296 = vadd.f32 0.0, %v5295
      %v5297 = vpop.f32.mrb[0].mxu0
      %v5298 = vpop.f32.mrb[0].mxu0
      %v5299 = vadd.f32 0.0, %v5298
      %v5300 = vpop.f32.mrb[0].mxu0
      %5301 = vdwg.mxu0
      %v5302 = vadd.f32 %v5184, %v5296
      %v5303 = vadd.f32 %v5185, %v5299
      %s5304 = scalar_lea.vmem %s2, 1984
      %v5305 = vld [vmem:[%s5304] sm:$0xf]
      %v5306 = vld [vmem:[%s5304 + $0x4] sm:$0xf]
      %v5307 = vld [vmem:[%s5304 + $0x8] sm:$0xf]
      %v5308 = vld [vmem:[%s5304 + $0xc] sm:$0xf]
      %v5309 = vld [vmem:[%s5304 + $0x10] sm:$0xf]
      %v5310 = vld [vmem:[%s5304 + $0x14] sm:$0xf]
      %v5311 = vld [vmem:[%s5304 + $0x18] sm:$0xf]
      %v5312 = vld [vmem:[%s5304 + $0x1c] sm:$0xf]
      %v5313 = vld [vmem:[%s5304 + $0x20] sm:$0xf]
      %v5314 = vld [vmem:[%s5304 + $0x24] sm:$0xf]
      %v5315 = vld [vmem:[%s5304 + $0x28] sm:$0xf]
      %v5316 = vld [vmem:[%s5304 + $0x2c] sm:$0xf]
      %v5317 = vld [vmem:[%s5304 + $0x30] sm:$0xf]
      %v5318 = vld [vmem:[%s5304 + $0x34] sm:$0xf]
      %v5319 = vld [vmem:[%s5304 + $0x38] sm:$0xf]
      %v5320 = vld [vmem:[%s5304 + $0x3c] sm:$0xf]
      %v5321 = vrot.slane %v4845, 2
      %v5322 = vrot.slane %v4863, 2
      %v5323 = vsel %vm1079, %v5321, %v5322
      %v5341 = vunpack.c.l.b16 %v5305
      %v5342 = vunpack.c.l.b16 %v5306
      %v5343 = vunpack.c.l.b16 %v5307
      %v5344 = vunpack.c.l.b16 %v5308
      %v5345 = vunpack.c.l.b16 %v5309
      %v5346 = vunpack.c.l.b16 %v5310
      %v5347 = vunpack.c.l.b16 %v5311
      %v5348 = vunpack.c.l.b16 %v5312
      %v5349 = vunpack.c.l.b16 %v5313
      %v5350 = vunpack.c.l.b16 %v5314
      %v5351 = vunpack.c.l.b16 %v5315
      %v5352 = vunpack.c.l.b16 %v5316
      %v5353 = vunpack.c.l.b16 %v5317
      %v5354 = vunpack.c.l.b16 %v5318
      %v5355 = vunpack.c.l.b16 %v5319
      %v5356 = vunpack.c.l.b16 %v5320
      %v5357 = vpack.c.b16 %v5342, %v5341
      %v5358 = vpack.c.b16 %v5344, %v5343
      %v5359 = vpack.c.b16 %v5346, %v5345
      %v5360 = vpack.c.b16 %v5348, %v5347
      %v5361 = vpack.c.b16 %v5350, %v5349
      %v5362 = vpack.c.b16 %v5352, %v5351
      %v5363 = vpack.c.b16 %v5354, %v5353
      %v5364 = vpack.c.b16 %v5356, %v5355
      %5373 = vmatprep.subr.bf16.mxu0 0
      %5374 = vmatpush1.bf16.msra.mxu0 %v5357
      %5375 = vmatprep.subr.bf16.mxu0 0
      %5376 = vmatpush1.bf16.msra.mxu0 %v5358
      %5377 = vmatprep.subr.bf16.mxu0 0
      %5378 = vmatpush1.bf16.msra.mxu0 %v5359
      %5379 = vmatprep.subr.bf16.mxu0 0
      %5380 = vmatpush1.bf16.msra.mxu0 %v5360
      %5381 = vmatprep.subr.bf16.mxu0 0
      %5382 = vmatpush1.bf16.msra.mxu0 %v5361
      %5383 = vmatprep.subr.bf16.mxu0 0
      %5384 = vmatpush1.bf16.msra.mxu0 %v5362
      %5385 = vmatprep.subr.bf16.mxu0 0
      %5386 = vmatpush1.bf16.msra.mxu0 %v5363
      %5387 = vmatprep.subr.bf16.mxu0 0
      %5388 = vmatpush1.bf16.msra.mxu0 %v5364
      %5389 = vmatprep.subr.bf16.mxu0 0
      %5390 = vmatpush1.bf16.msra.mxu0 0
      %5391 = vmatprep.subr.bf16.mxu0 0
      %5392 = vmatpush1.bf16.msra.mxu0 0
      %5393 = vmatprep.subr.bf16.mxu0 0
      %5394 = vmatpush1.bf16.msra.mxu0 0
      %5395 = vmatprep.subr.bf16.mxu0 0
      %5396 = vmatpush1.bf16.msra.mxu0 0
      %5397 = vmatprep.subr.bf16.mxu0 0
      %5398 = vmatpush1.bf16.msra.mxu0 0
      %5399 = vmatprep.subr.bf16.mxu0 0
      %5400 = vmatpush1.bf16.msra.mxu0 0
      %5401 = vmatprep.subr.bf16.mxu0 0
      %5402 = vmatpush1.bf16.msra.mxu0 0
      %5403 = vmatprep.subr.bf16.mxu0 0
      %5404 = vmatpush1.bf16.msra.mxu0 0
      %5405 = vmatprep.mubr.bf16.mxu0 0
      %5406 = vmatmul.mubr.bf16.gmra.mrb[0].mxu0 %v5323
      %v5407 = vpop.f32.mrb[0].mxu0
      %v5408 = vadd.f32 0.0, %v5407
      %v5409 = vpop.f32.mrb[0].mxu0
      %v5410 = vpop.f32.mrb[0].mxu0
      %v5411 = vadd.f32 0.0, %v5410
      %v5412 = vpop.f32.mrb[0].mxu0
      %5413 = vdwg.mxu0
      %v5414 = vadd.f32 %v5302, %v5408
      %v5415 = vadd.f32 %v5303, %v5411
      %s5416 = scalar_lea.vmem %s2, 2048
      %v5417 = vld [vmem:[%s5416] sm:$0xf]
      %v5418 = vld [vmem:[%s5416 + $0x4] sm:$0xf]
      %v5419 = vld [vmem:[%s5416 + $0x8] sm:$0xf]
      %v5420 = vld [vmem:[%s5416 + $0xc] sm:$0xf]
      %v5421 = vld [vmem:[%s5416 + $0x10] sm:$0xf]
      %v5422 = vld [vmem:[%s5416 + $0x14] sm:$0xf]
      %v5423 = vld [vmem:[%s5416 + $0x18] sm:$0xf]
      %v5424 = vld [vmem:[%s5416 + $0x1c] sm:$0xf]
      %v5425 = vld [vmem:[%s5416 + $0x20] sm:$0xf]
      %v5426 = vld [vmem:[%s5416 + $0x24] sm:$0xf]
      %v5427 = vld [vmem:[%s5416 + $0x28] sm:$0xf]
      %v5428 = vld [vmem:[%s5416 + $0x2c] sm:$0xf]
      %v5429 = vld [vmem:[%s5416 + $0x30] sm:$0xf]
      %v5430 = vld [vmem:[%s5416 + $0x34] sm:$0xf]
      %v5431 = vld [vmem:[%s5416 + $0x38] sm:$0xf]
      %v5432 = vld [vmem:[%s5416 + $0x3c] sm:$0xf]
      %v5433 = vrot.slane %v4882, 2
      %v5434 = vrot.slane %v4884, 3
      %v5435 = vor.u32 %v5433, %v5434
      %v5436 = vrot.slane %v5206, 2
      %v5437 = vrot.slane %v4889, 3
      %v5438 = vor.u32 %v5436, %v5437
      %v5439 = vsel %vm1192, %v5435, %v5438
      %v5457 = vunpack.c.l.b16 %v5417
      %v5458 = vunpack.c.l.b16 %v5418
      %v5459 = vunpack.c.l.b16 %v5419
      %v5460 = vunpack.c.l.b16 %v5420
      %v5461 = vunpack.c.l.b16 %v5421
      %v5462 = vunpack.c.l.b16 %v5422
      %v5463 = vunpack.c.l.b16 %v5423
      %v5464 = vunpack.c.l.b16 %v5424
      %v5465 = vunpack.c.l.b16 %v5425
      %v5466 = vunpack.c.l.b16 %v5426
      %v5467 = vunpack.c.l.b16 %v5427
      %v5468 = vunpack.c.l.b16 %v5428
      %v5469 = vunpack.c.l.b16 %v5429
      %v5470 = vunpack.c.l.b16 %v5430
      %v5471 = vunpack.c.l.b16 %v5431
      %v5472 = vunpack.c.l.b16 %v5432
      %v5473 = vpack.c.b16 %v5458, %v5457
      %v5474 = vpack.c.b16 %v5460, %v5459
      %v5475 = vpack.c.b16 %v5462, %v5461
      %v5476 = vpack.c.b16 %v5464, %v5463
      %v5477 = vpack.c.b16 %v5466, %v5465
      %v5478 = vpack.c.b16 %v5468, %v5467
      %v5479 = vpack.c.b16 %v5470, %v5469
      %v5480 = vpack.c.b16 %v5472, %v5471
      %5489 = vmatprep.subr.bf16.mxu0 0
      %5490 = vmatpush1.bf16.msra.mxu0 %v5473
      %5491 = vmatprep.subr.bf16.mxu0 0
      %5492 = vmatpush1.bf16.msra.mxu0 %v5474
      %5493 = vmatprep.subr.bf16.mxu0 0
      %5494 = vmatpush1.bf16.msra.mxu0 %v5475
      %5495 = vmatprep.subr.bf16.mxu0 0
      %5496 = vmatpush1.bf16.msra.mxu0 %v5476
      %5497 = vmatprep.subr.bf16.mxu0 0
      %5498 = vmatpush1.bf16.msra.mxu0 %v5477
      %5499 = vmatprep.subr.bf16.mxu0 0
      %5500 = vmatpush1.bf16.msra.mxu0 %v5478
      %5501 = vmatprep.subr.bf16.mxu0 0
      %5502 = vmatpush1.bf16.msra.mxu0 %v5479
      %5503 = vmatprep.subr.bf16.mxu0 0
      %5504 = vmatpush1.bf16.msra.mxu0 %v5480
      %5505 = vmatprep.subr.bf16.mxu0 0
      %5506 = vmatpush1.bf16.msra.mxu0 0
      %5507 = vmatprep.subr.bf16.mxu0 0
      %5508 = vmatpush1.bf16.msra.mxu0 0
      %5509 = vmatprep.subr.bf16.mxu0 0
      %5510 = vmatpush1.bf16.msra.mxu0 0
      %5511 = vmatprep.subr.bf16.mxu0 0
      %5512 = vmatpush1.bf16.msra.mxu0 0
      %5513 = vmatprep.subr.bf16.mxu0 0
      %5514 = vmatpush1.bf16.msra.mxu0 0
      %5515 = vmatprep.subr.bf16.mxu0 0
      %5516 = vmatpush1.bf16.msra.mxu0 0
      %5517 = vmatprep.subr.bf16.mxu0 0
      %5518 = vmatpush1.bf16.msra.mxu0 0
      %5519 = vmatprep.subr.bf16.mxu0 0
      %5520 = vmatpush1.bf16.msra.mxu0 0
      %5521 = vmatprep.mubr.bf16.mxu0 0
      %5522 = vmatmul.mubr.bf16.gmra.mrb[0].mxu0 %v5439
      %v5523 = vpop.f32.mrb[0].mxu0
      %v5524 = vadd.f32 0.0, %v5523
      %v5525 = vpop.f32.mrb[0].mxu0
      %v5526 = vpop.f32.mrb[0].mxu0
      %v5527 = vadd.f32 0.0, %v5526
      %v5528 = vpop.f32.mrb[0].mxu0
      %5529 = vdwg.mxu0
      %v5530 = vadd.f32 %v5414, %v5524
      %v5531 = vadd.f32 %v5415, %v5527
      %s5532 = scalar_lea.vmem %s2, 2112
      %v5533 = vld [vmem:[%s5532] sm:$0xf]
      %v5534 = vld [vmem:[%s5532 + $0x4] sm:$0xf]
      %v5535 = vld [vmem:[%s5532 + $0x8] sm:$0xf]
      %v5536 = vld [vmem:[%s5532 + $0xc] sm:$0xf]
      %v5537 = vld [vmem:[%s5532 + $0x10] sm:$0xf]
      %v5538 = vld [vmem:[%s5532 + $0x14] sm:$0xf]
      %v5539 = vld [vmem:[%s5532 + $0x18] sm:$0xf]
      %v5540 = vld [vmem:[%s5532 + $0x1c] sm:$0xf]
      %v5541 = vld [vmem:[%s5532 + $0x20] sm:$0xf]
      %v5542 = vld [vmem:[%s5532 + $0x24] sm:$0xf]
      %v5543 = vld [vmem:[%s5532 + $0x28] sm:$0xf]
      %v5544 = vld [vmem:[%s5532 + $0x2c] sm:$0xf]
      %v5545 = vld [vmem:[%s5532 + $0x30] sm:$0xf]
      %v5546 = vld [vmem:[%s5532 + $0x34] sm:$0xf]
      %v5547 = vld [vmem:[%s5532 + $0x38] sm:$0xf]
      %v5548 = vld [vmem:[%s5532 + $0x3c] sm:$0xf]
      %v5549 = vrot.slane %v4845, 3
      %v5550 = vrot.slane %v4863, 3
      %v5551 = vsel %vm1309, %v5549, %v5550
      %v5569 = vunpack.c.l.b16 %v5533
      %v5570 = vunpack.c.l.b16 %v5534
      %v5571 = vunpack.c.l.b16 %v5535
      %v5572 = vunpack.c.l.b16 %v5536
      %v5573 = vunpack.c.l.b16 %v5537
      %v5574 = vunpack.c.l.b16 %v5538
      %v5575 = vunpack.c.l.b16 %v5539
      %v5576 = vunpack.c.l.b16 %v5540
      %v5577 = vunpack.c.l.b16 %v5541
      %v5578 = vunpack.c.l.b16 %v5542
      %v5579 = vunpack.c.l.b16 %v5543
      %v5580 = vunpack.c.l.b16 %v5544
      %v5581 = vunpack.c.l.b16 %v5545
      %v5582 = vunpack.c.l.b16 %v5546
      %v5583 = vunpack.c.l.b16 %v5547
      %v5584 = vunpack.c.l.b16 %v5548
      %v5585 = vpack.c.b16 %v5570, %v5569
      %v5586 = vpack.c.b16 %v5572, %v5571
      %v5587 = vpack.c.b16 %v5574, %v5573
      %v5588 = vpack.c.b16 %v5576, %v5575
      %v5589 = vpack.c.b16 %v5578, %v5577
      %v5590 = vpack.c.b16 %v5580, %v5579
      %v5591 = vpack.c.b16 %v5582, %v5581
      %v5592 = vpack.c.b16 %v5584, %v5583
      %5601 = vmatprep.subr.bf16.mxu0 0
      %5602 = vmatpush1.bf16.msra.mxu0 %v5585
      %5603 = vmatprep.subr.bf16.mxu0 0
      %5604 = vmatpush1.bf16.msra.mxu0 %v5586
      %5605 = vmatprep.subr.bf16.mxu0 0
      %5606 = vmatpush1.bf16.msra.mxu0 %v5587
      %5607 = vmatprep.subr.bf16.mxu0 0
      %5608 = vmatpush1.bf16.msra.mxu0 %v5588
      %5609 = vmatprep.subr.bf16.mxu0 0
      %5610 = vmatpush1.bf16.msra.mxu0 %v5589
      %5611 = vmatprep.subr.bf16.mxu0 0
      %5612 = vmatpush1.bf16.msra.mxu0 %v5590
      %5613 = vmatprep.subr.bf16.mxu0 0
      %5614 = vmatpush1.bf16.msra.mxu0 %v5591
      %5615 = vmatprep.subr.bf16.mxu0 0
      %5616 = vmatpush1.bf16.msra.mxu0 %v5592
      %5617 = vmatprep.subr.bf16.mxu0 0
      %5618 = vmatpush1.bf16.msra.mxu0 0
      %5619 = vmatprep.subr.bf16.mxu0 0
      %5620 = vmatpush1.bf16.msra.mxu0 0
      %5621 = vmatprep.subr.bf16.mxu0 0
      %5622 = vmatpush1.bf16.msra.mxu0 0
      %5623 = vmatprep.subr.bf16.mxu0 0
      %5624 = vmatpush1.bf16.msra.mxu0 0
      %5625 = vmatprep.subr.bf16.mxu0 0
      %5626 = vmatpush1.bf16.msra.mxu0 0
      %5627 = vmatprep.subr.bf16.mxu0 0
      %5628 = vmatpush1.bf16.msra.mxu0 0
      %5629 = vmatprep.subr.bf16.mxu0 0
      %5630 = vmatpush1.bf16.msra.mxu0 0
      %5631 = vmatprep.subr.bf16.mxu0 0
      %5632 = vmatpush1.bf16.msra.mxu0 0
      %5633 = vmatprep.mubr.bf16.mxu0 0
      %5634 = vmatmul.mubr.bf16.gmra.mrb[0].mxu0 %v5551
      %v5635 = vpop.f32.mrb[0].mxu0
      %v5636 = vadd.f32 0.0, %v5635
      %v5637 = vpop.f32.mrb[0].mxu0
      %v5638 = vpop.f32.mrb[0].mxu0
      %v5639 = vadd.f32 0.0, %v5638
      %v5640 = vpop.f32.mrb[0].mxu0
      %5641 = vdwg.mxu0
      %v5642 = vadd.f32 %v5530, %v5636
      %v5643 = vadd.f32 %v5531, %v5639
      %s5644 = scalar_lea.vmem %s2, 2176
      %v5645 = vld [vmem:[%s5644] sm:$0xf]
      %v5646 = vld [vmem:[%s5644 + $0x4] sm:$0xf]
      %v5647 = vld [vmem:[%s5644 + $0x8] sm:$0xf]
      %v5648 = vld [vmem:[%s5644 + $0xc] sm:$0xf]
      %v5649 = vld [vmem:[%s5644 + $0x10] sm:$0xf]
      %v5650 = vld [vmem:[%s5644 + $0x14] sm:$0xf]
      %v5651 = vld [vmem:[%s5644 + $0x18] sm:$0xf]
      %v5652 = vld [vmem:[%s5644 + $0x1c] sm:$0xf]
      %v5653 = vld [vmem:[%s5644 + $0x20] sm:$0xf]
      %v5654 = vld [vmem:[%s5644 + $0x24] sm:$0xf]
      %v5655 = vld [vmem:[%s5644 + $0x28] sm:$0xf]
      %v5656 = vld [vmem:[%s5644 + $0x2c] sm:$0xf]
      %v5657 = vld [vmem:[%s5644 + $0x30] sm:$0xf]
      %v5658 = vld [vmem:[%s5644 + $0x34] sm:$0xf]
      %v5659 = vld [vmem:[%s5644 + $0x38] sm:$0xf]
      %v5660 = vld [vmem:[%s5644 + $0x3c] sm:$0xf]
      %v5661 = vrot.slane %v4882, 3
      %v5662 = vrot.slane %v4884, 4
      %v5663 = vor.u32 %v5661, %v5662
      %v5664 = vrot.slane %v5206, 3
      %v5665 = vrot.slane %v4889, 4
      %v5666 = vor.u32 %v5664, %v5665
      %v5667 = vsel %vm1422, %v5663, %v5666
      %v5685 = vunpack.c.l.b16 %v5645
      %v5686 = vunpack.c.l.b16 %v5646
      %v5687 = vunpack.c.l.b16 %v5647
      %v5688 = vunpack.c.l.b16 %v5648
      %v5689 = vunpack.c.l.b16 %v5649
      %v5690 = vunpack.c.l.b16 %v5650
      %v5691 = vunpack.c.l.b16 %v5651
      %v5692 = vunpack.c.l.b16 %v5652
      %v5693 = vunpack.c.l.b16 %v5653
      %v5694 = vunpack.c.l.b16 %v5654
      %v5695 = vunpack.c.l.b16 %v5655
      %v5696 = vunpack.c.l.b16 %v5656
      %v5697 = vunpack.c.l.b16 %v5657
      %v5698 = vunpack.c.l.b16 %v5658
      %v5699 = vunpack.c.l.b16 %v5659
      %v5700 = vunpack.c.l.b16 %v5660
      %v5701 = vpack.c.b16 %v5686, %v5685
      %v5702 = vpack.c.b16 %v5688, %v5687
      %v5703 = vpack.c.b16 %v5690, %v5689
      %v5704 = vpack.c.b16 %v5692, %v5691
      %v5705 = vpack.c.b16 %v5694, %v5693
      %v5706 = vpack.c.b16 %v5696, %v5695
      %v5707 = vpack.c.b16 %v5698, %v5697
      %v5708 = vpack.c.b16 %v5700, %v5699
      %5717 = vmatprep.subr.bf16.mxu0 0
      %5718 = vmatpush1.bf16.msra.mxu0 %v5701
      %5719 = vmatprep.subr.bf16.mxu0 0
      %5720 = vmatpush1.bf16.msra.mxu0 %v5702
      %5721 = vmatprep.subr.bf16.mxu0 0
      %5722 = vmatpush1.bf16.msra.mxu0 %v5703
      %5723 = vmatprep.subr.bf16.mxu0 0
      %5724 = vmatpush1.bf16.msra.mxu0 %v5704
      %5725 = vmatprep.subr.bf16.mxu0 0
      %5726 = vmatpush1.bf16.msra.mxu0 %v5705
      %5727 = vmatprep.subr.bf16.mxu0 0
      %5728 = vmatpush1.bf16.msra.mxu0 %v5706
      %5729 = vmatprep.subr.bf16.mxu0 0
      %5730 = vmatpush1.bf16.msra.mxu0 %v5707
      %5731 = vmatprep.subr.bf16.mxu0 0
      %5732 = vmatpush1.bf16.msra.mxu0 %v5708
      %5733 = vmatprep.subr.bf16.mxu0 0
      %5734 = vmatpush1.bf16.msra.mxu0 0
      %5735 = vmatprep.subr.bf16.mxu0 0
      %5736 = vmatpush1.bf16.msra.mxu0 0
      %5737 = vmatprep.subr.bf16.mxu0 0
      %5738 = vmatpush1.bf16.msra.mxu0 0
      %5739 = vmatprep.subr.bf16.mxu0 0
      %5740 = vmatpush1.bf16.msra.mxu0 0
      %5741 = vmatprep.subr.bf16.mxu0 0
      %5742 = vmatpush1.bf16.msra.mxu0 0
      %5743 = vmatprep.subr.bf16.mxu0 0
      %5744 = vmatpush1.bf16.msra.mxu0 0
      %5745 = vmatprep.subr.bf16.mxu0 0
      %5746 = vmatpush1.bf16.msra.mxu0 0
      %5747 = vmatprep.subr.bf16.mxu0 0
      %5748 = vmatpush1.bf16.msra.mxu0 0
      %5749 = vmatprep.mubr.bf16.mxu0 0
      %5750 = vmatmul.mubr.bf16.gmra.mrb[0].mxu0 %v5667
      %v5751 = vpop.f32.mrb[0].mxu0
      %v5752 = vadd.f32 0.0, %v5751
      %v5753 = vpop.f32.mrb[0].mxu0
      %v5754 = vpop.f32.mrb[0].mxu0
      %v5755 = vadd.f32 0.0, %v5754
      %v5756 = vpop.f32.mrb[0].mxu0
      %5757 = vdwg.mxu0
      %v5758 = vadd.f32 %v5642, %v5752
      %v5759 = vadd.f32 %v5643, %v5755
      %v5760 = vpack.c.bf16 %v4844, %v4839
      %s5761 = scalar_lea.vmem %s2, 2240
      %v5762 = vld [vmem:[%s5761] sm:$0xf]
      %v5763 = vld [vmem:[%s5761 + $0x4] sm:$0xf]
      %v5764 = vld [vmem:[%s5761 + $0x8] sm:$0xf]
      %v5765 = vld [vmem:[%s5761 + $0xc] sm:$0xf]
      %v5766 = vld [vmem:[%s5761 + $0x10] sm:$0xf]
      %v5767 = vld [vmem:[%s5761 + $0x14] sm:$0xf]
      %v5768 = vld [vmem:[%s5761 + $0x18] sm:$0xf]
      %v5769 = vld [vmem:[%s5761 + $0x1c] sm:$0xf]
      %v5770 = vld [vmem:[%s5761 + $0x20] sm:$0xf]
      %v5771 = vld [vmem:[%s5761 + $0x24] sm:$0xf]
      %v5772 = vld [vmem:[%s5761 + $0x28] sm:$0xf]
      %v5773 = vld [vmem:[%s5761 + $0x2c] sm:$0xf]
      %v5774 = vld [vmem:[%s5761 + $0x30] sm:$0xf]
      %v5775 = vld [vmem:[%s5761 + $0x34] sm:$0xf]
      %v5776 = vld [vmem:[%s5761 + $0x38] sm:$0xf]
      %v5777 = vld [vmem:[%s5761 + $0x3c] sm:$0xf]
      %v5794 = vunpack.c.l.b16 %v5762
      %v5795 = vunpack.c.l.b16 %v5763
      %v5796 = vunpack.c.l.b16 %v5764
      %v5797 = vunpack.c.l.b16 %v5765
      %v5798 = vunpack.c.l.b16 %v5766
      %v5799 = vunpack.c.l.b16 %v5767
      %v5800 = vunpack.c.l.b16 %v5768
      %v5801 = vunpack.c.l.b16 %v5769
      %v5802 = vunpack.c.l.b16 %v5770
      %v5803 = vunpack.c.l.b16 %v5771
      %v5804 = vunpack.c.l.b16 %v5772
      %v5805 = vunpack.c.l.b16 %v5773
      %v5806 = vunpack.c.l.b16 %v5774
      %v5807 = vunpack.c.l.b16 %v5775
      %v5808 = vunpack.c.l.b16 %v5776
      %v5809 = vunpack.c.l.b16 %v5777
      %v5810 = vpack.c.b16 %v5795, %v5794
      %v5811 = vpack.c.b16 %v5797, %v5796
      %v5812 = vpack.c.b16 %v5799, %v5798
      %v5813 = vpack.c.b16 %v5801, %v5800
      %v5814 = vpack.c.b16 %v5803, %v5802
      %v5815 = vpack.c.b16 %v5805, %v5804
      %v5816 = vpack.c.b16 %v5807, %v5806
      %v5817 = vpack.c.b16 %v5809, %v5808
      %5826 = vmatprep.subr.bf16.mxu0 0
      %5827 = vmatpush1.bf16.msra.mxu0 %v5810
      %5828 = vmatprep.subr.bf16.mxu0 0
      %5829 = vmatpush1.bf16.msra.mxu0 %v5811
      %5830 = vmatprep.subr.bf16.mxu0 0
      %5831 = vmatpush1.bf16.msra.mxu0 %v5812
      %5832 = vmatprep.subr.bf16.mxu0 0
      %5833 = vmatpush1.bf16.msra.mxu0 %v5813
      %5834 = vmatprep.subr.bf16.mxu0 0
      %5835 = vmatpush1.bf16.msra.mxu0 %v5814
      %5836 = vmatprep.subr.bf16.mxu0 0
      %5837 = vmatpush1.bf16.msra.mxu0 %v5815
      %5838 = vmatprep.subr.bf16.mxu0 0
      %5839 = vmatpush1.bf16.msra.mxu0 %v5816
      %5840 = vmatprep.subr.bf16.mxu0 0
      %5841 = vmatpush1.bf16.msra.mxu0 %v5817
      %5842 = vmatprep.subr.bf16.mxu0 0
      %5843 = vmatpush1.bf16.msra.mxu0 0
      %5844 = vmatprep.subr.bf16.mxu0 0
      %5845 = vmatpush1.bf16.msra.mxu0 0
      %5846 = vmatprep.subr.bf16.mxu0 0
      %5847 = vmatpush1.bf16.msra.mxu0 0
      %5848 = vmatprep.subr.bf16.mxu0 0
      %5849 = vmatpush1.bf16.msra.mxu0 0
      %5850 = vmatprep.subr.bf16.mxu0 0
      %5851 = vmatpush1.bf16.msra.mxu0 0
      %5852 = vmatprep.subr.bf16.mxu0 0
      %5853 = vmatpush1.bf16.msra.mxu0 0
      %5854 = vmatprep.subr.bf16.mxu0 0
      %5855 = vmatpush1.bf16.msra.mxu0 0
      %5856 = vmatprep.subr.bf16.mxu0 0
      %5857 = vmatpush1.bf16.msra.mxu0 0
      %5858 = vmatprep.mubr.bf16.mxu0 0
      %5859 = vmatmul.mubr.bf16.gmra.mrb[0].mxu0 %v5760
      %v5860 = vpop.f32.mrb[0].mxu0
      %v5861 = vadd.f32 0.0, %v5860
      %v5862 = vpop.f32.mrb[0].mxu0
      %v5863 = vpop.f32.mrb[0].mxu0
      %v5864 = vadd.f32 0.0, %v5863
      %v5865 = vpop.f32.mrb[0].mxu0
      %5866 = vdwg.mxu0
      %v5867 = vadd.f32 %v5758, %v5861
      %v5868 = vadd.f32 %v5759, %v5864
      %s5869 = scalar_lea.vmem %s4, 3
      %v5870 = vld [vmem:[%s5869] sm:$0x1]
      %v5872 = vlaneseq
      %v5873 = vshrl.u32 %v5872, 7
      %v5874 = vsub.s32 0, %v5873
      %v5875 = vrot.slane %v5870, %v5874
      %v5877 = vadd.f32 %v5867, %v5875
      %v5878 = vadd.f32 %v5868, %v5875
      %v5879 = vmul.f32 %v5877, %v5877
      %v5880 = vmul.f32 %v5878, %v5878
      %v5881 = vsub.f32 0.0, %v5879
      %v5882 = vsub.f32 0.0, %v5880
      %v5883 = vmul.f32 %v5881, 1.442695
      %v5884 = vpow.pop %v5883
      %v5885 = vmul.f32 %v5882, 1.442695
      %v5886 = vpow.pop %v5885
      %v5887 = vmul.f32 %v5884, %v4831
      %v5888 = vmul.f32 %v5886, %v4832
      %v5891 = vrot.slane %v5887, 7
      %v5892 = vrot.slane %v5888, 7
      %v5893 = vsel %vm230, %v5891, %v5892
      %v5897 = vsel %vm230, 0.0, %v5891
      %v5898 = vsel %vm230, %v5892, 0.0
      %v5899 = vpack.c.bf16 %v5893, %v5897
      %s5900 = scalar_lea.vmem %s1, 768
      %v5901 = vld [vmem:[%s5900] sm:$0xf]
      %v5902 = vld [vmem:[%s5900 + $0x4] sm:$0xf]
      %v5903 = vld [vmem:[%s5900 + $0x8] sm:$0xf]
      %v5904 = vld [vmem:[%s5900 + $0xc] sm:$0xf]
      %v5905 = vld [vmem:[%s5900 + $0x10] sm:$0xf]
      %v5906 = vld [vmem:[%s5900 + $0x14] sm:$0xf]
      %v5907 = vld [vmem:[%s5900 + $0x18] sm:$0xf]
      %v5908 = vld [vmem:[%s5900 + $0x1c] sm:$0xf]
      %v5909 = vld [vmem:[%s5900 + $0x20] sm:$0xf]
      %v5910 = vld [vmem:[%s5900 + $0x24] sm:$0xf]
      %v5911 = vld [vmem:[%s5900 + $0x28] sm:$0xf]
      %v5912 = vld [vmem:[%s5900 + $0x2c] sm:$0xf]
      %v5913 = vld [vmem:[%s5900 + $0x30] sm:$0xf]
      %v5914 = vld [vmem:[%s5900 + $0x34] sm:$0xf]
      %v5915 = vld [vmem:[%s5900 + $0x38] sm:$0xf]
      %v5916 = vld [vmem:[%s5900 + $0x3c] sm:$0xf]
      %v5917 = vpack.c.bf16 %v5898, %v5898
      %s5918 = scalar_lea.vmem %s1, 832
      %v5919 = vld [vmem:[%s5918] sm:$0xf]
      %v5920 = vld [vmem:[%s5918 + $0x4] sm:$0xf]
      %v5921 = vld [vmem:[%s5918 + $0x8] sm:$0xf]
      %v5922 = vld [vmem:[%s5918 + $0xc] sm:$0xf]
      %v5923 = vld [vmem:[%s5918 + $0x10] sm:$0xf]
      %v5924 = vld [vmem:[%s5918 + $0x14] sm:$0xf]
      %v5925 = vld [vmem:[%s5918 + $0x18] sm:$0xf]
      %v5926 = vld [vmem:[%s5918 + $0x1c] sm:$0xf]
      %v5927 = vld [vmem:[%s5918 + $0x20] sm:$0xf]
      %v5928 = vld [vmem:[%s5918 + $0x24] sm:$0xf]
      %v5929 = vld [vmem:[%s5918 + $0x28] sm:$0xf]
      %v5930 = vld [vmem:[%s5918 + $0x2c] sm:$0xf]
      %v5931 = vld [vmem:[%s5918 + $0x30] sm:$0xf]
      %v5932 = vld [vmem:[%s5918 + $0x34] sm:$0xf]
      %v5933 = vld [vmem:[%s5918 + $0x38] sm:$0xf]
      %v5934 = vld [vmem:[%s5918 + $0x3c] sm:$0xf]
      %v5936 = vshrl.u32 %v5899, 16
      %v5938 = vshll.u32 %v5899, 16
      %v5940 = vrot.slane %v5938, 1
      %v5941 = vor.u32 %v5936, %v5940
      %v5943 = vshll.u32 %v5917, 16
      %v5945 = vrot.slane %v5943, 1
      %v5946 = vsel %vm274, %v5941, %v5945
      %v5964 = vunpack.c.l.b16 %v5919
      %v5965 = vunpack.c.l.b16 %v5920
      %v5966 = vunpack.c.l.b16 %v5921
      %v5967 = vunpack.c.l.b16 %v5922
      %v5968 = vunpack.c.l.b16 %v5923
      %v5969 = vunpack.c.l.b16 %v5924
      %v5970 = vunpack.c.l.b16 %v5925
      %v5971 = vunpack.c.l.b16 %v5926
      %v5972 = vunpack.c.l.b16 %v5927
      %v5973 = vunpack.c.l.b16 %v5928
      %v5974 = vunpack.c.l.b16 %v5929
      %v5975 = vunpack.c.l.b16 %v5930
      %v5976 = vunpack.c.l.b16 %v5931
      %v5977 = vunpack.c.l.b16 %v5932
      %v5978 = vunpack.c.l.b16 %v5933
      %v5979 = vunpack.c.l.b16 %v5934
      %v5980 = vpack.c.b16 %v5965, %v5964
      %v5981 = vpack.c.b16 %v5967, %v5966
      %v5982 = vpack.c.b16 %v5969, %v5968
      %v5983 = vpack.c.b16 %v5971, %v5970
      %v5984 = vpack.c.b16 %v5973, %v5972
      %v5985 = vpack.c.b16 %v5975, %v5974
      %v5986 = vpack.c.b16 %v5977, %v5976
      %v5987 = vpack.c.b16 %v5979, %v5978
      %5996 = vmatprep.subr.bf16.mxu0 0
      %5997 = vmatpush1.bf16.msra.mxu0 %v5980
      %5998 = vmatprep.subr.bf16.mxu0 0
      %5999 = vmatpush1.bf16.msra.mxu0 %v5981
      %6000 = vmatprep.subr.bf16.mxu0 0
      %6001 = vmatpush1.bf16.msra.mxu0 %v5982
      %6002 = vmatprep.subr.bf16.mxu0 0
      %6003 = vmatpush1.bf16.msra.mxu0 %v5983
      %6004 = vmatprep.subr.bf16.mxu0 0
      %6005 = vmatpush1.bf16.msra.mxu0 %v5984
      %6006 = vmatprep.subr.bf16.mxu0 0
      %6007 = vmatpush1.bf16.msra.mxu0 %v5985
      %6008 = vmatprep.subr.bf16.mxu0 0
      %6009 = vmatpush1.bf16.msra.mxu0 %v5986
      %6010 = vmatprep.subr.bf16.mxu0 0
      %6011 = vmatpush1.bf16.msra.mxu0 %v5987
      %6012 = vmatprep.subr.bf16.mxu0 0
      %6013 = vmatpush1.bf16.msra.mxu0 0
      %6014 = vmatprep.subr.bf16.mxu0 0
      %6015 = vmatpush1.bf16.msra.mxu0 0
      %6016 = vmatprep.subr.bf16.mxu0 0
      %6017 = vmatpush1.bf16.msra.mxu0 0
      %6018 = vmatprep.subr.bf16.mxu0 0
      %6019 = vmatpush1.bf16.msra.mxu0 0
      %6020 = vmatprep.subr.bf16.mxu0 0
      %6021 = vmatpush1.bf16.msra.mxu0 0
      %6022 = vmatprep.subr.bf16.mxu0 0
      %6023 = vmatpush1.bf16.msra.mxu0 0
      %6024 = vmatprep.subr.bf16.mxu0 0
      %6025 = vmatpush1.bf16.msra.mxu0 0
      %6026 = vmatprep.subr.bf16.mxu0 0
      %6027 = vmatpush1.bf16.msra.mxu0 0
      %6028 = vmatprep.mubr.bf16.mxu0 0
      %6029 = vmatmul.mubr.bf16.gmra.mrb[0].mxu0 %v5946
      %v6030 = vpop.f32.mrb[0].mxu0
      %v6031 = vadd.f32 0.0, %v6030
      %v6032 = vpop.f32.mrb[0].mxu0
      %v6033 = vpop.f32.mrb[0].mxu0
      %v6034 = vadd.f32 0.0, %v6033
      %v6035 = vpop.f32.mrb[0].mxu0
      %6036 = vdwg.mxu0
      %v6053 = vunpack.c.l.b16 %v5901
      %v6054 = vunpack.c.l.b16 %v5902
      %v6055 = vunpack.c.l.b16 %v5903
      %v6056 = vunpack.c.l.b16 %v5904
      %v6057 = vunpack.c.l.b16 %v5905
      %v6058 = vunpack.c.l.b16 %v5906
      %v6059 = vunpack.c.l.b16 %v5907
      %v6060 = vunpack.c.l.b16 %v5908
      %v6061 = vunpack.c.l.b16 %v5909
      %v6062 = vunpack.c.l.b16 %v5910
      %v6063 = vunpack.c.l.b16 %v5911
      %v6064 = vunpack.c.l.b16 %v5912
      %v6065 = vunpack.c.l.b16 %v5913
      %v6066 = vunpack.c.l.b16 %v5914
      %v6067 = vunpack.c.l.b16 %v5915
      %v6068 = vunpack.c.l.b16 %v5916
      %v6069 = vpack.c.b16 %v6054, %v6053
      %v6070 = vpack.c.b16 %v6056, %v6055
      %v6071 = vpack.c.b16 %v6058, %v6057
      %v6072 = vpack.c.b16 %v6060, %v6059
      %v6073 = vpack.c.b16 %v6062, %v6061
      %v6074 = vpack.c.b16 %v6064, %v6063
      %v6075 = vpack.c.b16 %v6066, %v6065
      %v6076 = vpack.c.b16 %v6068, %v6067
      %6085 = vmatprep.subr.bf16.mxu0 0
      %6086 = vmatpush1.bf16.msra.mxu0 %v6069
      %6087 = vmatprep.subr.bf16.mxu0 0
      %6088 = vmatpush1.bf16.msra.mxu0 %v6070
      %6089 = vmatprep.subr.bf16.mxu0 0
      %6090 = vmatpush1.bf16.msra.mxu0 %v6071
      %6091 = vmatprep.subr.bf16.mxu0 0
      %6092 = vmatpush1.bf16.msra.mxu0 %v6072
      %6093 = vmatprep.subr.bf16.mxu0 0
      %6094 = vmatpush1.bf16.msra.mxu0 %v6073
      %6095 = vmatprep.subr.bf16.mxu0 0
      %6096 = vmatpush1.bf16.msra.mxu0 %v6074
      %6097 = vmatprep.subr.bf16.mxu0 0
      %6098 = vmatpush1.bf16.msra.mxu0 %v6075
      %6099 = vmatprep.subr.bf16.mxu0 0
      %6100 = vmatpush1.bf16.msra.mxu0 %v6076
      %6101 = vmatprep.subr.bf16.mxu0 0
      %6102 = vmatpush1.bf16.msra.mxu0 0
      %6103 = vmatprep.subr.bf16.mxu0 0
      %6104 = vmatpush1.bf16.msra.mxu0 0
      %6105 = vmatprep.subr.bf16.mxu0 0
      %6106 = vmatpush1.bf16.msra.mxu0 0
      %6107 = vmatprep.subr.bf16.mxu0 0
      %6108 = vmatpush1.bf16.msra.mxu0 0
      %6109 = vmatprep.subr.bf16.mxu0 0
      %6110 = vmatpush1.bf16.msra.mxu0 0
      %6111 = vmatprep.subr.bf16.mxu0 0
      %6112 = vmatpush1.bf16.msra.mxu0 0
      %6113 = vmatprep.subr.bf16.mxu0 0
      %6114 = vmatpush1.bf16.msra.mxu0 0
      %6115 = vmatprep.subr.bf16.mxu0 0
      %6116 = vmatpush1.bf16.msra.mxu0 0
      %6117 = vmatprep.mubr.bf16.mxu0 0
      %6118 = vmatmul.mubr.bf16.gmra.mrb[0].mxu0 %v5899
      %v6119 = vpop.f32.mrb[0].mxu0
      %v6120 = vadd.f32 %v6031, %v6119
      %v6121 = vpop.f32.mrb[0].mxu0
      %v6122 = vpop.f32.mrb[0].mxu0
      %v6123 = vadd.f32 %v6034, %v6122
      %v6124 = vpop.f32.mrb[0].mxu0
      %6125 = vdwg.mxu0
      %s6126 = scalar_lea.vmem %s1, 896
      %v6127 = vld [vmem:[%s6126] sm:$0xf]
      %v6128 = vld [vmem:[%s6126 + $0x4] sm:$0xf]
      %v6129 = vld [vmem:[%s6126 + $0x8] sm:$0xf]
      %v6130 = vld [vmem:[%s6126 + $0xc] sm:$0xf]
      %v6131 = vld [vmem:[%s6126 + $0x10] sm:$0xf]
      %v6132 = vld [vmem:[%s6126 + $0x14] sm:$0xf]
      %v6133 = vld [vmem:[%s6126 + $0x18] sm:$0xf]
      %v6134 = vld [vmem:[%s6126 + $0x1c] sm:$0xf]
      %v6135 = vld [vmem:[%s6126 + $0x20] sm:$0xf]
      %v6136 = vld [vmem:[%s6126 + $0x24] sm:$0xf]
      %v6137 = vld [vmem:[%s6126 + $0x28] sm:$0xf]
      %v6138 = vld [vmem:[%s6126 + $0x2c] sm:$0xf]
      %v6139 = vld [vmem:[%s6126 + $0x30] sm:$0xf]
      %v6140 = vld [vmem:[%s6126 + $0x34] sm:$0xf]
      %v6141 = vld [vmem:[%s6126 + $0x38] sm:$0xf]
      %v6142 = vld [vmem:[%s6126 + $0x3c] sm:$0xf]
      %v6145 = vrot.slane %v5899, 1
      %v6146 = vrot.slane %v5917, 1
      %v6147 = vsel %vm485, %v6145, %v6146
      %v6165 = vunpack.c.l.b16 %v6127
      %v6166 = vunpack.c.l.b16 %v6128
      %v6167 = vunpack.c.l.b16 %v6129
      %v6168 = vunpack.c.l.b16 %v6130
      %v6169 = vunpack.c.l.b16 %v6131
      %v6170 = vunpack.c.l.b16 %v6132
      %v6171 = vunpack.c.l.b16 %v6133
      %v6172 = vunpack.c.l.b16 %v6134
      %v6173 = vunpack.c.l.b16 %v6135
      %v6174 = vunpack.c.l.b16 %v6136
      %v6175 = vunpack.c.l.b16 %v6137
      %v6176 = vunpack.c.l.b16 %v6138
      %v6177 = vunpack.c.l.b16 %v6139
      %v6178 = vunpack.c.l.b16 %v6140
      %v6179 = vunpack.c.l.b16 %v6141
      %v6180 = vunpack.c.l.b16 %v6142
      %v6181 = vpack.c.b16 %v6166, %v6165
      %v6182 = vpack.c.b16 %v6168, %v6167
      %v6183 = vpack.c.b16 %v6170, %v6169
      %v6184 = vpack.c.b16 %v6172, %v6171
      %v6185 = vpack.c.b16 %v6174, %v6173
      %v6186 = vpack.c.b16 %v6176, %v6175
      %v6187 = vpack.c.b16 %v6178, %v6177
      %v6188 = vpack.c.b16 %v6180, %v6179
      %6197 = vmatprep.subr.bf16.mxu0 0
      %6198 = vmatpush1.bf16.msra.mxu0 %v6181
      %6199 = vmatprep.subr.bf16.mxu0 0
      %6200 = vmatpush1.bf16.msra.mxu0 %v6182
      %6201 = vmatprep.subr.bf16.mxu0 0
      %6202 = vmatpush1.bf16.msra.mxu0 %v6183
      %6203 = vmatprep.subr.bf16.mxu0 0
      %6204 = vmatpush1.bf16.msra.mxu0 %v6184
      %6205 = vmatprep.subr.bf16.mxu0 0
      %6206 = vmatpush1.bf16.msra.mxu0 %v6185
      %6207 = vmatprep.subr.bf16.mxu0 0
      %6208 = vmatpush1.bf16.msra.mxu0 %v6186
      %6209 = vmatprep.subr.bf16.mxu0 0
      %6210 = vmatpush1.bf16.msra.mxu0 %v6187
      %6211 = vmatprep.subr.bf16.mxu0 0
      %6212 = vmatpush1.bf16.msra.mxu0 %v6188
      %6213 = vmatprep.subr.bf16.mxu0 0
      %6214 = vmatpush1.bf16.msra.mxu0 0
      %6215 = vmatprep.subr.bf16.mxu0 0
      %6216 = vmatpush1.bf16.msra.mxu0 0
      %6217 = vmatprep.subr.bf16.mxu0 0
      %6218 = vmatpush1.bf16.msra.mxu0 0
      %6219 = vmatprep.subr.bf16.mxu0 0
      %6220 = vmatpush1.bf16.msra.mxu0 0
      %6221 = vmatprep.subr.bf16.mxu0 0
      %6222 = vmatpush1.bf16.msra.mxu0 0
      %6223 = vmatprep.subr.bf16.mxu0 0
      %6224 = vmatpush1.bf16.msra.mxu0 0
      %6225 = vmatprep.subr.bf16.mxu0 0
      %6226 = vmatpush1.bf16.msra.mxu0 0
      %6227 = vmatprep.subr.bf16.mxu0 0
      %6228 = vmatpush1.bf16.msra.mxu0 0
      %6229 = vmatprep.mubr.bf16.mxu0 0
      %6230 = vmatmul.mubr.bf16.gmra.mrb[0].mxu0 %v6147
      %v6231 = vpop.f32.mrb[0].mxu0
      %v6232 = vadd.f32 0.0, %v6231
      %v6233 = vpop.f32.mrb[0].mxu0
      %v6234 = vpop.f32.mrb[0].mxu0
      %v6235 = vadd.f32 0.0, %v6234
      %v6236 = vpop.f32.mrb[0].mxu0
      %6237 = vdwg.mxu0
      %v6238 = vadd.f32 %v6120, %v6232
      %v6239 = vadd.f32 %v6123, %v6235
      %v6240 = vrot.slane %v4482, 7
      %v6241 = vrot.slane %v4483, 7
      %v6242 = vsel %vm230, %v6240, %v6241
      %v6246 = vsel %vm230, 0.0, %v6240
      %v6247 = vsel %vm230, %v6241, 0.0
      %v6248 = vpack.c.bf16 %v6242, %v6246
      %s6249 = scalar_lea.vmem %s1, 960
      %v6250 = vld [vmem:[%s6249] sm:$0xf]
      %v6251 = vld [vmem:[%s6249 + $0x4] sm:$0xf]
      %v6252 = vld [vmem:[%s6249 + $0x8] sm:$0xf]
      %v6253 = vld [vmem:[%s6249 + $0xc] sm:$0xf]
      %v6254 = vld [vmem:[%s6249 + $0x10] sm:$0xf]
      %v6255 = vld [vmem:[%s6249 + $0x14] sm:$0xf]
      %v6256 = vld [vmem:[%s6249 + $0x18] sm:$0xf]
      %v6257 = vld [vmem:[%s6249 + $0x1c] sm:$0xf]
      %v6258 = vld [vmem:[%s6249 + $0x20] sm:$0xf]
      %v6259 = vld [vmem:[%s6249 + $0x24] sm:$0xf]
      %v6260 = vld [vmem:[%s6249 + $0x28] sm:$0xf]
      %v6261 = vld [vmem:[%s6249 + $0x2c] sm:$0xf]
      %v6262 = vld [vmem:[%s6249 + $0x30] sm:$0xf]
      %v6263 = vld [vmem:[%s6249 + $0x34] sm:$0xf]
      %v6264 = vld [vmem:[%s6249 + $0x38] sm:$0xf]
      %v6265 = vld [vmem:[%s6249 + $0x3c] sm:$0xf]
      %v6282 = vunpack.c.l.b16 %v6250
      %v6283 = vunpack.c.l.b16 %v6251
      %v6284 = vunpack.c.l.b16 %v6252
      %v6285 = vunpack.c.l.b16 %v6253
      %v6286 = vunpack.c.l.b16 %v6254
      %v6287 = vunpack.c.l.b16 %v6255
      %v6288 = vunpack.c.l.b16 %v6256
      %v6289 = vunpack.c.l.b16 %v6257
      %v6290 = vunpack.c.l.b16 %v6258
      %v6291 = vunpack.c.l.b16 %v6259
      %v6292 = vunpack.c.l.b16 %v6260
      %v6293 = vunpack.c.l.b16 %v6261
      %v6294 = vunpack.c.l.b16 %v6262
      %v6295 = vunpack.c.l.b16 %v6263
      %v6296 = vunpack.c.l.b16 %v6264
      %v6297 = vunpack.c.l.b16 %v6265
      %v6298 = vpack.c.b16 %v6283, %v6282
      %v6299 = vpack.c.b16 %v6285, %v6284
      %v6300 = vpack.c.b16 %v6287, %v6286
      %v6301 = vpack.c.b16 %v6289, %v6288
      %v6302 = vpack.c.b16 %v6291, %v6290
      %v6303 = vpack.c.b16 %v6293, %v6292
      %v6304 = vpack.c.b16 %v6295, %v6294
      %v6305 = vpack.c.b16 %v6297, %v6296
      %6314 = vmatprep.subr.bf16.mxu0 0
      %6315 = vmatpush1.bf16.msra.mxu0 %v6298
      %6316 = vmatprep.subr.bf16.mxu0 0
      %6317 = vmatpush1.bf16.msra.mxu0 %v6299
      %6318 = vmatprep.subr.bf16.mxu0 0
      %6319 = vmatpush1.bf16.msra.mxu0 %v6300
      %6320 = vmatprep.subr.bf16.mxu0 0
      %6321 = vmatpush1.bf16.msra.mxu0 %v6301
      %6322 = vmatprep.subr.bf16.mxu0 0
      %6323 = vmatpush1.bf16.msra.mxu0 %v6302
      %6324 = vmatprep.subr.bf16.mxu0 0
      %6325 = vmatpush1.bf16.msra.mxu0 %v6303
      %6326 = vmatprep.subr.bf16.mxu0 0
      %6327 = vmatpush1.bf16.msra.mxu0 %v6304
      %6328 = vmatprep.subr.bf16.mxu0 0
      %6329 = vmatpush1.bf16.msra.mxu0 %v6305
      %6330 = vmatprep.subr.bf16.mxu0 0
      %6331 = vmatpush1.bf16.msra.mxu0 0
      %6332 = vmatprep.subr.bf16.mxu0 0
      %6333 = vmatpush1.bf16.msra.mxu0 0
      %6334 = vmatprep.subr.bf16.mxu0 0
      %6335 = vmatpush1.bf16.msra.mxu0 0
      %6336 = vmatprep.subr.bf16.mxu0 0
      %6337 = vmatpush1.bf16.msra.mxu0 0
      %6338 = vmatprep.subr.bf16.mxu0 0
      %6339 = vmatpush1.bf16.msra.mxu0 0
      %6340 = vmatprep.subr.bf16.mxu0 0
      %6341 = vmatpush1.bf16.msra.mxu0 0
      %6342 = vmatprep.subr.bf16.mxu0 0
      %6343 = vmatpush1.bf16.msra.mxu0 0
      %6344 = vmatprep.subr.bf16.mxu0 0
      %6345 = vmatpush1.bf16.msra.mxu0 0
      %6346 = vmatprep.mubr.bf16.mxu0 0
      %6347 = vmatmul.mubr.bf16.gmra.mrb[0].mxu0 %v6248
      %v6348 = vpop.f32.mrb[0].mxu0
      %v6349 = vadd.f32 0.0, %v6348
      %v6350 = vpop.f32.mrb[0].mxu0
      %v6351 = vpop.f32.mrb[0].mxu0
      %v6352 = vadd.f32 0.0, %v6351
      %v6353 = vpop.f32.mrb[0].mxu0
      %6354 = vdwg.mxu0
      %v6355 = vadd.f32 %v6238, %v6349
      %v6356 = vadd.f32 %v6239, %v6352
      %v6357 = vpack.c.bf16 %v6247, %v6247
      %s6358 = scalar_lea.vmem %s1, 1024
      %v6359 = vld [vmem:[%s6358] sm:$0xf]
      %v6360 = vld [vmem:[%s6358 + $0x4] sm:$0xf]
      %v6361 = vld [vmem:[%s6358 + $0x8] sm:$0xf]
      %v6362 = vld [vmem:[%s6358 + $0xc] sm:$0xf]
      %v6363 = vld [vmem:[%s6358 + $0x10] sm:$0xf]
      %v6364 = vld [vmem:[%s6358 + $0x14] sm:$0xf]
      %v6365 = vld [vmem:[%s6358 + $0x18] sm:$0xf]
      %v6366 = vld [vmem:[%s6358 + $0x1c] sm:$0xf]
      %v6367 = vld [vmem:[%s6358 + $0x20] sm:$0xf]
      %v6368 = vld [vmem:[%s6358 + $0x24] sm:$0xf]
      %v6369 = vld [vmem:[%s6358 + $0x28] sm:$0xf]
      %v6370 = vld [vmem:[%s6358 + $0x2c] sm:$0xf]
      %v6371 = vld [vmem:[%s6358 + $0x30] sm:$0xf]
      %v6372 = vld [vmem:[%s6358 + $0x34] sm:$0xf]
      %v6373 = vld [vmem:[%s6358 + $0x38] sm:$0xf]
      %v6374 = vld [vmem:[%s6358 + $0x3c] sm:$0xf]
      %v6376 = vshrl.u32 %v6248, 16
      %v6378 = vshll.u32 %v6248, 16
      %v6380 = vrot.slane %v6378, 1
      %v6381 = vor.u32 %v6376, %v6380
      %v6383 = vshll.u32 %v6357, 16
      %v6385 = vrot.slane %v6383, 1
      %v6386 = vsel %vm274, %v6381, %v6385
      %v6404 = vunpack.c.l.b16 %v6359
      %v6405 = vunpack.c.l.b16 %v6360
      %v6406 = vunpack.c.l.b16 %v6361
      %v6407 = vunpack.c.l.b16 %v6362
      %v6408 = vunpack.c.l.b16 %v6363
      %v6409 = vunpack.c.l.b16 %v6364
      %v6410 = vunpack.c.l.b16 %v6365
      %v6411 = vunpack.c.l.b16 %v6366
      %v6412 = vunpack.c.l.b16 %v6367
      %v6413 = vunpack.c.l.b16 %v6368
      %v6414 = vunpack.c.l.b16 %v6369
      %v6415 = vunpack.c.l.b16 %v6370
      %v6416 = vunpack.c.l.b16 %v6371
      %v6417 = vunpack.c.l.b16 %v6372
      %v6418 = vunpack.c.l.b16 %v6373
      %v6419 = vunpack.c.l.b16 %v6374
      %v6420 = vpack.c.b16 %v6405, %v6404
      %v6421 = vpack.c.b16 %v6407, %v6406
      %v6422 = vpack.c.b16 %v6409, %v6408
      %v6423 = vpack.c.b16 %v6411, %v6410
      %v6424 = vpack.c.b16 %v6413, %v6412
      %v6425 = vpack.c.b16 %v6415, %v6414
      %v6426 = vpack.c.b16 %v6417, %v6416
      %v6427 = vpack.c.b16 %v6419, %v6418
      %6436 = vmatprep.subr.bf16.mxu0 0
      %6437 = vmatpush1.bf16.msra.mxu0 %v6420
      %6438 = vmatprep.subr.bf16.mxu0 0
      %6439 = vmatpush1.bf16.msra.mxu0 %v6421
      %6440 = vmatprep.subr.bf16.mxu0 0
      %6441 = vmatpush1.bf16.msra.mxu0 %v6422
      %6442 = vmatprep.subr.bf16.mxu0 0
      %6443 = vmatpush1.bf16.msra.mxu0 %v6423
      %6444 = vmatprep.subr.bf16.mxu0 0
      %6445 = vmatpush1.bf16.msra.mxu0 %v6424
      %6446 = vmatprep.subr.bf16.mxu0 0
      %6447 = vmatpush1.bf16.msra.mxu0 %v6425
      %6448 = vmatprep.subr.bf16.mxu0 0
      %6449 = vmatpush1.bf16.msra.mxu0 %v6426
      %6450 = vmatprep.subr.bf16.mxu0 0
      %6451 = vmatpush1.bf16.msra.mxu0 %v6427
      %6452 = vmatprep.subr.bf16.mxu0 0
      %6453 = vmatpush1.bf16.msra.mxu0 0
      %6454 = vmatprep.subr.bf16.mxu0 0
      %6455 = vmatpush1.bf16.msra.mxu0 0
      %6456 = vmatprep.subr.bf16.mxu0 0
      %6457 = vmatpush1.bf16.msra.mxu0 0
      %6458 = vmatprep.subr.bf16.mxu0 0
      %6459 = vmatpush1.bf16.msra.mxu0 0
      %6460 = vmatprep.subr.bf16.mxu0 0
      %6461 = vmatpush1.bf16.msra.mxu0 0
      %6462 = vmatprep.subr.bf16.mxu0 0
      %6463 = vmatpush1.bf16.msra.mxu0 0
      %6464 = vmatprep.subr.bf16.mxu0 0
      %6465 = vmatpush1.bf16.msra.mxu0 0
      %6466 = vmatprep.subr.bf16.mxu0 0
      %6467 = vmatpush1.bf16.msra.mxu0 0
      %6468 = vmatprep.mubr.bf16.mxu0 0
      %6469 = vmatmul.mubr.bf16.gmra.mrb[0].mxu0 %v6386
      %v6470 = vpop.f32.mrb[0].mxu0
      %v6471 = vadd.f32 0.0, %v6470
      %v6472 = vpop.f32.mrb[0].mxu0
      %v6473 = vpop.f32.mrb[0].mxu0
      %v6474 = vadd.f32 0.0, %v6473
      %v6475 = vpop.f32.mrb[0].mxu0
      %6476 = vdwg.mxu0
      %v6477 = vadd.f32 %v6355, %v6471
      %v6478 = vadd.f32 %v6356, %v6474
      %s6479 = scalar_lea.vmem %s1, 1088
      %v6480 = vld [vmem:[%s6479] sm:$0xf]
      %v6481 = vld [vmem:[%s6479 + $0x4] sm:$0xf]
      %v6482 = vld [vmem:[%s6479 + $0x8] sm:$0xf]
      %v6483 = vld [vmem:[%s6479 + $0xc] sm:$0xf]
      %v6484 = vld [vmem:[%s6479 + $0x10] sm:$0xf]
      %v6485 = vld [vmem:[%s6479 + $0x14] sm:$0xf]
      %v6486 = vld [vmem:[%s6479 + $0x18] sm:$0xf]
      %v6487 = vld [vmem:[%s6479 + $0x1c] sm:$0xf]
      %v6488 = vld [vmem:[%s6479 + $0x20] sm:$0xf]
      %v6489 = vld [vmem:[%s6479 + $0x24] sm:$0xf]
      %v6490 = vld [vmem:[%s6479 + $0x28] sm:$0xf]
      %v6491 = vld [vmem:[%s6479 + $0x2c] sm:$0xf]
      %v6492 = vld [vmem:[%s6479 + $0x30] sm:$0xf]
      %v6493 = vld [vmem:[%s6479 + $0x34] sm:$0xf]
      %v6494 = vld [vmem:[%s6479 + $0x38] sm:$0xf]
      %v6495 = vld [vmem:[%s6479 + $0x3c] sm:$0xf]
      %v6498 = vrot.slane %v6248, 1
      %v6499 = vrot.slane %v6357, 1
      %v6500 = vsel %vm485, %v6498, %v6499
      %v6518 = vunpack.c.l.b16 %v6480
      %v6519 = vunpack.c.l.b16 %v6481
      %v6520 = vunpack.c.l.b16 %v6482
      %v6521 = vunpack.c.l.b16 %v6483
      %v6522 = vunpack.c.l.b16 %v6484
      %v6523 = vunpack.c.l.b16 %v6485
      %v6524 = vunpack.c.l.b16 %v6486
      %v6525 = vunpack.c.l.b16 %v6487
      %v6526 = vunpack.c.l.b16 %v6488
      %v6527 = vunpack.c.l.b16 %v6489
      %v6528 = vunpack.c.l.b16 %v6490
      %v6529 = vunpack.c.l.b16 %v6491
      %v6530 = vunpack.c.l.b16 %v6492
      %v6531 = vunpack.c.l.b16 %v6493
      %v6532 = vunpack.c.l.b16 %v6494
      %v6533 = vunpack.c.l.b16 %v6495
      %v6534 = vpack.c.b16 %v6519, %v6518
      %v6535 = vpack.c.b16 %v6521, %v6520
      %v6536 = vpack.c.b16 %v6523, %v6522
      %v6537 = vpack.c.b16 %v6525, %v6524
      %v6538 = vpack.c.b16 %v6527, %v6526
      %v6539 = vpack.c.b16 %v6529, %v6528
      %v6540 = vpack.c.b16 %v6531, %v6530
      %v6541 = vpack.c.b16 %v6533, %v6532
      %6550 = vmatprep.subr.bf16.mxu0 0
      %6551 = vmatpush1.bf16.msra.mxu0 %v6534
      %6552 = vmatprep.subr.bf16.mxu0 0
      %6553 = vmatpush1.bf16.msra.mxu0 %v6535
      %6554 = vmatprep.subr.bf16.mxu0 0
      %6555 = vmatpush1.bf16.msra.mxu0 %v6536
      %6556 = vmatprep.subr.bf16.mxu0 0
      %6557 = vmatpush1.bf16.msra.mxu0 %v6537
      %6558 = vmatprep.subr.bf16.mxu0 0
      %6559 = vmatpush1.bf16.msra.mxu0 %v6538
      %6560 = vmatprep.subr.bf16.mxu0 0
      %6561 = vmatpush1.bf16.msra.mxu0 %v6539
      %6562 = vmatprep.subr.bf16.mxu0 0
      %6563 = vmatpush1.bf16.msra.mxu0 %v6540
      %6564 = vmatprep.subr.bf16.mxu0 0
      %6565 = vmatpush1.bf16.msra.mxu0 %v6541
      %6566 = vmatprep.subr.bf16.mxu0 0
      %6567 = vmatpush1.bf16.msra.mxu0 0
      %6568 = vmatprep.subr.bf16.mxu0 0
      %6569 = vmatpush1.bf16.msra.mxu0 0
      %6570 = vmatprep.subr.bf16.mxu0 0
      %6571 = vmatpush1.bf16.msra.mxu0 0
      %6572 = vmatprep.subr.bf16.mxu0 0
      %6573 = vmatpush1.bf16.msra.mxu0 0
      %6574 = vmatprep.subr.bf16.mxu0 0
      %6575 = vmatpush1.bf16.msra.mxu0 0
      %6576 = vmatprep.subr.bf16.mxu0 0
      %6577 = vmatpush1.bf16.msra.mxu0 0
      %6578 = vmatprep.subr.bf16.mxu0 0
      %6579 = vmatpush1.bf16.msra.mxu0 0
      %6580 = vmatprep.subr.bf16.mxu0 0
      %6581 = vmatpush1.bf16.msra.mxu0 0
      %6582 = vmatprep.mubr.bf16.mxu0 0
      %6583 = vmatmul.mubr.bf16.gmra.mrb[0].mxu0 %v6500
      %v6584 = vpop.f32.mrb[0].mxu0
      %v6585 = vadd.f32 0.0, %v6584
      %v6586 = vpop.f32.mrb[0].mxu0
      %v6587 = vpop.f32.mrb[0].mxu0
      %v6588 = vadd.f32 0.0, %v6587
      %v6589 = vpop.f32.mrb[0].mxu0
      %6590 = vdwg.mxu0
      %v6591 = vadd.f32 %v6477, %v6585
      %v6592 = vadd.f32 %v6478, %v6588
      %s6593 = scalar_lea.vmem %s3, 4
      %v6594 = vld [vmem:[%s6593] sm:$0x1]
      %v6596 = vlaneseq
      %v6597 = vshrl.u32 %v6596, 7
      %v6598 = vsub.s32 0, %v6597
      %v6599 = vrot.slane %v6594, %v6598
      %v6601 = vadd.f32 %v6591, %v6599
      %v6602 = vadd.f32 %v6592, %v6599
      %v6603 = vmax.f32 %v6601, 0.0
      %v6604 = vmax.f32 %v6602, 0.0
      %v6607 = vrot.slane %v6603, 4
      %v6608 = vrot.slane %v6604, 4
      %v6609 = vsel %vm594, %v6607, %v6608
      %v6613 = vsel %vm594, 0.0, %v6607
      %v6614 = vsel %vm594, %v6608, 0.0
      %v6615 = vpack.c.bf16 %v6609, %v6613
      %s6616 = scalar_lea.vmem %s2, 2304
      %v6617 = vld [vmem:[%s6616] sm:$0xf]
      %v6618 = vld [vmem:[%s6616 + $0x4] sm:$0xf]
      %v6619 = vld [vmem:[%s6616 + $0x8] sm:$0xf]
      %v6620 = vld [vmem:[%s6616 + $0xc] sm:$0xf]
      %v6621 = vld [vmem:[%s6616 + $0x10] sm:$0xf]
      %v6622 = vld [vmem:[%s6616 + $0x14] sm:$0xf]
      %v6623 = vld [vmem:[%s6616 + $0x18] sm:$0xf]
      %v6624 = vld [vmem:[%s6616 + $0x1c] sm:$0xf]
      %v6625 = vld [vmem:[%s6616 + $0x20] sm:$0xf]
      %v6626 = vld [vmem:[%s6616 + $0x24] sm:$0xf]
      %v6627 = vld [vmem:[%s6616 + $0x28] sm:$0xf]
      %v6628 = vld [vmem:[%s6616 + $0x2c] sm:$0xf]
      %v6629 = vld [vmem:[%s6616 + $0x30] sm:$0xf]
      %v6630 = vld [vmem:[%s6616 + $0x34] sm:$0xf]
      %v6631 = vld [vmem:[%s6616 + $0x38] sm:$0xf]
      %v6632 = vld [vmem:[%s6616 + $0x3c] sm:$0xf]
      %v6633 = vpack.c.bf16 %v6614, %v6614
      %s6634 = scalar_lea.vmem %s2, 2368
      %v6635 = vld [vmem:[%s6634] sm:$0xf]
      %v6636 = vld [vmem:[%s6634 + $0x4] sm:$0xf]
      %v6637 = vld [vmem:[%s6634 + $0x8] sm:$0xf]
      %v6638 = vld [vmem:[%s6634 + $0xc] sm:$0xf]
      %v6639 = vld [vmem:[%s6634 + $0x10] sm:$0xf]
      %v6640 = vld [vmem:[%s6634 + $0x14] sm:$0xf]
      %v6641 = vld [vmem:[%s6634 + $0x18] sm:$0xf]
      %v6642 = vld [vmem:[%s6634 + $0x1c] sm:$0xf]
      %v6643 = vld [vmem:[%s6634 + $0x20] sm:$0xf]
      %v6644 = vld [vmem:[%s6634 + $0x24] sm:$0xf]
      %v6645 = vld [vmem:[%s6634 + $0x28] sm:$0xf]
      %v6646 = vld [vmem:[%s6634 + $0x2c] sm:$0xf]
      %v6647 = vld [vmem:[%s6634 + $0x30] sm:$0xf]
      %v6648 = vld [vmem:[%s6634 + $0x34] sm:$0xf]
      %v6649 = vld [vmem:[%s6634 + $0x38] sm:$0xf]
      %v6650 = vld [vmem:[%s6634 + $0x3c] sm:$0xf]
      %v6652 = vshrl.u32 %v6615, 16
      %v6654 = vshll.u32 %v6615, 16
      %v6656 = vrot.slane %v6654, 1
      %v6657 = vor.u32 %v6652, %v6656
      %v6659 = vshll.u32 %v6633, 16
      %v6661 = vrot.slane %v6659, 1
      %v6662 = vsel %vm274, %v6657, %v6661
      %v6680 = vunpack.c.l.b16 %v6635
      %v6681 = vunpack.c.l.b16 %v6636
      %v6682 = vunpack.c.l.b16 %v6637
      %v6683 = vunpack.c.l.b16 %v6638
      %v6684 = vunpack.c.l.b16 %v6639
      %v6685 = vunpack.c.l.b16 %v6640
      %v6686 = vunpack.c.l.b16 %v6641
      %v6687 = vunpack.c.l.b16 %v6642
      %v6688 = vunpack.c.l.b16 %v6643
      %v6689 = vunpack.c.l.b16 %v6644
      %v6690 = vunpack.c.l.b16 %v6645
      %v6691 = vunpack.c.l.b16 %v6646
      %v6692 = vunpack.c.l.b16 %v6647
      %v6693 = vunpack.c.l.b16 %v6648
      %v6694 = vunpack.c.l.b16 %v6649
      %v6695 = vunpack.c.l.b16 %v6650
      %v6696 = vpack.c.b16 %v6681, %v6680
      %v6697 = vpack.c.b16 %v6683, %v6682
      %v6698 = vpack.c.b16 %v6685, %v6684
      %v6699 = vpack.c.b16 %v6687, %v6686
      %v6700 = vpack.c.b16 %v6689, %v6688
      %v6701 = vpack.c.b16 %v6691, %v6690
      %v6702 = vpack.c.b16 %v6693, %v6692
      %v6703 = vpack.c.b16 %v6695, %v6694
      %6712 = vmatprep.subr.bf16.mxu0 0
      %6713 = vmatpush1.bf16.msra.mxu0 %v6696
      %6714 = vmatprep.subr.bf16.mxu0 0
      %6715 = vmatpush1.bf16.msra.mxu0 %v6697
      %6716 = vmatprep.subr.bf16.mxu0 0
      %6717 = vmatpush1.bf16.msra.mxu0 %v6698
      %6718 = vmatprep.subr.bf16.mxu0 0
      %6719 = vmatpush1.bf16.msra.mxu0 %v6699
      %6720 = vmatprep.subr.bf16.mxu0 0
      %6721 = vmatpush1.bf16.msra.mxu0 %v6700
      %6722 = vmatprep.subr.bf16.mxu0 0
      %6723 = vmatpush1.bf16.msra.mxu0 %v6701
      %6724 = vmatprep.subr.bf16.mxu0 0
      %6725 = vmatpush1.bf16.msra.mxu0 %v6702
      %6726 = vmatprep.subr.bf16.mxu0 0
      %6727 = vmatpush1.bf16.msra.mxu0 %v6703
      %6728 = vmatprep.subr.bf16.mxu0 0
      %6729 = vmatpush1.bf16.msra.mxu0 0
      %6730 = vmatprep.subr.bf16.mxu0 0
      %6731 = vmatpush1.bf16.msra.mxu0 0
      %6732 = vmatprep.subr.bf16.mxu0 0
      %6733 = vmatpush1.bf16.msra.mxu0 0
      %6734 = vmatprep.subr.bf16.mxu0 0
      %6735 = vmatpush1.bf16.msra.mxu0 0
      %6736 = vmatprep.subr.bf16.mxu0 0
      %6737 = vmatpush1.bf16.msra.mxu0 0
      %6738 = vmatprep.subr.bf16.mxu0 0
      %6739 = vmatpush1.bf16.msra.mxu0 0
      %6740 = vmatprep.subr.bf16.mxu0 0
      %6741 = vmatpush1.bf16.msra.mxu0 0
      %6742 = vmatprep.subr.bf16.mxu0 0
      %6743 = vmatpush1.bf16.msra.mxu0 0
      %6744 = vmatprep.mubr.bf16.mxu0 0
      %6745 = vmatmul.mubr.bf16.gmra.mrb[0].mxu0 %v6662
      %v6746 = vpop.f32.mrb[0].mxu0
      %v6747 = vadd.f32 0.0, %v6746
      %v6748 = vpop.f32.mrb[0].mxu0
      %v6749 = vpop.f32.mrb[0].mxu0
      %v6750 = vadd.f32 0.0, %v6749
      %v6751 = vpop.f32.mrb[0].mxu0
      %6752 = vdwg.mxu0
      %v6769 = vunpack.c.l.b16 %v6617
      %v6770 = vunpack.c.l.b16 %v6618
      %v6771 = vunpack.c.l.b16 %v6619
      %v6772 = vunpack.c.l.b16 %v6620
      %v6773 = vunpack.c.l.b16 %v6621
      %v6774 = vunpack.c.l.b16 %v6622
      %v6775 = vunpack.c.l.b16 %v6623
      %v6776 = vunpack.c.l.b16 %v6624
      %v6777 = vunpack.c.l.b16 %v6625
      %v6778 = vunpack.c.l.b16 %v6626
      %v6779 = vunpack.c.l.b16 %v6627
      %v6780 = vunpack.c.l.b16 %v6628
      %v6781 = vunpack.c.l.b16 %v6629
      %v6782 = vunpack.c.l.b16 %v6630
      %v6783 = vunpack.c.l.b16 %v6631
      %v6784 = vunpack.c.l.b16 %v6632
      %v6785 = vpack.c.b16 %v6770, %v6769
      %v6786 = vpack.c.b16 %v6772, %v6771
      %v6787 = vpack.c.b16 %v6774, %v6773
      %v6788 = vpack.c.b16 %v6776, %v6775
      %v6789 = vpack.c.b16 %v6778, %v6777
      %v6790 = vpack.c.b16 %v6780, %v6779
      %v6791 = vpack.c.b16 %v6782, %v6781
      %v6792 = vpack.c.b16 %v6784, %v6783
      %6801 = vmatprep.subr.bf16.mxu0 0
      %6802 = vmatpush1.bf16.msra.mxu0 %v6785
      %6803 = vmatprep.subr.bf16.mxu0 0
      %6804 = vmatpush1.bf16.msra.mxu0 %v6786
      %6805 = vmatprep.subr.bf16.mxu0 0
      %6806 = vmatpush1.bf16.msra.mxu0 %v6787
      %6807 = vmatprep.subr.bf16.mxu0 0
      %6808 = vmatpush1.bf16.msra.mxu0 %v6788
      %6809 = vmatprep.subr.bf16.mxu0 0
      %6810 = vmatpush1.bf16.msra.mxu0 %v6789
      %6811 = vmatprep.subr.bf16.mxu0 0
      %6812 = vmatpush1.bf16.msra.mxu0 %v6790
      %6813 = vmatprep.subr.bf16.mxu0 0
      %6814 = vmatpush1.bf16.msra.mxu0 %v6791
      %6815 = vmatprep.subr.bf16.mxu0 0
      %6816 = vmatpush1.bf16.msra.mxu0 %v6792
      %6817 = vmatprep.subr.bf16.mxu0 0
      %6818 = vmatpush1.bf16.msra.mxu0 0
      %6819 = vmatprep.subr.bf16.mxu0 0
      %6820 = vmatpush1.bf16.msra.mxu0 0
      %6821 = vmatprep.subr.bf16.mxu0 0
      %6822 = vmatpush1.bf16.msra.mxu0 0
      %6823 = vmatprep.subr.bf16.mxu0 0
      %6824 = vmatpush1.bf16.msra.mxu0 0
      %6825 = vmatprep.subr.bf16.mxu0 0
      %6826 = vmatpush1.bf16.msra.mxu0 0
      %6827 = vmatprep.subr.bf16.mxu0 0
      %6828 = vmatpush1.bf16.msra.mxu0 0
      %6829 = vmatprep.subr.bf16.mxu0 0
      %6830 = vmatpush1.bf16.msra.mxu0 0
      %6831 = vmatprep.subr.bf16.mxu0 0
      %6832 = vmatpush1.bf16.msra.mxu0 0
      %6833 = vmatprep.mubr.bf16.mxu0 0
      %6834 = vmatmul.mubr.bf16.gmra.mrb[0].mxu0 %v6615
      %v6835 = vpop.f32.mrb[0].mxu0
      %v6836 = vadd.f32 %v6747, %v6835
      %v6837 = vpop.f32.mrb[0].mxu0
      %v6838 = vpop.f32.mrb[0].mxu0
      %v6839 = vadd.f32 %v6750, %v6838
      %v6840 = vpop.f32.mrb[0].mxu0
      %6841 = vdwg.mxu0
      %s6842 = scalar_lea.vmem %s2, 2432
      %v6843 = vld [vmem:[%s6842] sm:$0xf]
      %v6844 = vld [vmem:[%s6842 + $0x4] sm:$0xf]
      %v6845 = vld [vmem:[%s6842 + $0x8] sm:$0xf]
      %v6846 = vld [vmem:[%s6842 + $0xc] sm:$0xf]
      %v6847 = vld [vmem:[%s6842 + $0x10] sm:$0xf]
      %v6848 = vld [vmem:[%s6842 + $0x14] sm:$0xf]
      %v6849 = vld [vmem:[%s6842 + $0x18] sm:$0xf]
      %v6850 = vld [vmem:[%s6842 + $0x1c] sm:$0xf]
      %v6851 = vld [vmem:[%s6842 + $0x20] sm:$0xf]
      %v6852 = vld [vmem:[%s6842 + $0x24] sm:$0xf]
      %v6853 = vld [vmem:[%s6842 + $0x28] sm:$0xf]
      %v6854 = vld [vmem:[%s6842 + $0x2c] sm:$0xf]
      %v6855 = vld [vmem:[%s6842 + $0x30] sm:$0xf]
      %v6856 = vld [vmem:[%s6842 + $0x34] sm:$0xf]
      %v6857 = vld [vmem:[%s6842 + $0x38] sm:$0xf]
      %v6858 = vld [vmem:[%s6842 + $0x3c] sm:$0xf]
      %v6861 = vrot.slane %v6615, 1
      %v6862 = vrot.slane %v6633, 1
      %v6863 = vsel %vm485, %v6861, %v6862
      %v6881 = vunpack.c.l.b16 %v6843
      %v6882 = vunpack.c.l.b16 %v6844
      %v6883 = vunpack.c.l.b16 %v6845
      %v6884 = vunpack.c.l.b16 %v6846
      %v6885 = vunpack.c.l.b16 %v6847
      %v6886 = vunpack.c.l.b16 %v6848
      %v6887 = vunpack.c.l.b16 %v6849
      %v6888 = vunpack.c.l.b16 %v6850
      %v6889 = vunpack.c.l.b16 %v6851
      %v6890 = vunpack.c.l.b16 %v6852
      %v6891 = vunpack.c.l.b16 %v6853
      %v6892 = vunpack.c.l.b16 %v6854
      %v6893 = vunpack.c.l.b16 %v6855
      %v6894 = vunpack.c.l.b16 %v6856
      %v6895 = vunpack.c.l.b16 %v6857
      %v6896 = vunpack.c.l.b16 %v6858
      %v6897 = vpack.c.b16 %v6882, %v6881
      %v6898 = vpack.c.b16 %v6884, %v6883
      %v6899 = vpack.c.b16 %v6886, %v6885
      %v6900 = vpack.c.b16 %v6888, %v6887
      %v6901 = vpack.c.b16 %v6890, %v6889
      %v6902 = vpack.c.b16 %v6892, %v6891
      %v6903 = vpack.c.b16 %v6894, %v6893
      %v6904 = vpack.c.b16 %v6896, %v6895
      %6913 = vmatprep.subr.bf16.mxu0 0
      %6914 = vmatpush1.bf16.msra.mxu0 %v6897
      %6915 = vmatprep.subr.bf16.mxu0 0
      %6916 = vmatpush1.bf16.msra.mxu0 %v6898
      %6917 = vmatprep.subr.bf16.mxu0 0
      %6918 = vmatpush1.bf16.msra.mxu0 %v6899
      %6919 = vmatprep.subr.bf16.mxu0 0
      %6920 = vmatpush1.bf16.msra.mxu0 %v6900
      %6921 = vmatprep.subr.bf16.mxu0 0
      %6922 = vmatpush1.bf16.msra.mxu0 %v6901
      %6923 = vmatprep.subr.bf16.mxu0 0
      %6924 = vmatpush1.bf16.msra.mxu0 %v6902
      %6925 = vmatprep.subr.bf16.mxu0 0
      %6926 = vmatpush1.bf16.msra.mxu0 %v6903
      %6927 = vmatprep.subr.bf16.mxu0 0
      %6928 = vmatpush1.bf16.msra.mxu0 %v6904
      %6929 = vmatprep.subr.bf16.mxu0 0
      %6930 = vmatpush1.bf16.msra.mxu0 0
      %6931 = vmatprep.subr.bf16.mxu0 0
      %6932 = vmatpush1.bf16.msra.mxu0 0
      %6933 = vmatprep.subr.bf16.mxu0 0
      %6934 = vmatpush1.bf16.msra.mxu0 0
      %6935 = vmatprep.subr.bf16.mxu0 0
      %6936 = vmatpush1.bf16.msra.mxu0 0
      %6937 = vmatprep.subr.bf16.mxu0 0
      %6938 = vmatpush1.bf16.msra.mxu0 0
      %6939 = vmatprep.subr.bf16.mxu0 0
      %6940 = vmatpush1.bf16.msra.mxu0 0
      %6941 = vmatprep.subr.bf16.mxu0 0
      %6942 = vmatpush1.bf16.msra.mxu0 0
      %6943 = vmatprep.subr.bf16.mxu0 0
      %6944 = vmatpush1.bf16.msra.mxu0 0
      %6945 = vmatprep.mubr.bf16.mxu0 0
      %6946 = vmatmul.mubr.bf16.gmra.mrb[0].mxu0 %v6863
      %v6947 = vpop.f32.mrb[0].mxu0
      %v6948 = vadd.f32 0.0, %v6947
      %v6949 = vpop.f32.mrb[0].mxu0
      %v6950 = vpop.f32.mrb[0].mxu0
      %v6951 = vadd.f32 0.0, %v6950
      %v6952 = vpop.f32.mrb[0].mxu0
      %6953 = vdwg.mxu0
      %v6954 = vadd.f32 %v6836, %v6948
      %v6955 = vadd.f32 %v6839, %v6951
      %s6956 = scalar_lea.vmem %s2, 2496
      %v6957 = vld [vmem:[%s6956] sm:$0xf]
      %v6958 = vld [vmem:[%s6956 + $0x4] sm:$0xf]
      %v6959 = vld [vmem:[%s6956 + $0x8] sm:$0xf]
      %v6960 = vld [vmem:[%s6956 + $0xc] sm:$0xf]
      %v6961 = vld [vmem:[%s6956 + $0x10] sm:$0xf]
      %v6962 = vld [vmem:[%s6956 + $0x14] sm:$0xf]
      %v6963 = vld [vmem:[%s6956 + $0x18] sm:$0xf]
      %v6964 = vld [vmem:[%s6956 + $0x1c] sm:$0xf]
      %v6965 = vld [vmem:[%s6956 + $0x20] sm:$0xf]
      %v6966 = vld [vmem:[%s6956 + $0x24] sm:$0xf]
      %v6967 = vld [vmem:[%s6956 + $0x28] sm:$0xf]
      %v6968 = vld [vmem:[%s6956 + $0x2c] sm:$0xf]
      %v6969 = vld [vmem:[%s6956 + $0x30] sm:$0xf]
      %v6970 = vld [vmem:[%s6956 + $0x34] sm:$0xf]
      %v6971 = vld [vmem:[%s6956 + $0x38] sm:$0xf]
      %v6972 = vld [vmem:[%s6956 + $0x3c] sm:$0xf]
      %v6973 = vrot.slane %v6652, 1
      %v6974 = vrot.slane %v6654, 2
      %v6975 = vor.u32 %v6973, %v6974
      %v6976 = vshrl.u32 %v6633, 16
      %v6978 = vrot.slane %v6976, 1
      %v6979 = vrot.slane %v6659, 2
      %v6980 = vor.u32 %v6978, %v6979
      %v6981 = vsel %vm960, %v6975, %v6980
      %v6999 = vunpack.c.l.b16 %v6957
      %v7000 = vunpack.c.l.b16 %v6958
      %v7001 = vunpack.c.l.b16 %v6959
      %v7002 = vunpack.c.l.b16 %v6960
      %v7003 = vunpack.c.l.b16 %v6961
      %v7004 = vunpack.c.l.b16 %v6962
      %v7005 = vunpack.c.l.b16 %v6963
      %v7006 = vunpack.c.l.b16 %v6964
      %v7007 = vunpack.c.l.b16 %v6965
      %v7008 = vunpack.c.l.b16 %v6966
      %v7009 = vunpack.c.l.b16 %v6967
      %v7010 = vunpack.c.l.b16 %v6968
      %v7011 = vunpack.c.l.b16 %v6969
      %v7012 = vunpack.c.l.b16 %v6970
      %v7013 = vunpack.c.l.b16 %v6971
      %v7014 = vunpack.c.l.b16 %v6972
      %v7015 = vpack.c.b16 %v7000, %v6999
      %v7016 = vpack.c.b16 %v7002, %v7001
      %v7017 = vpack.c.b16 %v7004, %v7003
      %v7018 = vpack.c.b16 %v7006, %v7005
      %v7019 = vpack.c.b16 %v7008, %v7007
      %v7020 = vpack.c.b16 %v7010, %v7009
      %v7021 = vpack.c.b16 %v7012, %v7011
      %v7022 = vpack.c.b16 %v7014, %v7013
      %7031 = vmatprep.subr.bf16.mxu0 0
      %7032 = vmatpush1.bf16.msra.mxu0 %v7015
      %7033 = vmatprep.subr.bf16.mxu0 0
      %7034 = vmatpush1.bf16.msra.mxu0 %v7016
      %7035 = vmatprep.subr.bf16.mxu0 0
      %7036 = vmatpush1.bf16.msra.mxu0 %v7017
      %7037 = vmatprep.subr.bf16.mxu0 0
      %7038 = vmatpush1.bf16.msra.mxu0 %v7018
      %7039 = vmatprep.subr.bf16.mxu0 0
      %7040 = vmatpush1.bf16.msra.mxu0 %v7019
      %7041 = vmatprep.subr.bf16.mxu0 0
      %7042 = vmatpush1.bf16.msra.mxu0 %v7020
      %7043 = vmatprep.subr.bf16.mxu0 0
      %7044 = vmatpush1.bf16.msra.mxu0 %v7021
      %7045 = vmatprep.subr.bf16.mxu0 0
      %7046 = vmatpush1.bf16.msra.mxu0 %v7022
      %7047 = vmatprep.subr.bf16.mxu0 0
      %7048 = vmatpush1.bf16.msra.mxu0 0
      %7049 = vmatprep.subr.bf16.mxu0 0
      %7050 = vmatpush1.bf16.msra.mxu0 0
      %7051 = vmatprep.subr.bf16.mxu0 0
      %7052 = vmatpush1.bf16.msra.mxu0 0
      %7053 = vmatprep.subr.bf16.mxu0 0
      %7054 = vmatpush1.bf16.msra.mxu0 0
      %7055 = vmatprep.subr.bf16.mxu0 0
      %7056 = vmatpush1.bf16.msra.mxu0 0
      %7057 = vmatprep.subr.bf16.mxu0 0
      %7058 = vmatpush1.bf16.msra.mxu0 0
      %7059 = vmatprep.subr.bf16.mxu0 0
      %7060 = vmatpush1.bf16.msra.mxu0 0
      %7061 = vmatprep.subr.bf16.mxu0 0
      %7062 = vmatpush1.bf16.msra.mxu0 0
      %7063 = vmatprep.mubr.bf16.mxu0 0
      %7064 = vmatmul.mubr.bf16.gmra.mrb[0].mxu0 %v6981
      %v7065 = vpop.f32.mrb[0].mxu0
      %v7066 = vadd.f32 0.0, %v7065
      %v7067 = vpop.f32.mrb[0].mxu0
      %v7068 = vpop.f32.mrb[0].mxu0
      %v7069 = vadd.f32 0.0, %v7068
      %v7070 = vpop.f32.mrb[0].mxu0
      %7071 = vdwg.mxu0
      %v7072 = vadd.f32 %v6954, %v7066
      %v7073 = vadd.f32 %v6955, %v7069
      %s7074 = scalar_lea.vmem %s2, 2560
      %v7075 = vld [vmem:[%s7074] sm:$0xf]
      %v7076 = vld [vmem:[%s7074 + $0x4] sm:$0xf]
      %v7077 = vld [vmem:[%s7074 + $0x8] sm:$0xf]
      %v7078 = vld [vmem:[%s7074 + $0xc] sm:$0xf]
      %v7079 = vld [vmem:[%s7074 + $0x10] sm:$0xf]
      %v7080 = vld [vmem:[%s7074 + $0x14] sm:$0xf]
      %v7081 = vld [vmem:[%s7074 + $0x18] sm:$0xf]
      %v7082 = vld [vmem:[%s7074 + $0x1c] sm:$0xf]
      %v7083 = vld [vmem:[%s7074 + $0x20] sm:$0xf]
      %v7084 = vld [vmem:[%s7074 + $0x24] sm:$0xf]
      %v7085 = vld [vmem:[%s7074 + $0x28] sm:$0xf]
      %v7086 = vld [vmem:[%s7074 + $0x2c] sm:$0xf]
      %v7087 = vld [vmem:[%s7074 + $0x30] sm:$0xf]
      %v7088 = vld [vmem:[%s7074 + $0x34] sm:$0xf]
      %v7089 = vld [vmem:[%s7074 + $0x38] sm:$0xf]
      %v7090 = vld [vmem:[%s7074 + $0x3c] sm:$0xf]
      %v7091 = vrot.slane %v6615, 2
      %v7092 = vrot.slane %v6633, 2
      %v7093 = vsel %vm1079, %v7091, %v7092
      %v7111 = vunpack.c.l.b16 %v7075
      %v7112 = vunpack.c.l.b16 %v7076
      %v7113 = vunpack.c.l.b16 %v7077
      %v7114 = vunpack.c.l.b16 %v7078
      %v7115 = vunpack.c.l.b16 %v7079
      %v7116 = vunpack.c.l.b16 %v7080
      %v7117 = vunpack.c.l.b16 %v7081
      %v7118 = vunpack.c.l.b16 %v7082
      %v7119 = vunpack.c.l.b16 %v7083
      %v7120 = vunpack.c.l.b16 %v7084
      %v7121 = vunpack.c.l.b16 %v7085
      %v7122 = vunpack.c.l.b16 %v7086
      %v7123 = vunpack.c.l.b16 %v7087
      %v7124 = vunpack.c.l.b16 %v7088
      %v7125 = vunpack.c.l.b16 %v7089
      %v7126 = vunpack.c.l.b16 %v7090
      %v7127 = vpack.c.b16 %v7112, %v7111
      %v7128 = vpack.c.b16 %v7114, %v7113
      %v7129 = vpack.c.b16 %v7116, %v7115
      %v7130 = vpack.c.b16 %v7118, %v7117
      %v7131 = vpack.c.b16 %v7120, %v7119
      %v7132 = vpack.c.b16 %v7122, %v7121
      %v7133 = vpack.c.b16 %v7124, %v7123
      %v7134 = vpack.c.b16 %v7126, %v7125
      %7143 = vmatprep.subr.bf16.mxu0 0
      %7144 = vmatpush1.bf16.msra.mxu0 %v7127
      %7145 = vmatprep.subr.bf16.mxu0 0
      %7146 = vmatpush1.bf16.msra.mxu0 %v7128
      %7147 = vmatprep.subr.bf16.mxu0 0
      %7148 = vmatpush1.bf16.msra.mxu0 %v7129
      %7149 = vmatprep.subr.bf16.mxu0 0
      %7150 = vmatpush1.bf16.msra.mxu0 %v7130
      %7151 = vmatprep.subr.bf16.mxu0 0
      %7152 = vmatpush1.bf16.msra.mxu0 %v7131
      %7153 = vmatprep.subr.bf16.mxu0 0
      %7154 = vmatpush1.bf16.msra.mxu0 %v7132
      %7155 = vmatprep.subr.bf16.mxu0 0
      %7156 = vmatpush1.bf16.msra.mxu0 %v7133
      %7157 = vmatprep.subr.bf16.mxu0 0
      %7158 = vmatpush1.bf16.msra.mxu0 %v7134
      %7159 = vmatprep.subr.bf16.mxu0 0
      %7160 = vmatpush1.bf16.msra.mxu0 0
      %7161 = vmatprep.subr.bf16.mxu0 0
      %7162 = vmatpush1.bf16.msra.mxu0 0
      %7163 = vmatprep.subr.bf16.mxu0 0
      %7164 = vmatpush1.bf16.msra.mxu0 0
      %7165 = vmatprep.subr.bf16.mxu0 0
      %7166 = vmatpush1.bf16.msra.mxu0 0
      %7167 = vmatprep.subr.bf16.mxu0 0
      %7168 = vmatpush1.bf16.msra.mxu0 0
      %7169 = vmatprep.subr.bf16.mxu0 0
      %7170 = vmatpush1.bf16.msra.mxu0 0
      %7171 = vmatprep.subr.bf16.mxu0 0
      %7172 = vmatpush1.bf16.msra.mxu0 0
      %7173 = vmatprep.subr.bf16.mxu0 0
      %7174 = vmatpush1.bf16.msra.mxu0 0
      %7175 = vmatprep.mubr.bf16.mxu0 0
      %7176 = vmatmul.mubr.bf16.gmra.mrb[0].mxu0 %v7093
      %v7177 = vpop.f32.mrb[0].mxu0
      %v7178 = vadd.f32 0.0, %v7177
      %v7179 = vpop.f32.mrb[0].mxu0
      %v7180 = vpop.f32.mrb[0].mxu0
      %v7181 = vadd.f32 0.0, %v7180
      %v7182 = vpop.f32.mrb[0].mxu0
      %7183 = vdwg.mxu0
      %v7184 = vadd.f32 %v7072, %v7178
      %v7185 = vadd.f32 %v7073, %v7181
      %s7186 = scalar_lea.vmem %s2, 2624
      %v7187 = vld [vmem:[%s7186] sm:$0xf]
      %v7188 = vld [vmem:[%s7186 + $0x4] sm:$0xf]
      %v7189 = vld [vmem:[%s7186 + $0x8] sm:$0xf]
      %v7190 = vld [vmem:[%s7186 + $0xc] sm:$0xf]
      %v7191 = vld [vmem:[%s7186 + $0x10] sm:$0xf]
      %v7192 = vld [vmem:[%s7186 + $0x14] sm:$0xf]
      %v7193 = vld [vmem:[%s7186 + $0x18] sm:$0xf]
      %v7194 = vld [vmem:[%s7186 + $0x1c] sm:$0xf]
      %v7195 = vld [vmem:[%s7186 + $0x20] sm:$0xf]
      %v7196 = vld [vmem:[%s7186 + $0x24] sm:$0xf]
      %v7197 = vld [vmem:[%s7186 + $0x28] sm:$0xf]
      %v7198 = vld [vmem:[%s7186 + $0x2c] sm:$0xf]
      %v7199 = vld [vmem:[%s7186 + $0x30] sm:$0xf]
      %v7200 = vld [vmem:[%s7186 + $0x34] sm:$0xf]
      %v7201 = vld [vmem:[%s7186 + $0x38] sm:$0xf]
      %v7202 = vld [vmem:[%s7186 + $0x3c] sm:$0xf]
      %v7203 = vrot.slane %v6652, 2
      %v7204 = vrot.slane %v6654, 3
      %v7205 = vor.u32 %v7203, %v7204
      %v7206 = vrot.slane %v6976, 2
      %v7207 = vrot.slane %v6659, 3
      %v7208 = vor.u32 %v7206, %v7207
      %v7209 = vsel %vm1192, %v7205, %v7208
      %v7227 = vunpack.c.l.b16 %v7187
      %v7228 = vunpack.c.l.b16 %v7188
      %v7229 = vunpack.c.l.b16 %v7189
      %v7230 = vunpack.c.l.b16 %v7190
      %v7231 = vunpack.c.l.b16 %v7191
      %v7232 = vunpack.c.l.b16 %v7192
      %v7233 = vunpack.c.l.b16 %v7193
      %v7234 = vunpack.c.l.b16 %v7194
      %v7235 = vunpack.c.l.b16 %v7195
      %v7236 = vunpack.c.l.b16 %v7196
      %v7237 = vunpack.c.l.b16 %v7197
      %v7238 = vunpack.c.l.b16 %v7198
      %v7239 = vunpack.c.l.b16 %v7199
      %v7240 = vunpack.c.l.b16 %v7200
      %v7241 = vunpack.c.l.b16 %v7201
      %v7242 = vunpack.c.l.b16 %v7202
      %v7243 = vpack.c.b16 %v7228, %v7227
      %v7244 = vpack.c.b16 %v7230, %v7229
      %v7245 = vpack.c.b16 %v7232, %v7231
      %v7246 = vpack.c.b16 %v7234, %v7233
      %v7247 = vpack.c.b16 %v7236, %v7235
      %v7248 = vpack.c.b16 %v7238, %v7237
      %v7249 = vpack.c.b16 %v7240, %v7239
      %v7250 = vpack.c.b16 %v7242, %v7241
      %7259 = vmatprep.subr.bf16.mxu0 0
      %7260 = vmatpush1.bf16.msra.mxu0 %v7243
      %7261 = vmatprep.subr.bf16.mxu0 0
      %7262 = vmatpush1.bf16.msra.mxu0 %v7244
      %7263 = vmatprep.subr.bf16.mxu0 0
      %7264 = vmatpush1.bf16.msra.mxu0 %v7245
      %7265 = vmatprep.subr.bf16.mxu0 0
      %7266 = vmatpush1.bf16.msra.mxu0 %v7246
      %7267 = vmatprep.subr.bf16.mxu0 0
      %7268 = vmatpush1.bf16.msra.mxu0 %v7247
      %7269 = vmatprep.subr.bf16.mxu0 0
      %7270 = vmatpush1.bf16.msra.mxu0 %v7248
      %7271 = vmatprep.subr.bf16.mxu0 0
      %7272 = vmatpush1.bf16.msra.mxu0 %v7249
      %7273 = vmatprep.subr.bf16.mxu0 0
      %7274 = vmatpush1.bf16.msra.mxu0 %v7250
      %7275 = vmatprep.subr.bf16.mxu0 0
      %7276 = vmatpush1.bf16.msra.mxu0 0
      %7277 = vmatprep.subr.bf16.mxu0 0
      %7278 = vmatpush1.bf16.msra.mxu0 0
      %7279 = vmatprep.subr.bf16.mxu0 0
      %7280 = vmatpush1.bf16.msra.mxu0 0
      %7281 = vmatprep.subr.bf16.mxu0 0
      %7282 = vmatpush1.bf16.msra.mxu0 0
      %7283 = vmatprep.subr.bf16.mxu0 0
      %7284 = vmatpush1.bf16.msra.mxu0 0
      %7285 = vmatprep.subr.bf16.mxu0 0
      %7286 = vmatpush1.bf16.msra.mxu0 0
      %7287 = vmatprep.subr.bf16.mxu0 0
      %7288 = vmatpush1.bf16.msra.mxu0 0
      %7289 = vmatprep.subr.bf16.mxu0 0
      %7290 = vmatpush1.bf16.msra.mxu0 0
      %7291 = vmatprep.mubr.bf16.mxu0 0
      %7292 = vmatmul.mubr.bf16.gmra.mrb[0].mxu0 %v7209
      %v7293 = vpop.f32.mrb[0].mxu0
      %v7294 = vadd.f32 0.0, %v7293
      %v7295 = vpop.f32.mrb[0].mxu0
      %v7296 = vpop.f32.mrb[0].mxu0
      %v7297 = vadd.f32 0.0, %v7296
      %v7298 = vpop.f32.mrb[0].mxu0
      %7299 = vdwg.mxu0
      %v7300 = vadd.f32 %v7184, %v7294
      %v7301 = vadd.f32 %v7185, %v7297
      %s7302 = scalar_lea.vmem %s2, 2688
      %v7303 = vld [vmem:[%s7302] sm:$0xf]
      %v7304 = vld [vmem:[%s7302 + $0x4] sm:$0xf]
      %v7305 = vld [vmem:[%s7302 + $0x8] sm:$0xf]
      %v7306 = vld [vmem:[%s7302 + $0xc] sm:$0xf]
      %v7307 = vld [vmem:[%s7302 + $0x10] sm:$0xf]
      %v7308 = vld [vmem:[%s7302 + $0x14] sm:$0xf]
      %v7309 = vld [vmem:[%s7302 + $0x18] sm:$0xf]
      %v7310 = vld [vmem:[%s7302 + $0x1c] sm:$0xf]
      %v7311 = vld [vmem:[%s7302 + $0x20] sm:$0xf]
      %v7312 = vld [vmem:[%s7302 + $0x24] sm:$0xf]
      %v7313 = vld [vmem:[%s7302 + $0x28] sm:$0xf]
      %v7314 = vld [vmem:[%s7302 + $0x2c] sm:$0xf]
      %v7315 = vld [vmem:[%s7302 + $0x30] sm:$0xf]
      %v7316 = vld [vmem:[%s7302 + $0x34] sm:$0xf]
      %v7317 = vld [vmem:[%s7302 + $0x38] sm:$0xf]
      %v7318 = vld [vmem:[%s7302 + $0x3c] sm:$0xf]
      %v7319 = vrot.slane %v6615, 3
      %v7320 = vrot.slane %v6633, 3
      %v7321 = vsel %vm1309, %v7319, %v7320
      %v7339 = vunpack.c.l.b16 %v7303
      %v7340 = vunpack.c.l.b16 %v7304
      %v7341 = vunpack.c.l.b16 %v7305
      %v7342 = vunpack.c.l.b16 %v7306
      %v7343 = vunpack.c.l.b16 %v7307
      %v7344 = vunpack.c.l.b16 %v7308
      %v7345 = vunpack.c.l.b16 %v7309
      %v7346 = vunpack.c.l.b16 %v7310
      %v7347 = vunpack.c.l.b16 %v7311
      %v7348 = vunpack.c.l.b16 %v7312
      %v7349 = vunpack.c.l.b16 %v7313
      %v7350 = vunpack.c.l.b16 %v7314
      %v7351 = vunpack.c.l.b16 %v7315
      %v7352 = vunpack.c.l.b16 %v7316
      %v7353 = vunpack.c.l.b16 %v7317
      %v7354 = vunpack.c.l.b16 %v7318
      %v7355 = vpack.c.b16 %v7340, %v7339
      %v7356 = vpack.c.b16 %v7342, %v7341
      %v7357 = vpack.c.b16 %v7344, %v7343
      %v7358 = vpack.c.b16 %v7346, %v7345
      %v7359 = vpack.c.b16 %v7348, %v7347
      %v7360 = vpack.c.b16 %v7350, %v7349
      %v7361 = vpack.c.b16 %v7352, %v7351
      %v7362 = vpack.c.b16 %v7354, %v7353
      %7371 = vmatprep.subr.bf16.mxu0 0
      %7372 = vmatpush1.bf16.msra.mxu0 %v7355
      %7373 = vmatprep.subr.bf16.mxu0 0
      %7374 = vmatpush1.bf16.msra.mxu0 %v7356
      %7375 = vmatprep.subr.bf16.mxu0 0
      %7376 = vmatpush1.bf16.msra.mxu0 %v7357
      %7377 = vmatprep.subr.bf16.mxu0 0
      %7378 = vmatpush1.bf16.msra.mxu0 %v7358
      %7379 = vmatprep.subr.bf16.mxu0 0
      %7380 = vmatpush1.bf16.msra.mxu0 %v7359
      %7381 = vmatprep.subr.bf16.mxu0 0
      %7382 = vmatpush1.bf16.msra.mxu0 %v7360
      %7383 = vmatprep.subr.bf16.mxu0 0
      %7384 = vmatpush1.bf16.msra.mxu0 %v7361
      %7385 = vmatprep.subr.bf16.mxu0 0
      %7386 = vmatpush1.bf16.msra.mxu0 %v7362
      %7387 = vmatprep.subr.bf16.mxu0 0
      %7388 = vmatpush1.bf16.msra.mxu0 0
      %7389 = vmatprep.subr.bf16.mxu0 0
      %7390 = vmatpush1.bf16.msra.mxu0 0
      %7391 = vmatprep.subr.bf16.mxu0 0
      %7392 = vmatpush1.bf16.msra.mxu0 0
      %7393 = vmatprep.subr.bf16.mxu0 0
      %7394 = vmatpush1.bf16.msra.mxu0 0
      %7395 = vmatprep.subr.bf16.mxu0 0
      %7396 = vmatpush1.bf16.msra.mxu0 0
      %7397 = vmatprep.subr.bf16.mxu0 0
      %7398 = vmatpush1.bf16.msra.mxu0 0
      %7399 = vmatprep.subr.bf16.mxu0 0
      %7400 = vmatpush1.bf16.msra.mxu0 0
      %7401 = vmatprep.subr.bf16.mxu0 0
      %7402 = vmatpush1.bf16.msra.mxu0 0
      %7403 = vmatprep.mubr.bf16.mxu0 0
      %7404 = vmatmul.mubr.bf16.gmra.mrb[0].mxu0 %v7321
      %v7405 = vpop.f32.mrb[0].mxu0
      %v7406 = vadd.f32 0.0, %v7405
      %v7407 = vpop.f32.mrb[0].mxu0
      %v7408 = vpop.f32.mrb[0].mxu0
      %v7409 = vadd.f32 0.0, %v7408
      %v7410 = vpop.f32.mrb[0].mxu0
      %7411 = vdwg.mxu0
      %v7412 = vadd.f32 %v7300, %v7406
      %v7413 = vadd.f32 %v7301, %v7409
      %s7414 = scalar_lea.vmem %s2, 2752
      %v7415 = vld [vmem:[%s7414] sm:$0xf]
      %v7416 = vld [vmem:[%s7414 + $0x4] sm:$0xf]
      %v7417 = vld [vmem:[%s7414 + $0x8] sm:$0xf]
      %v7418 = vld [vmem:[%s7414 + $0xc] sm:$0xf]
      %v7419 = vld [vmem:[%s7414 + $0x10] sm:$0xf]
      %v7420 = vld [vmem:[%s7414 + $0x14] sm:$0xf]
      %v7421 = vld [vmem:[%s7414 + $0x18] sm:$0xf]
      %v7422 = vld [vmem:[%s7414 + $0x1c] sm:$0xf]
      %v7423 = vld [vmem:[%s7414 + $0x20] sm:$0xf]
      %v7424 = vld [vmem:[%s7414 + $0x24] sm:$0xf]
      %v7425 = vld [vmem:[%s7414 + $0x28] sm:$0xf]
      %v7426 = vld [vmem:[%s7414 + $0x2c] sm:$0xf]
      %v7427 = vld [vmem:[%s7414 + $0x30] sm:$0xf]
      %v7428 = vld [vmem:[%s7414 + $0x34] sm:$0xf]
      %v7429 = vld [vmem:[%s7414 + $0x38] sm:$0xf]
      %v7430 = vld [vmem:[%s7414 + $0x3c] sm:$0xf]
      %v7431 = vrot.slane %v6652, 3
      %v7432 = vrot.slane %v6654, 4
      %v7433 = vor.u32 %v7431, %v7432
      %v7434 = vrot.slane %v6976, 3
      %v7435 = vrot.slane %v6659, 4
      %v7436 = vor.u32 %v7434, %v7435
      %v7437 = vsel %vm1422, %v7433, %v7436
      %v7455 = vunpack.c.l.b16 %v7415
      %v7456 = vunpack.c.l.b16 %v7416
      %v7457 = vunpack.c.l.b16 %v7417
      %v7458 = vunpack.c.l.b16 %v7418
      %v7459 = vunpack.c.l.b16 %v7419
      %v7460 = vunpack.c.l.b16 %v7420
      %v7461 = vunpack.c.l.b16 %v7421
      %v7462 = vunpack.c.l.b16 %v7422
      %v7463 = vunpack.c.l.b16 %v7423
      %v7464 = vunpack.c.l.b16 %v7424
      %v7465 = vunpack.c.l.b16 %v7425
      %v7466 = vunpack.c.l.b16 %v7426
      %v7467 = vunpack.c.l.b16 %v7427
      %v7468 = vunpack.c.l.b16 %v7428
      %v7469 = vunpack.c.l.b16 %v7429
      %v7470 = vunpack.c.l.b16 %v7430
      %v7471 = vpack.c.b16 %v7456, %v7455
      %v7472 = vpack.c.b16 %v7458, %v7457
      %v7473 = vpack.c.b16 %v7460, %v7459
      %v7474 = vpack.c.b16 %v7462, %v7461
      %v7475 = vpack.c.b16 %v7464, %v7463
      %v7476 = vpack.c.b16 %v7466, %v7465
      %v7477 = vpack.c.b16 %v7468, %v7467
      %v7478 = vpack.c.b16 %v7470, %v7469
      %7487 = vmatprep.subr.bf16.mxu0 0
      %7488 = vmatpush1.bf16.msra.mxu0 %v7471
      %7489 = vmatprep.subr.bf16.mxu0 0
      %7490 = vmatpush1.bf16.msra.mxu0 %v7472
      %7491 = vmatprep.subr.bf16.mxu0 0
      %7492 = vmatpush1.bf16.msra.mxu0 %v7473
      %7493 = vmatprep.subr.bf16.mxu0 0
      %7494 = vmatpush1.bf16.msra.mxu0 %v7474
      %7495 = vmatprep.subr.bf16.mxu0 0
      %7496 = vmatpush1.bf16.msra.mxu0 %v7475
      %7497 = vmatprep.subr.bf16.mxu0 0
      %7498 = vmatpush1.bf16.msra.mxu0 %v7476
      %7499 = vmatprep.subr.bf16.mxu0 0
      %7500 = vmatpush1.bf16.msra.mxu0 %v7477
      %7501 = vmatprep.subr.bf16.mxu0 0
      %7502 = vmatpush1.bf16.msra.mxu0 %v7478
      %7503 = vmatprep.subr.bf16.mxu0 0
      %7504 = vmatpush1.bf16.msra.mxu0 0
      %7505 = vmatprep.subr.bf16.mxu0 0
      %7506 = vmatpush1.bf16.msra.mxu0 0
      %7507 = vmatprep.subr.bf16.mxu0 0
      %7508 = vmatpush1.bf16.msra.mxu0 0
      %7509 = vmatprep.subr.bf16.mxu0 0
      %7510 = vmatpush1.bf16.msra.mxu0 0
      %7511 = vmatprep.subr.bf16.mxu0 0
      %7512 = vmatpush1.bf16.msra.mxu0 0
      %7513 = vmatprep.subr.bf16.mxu0 0
      %7514 = vmatpush1.bf16.msra.mxu0 0
      %7515 = vmatprep.subr.bf16.mxu0 0
      %7516 = vmatpush1.bf16.msra.mxu0 0
      %7517 = vmatprep.subr.bf16.mxu0 0
      %7518 = vmatpush1.bf16.msra.mxu0 0
      %7519 = vmatprep.mubr.bf16.mxu0 0
      %7520 = vmatmul.mubr.bf16.gmra.mrb[0].mxu0 %v7437
      %v7521 = vpop.f32.mrb[0].mxu0
      %v7522 = vadd.f32 0.0, %v7521
      %v7523 = vpop.f32.mrb[0].mxu0
      %v7524 = vpop.f32.mrb[0].mxu0
      %v7525 = vadd.f32 0.0, %v7524
      %v7526 = vpop.f32.mrb[0].mxu0
      %7527 = vdwg.mxu0
      %v7528 = vadd.f32 %v7412, %v7522
      %v7529 = vadd.f32 %v7413, %v7525
      %v7530 = vpack.c.bf16 %v6614, %v6609
      %s7531 = scalar_lea.vmem %s2, 2816
      %v7532 = vld [vmem:[%s7531] sm:$0xf]
      %v7533 = vld [vmem:[%s7531 + $0x4] sm:$0xf]
      %v7534 = vld [vmem:[%s7531 + $0x8] sm:$0xf]
      %v7535 = vld [vmem:[%s7531 + $0xc] sm:$0xf]
      %v7536 = vld [vmem:[%s7531 + $0x10] sm:$0xf]
      %v7537 = vld [vmem:[%s7531 + $0x14] sm:$0xf]
      %v7538 = vld [vmem:[%s7531 + $0x18] sm:$0xf]
      %v7539 = vld [vmem:[%s7531 + $0x1c] sm:$0xf]
      %v7540 = vld [vmem:[%s7531 + $0x20] sm:$0xf]
      %v7541 = vld [vmem:[%s7531 + $0x24] sm:$0xf]
      %v7542 = vld [vmem:[%s7531 + $0x28] sm:$0xf]
      %v7543 = vld [vmem:[%s7531 + $0x2c] sm:$0xf]
      %v7544 = vld [vmem:[%s7531 + $0x30] sm:$0xf]
      %v7545 = vld [vmem:[%s7531 + $0x34] sm:$0xf]
      %v7546 = vld [vmem:[%s7531 + $0x38] sm:$0xf]
      %v7547 = vld [vmem:[%s7531 + $0x3c] sm:$0xf]
      %v7564 = vunpack.c.l.b16 %v7532
      %v7565 = vunpack.c.l.b16 %v7533
      %v7566 = vunpack.c.l.b16 %v7534
      %v7567 = vunpack.c.l.b16 %v7535
      %v7568 = vunpack.c.l.b16 %v7536
      %v7569 = vunpack.c.l.b16 %v7537
      %v7570 = vunpack.c.l.b16 %v7538
      %v7571 = vunpack.c.l.b16 %v7539
      %v7572 = vunpack.c.l.b16 %v7540
      %v7573 = vunpack.c.l.b16 %v7541
      %v7574 = vunpack.c.l.b16 %v7542
      %v7575 = vunpack.c.l.b16 %v7543
      %v7576 = vunpack.c.l.b16 %v7544
      %v7577 = vunpack.c.l.b16 %v7545
      %v7578 = vunpack.c.l.b16 %v7546
      %v7579 = vunpack.c.l.b16 %v7547
      %v7580 = vpack.c.b16 %v7565, %v7564
      %v7581 = vpack.c.b16 %v7567, %v7566
      %v7582 = vpack.c.b16 %v7569, %v7568
      %v7583 = vpack.c.b16 %v7571, %v7570
      %v7584 = vpack.c.b16 %v7573, %v7572
      %v7585 = vpack.c.b16 %v7575, %v7574
      %v7586 = vpack.c.b16 %v7577, %v7576
      %v7587 = vpack.c.b16 %v7579, %v7578
      %7596 = vmatprep.subr.bf16.mxu0 0
      %7597 = vmatpush1.bf16.msra.mxu0 %v7580
      %7598 = vmatprep.subr.bf16.mxu0 0
      %7599 = vmatpush1.bf16.msra.mxu0 %v7581
      %7600 = vmatprep.subr.bf16.mxu0 0
      %7601 = vmatpush1.bf16.msra.mxu0 %v7582
      %7602 = vmatprep.subr.bf16.mxu0 0
      %7603 = vmatpush1.bf16.msra.mxu0 %v7583
      %7604 = vmatprep.subr.bf16.mxu0 0
      %7605 = vmatpush1.bf16.msra.mxu0 %v7584
      %7606 = vmatprep.subr.bf16.mxu0 0
      %7607 = vmatpush1.bf16.msra.mxu0 %v7585
      %7608 = vmatprep.subr.bf16.mxu0 0
      %7609 = vmatpush1.bf16.msra.mxu0 %v7586
      %7610 = vmatprep.subr.bf16.mxu0 0
      %7611 = vmatpush1.bf16.msra.mxu0 %v7587
      %7612 = vmatprep.subr.bf16.mxu0 0
      %7613 = vmatpush1.bf16.msra.mxu0 0
      %7614 = vmatprep.subr.bf16.mxu0 0
      %7615 = vmatpush1.bf16.msra.mxu0 0
      %7616 = vmatprep.subr.bf16.mxu0 0
      %7617 = vmatpush1.bf16.msra.mxu0 0
      %7618 = vmatprep.subr.bf16.mxu0 0
      %7619 = vmatpush1.bf16.msra.mxu0 0
      %7620 = vmatprep.subr.bf16.mxu0 0
      %7621 = vmatpush1.bf16.msra.mxu0 0
      %7622 = vmatprep.subr.bf16.mxu0 0
      %7623 = vmatpush1.bf16.msra.mxu0 0
      %7624 = vmatprep.subr.bf16.mxu0 0
      %7625 = vmatpush1.bf16.msra.mxu0 0
      %7626 = vmatprep.subr.bf16.mxu0 0
      %7627 = vmatpush1.bf16.msra.mxu0 0
      %7628 = vmatprep.mubr.bf16.mxu0 0
      %7629 = vmatmul.mubr.bf16.gmra.mrb[0].mxu0 %v7530
      %v7630 = vpop.f32.mrb[0].mxu0
      %v7631 = vadd.f32 0.0, %v7630
      %v7632 = vpop.f32.mrb[0].mxu0
      %v7633 = vpop.f32.mrb[0].mxu0
      %v7634 = vadd.f32 0.0, %v7633
      %v7635 = vpop.f32.mrb[0].mxu0
      %7636 = vdwg.mxu0
      %v7637 = vadd.f32 %v7528, %v7631
      %v7638 = vadd.f32 %v7529, %v7634
      %s7639 = scalar_lea.vmem %s4, 4
      %v7640 = vld [vmem:[%s7639] sm:$0x1]
      %v7642 = vlaneseq
      %v7643 = vshrl.u32 %v7642, 7
      %v7644 = vsub.s32 0, %v7643
      %v7645 = vrot.slane %v7640, %v7644
      %v7647 = vadd.f32 %v7637, %v7645
      %v7648 = vadd.f32 %v7638, %v7645
      %v7649 = vmul.f32 %v7647, %v7647
      %v7650 = vmul.f32 %v7648, %v7648
      %v7651 = vsub.f32 0.0, %v7649
      %v7652 = vsub.f32 0.0, %v7650
      %v7653 = vmul.f32 %v7651, 1.442695
      %v7654 = vpow.pop %v7653
      %v7655 = vmul.f32 %v7652, 1.442695
      %v7656 = vpow.pop %v7655
      %v7657 = vmul.f32 %v7654, %v6601
      %v7658 = vmul.f32 %v7656, %v6602
      %v7661 = vrot.slane %v7657, 7
      %v7662 = vrot.slane %v7658, 7
      %v7663 = vsel %vm230, %v7661, %v7662
      %v7667 = vsel %vm230, 0.0, %v7661
      %v7668 = vsel %vm230, %v7662, 0.0
      %v7669 = vpack.c.bf16 %v7663, %v7667
      %s7670 = scalar_lea.vmem %s1, 1152
      %v7671 = vld [vmem:[%s7670] sm:$0xf]
      %v7672 = vld [vmem:[%s7670 + $0x4] sm:$0xf]
      %v7673 = vld [vmem:[%s7670 + $0x8] sm:$0xf]
      %v7674 = vld [vmem:[%s7670 + $0xc] sm:$0xf]
      %v7675 = vld [vmem:[%s7670 + $0x10] sm:$0xf]
      %v7676 = vld [vmem:[%s7670 + $0x14] sm:$0xf]
      %v7677 = vld [vmem:[%s7670 + $0x18] sm:$0xf]
      %v7678 = vld [vmem:[%s7670 + $0x1c] sm:$0xf]
      %v7679 = vld [vmem:[%s7670 + $0x20] sm:$0xf]
      %v7680 = vld [vmem:[%s7670 + $0x24] sm:$0xf]
      %v7681 = vld [vmem:[%s7670 + $0x28] sm:$0xf]
      %v7682 = vld [vmem:[%s7670 + $0x2c] sm:$0xf]
      %v7683 = vld [vmem:[%s7670 + $0x30] sm:$0xf]
      %v7684 = vld [vmem:[%s7670 + $0x34] sm:$0xf]
      %v7685 = vld [vmem:[%s7670 + $0x38] sm:$0xf]
      %v7686 = vld [vmem:[%s7670 + $0x3c] sm:$0xf]
      %v7687 = vpack.c.bf16 %v7668, %v7668
      %s7688 = scalar_lea.vmem %s1, 1216
      %v7689 = vld [vmem:[%s7688] sm:$0xf]
      %v7690 = vld [vmem:[%s7688 + $0x4] sm:$0xf]
      %v7691 = vld [vmem:[%s7688 + $0x8] sm:$0xf]
      %v7692 = vld [vmem:[%s7688 + $0xc] sm:$0xf]
      %v7693 = vld [vmem:[%s7688 + $0x10] sm:$0xf]
      %v7694 = vld [vmem:[%s7688 + $0x14] sm:$0xf]
      %v7695 = vld [vmem:[%s7688 + $0x18] sm:$0xf]
      %v7696 = vld [vmem:[%s7688 + $0x1c] sm:$0xf]
      %v7697 = vld [vmem:[%s7688 + $0x20] sm:$0xf]
      %v7698 = vld [vmem:[%s7688 + $0x24] sm:$0xf]
      %v7699 = vld [vmem:[%s7688 + $0x28] sm:$0xf]
      %v7700 = vld [vmem:[%s7688 + $0x2c] sm:$0xf]
      %v7701 = vld [vmem:[%s7688 + $0x30] sm:$0xf]
      %v7702 = vld [vmem:[%s7688 + $0x34] sm:$0xf]
      %v7703 = vld [vmem:[%s7688 + $0x38] sm:$0xf]
      %v7704 = vld [vmem:[%s7688 + $0x3c] sm:$0xf]
      %v7706 = vshrl.u32 %v7669, 16
      %v7708 = vshll.u32 %v7669, 16
      %v7710 = vrot.slane %v7708, 1
      %v7711 = vor.u32 %v7706, %v7710
      %v7713 = vshll.u32 %v7687, 16
      %v7715 = vrot.slane %v7713, 1
      %v7716 = vsel %vm274, %v7711, %v7715
      %v7734 = vunpack.c.l.b16 %v7689
      %v7735 = vunpack.c.l.b16 %v7690
      %v7736 = vunpack.c.l.b16 %v7691
      %v7737 = vunpack.c.l.b16 %v7692
      %v7738 = vunpack.c.l.b16 %v7693
      %v7739 = vunpack.c.l.b16 %v7694
      %v7740 = vunpack.c.l.b16 %v7695
      %v7741 = vunpack.c.l.b16 %v7696
      %v7742 = vunpack.c.l.b16 %v7697
      %v7743 = vunpack.c.l.b16 %v7698
      %v7744 = vunpack.c.l.b16 %v7699
      %v7745 = vunpack.c.l.b16 %v7700
      %v7746 = vunpack.c.l.b16 %v7701
      %v7747 = vunpack.c.l.b16 %v7702
      %v7748 = vunpack.c.l.b16 %v7703
      %v7749 = vunpack.c.l.b16 %v7704
      %v7750 = vpack.c.b16 %v7735, %v7734
      %v7751 = vpack.c.b16 %v7737, %v7736
      %v7752 = vpack.c.b16 %v7739, %v7738
      %v7753 = vpack.c.b16 %v7741, %v7740
      %v7754 = vpack.c.b16 %v7743, %v7742
      %v7755 = vpack.c.b16 %v7745, %v7744
      %v7756 = vpack.c.b16 %v7747, %v7746
      %v7757 = vpack.c.b16 %v7749, %v7748
      %7766 = vmatprep.subr.bf16.mxu0 0
      %7767 = vmatpush1.bf16.msra.mxu0 %v7750
      %7768 = vmatprep.subr.bf16.mxu0 0
      %7769 = vmatpush1.bf16.msra.mxu0 %v7751
      %7770 = vmatprep.subr.bf16.mxu0 0
      %7771 = vmatpush1.bf16.msra.mxu0 %v7752
      %7772 = vmatprep.subr.bf16.mxu0 0
      %7773 = vmatpush1.bf16.msra.mxu0 %v7753
      %7774 = vmatprep.subr.bf16.mxu0 0
      %7775 = vmatpush1.bf16.msra.mxu0 %v7754
      %7776 = vmatprep.subr.bf16.mxu0 0
      %7777 = vmatpush1.bf16.msra.mxu0 %v7755
      %7778 = vmatprep.subr.bf16.mxu0 0
      %7779 = vmatpush1.bf16.msra.mxu0 %v7756
      %7780 = vmatprep.subr.bf16.mxu0 0
      %7781 = vmatpush1.bf16.msra.mxu0 %v7757
      %7782 = vmatprep.subr.bf16.mxu0 0
      %7783 = vmatpush1.bf16.msra.mxu0 0
      %7784 = vmatprep.subr.bf16.mxu0 0
      %7785 = vmatpush1.bf16.msra.mxu0 0
      %7786 = vmatprep.subr.bf16.mxu0 0
      %7787 = vmatpush1.bf16.msra.mxu0 0
      %7788 = vmatprep.subr.bf16.mxu0 0
      %7789 = vmatpush1.bf16.msra.mxu0 0
      %7790 = vmatprep.subr.bf16.mxu0 0
      %7791 = vmatpush1.bf16.msra.mxu0 0
      %7792 = vmatprep.subr.bf16.mxu0 0
      %7793 = vmatpush1.bf16.msra.mxu0 0
      %7794 = vmatprep.subr.bf16.mxu0 0
      %7795 = vmatpush1.bf16.msra.mxu0 0
      %7796 = vmatprep.subr.bf16.mxu0 0
      %7797 = vmatpush1.bf16.msra.mxu0 0
      %7798 = vmatprep.mubr.bf16.mxu0 0
      %7799 = vmatmul.mubr.bf16.gmra.mrb[0].mxu0 %v7716
      %v7800 = vpop.f32.mrb[0].mxu0
      %v7801 = vadd.f32 0.0, %v7800
      %v7802 = vpop.f32.mrb[0].mxu0
      %v7803 = vpop.f32.mrb[0].mxu0
      %v7804 = vadd.f32 0.0, %v7803
      %v7805 = vpop.f32.mrb[0].mxu0
      %7806 = vdwg.mxu0
      %v7823 = vunpack.c.l.b16 %v7671
      %v7824 = vunpack.c.l.b16 %v7672
      %v7825 = vunpack.c.l.b16 %v7673
      %v7826 = vunpack.c.l.b16 %v7674
      %v7827 = vunpack.c.l.b16 %v7675
      %v7828 = vunpack.c.l.b16 %v7676
      %v7829 = vunpack.c.l.b16 %v7677
      %v7830 = vunpack.c.l.b16 %v7678
      %v7831 = vunpack.c.l.b16 %v7679
      %v7832 = vunpack.c.l.b16 %v7680
      %v7833 = vunpack.c.l.b16 %v7681
      %v7834 = vunpack.c.l.b16 %v7682
      %v7835 = vunpack.c.l.b16 %v7683
      %v7836 = vunpack.c.l.b16 %v7684
      %v7837 = vunpack.c.l.b16 %v7685
      %v7838 = vunpack.c.l.b16 %v7686
      %v7839 = vpack.c.b16 %v7824, %v7823
      %v7840 = vpack.c.b16 %v7826, %v7825
      %v7841 = vpack.c.b16 %v7828, %v7827
      %v7842 = vpack.c.b16 %v7830, %v7829
      %v7843 = vpack.c.b16 %v7832, %v7831
      %v7844 = vpack.c.b16 %v7834, %v7833
      %v7845 = vpack.c.b16 %v7836, %v7835
      %v7846 = vpack.c.b16 %v7838, %v7837
      %7855 = vmatprep.subr.bf16.mxu0 0
      %7856 = vmatpush1.bf16.msra.mxu0 %v7839
      %7857 = vmatprep.subr.bf16.mxu0 0
      %7858 = vmatpush1.bf16.msra.mxu0 %v7840
      %7859 = vmatprep.subr.bf16.mxu0 0
      %7860 = vmatpush1.bf16.msra.mxu0 %v7841
      %7861 = vmatprep.subr.bf16.mxu0 0
      %7862 = vmatpush1.bf16.msra.mxu0 %v7842
      %7863 = vmatprep.subr.bf16.mxu0 0
      %7864 = vmatpush1.bf16.msra.mxu0 %v7843
      %7865 = vmatprep.subr.bf16.mxu0 0
      %7866 = vmatpush1.bf16.msra.mxu0 %v7844
      %7867 = vmatprep.subr.bf16.mxu0 0
      %7868 = vmatpush1.bf16.msra.mxu0 %v7845
      %7869 = vmatprep.subr.bf16.mxu0 0
      %7870 = vmatpush1.bf16.msra.mxu0 %v7846
      %7871 = vmatprep.subr.bf16.mxu0 0
      %7872 = vmatpush1.bf16.msra.mxu0 0
      %7873 = vmatprep.subr.bf16.mxu0 0
      %7874 = vmatpush1.bf16.msra.mxu0 0
      %7875 = vmatprep.subr.bf16.mxu0 0
      %7876 = vmatpush1.bf16.msra.mxu0 0
      %7877 = vmatprep.subr.bf16.mxu0 0
      %7878 = vmatpush1.bf16.msra.mxu0 0
      %7879 = vmatprep.subr.bf16.mxu0 0
      %7880 = vmatpush1.bf16.msra.mxu0 0
      %7881 = vmatprep.subr.bf16.mxu0 0
      %7882 = vmatpush1.bf16.msra.mxu0 0
      %7883 = vmatprep.subr.bf16.mxu0 0
      %7884 = vmatpush1.bf16.msra.mxu0 0
      %7885 = vmatprep.subr.bf16.mxu0 0
      %7886 = vmatpush1.bf16.msra.mxu0 0
      %7887 = vmatprep.mubr.bf16.mxu0 0
      %7888 = vmatmul.mubr.bf16.gmra.mrb[0].mxu0 %v7669
      %v7889 = vpop.f32.mrb[0].mxu0
      %v7890 = vadd.f32 %v7801, %v7889
      %v7891 = vpop.f32.mrb[0].mxu0
      %v7892 = vpop.f32.mrb[0].mxu0
      %v7893 = vadd.f32 %v7804, %v7892
      %v7894 = vpop.f32.mrb[0].mxu0
      %7895 = vdwg.mxu0
      %s7896 = scalar_lea.vmem %s1, 1280
      %v7897 = vld [vmem:[%s7896] sm:$0xf]
      %v7898 = vld [vmem:[%s7896 + $0x4] sm:$0xf]
      %v7899 = vld [vmem:[%s7896 + $0x8] sm:$0xf]
      %v7900 = vld [vmem:[%s7896 + $0xc] sm:$0xf]
      %v7901 = vld [vmem:[%s7896 + $0x10] sm:$0xf]
      %v7902 = vld [vmem:[%s7896 + $0x14] sm:$0xf]
      %v7903 = vld [vmem:[%s7896 + $0x18] sm:$0xf]
      %v7904 = vld [vmem:[%s7896 + $0x1c] sm:$0xf]
      %v7905 = vld [vmem:[%s7896 + $0x20] sm:$0xf]
      %v7906 = vld [vmem:[%s7896 + $0x24] sm:$0xf]
      %v7907 = vld [vmem:[%s7896 + $0x28] sm:$0xf]
      %v7908 = vld [vmem:[%s7896 + $0x2c] sm:$0xf]
      %v7909 = vld [vmem:[%s7896 + $0x30] sm:$0xf]
      %v7910 = vld [vmem:[%s7896 + $0x34] sm:$0xf]
      %v7911 = vld [vmem:[%s7896 + $0x38] sm:$0xf]
      %v7912 = vld [vmem:[%s7896 + $0x3c] sm:$0xf]
      %v7915 = vrot.slane %v7669, 1
      %v7916 = vrot.slane %v7687, 1
      %v7917 = vsel %vm485, %v7915, %v7916
      %v7935 = vunpack.c.l.b16 %v7897
      %v7936 = vunpack.c.l.b16 %v7898
      %v7937 = vunpack.c.l.b16 %v7899
      %v7938 = vunpack.c.l.b16 %v7900
      %v7939 = vunpack.c.l.b16 %v7901
      %v7940 = vunpack.c.l.b16 %v7902
      %v7941 = vunpack.c.l.b16 %v7903
      %v7942 = vunpack.c.l.b16 %v7904
      %v7943 = vunpack.c.l.b16 %v7905
      %v7944 = vunpack.c.l.b16 %v7906
      %v7945 = vunpack.c.l.b16 %v7907
      %v7946 = vunpack.c.l.b16 %v7908
      %v7947 = vunpack.c.l.b16 %v7909
      %v7948 = vunpack.c.l.b16 %v7910
      %v7949 = vunpack.c.l.b16 %v7911
      %v7950 = vunpack.c.l.b16 %v7912
      %v7951 = vpack.c.b16 %v7936, %v7935
      %v7952 = vpack.c.b16 %v7938, %v7937
      %v7953 = vpack.c.b16 %v7940, %v7939
      %v7954 = vpack.c.b16 %v7942, %v7941
      %v7955 = vpack.c.b16 %v7944, %v7943
      %v7956 = vpack.c.b16 %v7946, %v7945
      %v7957 = vpack.c.b16 %v7948, %v7947
      %v7958 = vpack.c.b16 %v7950, %v7949
      %7967 = vmatprep.subr.bf16.mxu0 0
      %7968 = vmatpush1.bf16.msra.mxu0 %v7951
      %7969 = vmatprep.subr.bf16.mxu0 0
      %7970 = vmatpush1.bf16.msra.mxu0 %v7952
      %7971 = vmatprep.subr.bf16.mxu0 0
      %7972 = vmatpush1.bf16.msra.mxu0 %v7953
      %7973 = vmatprep.subr.bf16.mxu0 0
      %7974 = vmatpush1.bf16.msra.mxu0 %v7954
      %7975 = vmatprep.subr.bf16.mxu0 0
      %7976 = vmatpush1.bf16.msra.mxu0 %v7955
      %7977 = vmatprep.subr.bf16.mxu0 0
      %7978 = vmatpush1.bf16.msra.mxu0 %v7956
      %7979 = vmatprep.subr.bf16.mxu0 0
      %7980 = vmatpush1.bf16.msra.mxu0 %v7957
      %7981 = vmatprep.subr.bf16.mxu0 0
      %7982 = vmatpush1.bf16.msra.mxu0 %v7958
      %7983 = vmatprep.subr.bf16.mxu0 0
      %7984 = vmatpush1.bf16.msra.mxu0 0
      %7985 = vmatprep.subr.bf16.mxu0 0
      %7986 = vmatpush1.bf16.msra.mxu0 0
      %7987 = vmatprep.subr.bf16.mxu0 0
      %7988 = vmatpush1.bf16.msra.mxu0 0
      %7989 = vmatprep.subr.bf16.mxu0 0
      %7990 = vmatpush1.bf16.msra.mxu0 0
      %7991 = vmatprep.subr.bf16.mxu0 0
      %7992 = vmatpush1.bf16.msra.mxu0 0
      %7993 = vmatprep.subr.bf16.mxu0 0
      %7994 = vmatpush1.bf16.msra.mxu0 0
      %7995 = vmatprep.subr.bf16.mxu0 0
      %7996 = vmatpush1.bf16.msra.mxu0 0
      %7997 = vmatprep.subr.bf16.mxu0 0
      %7998 = vmatpush1.bf16.msra.mxu0 0
      %7999 = vmatprep.mubr.bf16.mxu0 0
      %8000 = vmatmul.mubr.bf16.gmra.mrb[0].mxu0 %v7917
      %v8001 = vpop.f32.mrb[0].mxu0
      %v8002 = vadd.f32 0.0, %v8001
      %v8003 = vpop.f32.mrb[0].mxu0
      %v8004 = vpop.f32.mrb[0].mxu0
      %v8005 = vadd.f32 0.0, %v8004
      %v8006 = vpop.f32.mrb[0].mxu0
      %8007 = vdwg.mxu0
      %v8008 = vadd.f32 %v7890, %v8002
      %v8009 = vadd.f32 %v7893, %v8005
      %s8010 = scalar_lea.vmem %s1, 1344
      %v8011 = vld [vmem:[%s8010] sm:$0xf]
      %v8012 = vld [vmem:[%s8010 + $0x4] sm:$0xf]
      %v8013 = vld [vmem:[%s8010 + $0x8] sm:$0xf]
      %v8014 = vld [vmem:[%s8010 + $0xc] sm:$0xf]
      %v8015 = vld [vmem:[%s8010 + $0x10] sm:$0xf]
      %v8016 = vld [vmem:[%s8010 + $0x14] sm:$0xf]
      %v8017 = vld [vmem:[%s8010 + $0x18] sm:$0xf]
      %v8018 = vld [vmem:[%s8010 + $0x1c] sm:$0xf]
      %v8019 = vld [vmem:[%s8010 + $0x20] sm:$0xf]
      %v8020 = vld [vmem:[%s8010 + $0x24] sm:$0xf]
      %v8021 = vld [vmem:[%s8010 + $0x28] sm:$0xf]
      %v8022 = vld [vmem:[%s8010 + $0x2c] sm:$0xf]
      %v8023 = vld [vmem:[%s8010 + $0x30] sm:$0xf]
      %v8024 = vld [vmem:[%s8010 + $0x34] sm:$0xf]
      %v8025 = vld [vmem:[%s8010 + $0x38] sm:$0xf]
      %v8026 = vld [vmem:[%s8010 + $0x3c] sm:$0xf]
      %v8043 = vunpack.c.l.b16 %v8011
      %v8044 = vunpack.c.l.b16 %v8012
      %v8045 = vunpack.c.l.b16 %v8013
      %v8046 = vunpack.c.l.b16 %v8014
      %v8047 = vunpack.c.l.b16 %v8015
      %v8048 = vunpack.c.l.b16 %v8016
      %v8049 = vunpack.c.l.b16 %v8017
      %v8050 = vunpack.c.l.b16 %v8018
      %v8051 = vunpack.c.l.b16 %v8019
      %v8052 = vunpack.c.l.b16 %v8020
      %v8053 = vunpack.c.l.b16 %v8021
      %v8054 = vunpack.c.l.b16 %v8022
      %v8055 = vunpack.c.l.b16 %v8023
      %v8056 = vunpack.c.l.b16 %v8024
      %v8057 = vunpack.c.l.b16 %v8025
      %v8058 = vunpack.c.l.b16 %v8026
      %v8059 = vpack.c.b16 %v8044, %v8043
      %v8060 = vpack.c.b16 %v8046, %v8045
      %v8061 = vpack.c.b16 %v8048, %v8047
      %v8062 = vpack.c.b16 %v8050, %v8049
      %v8063 = vpack.c.b16 %v8052, %v8051
      %v8064 = vpack.c.b16 %v8054, %v8053
      %v8065 = vpack.c.b16 %v8056, %v8055
      %v8066 = vpack.c.b16 %v8058, %v8057
      %8075 = vmatprep.subr.bf16.mxu0 0
      %8076 = vmatpush1.bf16.msra.mxu0 %v8059
      %8077 = vmatprep.subr.bf16.mxu0 0
      %8078 = vmatpush1.bf16.msra.mxu0 %v8060
      %8079 = vmatprep.subr.bf16.mxu0 0
      %8080 = vmatpush1.bf16.msra.mxu0 %v8061
      %8081 = vmatprep.subr.bf16.mxu0 0
      %8082 = vmatpush1.bf16.msra.mxu0 %v8062
      %8083 = vmatprep.subr.bf16.mxu0 0
      %8084 = vmatpush1.bf16.msra.mxu0 %v8063
      %8085 = vmatprep.subr.bf16.mxu0 0
      %8086 = vmatpush1.bf16.msra.mxu0 %v8064
      %8087 = vmatprep.subr.bf16.mxu0 0
      %8088 = vmatpush1.bf16.msra.mxu0 %v8065
      %8089 = vmatprep.subr.bf16.mxu0 0
      %8090 = vmatpush1.bf16.msra.mxu0 %v8066
      %8091 = vmatprep.subr.bf16.mxu0 0
      %8092 = vmatpush1.bf16.msra.mxu0 0
      %8093 = vmatprep.subr.bf16.mxu0 0
      %8094 = vmatpush1.bf16.msra.mxu0 0
      %8095 = vmatprep.subr.bf16.mxu0 0
      %8096 = vmatpush1.bf16.msra.mxu0 0
      %8097 = vmatprep.subr.bf16.mxu0 0
      %8098 = vmatpush1.bf16.msra.mxu0 0
      %8099 = vmatprep.subr.bf16.mxu0 0
      %8100 = vmatpush1.bf16.msra.mxu0 0
      %8101 = vmatprep.subr.bf16.mxu0 0
      %8102 = vmatpush1.bf16.msra.mxu0 0
      %8103 = vmatprep.subr.bf16.mxu0 0
      %8104 = vmatpush1.bf16.msra.mxu0 0
      %8105 = vmatprep.subr.bf16.mxu0 0
      %8106 = vmatpush1.bf16.msra.mxu0 0
      %8107 = vmatprep.mubr.bf16.mxu0 0
      %8108 = vmatmul.mubr.bf16.gmra.mrb[0].mxu0 %v3077
      %v8109 = vpop.f32.mrb[0].mxu0
      %v8110 = vadd.f32 0.0, %v8109
      %v8111 = vpop.f32.mrb[0].mxu0
      %v8112 = vpop.f32.mrb[0].mxu0
      %v8113 = vadd.f32 0.0, %v8112
      %v8114 = vpop.f32.mrb[0].mxu0
      %8115 = vdwg.mxu0
      %v8116 = vadd.f32 %v8008, %v8110
      %v8117 = vadd.f32 %v8009, %v8113
      %s8118 = scalar_lea.vmem %s1, 1408
      %v8119 = vld [vmem:[%s8118] sm:$0xf]
      %v8120 = vld [vmem:[%s8118 + $0x4] sm:$0xf]
      %v8121 = vld [vmem:[%s8118 + $0x8] sm:$0xf]
      %v8122 = vld [vmem:[%s8118 + $0xc] sm:$0xf]
      %v8123 = vld [vmem:[%s8118 + $0x10] sm:$0xf]
      %v8124 = vld [vmem:[%s8118 + $0x14] sm:$0xf]
      %v8125 = vld [vmem:[%s8118 + $0x18] sm:$0xf]
      %v8126 = vld [vmem:[%s8118 + $0x1c] sm:$0xf]
      %v8127 = vld [vmem:[%s8118 + $0x20] sm:$0xf]
      %v8128 = vld [vmem:[%s8118 + $0x24] sm:$0xf]
      %v8129 = vld [vmem:[%s8118 + $0x28] sm:$0xf]
      %v8130 = vld [vmem:[%s8118 + $0x2c] sm:$0xf]
      %v8131 = vld [vmem:[%s8118 + $0x30] sm:$0xf]
      %v8132 = vld [vmem:[%s8118 + $0x34] sm:$0xf]
      %v8133 = vld [vmem:[%s8118 + $0x38] sm:$0xf]
      %v8134 = vld [vmem:[%s8118 + $0x3c] sm:$0xf]
      %v8151 = vunpack.c.l.b16 %v8119
      %v8152 = vunpack.c.l.b16 %v8120
      %v8153 = vunpack.c.l.b16 %v8121
      %v8154 = vunpack.c.l.b16 %v8122
      %v8155 = vunpack.c.l.b16 %v8123
      %v8156 = vunpack.c.l.b16 %v8124
      %v8157 = vunpack.c.l.b16 %v8125
      %v8158 = vunpack.c.l.b16 %v8126
      %v8159 = vunpack.c.l.b16 %v8127
      %v8160 = vunpack.c.l.b16 %v8128
      %v8161 = vunpack.c.l.b16 %v8129
      %v8162 = vunpack.c.l.b16 %v8130
      %v8163 = vunpack.c.l.b16 %v8131
      %v8164 = vunpack.c.l.b16 %v8132
      %v8165 = vunpack.c.l.b16 %v8133
      %v8166 = vunpack.c.l.b16 %v8134
      %v8167 = vpack.c.b16 %v8152, %v8151
      %v8168 = vpack.c.b16 %v8154, %v8153
      %v8169 = vpack.c.b16 %v8156, %v8155
      %v8170 = vpack.c.b16 %v8158, %v8157
      %v8171 = vpack.c.b16 %v8160, %v8159
      %v8172 = vpack.c.b16 %v8162, %v8161
      %v8173 = vpack.c.b16 %v8164, %v8163
      %v8174 = vpack.c.b16 %v8166, %v8165
      %8183 = vmatprep.subr.bf16.mxu0 0
      %8184 = vmatpush1.bf16.msra.mxu0 %v8167
      %8185 = vmatprep.subr.bf16.mxu0 0
      %8186 = vmatpush1.bf16.msra.mxu0 %v8168
      %8187 = vmatprep.subr.bf16.mxu0 0
      %8188 = vmatpush1.bf16.msra.mxu0 %v8169
      %8189 = vmatprep.subr.bf16.mxu0 0
      %8190 = vmatpush1.bf16.msra.mxu0 %v8170
      %8191 = vmatprep.subr.bf16.mxu0 0
      %8192 = vmatpush1.bf16.msra.mxu0 %v8171
      %8193 = vmatprep.subr.bf16.mxu0 0
      %8194 = vmatpush1.bf16.msra.mxu0 %v8172
      %8195 = vmatprep.subr.bf16.mxu0 0
      %8196 = vmatpush1.bf16.msra.mxu0 %v8173
      %8197 = vmatprep.subr.bf16.mxu0 0
      %8198 = vmatpush1.bf16.msra.mxu0 %v8174
      %8199 = vmatprep.subr.bf16.mxu0 0
      %8200 = vmatpush1.bf16.msra.mxu0 0
      %8201 = vmatprep.subr.bf16.mxu0 0
      %8202 = vmatpush1.bf16.msra.mxu0 0
      %8203 = vmatprep.subr.bf16.mxu0 0
      %8204 = vmatpush1.bf16.msra.mxu0 0
      %8205 = vmatprep.subr.bf16.mxu0 0
      %8206 = vmatpush1.bf16.msra.mxu0 0
      %8207 = vmatprep.subr.bf16.mxu0 0
      %8208 = vmatpush1.bf16.msra.mxu0 0
      %8209 = vmatprep.subr.bf16.mxu0 0
      %8210 = vmatpush1.bf16.msra.mxu0 0
      %8211 = vmatprep.subr.bf16.mxu0 0
      %8212 = vmatpush1.bf16.msra.mxu0 0
      %8213 = vmatprep.subr.bf16.mxu0 0
      %8214 = vmatpush1.bf16.msra.mxu0 0
      %8215 = vmatprep.mubr.bf16.mxu0 0
      %8216 = vmatmul.mubr.bf16.gmra.mrb[0].mxu0 %v3124
      %v8217 = vpop.f32.mrb[0].mxu0
      %v8218 = vadd.f32 0.0, %v8217
      %v8219 = vpop.f32.mrb[0].mxu0
      %v8220 = vpop.f32.mrb[0].mxu0
      %v8221 = vadd.f32 0.0, %v8220
      %v8222 = vpop.f32.mrb[0].mxu0
      %8223 = vdwg.mxu0
      %v8224 = vadd.f32 %v8116, %v8218
      %v8225 = vadd.f32 %v8117, %v8221
      %s8226 = scalar_lea.vmem %s1, 1472
      %v8227 = vld [vmem:[%s8226] sm:$0xf]
      %v8228 = vld [vmem:[%s8226 + $0x4] sm:$0xf]
      %v8229 = vld [vmem:[%s8226 + $0x8] sm:$0xf]
      %v8230 = vld [vmem:[%s8226 + $0xc] sm:$0xf]
      %v8231 = vld [vmem:[%s8226 + $0x10] sm:$0xf]
      %v8232 = vld [vmem:[%s8226 + $0x14] sm:$0xf]
      %v8233 = vld [vmem:[%s8226 + $0x18] sm:$0xf]
      %v8234 = vld [vmem:[%s8226 + $0x1c] sm:$0xf]
      %v8235 = vld [vmem:[%s8226 + $0x20] sm:$0xf]
      %v8236 = vld [vmem:[%s8226 + $0x24] sm:$0xf]
      %v8237 = vld [vmem:[%s8226 + $0x28] sm:$0xf]
      %v8238 = vld [vmem:[%s8226 + $0x2c] sm:$0xf]
      %v8239 = vld [vmem:[%s8226 + $0x30] sm:$0xf]
      %v8240 = vld [vmem:[%s8226 + $0x34] sm:$0xf]
      %v8241 = vld [vmem:[%s8226 + $0x38] sm:$0xf]
      %v8242 = vld [vmem:[%s8226 + $0x3c] sm:$0xf]
      %v8259 = vunpack.c.l.b16 %v8227
      %v8260 = vunpack.c.l.b16 %v8228
      %v8261 = vunpack.c.l.b16 %v8229
      %v8262 = vunpack.c.l.b16 %v8230
      %v8263 = vunpack.c.l.b16 %v8231
      %v8264 = vunpack.c.l.b16 %v8232
      %v8265 = vunpack.c.l.b16 %v8233
      %v8266 = vunpack.c.l.b16 %v8234
      %v8267 = vunpack.c.l.b16 %v8235
      %v8268 = vunpack.c.l.b16 %v8236
      %v8269 = vunpack.c.l.b16 %v8237
      %v8270 = vunpack.c.l.b16 %v8238
      %v8271 = vunpack.c.l.b16 %v8239
      %v8272 = vunpack.c.l.b16 %v8240
      %v8273 = vunpack.c.l.b16 %v8241
      %v8274 = vunpack.c.l.b16 %v8242
      %v8275 = vpack.c.b16 %v8260, %v8259
      %v8276 = vpack.c.b16 %v8262, %v8261
      %v8277 = vpack.c.b16 %v8264, %v8263
      %v8278 = vpack.c.b16 %v8266, %v8265
      %v8279 = vpack.c.b16 %v8268, %v8267
      %v8280 = vpack.c.b16 %v8270, %v8269
      %v8281 = vpack.c.b16 %v8272, %v8271
      %v8282 = vpack.c.b16 %v8274, %v8273
      %8291 = vmatprep.subr.bf16.mxu0 0
      %8292 = vmatpush1.bf16.msra.mxu0 %v8275
      %8293 = vmatprep.subr.bf16.mxu0 0
      %8294 = vmatpush1.bf16.msra.mxu0 %v8276
      %8295 = vmatprep.subr.bf16.mxu0 0
      %8296 = vmatpush1.bf16.msra.mxu0 %v8277
      %8297 = vmatprep.subr.bf16.mxu0 0
      %8298 = vmatpush1.bf16.msra.mxu0 %v8278
      %8299 = vmatprep.subr.bf16.mxu0 0
      %8300 = vmatpush1.bf16.msra.mxu0 %v8279
      %8301 = vmatprep.subr.bf16.mxu0 0
      %8302 = vmatpush1.bf16.msra.mxu0 %v8280
      %8303 = vmatprep.subr.bf16.mxu0 0
      %8304 = vmatpush1.bf16.msra.mxu0 %v8281
      %8305 = vmatprep.subr.bf16.mxu0 0
      %8306 = vmatpush1.bf16.msra.mxu0 %v8282
      %8307 = vmatprep.subr.bf16.mxu0 0
      %8308 = vmatpush1.bf16.msra.mxu0 0
      %8309 = vmatprep.subr.bf16.mxu0 0
      %8310 = vmatpush1.bf16.msra.mxu0 0
      %8311 = vmatprep.subr.bf16.mxu0 0
      %8312 = vmatpush1.bf16.msra.mxu0 0
      %8313 = vmatprep.subr.bf16.mxu0 0
      %8314 = vmatpush1.bf16.msra.mxu0 0
      %8315 = vmatprep.subr.bf16.mxu0 0
      %8316 = vmatpush1.bf16.msra.mxu0 0
      %8317 = vmatprep.subr.bf16.mxu0 0
      %8318 = vmatpush1.bf16.msra.mxu0 0
      %8319 = vmatprep.subr.bf16.mxu0 0
      %8320 = vmatpush1.bf16.msra.mxu0 0
      %8321 = vmatprep.subr.bf16.mxu0 0
      %8322 = vmatpush1.bf16.msra.mxu0 0
      %8323 = vmatprep.mubr.bf16.mxu0 0
      %8324 = vmatmul.mubr.bf16.gmra.mrb[0].mxu0 %v3325
      %v8325 = vpop.f32.mrb[0].mxu0
      %v8326 = vadd.f32 0.0, %v8325
      %v8327 = vpop.f32.mrb[0].mxu0
      %v8328 = vpop.f32.mrb[0].mxu0
      %v8329 = vadd.f32 0.0, %v8328
      %v8330 = vpop.f32.mrb[0].mxu0
      %8331 = vdwg.mxu0
      %v8332 = vadd.f32 %v8224, %v8326
      %v8333 = vadd.f32 %v8225, %v8329
      %s8334 = scalar_lea.vmem %s3, 5
      %v8335 = vld [vmem:[%s8334] sm:$0x1]
      %v8337 = vlaneseq
      %v8338 = vshrl.u32 %v8337, 7
      %v8339 = vsub.s32 0, %v8338
      %v8340 = vrot.slane %v8335, %v8339
      %v8342 = vadd.f32 %v8332, %v8340
      %v8343 = vadd.f32 %v8333, %v8340
      %v8344 = vmax.f32 %v8342, 0.0
      %v8345 = vmax.f32 %v8343, 0.0
      %v8348 = vrot.slane %v8344, 4
      %v8349 = vrot.slane %v8345, 4
      %v8350 = vsel %vm594, %v8348, %v8349
      %v8354 = vsel %vm594, 0.0, %v8348
      %v8355 = vsel %vm594, %v8349, 0.0
      %v8356 = vpack.c.bf16 %v8350, %v8354
      %s8357 = scalar_lea.vmem %s2, 2880
      %v8358 = vld [vmem:[%s8357] sm:$0xf]
      %v8359 = vld [vmem:[%s8357 + $0x4] sm:$0xf]
      %v8360 = vld [vmem:[%s8357 + $0x8] sm:$0xf]
      %v8361 = vld [vmem:[%s8357 + $0xc] sm:$0xf]
      %v8362 = vld [vmem:[%s8357 + $0x10] sm:$0xf]
      %v8363 = vld [vmem:[%s8357 + $0x14] sm:$0xf]
      %v8364 = vld [vmem:[%s8357 + $0x18] sm:$0xf]
      %v8365 = vld [vmem:[%s8357 + $0x1c] sm:$0xf]
      %v8366 = vld [vmem:[%s8357 + $0x20] sm:$0xf]
      %v8367 = vld [vmem:[%s8357 + $0x24] sm:$0xf]
      %v8368 = vld [vmem:[%s8357 + $0x28] sm:$0xf]
      %v8369 = vld [vmem:[%s8357 + $0x2c] sm:$0xf]
      %v8370 = vld [vmem:[%s8357 + $0x30] sm:$0xf]
      %v8371 = vld [vmem:[%s8357 + $0x34] sm:$0xf]
      %v8372 = vld [vmem:[%s8357 + $0x38] sm:$0xf]
      %v8373 = vld [vmem:[%s8357 + $0x3c] sm:$0xf]
      %v8374 = vpack.c.bf16 %v8355, %v8355
      %s8375 = scalar_lea.vmem %s2, 2944
      %v8376 = vld [vmem:[%s8375] sm:$0xf]
      %v8377 = vld [vmem:[%s8375 + $0x4] sm:$0xf]
      %v8378 = vld [vmem:[%s8375 + $0x8] sm:$0xf]
      %v8379 = vld [vmem:[%s8375 + $0xc] sm:$0xf]
      %v8380 = vld [vmem:[%s8375 + $0x10] sm:$0xf]
      %v8381 = vld [vmem:[%s8375 + $0x14] sm:$0xf]
      %v8382 = vld [vmem:[%s8375 + $0x18] sm:$0xf]
      %v8383 = vld [vmem:[%s8375 + $0x1c] sm:$0xf]
      %v8384 = vld [vmem:[%s8375 + $0x20] sm:$0xf]
      %v8385 = vld [vmem:[%s8375 + $0x24] sm:$0xf]
      %v8386 = vld [vmem:[%s8375 + $0x28] sm:$0xf]
      %v8387 = vld [vmem:[%s8375 + $0x2c] sm:$0xf]
      %v8388 = vld [vmem:[%s8375 + $0x30] sm:$0xf]
      %v8389 = vld [vmem:[%s8375 + $0x34] sm:$0xf]
      %v8390 = vld [vmem:[%s8375 + $0x38] sm:$0xf]
      %v8391 = vld [vmem:[%s8375 + $0x3c] sm:$0xf]
      %v8393 = vshrl.u32 %v8356, 16
      %v8395 = vshll.u32 %v8356, 16
      %v8397 = vrot.slane %v8395, 1
      %v8398 = vor.u32 %v8393, %v8397
      %v8400 = vshll.u32 %v8374, 16
      %v8402 = vrot.slane %v8400, 1
      %v8403 = vsel %vm274, %v8398, %v8402
      %v8421 = vunpack.c.l.b16 %v8376
      %v8422 = vunpack.c.l.b16 %v8377
      %v8423 = vunpack.c.l.b16 %v8378
      %v8424 = vunpack.c.l.b16 %v8379
      %v8425 = vunpack.c.l.b16 %v8380
      %v8426 = vunpack.c.l.b16 %v8381
      %v8427 = vunpack.c.l.b16 %v8382
      %v8428 = vunpack.c.l.b16 %v8383
      %v8429 = vunpack.c.l.b16 %v8384
      %v8430 = vunpack.c.l.b16 %v8385
      %v8431 = vunpack.c.l.b16 %v8386
      %v8432 = vunpack.c.l.b16 %v8387
      %v8433 = vunpack.c.l.b16 %v8388
      %v8434 = vunpack.c.l.b16 %v8389
      %v8435 = vunpack.c.l.b16 %v8390
      %v8436 = vunpack.c.l.b16 %v8391
      %v8437 = vpack.c.b16 %v8422, %v8421
      %v8438 = vpack.c.b16 %v8424, %v8423
      %v8439 = vpack.c.b16 %v8426, %v8425
      %v8440 = vpack.c.b16 %v8428, %v8427
      %v8441 = vpack.c.b16 %v8430, %v8429
      %v8442 = vpack.c.b16 %v8432, %v8431
      %v8443 = vpack.c.b16 %v8434, %v8433
      %v8444 = vpack.c.b16 %v8436, %v8435
      %8453 = vmatprep.subr.bf16.mxu0 0
      %8454 = vmatpush1.bf16.msra.mxu0 %v8437
      %8455 = vmatprep.subr.bf16.mxu0 0
      %8456 = vmatpush1.bf16.msra.mxu0 %v8438
      %8457 = vmatprep.subr.bf16.mxu0 0
      %8458 = vmatpush1.bf16.msra.mxu0 %v8439
      %8459 = vmatprep.subr.bf16.mxu0 0
      %8460 = vmatpush1.bf16.msra.mxu0 %v8440
      %8461 = vmatprep.subr.bf16.mxu0 0
      %8462 = vmatpush1.bf16.msra.mxu0 %v8441
      %8463 = vmatprep.subr.bf16.mxu0 0
      %8464 = vmatpush1.bf16.msra.mxu0 %v8442
      %8465 = vmatprep.subr.bf16.mxu0 0
      %8466 = vmatpush1.bf16.msra.mxu0 %v8443
      %8467 = vmatprep.subr.bf16.mxu0 0
      %8468 = vmatpush1.bf16.msra.mxu0 %v8444
      %8469 = vmatprep.subr.bf16.mxu0 0
      %8470 = vmatpush1.bf16.msra.mxu0 0
      %8471 = vmatprep.subr.bf16.mxu0 0
      %8472 = vmatpush1.bf16.msra.mxu0 0
      %8473 = vmatprep.subr.bf16.mxu0 0
      %8474 = vmatpush1.bf16.msra.mxu0 0
      %8475 = vmatprep.subr.bf16.mxu0 0
      %8476 = vmatpush1.bf16.msra.mxu0 0
      %8477 = vmatprep.subr.bf16.mxu0 0
      %8478 = vmatpush1.bf16.msra.mxu0 0
      %8479 = vmatprep.subr.bf16.mxu0 0
      %8480 = vmatpush1.bf16.msra.mxu0 0
      %8481 = vmatprep.subr.bf16.mxu0 0
      %8482 = vmatpush1.bf16.msra.mxu0 0
      %8483 = vmatprep.subr.bf16.mxu0 0
      %8484 = vmatpush1.bf16.msra.mxu0 0
      %8485 = vmatprep.mubr.bf16.mxu0 0
      %8486 = vmatmul.mubr.bf16.gmra.mrb[0].mxu0 %v8403
      %v8487 = vpop.f32.mrb[0].mxu0
      %v8488 = vadd.f32 0.0, %v8487
      %v8489 = vpop.f32.mrb[0].mxu0
      %v8490 = vpop.f32.mrb[0].mxu0
      %v8491 = vadd.f32 0.0, %v8490
      %v8492 = vpop.f32.mrb[0].mxu0
      %8493 = vdwg.mxu0
      %v8510 = vunpack.c.l.b16 %v8358
      %v8511 = vunpack.c.l.b16 %v8359
      %v8512 = vunpack.c.l.b16 %v8360
      %v8513 = vunpack.c.l.b16 %v8361
      %v8514 = vunpack.c.l.b16 %v8362
      %v8515 = vunpack.c.l.b16 %v8363
      %v8516 = vunpack.c.l.b16 %v8364
      %v8517 = vunpack.c.l.b16 %v8365
      %v8518 = vunpack.c.l.b16 %v8366
      %v8519 = vunpack.c.l.b16 %v8367
      %v8520 = vunpack.c.l.b16 %v8368
      %v8521 = vunpack.c.l.b16 %v8369
      %v8522 = vunpack.c.l.b16 %v8370
      %v8523 = vunpack.c.l.b16 %v8371
      %v8524 = vunpack.c.l.b16 %v8372
      %v8525 = vunpack.c.l.b16 %v8373
      %v8526 = vpack.c.b16 %v8511, %v8510
      %v8527 = vpack.c.b16 %v8513, %v8512
      %v8528 = vpack.c.b16 %v8515, %v8514
      %v8529 = vpack.c.b16 %v8517, %v8516
      %v8530 = vpack.c.b16 %v8519, %v8518
      %v8531 = vpack.c.b16 %v8521, %v8520
      %v8532 = vpack.c.b16 %v8523, %v8522
      %v8533 = vpack.c.b16 %v8525, %v8524
      %8542 = vmatprep.subr.bf16.mxu0 0
      %8543 = vmatpush1.bf16.msra.mxu0 %v8526
      %8544 = vmatprep.subr.bf16.mxu0 0
      %8545 = vmatpush1.bf16.msra.mxu0 %v8527
      %8546 = vmatprep.subr.bf16.mxu0 0
      %8547 = vmatpush1.bf16.msra.mxu0 %v8528
      %8548 = vmatprep.subr.bf16.mxu0 0
      %8549 = vmatpush1.bf16.msra.mxu0 %v8529
      %8550 = vmatprep.subr.bf16.mxu0 0
      %8551 = vmatpush1.bf16.msra.mxu0 %v8530
      %8552 = vmatprep.subr.bf16.mxu0 0
      %8553 = vmatpush1.bf16.msra.mxu0 %v8531
      %8554 = vmatprep.subr.bf16.mxu0 0
      %8555 = vmatpush1.bf16.msra.mxu0 %v8532
      %8556 = vmatprep.subr.bf16.mxu0 0
      %8557 = vmatpush1.bf16.msra.mxu0 %v8533
      %8558 = vmatprep.subr.bf16.mxu0 0
      %8559 = vmatpush1.bf16.msra.mxu0 0
      %8560 = vmatprep.subr.bf16.mxu0 0
      %8561 = vmatpush1.bf16.msra.mxu0 0
      %8562 = vmatprep.subr.bf16.mxu0 0
      %8563 = vmatpush1.bf16.msra.mxu0 0
      %8564 = vmatprep.subr.bf16.mxu0 0
      %8565 = vmatpush1.bf16.msra.mxu0 0
      %8566 = vmatprep.subr.bf16.mxu0 0
      %8567 = vmatpush1.bf16.msra.mxu0 0
      %8568 = vmatprep.subr.bf16.mxu0 0
      %8569 = vmatpush1.bf16.msra.mxu0 0
      %8570 = vmatprep.subr.bf16.mxu0 0
      %8571 = vmatpush1.bf16.msra.mxu0 0
      %8572 = vmatprep.subr.bf16.mxu0 0
      %8573 = vmatpush1.bf16.msra.mxu0 0
      %8574 = vmatprep.mubr.bf16.mxu0 0
      %8575 = vmatmul.mubr.bf16.gmra.mrb[0].mxu0 %v8356
      %v8576 = vpop.f32.mrb[0].mxu0
      %v8577 = vadd.f32 %v8488, %v8576
      %v8578 = vpop.f32.mrb[0].mxu0
      %v8579 = vpop.f32.mrb[0].mxu0
      %v8580 = vadd.f32 %v8491, %v8579
      %v8581 = vpop.f32.mrb[0].mxu0
      %8582 = vdwg.mxu0
      %s8583 = scalar_lea.vmem %s2, 3008
      %v8584 = vld [vmem:[%s8583] sm:$0xf]
      %v8585 = vld [vmem:[%s8583 + $0x4] sm:$0xf]
      %v8586 = vld [vmem:[%s8583 + $0x8] sm:$0xf]
      %v8587 = vld [vmem:[%s8583 + $0xc] sm:$0xf]
      %v8588 = vld [vmem:[%s8583 + $0x10] sm:$0xf]
      %v8589 = vld [vmem:[%s8583 + $0x14] sm:$0xf]
      %v8590 = vld [vmem:[%s8583 + $0x18] sm:$0xf]
      %v8591 = vld [vmem:[%s8583 + $0x1c] sm:$0xf]
      %v8592 = vld [vmem:[%s8583 + $0x20] sm:$0xf]
      %v8593 = vld [vmem:[%s8583 + $0x24] sm:$0xf]
      %v8594 = vld [vmem:[%s8583 + $0x28] sm:$0xf]
      %v8595 = vld [vmem:[%s8583 + $0x2c] sm:$0xf]
      %v8596 = vld [vmem:[%s8583 + $0x30] sm:$0xf]
      %v8597 = vld [vmem:[%s8583 + $0x34] sm:$0xf]
      %v8598 = vld [vmem:[%s8583 + $0x38] sm:$0xf]
      %v8599 = vld [vmem:[%s8583 + $0x3c] sm:$0xf]
      %v8602 = vrot.slane %v8356, 1
      %v8603 = vrot.slane %v8374, 1
      %v8604 = vsel %vm485, %v8602, %v8603
      %v8622 = vunpack.c.l.b16 %v8584
      %v8623 = vunpack.c.l.b16 %v8585
      %v8624 = vunpack.c.l.b16 %v8586
      %v8625 = vunpack.c.l.b16 %v8587
      %v8626 = vunpack.c.l.b16 %v8588
      %v8627 = vunpack.c.l.b16 %v8589
      %v8628 = vunpack.c.l.b16 %v8590
      %v8629 = vunpack.c.l.b16 %v8591
      %v8630 = vunpack.c.l.b16 %v8592
      %v8631 = vunpack.c.l.b16 %v8593
      %v8632 = vunpack.c.l.b16 %v8594
      %v8633 = vunpack.c.l.b16 %v8595
      %v8634 = vunpack.c.l.b16 %v8596
      %v8635 = vunpack.c.l.b16 %v8597
      %v8636 = vunpack.c.l.b16 %v8598
      %v8637 = vunpack.c.l.b16 %v8599
      %v8638 = vpack.c.b16 %v8623, %v8622
      %v8639 = vpack.c.b16 %v8625, %v8624
      %v8640 = vpack.c.b16 %v8627, %v8626
      %v8641 = vpack.c.b16 %v8629, %v8628
      %v8642 = vpack.c.b16 %v8631, %v8630
      %v8643 = vpack.c.b16 %v8633, %v8632
      %v8644 = vpack.c.b16 %v8635, %v8634
      %v8645 = vpack.c.b16 %v8637, %v8636
      %8654 = vmatprep.subr.bf16.mxu0 0
      %8655 = vmatpush1.bf16.msra.mxu0 %v8638
      %8656 = vmatprep.subr.bf16.mxu0 0
      %8657 = vmatpush1.bf16.msra.mxu0 %v8639
      %8658 = vmatprep.subr.bf16.mxu0 0
      %8659 = vmatpush1.bf16.msra.mxu0 %v8640
      %8660 = vmatprep.subr.bf16.mxu0 0
      %8661 = vmatpush1.bf16.msra.mxu0 %v8641
      %8662 = vmatprep.subr.bf16.mxu0 0
      %8663 = vmatpush1.bf16.msra.mxu0 %v8642
      %8664 = vmatprep.subr.bf16.mxu0 0
      %8665 = vmatpush1.bf16.msra.mxu0 %v8643
      %8666 = vmatprep.subr.bf16.mxu0 0
      %8667 = vmatpush1.bf16.msra.mxu0 %v8644
      %8668 = vmatprep.subr.bf16.mxu0 0
      %8669 = vmatpush1.bf16.msra.mxu0 %v8645
      %8670 = vmatprep.subr.bf16.mxu0 0
      %8671 = vmatpush1.bf16.msra.mxu0 0
      %8672 = vmatprep.subr.bf16.mxu0 0
      %8673 = vmatpush1.bf16.msra.mxu0 0
      %8674 = vmatprep.subr.bf16.mxu0 0
      %8675 = vmatpush1.bf16.msra.mxu0 0
      %8676 = vmatprep.subr.bf16.mxu0 0
      %8677 = vmatpush1.bf16.msra.mxu0 0
      %8678 = vmatprep.subr.bf16.mxu0 0
      %8679 = vmatpush1.bf16.msra.mxu0 0
      %8680 = vmatprep.subr.bf16.mxu0 0
      %8681 = vmatpush1.bf16.msra.mxu0 0
      %8682 = vmatprep.subr.bf16.mxu0 0
      %8683 = vmatpush1.bf16.msra.mxu0 0
      %8684 = vmatprep.subr.bf16.mxu0 0
      %8685 = vmatpush1.bf16.msra.mxu0 0
      %8686 = vmatprep.mubr.bf16.mxu0 0
      %8687 = vmatmul.mubr.bf16.gmra.mrb[0].mxu0 %v8604
      %v8688 = vpop.f32.mrb[0].mxu0
      %v8689 = vadd.f32 0.0, %v8688
      %v8690 = vpop.f32.mrb[0].mxu0
      %v8691 = vpop.f32.mrb[0].mxu0
      %v8692 = vadd.f32 0.0, %v8691
      %v8693 = vpop.f32.mrb[0].mxu0
      %8694 = vdwg.mxu0
      %v8695 = vadd.f32 %v8577, %v8689
      %v8696 = vadd.f32 %v8580, %v8692
      %s8697 = scalar_lea.vmem %s2, 3072
      %v8698 = vld [vmem:[%s8697] sm:$0xf]
      %v8699 = vld [vmem:[%s8697 + $0x4] sm:$0xf]
      %v8700 = vld [vmem:[%s8697 + $0x8] sm:$0xf]
      %v8701 = vld [vmem:[%s8697 + $0xc] sm:$0xf]
      %v8702 = vld [vmem:[%s8697 + $0x10] sm:$0xf]
      %v8703 = vld [vmem:[%s8697 + $0x14] sm:$0xf]
      %v8704 = vld [vmem:[%s8697 + $0x18] sm:$0xf]
      %v8705 = vld [vmem:[%s8697 + $0x1c] sm:$0xf]
      %v8706 = vld [vmem:[%s8697 + $0x20] sm:$0xf]
      %v8707 = vld [vmem:[%s8697 + $0x24] sm:$0xf]
      %v8708 = vld [vmem:[%s8697 + $0x28] sm:$0xf]
      %v8709 = vld [vmem:[%s8697 + $0x2c] sm:$0xf]
      %v8710 = vld [vmem:[%s8697 + $0x30] sm:$0xf]
      %v8711 = vld [vmem:[%s8697 + $0x34] sm:$0xf]
      %v8712 = vld [vmem:[%s8697 + $0x38] sm:$0xf]
      %v8713 = vld [vmem:[%s8697 + $0x3c] sm:$0xf]
      %v8714 = vrot.slane %v8393, 1
      %v8715 = vrot.slane %v8395, 2
      %v8716 = vor.u32 %v8714, %v8715
      %v8717 = vshrl.u32 %v8374, 16
      %v8719 = vrot.slane %v8717, 1
      %v8720 = vrot.slane %v8400, 2
      %v8721 = vor.u32 %v8719, %v8720
      %v8722 = vsel %vm960, %v8716, %v8721
      %v8740 = vunpack.c.l.b16 %v8698
      %v8741 = vunpack.c.l.b16 %v8699
      %v8742 = vunpack.c.l.b16 %v8700
      %v8743 = vunpack.c.l.b16 %v8701
      %v8744 = vunpack.c.l.b16 %v8702
      %v8745 = vunpack.c.l.b16 %v8703
      %v8746 = vunpack.c.l.b16 %v8704
      %v8747 = vunpack.c.l.b16 %v8705
      %v8748 = vunpack.c.l.b16 %v8706
      %v8749 = vunpack.c.l.b16 %v8707
      %v8750 = vunpack.c.l.b16 %v8708
      %v8751 = vunpack.c.l.b16 %v8709
      %v8752 = vunpack.c.l.b16 %v8710
      %v8753 = vunpack.c.l.b16 %v8711
      %v8754 = vunpack.c.l.b16 %v8712
      %v8755 = vunpack.c.l.b16 %v8713
      %v8756 = vpack.c.b16 %v8741, %v8740
      %v8757 = vpack.c.b16 %v8743, %v8742
      %v8758 = vpack.c.b16 %v8745, %v8744
      %v8759 = vpack.c.b16 %v8747, %v8746
      %v8760 = vpack.c.b16 %v8749, %v8748
      %v8761 = vpack.c.b16 %v8751, %v8750
      %v8762 = vpack.c.b16 %v8753, %v8752
      %v8763 = vpack.c.b16 %v8755, %v8754
      %8772 = vmatprep.subr.bf16.mxu0 0
      %8773 = vmatpush1.bf16.msra.mxu0 %v8756
      %8774 = vmatprep.subr.bf16.mxu0 0
      %8775 = vmatpush1.bf16.msra.mxu0 %v8757
      %8776 = vmatprep.subr.bf16.mxu0 0
      %8777 = vmatpush1.bf16.msra.mxu0 %v8758
      %8778 = vmatprep.subr.bf16.mxu0 0
      %8779 = vmatpush1.bf16.msra.mxu0 %v8759
      %8780 = vmatprep.subr.bf16.mxu0 0
      %8781 = vmatpush1.bf16.msra.mxu0 %v8760
      %8782 = vmatprep.subr.bf16.mxu0 0
      %8783 = vmatpush1.bf16.msra.mxu0 %v8761
      %8784 = vmatprep.subr.bf16.mxu0 0
      %8785 = vmatpush1.bf16.msra.mxu0 %v8762
      %8786 = vmatprep.subr.bf16.mxu0 0
      %8787 = vmatpush1.bf16.msra.mxu0 %v8763
      %8788 = vmatprep.subr.bf16.mxu0 0
      %8789 = vmatpush1.bf16.msra.mxu0 0
      %8790 = vmatprep.subr.bf16.mxu0 0
      %8791 = vmatpush1.bf16.msra.mxu0 0
      %8792 = vmatprep.subr.bf16.mxu0 0
      %8793 = vmatpush1.bf16.msra.mxu0 0
      %8794 = vmatprep.subr.bf16.mxu0 0
      %8795 = vmatpush1.bf16.msra.mxu0 0
      %8796 = vmatprep.subr.bf16.mxu0 0
      %8797 = vmatpush1.bf16.msra.mxu0 0
      %8798 = vmatprep.subr.bf16.mxu0 0
      %8799 = vmatpush1.bf16.msra.mxu0 0
      %8800 = vmatprep.subr.bf16.mxu0 0
      %8801 = vmatpush1.bf16.msra.mxu0 0
      %8802 = vmatprep.subr.bf16.mxu0 0
      %8803 = vmatpush1.bf16.msra.mxu0 0
      %8804 = vmatprep.mubr.bf16.mxu0 0
      %8805 = vmatmul.mubr.bf16.gmra.mrb[0].mxu0 %v8722
      %v8806 = vpop.f32.mrb[0].mxu0
      %v8807 = vadd.f32 0.0, %v8806
      %v8808 = vpop.f32.mrb[0].mxu0
      %v8809 = vpop.f32.mrb[0].mxu0
      %v8810 = vadd.f32 0.0, %v8809
      %v8811 = vpop.f32.mrb[0].mxu0
      %8812 = vdwg.mxu0
      %v8813 = vadd.f32 %v8695, %v8807
      %v8814 = vadd.f32 %v8696, %v8810
      %s8815 = scalar_lea.vmem %s2, 3136
      %v8816 = vld [vmem:[%s8815] sm:$0xf]
      %v8817 = vld [vmem:[%s8815 + $0x4] sm:$0xf]
      %v8818 = vld [vmem:[%s8815 + $0x8] sm:$0xf]
      %v8819 = vld [vmem:[%s8815 + $0xc] sm:$0xf]
      %v8820 = vld [vmem:[%s8815 + $0x10] sm:$0xf]
      %v8821 = vld [vmem:[%s8815 + $0x14] sm:$0xf]
      %v8822 = vld [vmem:[%s8815 + $0x18] sm:$0xf]
      %v8823 = vld [vmem:[%s8815 + $0x1c] sm:$0xf]
      %v8824 = vld [vmem:[%s8815 + $0x20] sm:$0xf]
      %v8825 = vld [vmem:[%s8815 + $0x24] sm:$0xf]
      %v8826 = vld [vmem:[%s8815 + $0x28] sm:$0xf]
      %v8827 = vld [vmem:[%s8815 + $0x2c] sm:$0xf]
      %v8828 = vld [vmem:[%s8815 + $0x30] sm:$0xf]
      %v8829 = vld [vmem:[%s8815 + $0x34] sm:$0xf]
      %v8830 = vld [vmem:[%s8815 + $0x38] sm:$0xf]
      %v8831 = vld [vmem:[%s8815 + $0x3c] sm:$0xf]
      %v8832 = vrot.slane %v8356, 2
      %v8833 = vrot.slane %v8374, 2
      %v8834 = vsel %vm1079, %v8832, %v8833
      %v8852 = vunpack.c.l.b16 %v8816
      %v8853 = vunpack.c.l.b16 %v8817
      %v8854 = vunpack.c.l.b16 %v8818
      %v8855 = vunpack.c.l.b16 %v8819
      %v8856 = vunpack.c.l.b16 %v8820
      %v8857 = vunpack.c.l.b16 %v8821
      %v8858 = vunpack.c.l.b16 %v8822
      %v8859 = vunpack.c.l.b16 %v8823
      %v8860 = vunpack.c.l.b16 %v8824
      %v8861 = vunpack.c.l.b16 %v8825
      %v8862 = vunpack.c.l.b16 %v8826
      %v8863 = vunpack.c.l.b16 %v8827
      %v8864 = vunpack.c.l.b16 %v8828
      %v8865 = vunpack.c.l.b16 %v8829
      %v8866 = vunpack.c.l.b16 %v8830
      %v8867 = vunpack.c.l.b16 %v8831
      %v8868 = vpack.c.b16 %v8853, %v8852
      %v8869 = vpack.c.b16 %v8855, %v8854
      %v8870 = vpack.c.b16 %v8857, %v8856
      %v8871 = vpack.c.b16 %v8859, %v8858
      %v8872 = vpack.c.b16 %v8861, %v8860
      %v8873 = vpack.c.b16 %v8863, %v8862
      %v8874 = vpack.c.b16 %v8865, %v8864
      %v8875 = vpack.c.b16 %v8867, %v8866
      %8884 = vmatprep.subr.bf16.mxu0 0
      %8885 = vmatpush1.bf16.msra.mxu0 %v8868
      %8886 = vmatprep.subr.bf16.mxu0 0
      %8887 = vmatpush1.bf16.msra.mxu0 %v8869
      %8888 = vmatprep.subr.bf16.mxu0 0
      %8889 = vmatpush1.bf16.msra.mxu0 %v8870
      %8890 = vmatprep.subr.bf16.mxu0 0
      %8891 = vmatpush1.bf16.msra.mxu0 %v8871
      %8892 = vmatprep.subr.bf16.mxu0 0
      %8893 = vmatpush1.bf16.msra.mxu0 %v8872
      %8894 = vmatprep.subr.bf16.mxu0 0
      %8895 = vmatpush1.bf16.msra.mxu0 %v8873
      %8896 = vmatprep.subr.bf16.mxu0 0
      %8897 = vmatpush1.bf16.msra.mxu0 %v8874
      %8898 = vmatprep.subr.bf16.mxu0 0
      %8899 = vmatpush1.bf16.msra.mxu0 %v8875
      %8900 = vmatprep.subr.bf16.mxu0 0
      %8901 = vmatpush1.bf16.msra.mxu0 0
      %8902 = vmatprep.subr.bf16.mxu0 0
      %8903 = vmatpush1.bf16.msra.mxu0 0
      %8904 = vmatprep.subr.bf16.mxu0 0
      %8905 = vmatpush1.bf16.msra.mxu0 0
      %8906 = vmatprep.subr.bf16.mxu0 0
      %8907 = vmatpush1.bf16.msra.mxu0 0
      %8908 = vmatprep.subr.bf16.mxu0 0
      %8909 = vmatpush1.bf16.msra.mxu0 0
      %8910 = vmatprep.subr.bf16.mxu0 0
      %8911 = vmatpush1.bf16.msra.mxu0 0
      %8912 = vmatprep.subr.bf16.mxu0 0
      %8913 = vmatpush1.bf16.msra.mxu0 0
      %8914 = vmatprep.subr.bf16.mxu0 0
      %8915 = vmatpush1.bf16.msra.mxu0 0
      %8916 = vmatprep.mubr.bf16.mxu0 0
      %8917 = vmatmul.mubr.bf16.gmra.mrb[0].mxu0 %v8834
      %v8918 = vpop.f32.mrb[0].mxu0
      %v8919 = vadd.f32 0.0, %v8918
      %v8920 = vpop.f32.mrb[0].mxu0
      %v8921 = vpop.f32.mrb[0].mxu0
      %v8922 = vadd.f32 0.0, %v8921
      %v8923 = vpop.f32.mrb[0].mxu0
      %8924 = vdwg.mxu0
      %v8925 = vadd.f32 %v8813, %v8919
      %v8926 = vadd.f32 %v8814, %v8922
      %s8927 = scalar_lea.vmem %s2, 3200
      %v8928 = vld [vmem:[%s8927] sm:$0xf]
      %v8929 = vld [vmem:[%s8927 + $0x4] sm:$0xf]
      %v8930 = vld [vmem:[%s8927 + $0x8] sm:$0xf]
      %v8931 = vld [vmem:[%s8927 + $0xc] sm:$0xf]
      %v8932 = vld [vmem:[%s8927 + $0x10] sm:$0xf]
      %v8933 = vld [vmem:[%s8927 + $0x14] sm:$0xf]
      %v8934 = vld [vmem:[%s8927 + $0x18] sm:$0xf]
      %v8935 = vld [vmem:[%s8927 + $0x1c] sm:$0xf]
      %v8936 = vld [vmem:[%s8927 + $0x20] sm:$0xf]
      %v8937 = vld [vmem:[%s8927 + $0x24] sm:$0xf]
      %v8938 = vld [vmem:[%s8927 + $0x28] sm:$0xf]
      %v8939 = vld [vmem:[%s8927 + $0x2c] sm:$0xf]
      %v8940 = vld [vmem:[%s8927 + $0x30] sm:$0xf]
      %v8941 = vld [vmem:[%s8927 + $0x34] sm:$0xf]
      %v8942 = vld [vmem:[%s8927 + $0x38] sm:$0xf]
      %v8943 = vld [vmem:[%s8927 + $0x3c] sm:$0xf]
      %v8944 = vrot.slane %v8393, 2
      %v8945 = vrot.slane %v8395, 3
      %v8946 = vor.u32 %v8944, %v8945
      %v8947 = vrot.slane %v8717, 2
      %v8948 = vrot.slane %v8400, 3
      %v8949 = vor.u32 %v8947, %v8948
      %v8950 = vsel %vm1192, %v8946, %v8949
      %v8968 = vunpack.c.l.b16 %v8928
      %v8969 = vunpack.c.l.b16 %v8929
      %v8970 = vunpack.c.l.b16 %v8930
      %v8971 = vunpack.c.l.b16 %v8931
      %v8972 = vunpack.c.l.b16 %v8932
      %v8973 = vunpack.c.l.b16 %v8933
      %v8974 = vunpack.c.l.b16 %v8934
      %v8975 = vunpack.c.l.b16 %v8935
      %v8976 = vunpack.c.l.b16 %v8936
      %v8977 = vunpack.c.l.b16 %v8937
      %v8978 = vunpack.c.l.b16 %v8938
      %v8979 = vunpack.c.l.b16 %v8939
      %v8980 = vunpack.c.l.b16 %v8940
      %v8981 = vunpack.c.l.b16 %v8941
      %v8982 = vunpack.c.l.b16 %v8942
      %v8983 = vunpack.c.l.b16 %v8943
      %v8984 = vpack.c.b16 %v8969, %v8968
      %v8985 = vpack.c.b16 %v8971, %v8970
      %v8986 = vpack.c.b16 %v8973, %v8972
      %v8987 = vpack.c.b16 %v8975, %v8974
      %v8988 = vpack.c.b16 %v8977, %v8976
      %v8989 = vpack.c.b16 %v8979, %v8978
      %v8990 = vpack.c.b16 %v8981, %v8980
      %v8991 = vpack.c.b16 %v8983, %v8982
      %9000 = vmatprep.subr.bf16.mxu0 0
      %9001 = vmatpush1.bf16.msra.mxu0 %v8984
      %9002 = vmatprep.subr.bf16.mxu0 0
      %9003 = vmatpush1.bf16.msra.mxu0 %v8985
      %9004 = vmatprep.subr.bf16.mxu0 0
      %9005 = vmatpush1.bf16.msra.mxu0 %v8986
      %9006 = vmatprep.subr.bf16.mxu0 0
      %9007 = vmatpush1.bf16.msra.mxu0 %v8987
      %9008 = vmatprep.subr.bf16.mxu0 0
      %9009 = vmatpush1.bf16.msra.mxu0 %v8988
      %9010 = vmatprep.subr.bf16.mxu0 0
      %9011 = vmatpush1.bf16.msra.mxu0 %v8989
      %9012 = vmatprep.subr.bf16.mxu0 0
      %9013 = vmatpush1.bf16.msra.mxu0 %v8990
      %9014 = vmatprep.subr.bf16.mxu0 0
      %9015 = vmatpush1.bf16.msra.mxu0 %v8991
      %9016 = vmatprep.subr.bf16.mxu0 0
      %9017 = vmatpush1.bf16.msra.mxu0 0
      %9018 = vmatprep.subr.bf16.mxu0 0
      %9019 = vmatpush1.bf16.msra.mxu0 0
      %9020 = vmatprep.subr.bf16.mxu0 0
      %9021 = vmatpush1.bf16.msra.mxu0 0
      %9022 = vmatprep.subr.bf16.mxu0 0
      %9023 = vmatpush1.bf16.msra.mxu0 0
      %9024 = vmatprep.subr.bf16.mxu0 0
      %9025 = vmatpush1.bf16.msra.mxu0 0
      %9026 = vmatprep.subr.bf16.mxu0 0
      %9027 = vmatpush1.bf16.msra.mxu0 0
      %9028 = vmatprep.subr.bf16.mxu0 0
      %9029 = vmatpush1.bf16.msra.mxu0 0
      %9030 = vmatprep.subr.bf16.mxu0 0
      %9031 = vmatpush1.bf16.msra.mxu0 0
      %9032 = vmatprep.mubr.bf16.mxu0 0
      %9033 = vmatmul.mubr.bf16.gmra.mrb[0].mxu0 %v8950
      %v9034 = vpop.f32.mrb[0].mxu0
      %v9035 = vadd.f32 0.0, %v9034
      %v9036 = vpop.f32.mrb[0].mxu0
      %v9037 = vpop.f32.mrb[0].mxu0
      %v9038 = vadd.f32 0.0, %v9037
      %v9039 = vpop.f32.mrb[0].mxu0
      %9040 = vdwg.mxu0
      %v9041 = vadd.f32 %v8925, %v9035
      %v9042 = vadd.f32 %v8926, %v9038
      %s9043 = scalar_lea.vmem %s2, 3264
      %v9044 = vld [vmem:[%s9043] sm:$0xf]
      %v9045 = vld [vmem:[%s9043 + $0x4] sm:$0xf]
      %v9046 = vld [vmem:[%s9043 + $0x8] sm:$0xf]
      %v9047 = vld [vmem:[%s9043 + $0xc] sm:$0xf]
      %v9048 = vld [vmem:[%s9043 + $0x10] sm:$0xf]
      %v9049 = vld [vmem:[%s9043 + $0x14] sm:$0xf]
      %v9050 = vld [vmem:[%s9043 + $0x18] sm:$0xf]
      %v9051 = vld [vmem:[%s9043 + $0x1c] sm:$0xf]
      %v9052 = vld [vmem:[%s9043 + $0x20] sm:$0xf]
      %v9053 = vld [vmem:[%s9043 + $0x24] sm:$0xf]
      %v9054 = vld [vmem:[%s9043 + $0x28] sm:$0xf]
      %v9055 = vld [vmem:[%s9043 + $0x2c] sm:$0xf]
      %v9056 = vld [vmem:[%s9043 + $0x30] sm:$0xf]
      %v9057 = vld [vmem:[%s9043 + $0x34] sm:$0xf]
      %v9058 = vld [vmem:[%s9043 + $0x38] sm:$0xf]
      %v9059 = vld [vmem:[%s9043 + $0x3c] sm:$0xf]
      %v9060 = vrot.slane %v8356, 3
      %v9061 = vrot.slane %v8374, 3
      %v9062 = vsel %vm1309, %v9060, %v9061
      %v9080 = vunpack.c.l.b16 %v9044
      %v9081 = vunpack.c.l.b16 %v9045
      %v9082 = vunpack.c.l.b16 %v9046
      %v9083 = vunpack.c.l.b16 %v9047
      %v9084 = vunpack.c.l.b16 %v9048
      %v9085 = vunpack.c.l.b16 %v9049
      %v9086 = vunpack.c.l.b16 %v9050
      %v9087 = vunpack.c.l.b16 %v9051
      %v9088 = vunpack.c.l.b16 %v9052
      %v9089 = vunpack.c.l.b16 %v9053
      %v9090 = vunpack.c.l.b16 %v9054
      %v9091 = vunpack.c.l.b16 %v9055
      %v9092 = vunpack.c.l.b16 %v9056
      %v9093 = vunpack.c.l.b16 %v9057
      %v9094 = vunpack.c.l.b16 %v9058
      %v9095 = vunpack.c.l.b16 %v9059
      %v9096 = vpack.c.b16 %v9081, %v9080
      %v9097 = vpack.c.b16 %v9083, %v9082
      %v9098 = vpack.c.b16 %v9085, %v9084
      %v9099 = vpack.c.b16 %v9087, %v9086
      %v9100 = vpack.c.b16 %v9089, %v9088
      %v9101 = vpack.c.b16 %v9091, %v9090
      %v9102 = vpack.c.b16 %v9093, %v9092
      %v9103 = vpack.c.b16 %v9095, %v9094
      %9112 = vmatprep.subr.bf16.mxu0 0
      %9113 = vmatpush1.bf16.msra.mxu0 %v9096
      %9114 = vmatprep.subr.bf16.mxu0 0
      %9115 = vmatpush1.bf16.msra.mxu0 %v9097
      %9116 = vmatprep.subr.bf16.mxu0 0
      %9117 = vmatpush1.bf16.msra.mxu0 %v9098
      %9118 = vmatprep.subr.bf16.mxu0 0
      %9119 = vmatpush1.bf16.msra.mxu0 %v9099
      %9120 = vmatprep.subr.bf16.mxu0 0
      %9121 = vmatpush1.bf16.msra.mxu0 %v9100
      %9122 = vmatprep.subr.bf16.mxu0 0
      %9123 = vmatpush1.bf16.msra.mxu0 %v9101
      %9124 = vmatprep.subr.bf16.mxu0 0
      %9125 = vmatpush1.bf16.msra.mxu0 %v9102
      %9126 = vmatprep.subr.bf16.mxu0 0
      %9127 = vmatpush1.bf16.msra.mxu0 %v9103
      %9128 = vmatprep.subr.bf16.mxu0 0
      %9129 = vmatpush1.bf16.msra.mxu0 0
      %9130 = vmatprep.subr.bf16.mxu0 0
      %9131 = vmatpush1.bf16.msra.mxu0 0
      %9132 = vmatprep.subr.bf16.mxu0 0
      %9133 = vmatpush1.bf16.msra.mxu0 0
      %9134 = vmatprep.subr.bf16.mxu0 0
      %9135 = vmatpush1.bf16.msra.mxu0 0
      %9136 = vmatprep.subr.bf16.mxu0 0
      %9137 = vmatpush1.bf16.msra.mxu0 0
      %9138 = vmatprep.subr.bf16.mxu0 0
      %9139 = vmatpush1.bf16.msra.mxu0 0
      %9140 = vmatprep.subr.bf16.mxu0 0
      %9141 = vmatpush1.bf16.msra.mxu0 0
      %9142 = vmatprep.subr.bf16.mxu0 0
      %9143 = vmatpush1.bf16.msra.mxu0 0
      %9144 = vmatprep.mubr.bf16.mxu0 0
      %9145 = vmatmul.mubr.bf16.gmra.mrb[0].mxu0 %v9062
      %v9146 = vpop.f32.mrb[0].mxu0
      %v9147 = vadd.f32 0.0, %v9146
      %v9148 = vpop.f32.mrb[0].mxu0
      %v9149 = vpop.f32.mrb[0].mxu0
      %v9150 = vadd.f32 0.0, %v9149
      %v9151 = vpop.f32.mrb[0].mxu0
      %9152 = vdwg.mxu0
      %v9153 = vadd.f32 %v9041, %v9147
      %v9154 = vadd.f32 %v9042, %v9150
      %s9155 = scalar_lea.vmem %s2, 3328
      %v9156 = vld [vmem:[%s9155] sm:$0xf]
      %v9157 = vld [vmem:[%s9155 + $0x4] sm:$0xf]
      %v9158 = vld [vmem:[%s9155 + $0x8] sm:$0xf]
      %v9159 = vld [vmem:[%s9155 + $0xc] sm:$0xf]
      %v9160 = vld [vmem:[%s9155 + $0x10] sm:$0xf]
      %v9161 = vld [vmem:[%s9155 + $0x14] sm:$0xf]
      %v9162 = vld [vmem:[%s9155 + $0x18] sm:$0xf]
      %v9163 = vld [vmem:[%s9155 + $0x1c] sm:$0xf]
      %v9164 = vld [vmem:[%s9155 + $0x20] sm:$0xf]
      %v9165 = vld [vmem:[%s9155 + $0x24] sm:$0xf]
      %v9166 = vld [vmem:[%s9155 + $0x28] sm:$0xf]
      %v9167 = vld [vmem:[%s9155 + $0x2c] sm:$0xf]
      %v9168 = vld [vmem:[%s9155 + $0x30] sm:$0xf]
      %v9169 = vld [vmem:[%s9155 + $0x34] sm:$0xf]
      %v9170 = vld [vmem:[%s9155 + $0x38] sm:$0xf]
      %v9171 = vld [vmem:[%s9155 + $0x3c] sm:$0xf]
      %v9172 = vrot.slane %v8393, 3
      %v9173 = vrot.slane %v8395, 4
      %v9174 = vor.u32 %v9172, %v9173
      %v9175 = vrot.slane %v8717, 3
      %v9176 = vrot.slane %v8400, 4
      %v9177 = vor.u32 %v9175, %v9176
      %v9178 = vsel %vm1422, %v9174, %v9177
      %v9196 = vunpack.c.l.b16 %v9156
      %v9197 = vunpack.c.l.b16 %v9157
      %v9198 = vunpack.c.l.b16 %v9158
      %v9199 = vunpack.c.l.b16 %v9159
      %v9200 = vunpack.c.l.b16 %v9160
      %v9201 = vunpack.c.l.b16 %v9161
      %v9202 = vunpack.c.l.b16 %v9162
      %v9203 = vunpack.c.l.b16 %v9163
      %v9204 = vunpack.c.l.b16 %v9164
      %v9205 = vunpack.c.l.b16 %v9165
      %v9206 = vunpack.c.l.b16 %v9166
      %v9207 = vunpack.c.l.b16 %v9167
      %v9208 = vunpack.c.l.b16 %v9168
      %v9209 = vunpack.c.l.b16 %v9169
      %v9210 = vunpack.c.l.b16 %v9170
      %v9211 = vunpack.c.l.b16 %v9171
      %v9212 = vpack.c.b16 %v9197, %v9196
      %v9213 = vpack.c.b16 %v9199, %v9198
      %v9214 = vpack.c.b16 %v9201, %v9200
      %v9215 = vpack.c.b16 %v9203, %v9202
      %v9216 = vpack.c.b16 %v9205, %v9204
      %v9217 = vpack.c.b16 %v9207, %v9206
      %v9218 = vpack.c.b16 %v9209, %v9208
      %v9219 = vpack.c.b16 %v9211, %v9210
      %9228 = vmatprep.subr.bf16.mxu0 0
      %9229 = vmatpush1.bf16.msra.mxu0 %v9212
      %9230 = vmatprep.subr.bf16.mxu0 0
      %9231 = vmatpush1.bf16.msra.mxu0 %v9213
      %9232 = vmatprep.subr.bf16.mxu0 0
      %9233 = vmatpush1.bf16.msra.mxu0 %v9214
      %9234 = vmatprep.subr.bf16.mxu0 0
      %9235 = vmatpush1.bf16.msra.mxu0 %v9215
      %9236 = vmatprep.subr.bf16.mxu0 0
      %9237 = vmatpush1.bf16.msra.mxu0 %v9216
      %9238 = vmatprep.subr.bf16.mxu0 0
      %9239 = vmatpush1.bf16.msra.mxu0 %v9217
      %9240 = vmatprep.subr.bf16.mxu0 0
      %9241 = vmatpush1.bf16.msra.mxu0 %v9218
      %9242 = vmatprep.subr.bf16.mxu0 0
      %9243 = vmatpush1.bf16.msra.mxu0 %v9219
      %9244 = vmatprep.subr.bf16.mxu0 0
      %9245 = vmatpush1.bf16.msra.mxu0 0
      %9246 = vmatprep.subr.bf16.mxu0 0
      %9247 = vmatpush1.bf16.msra.mxu0 0
      %9248 = vmatprep.subr.bf16.mxu0 0
      %9249 = vmatpush1.bf16.msra.mxu0 0
      %9250 = vmatprep.subr.bf16.mxu0 0
      %9251 = vmatpush1.bf16.msra.mxu0 0
      %9252 = vmatprep.subr.bf16.mxu0 0
      %9253 = vmatpush1.bf16.msra.mxu0 0
      %9254 = vmatprep.subr.bf16.mxu0 0
      %9255 = vmatpush1.bf16.msra.mxu0 0
      %9256 = vmatprep.subr.bf16.mxu0 0
      %9257 = vmatpush1.bf16.msra.mxu0 0
      %9258 = vmatprep.subr.bf16.mxu0 0
      %9259 = vmatpush1.bf16.msra.mxu0 0
      %9260 = vmatprep.mubr.bf16.mxu0 0
      %9261 = vmatmul.mubr.bf16.gmra.mrb[0].mxu0 %v9178
      %v9262 = vpop.f32.mrb[0].mxu0
      %v9263 = vadd.f32 0.0, %v9262
      %v9264 = vpop.f32.mrb[0].mxu0
      %v9265 = vpop.f32.mrb[0].mxu0
      %v9266 = vadd.f32 0.0, %v9265
      %v9267 = vpop.f32.mrb[0].mxu0
      %9268 = vdwg.mxu0
      %v9269 = vadd.f32 %v9153, %v9263
      %v9270 = vadd.f32 %v9154, %v9266
      %v9271 = vpack.c.bf16 %v8355, %v8350
      %s9272 = scalar_lea.vmem %s2, 3392
      %v9273 = vld [vmem:[%s9272] sm:$0xf]
      %v9274 = vld [vmem:[%s9272 + $0x4] sm:$0xf]
      %v9275 = vld [vmem:[%s9272 + $0x8] sm:$0xf]
      %v9276 = vld [vmem:[%s9272 + $0xc] sm:$0xf]
      %v9277 = vld [vmem:[%s9272 + $0x10] sm:$0xf]
      %v9278 = vld [vmem:[%s9272 + $0x14] sm:$0xf]
      %v9279 = vld [vmem:[%s9272 + $0x18] sm:$0xf]
      %v9280 = vld [vmem:[%s9272 + $0x1c] sm:$0xf]
      %v9281 = vld [vmem:[%s9272 + $0x20] sm:$0xf]
      %v9282 = vld [vmem:[%s9272 + $0x24] sm:$0xf]
      %v9283 = vld [vmem:[%s9272 + $0x28] sm:$0xf]
      %v9284 = vld [vmem:[%s9272 + $0x2c] sm:$0xf]
      %v9285 = vld [vmem:[%s9272 + $0x30] sm:$0xf]
      %v9286 = vld [vmem:[%s9272 + $0x34] sm:$0xf]
      %v9287 = vld [vmem:[%s9272 + $0x38] sm:$0xf]
      %v9288 = vld [vmem:[%s9272 + $0x3c] sm:$0xf]
      %v9305 = vunpack.c.l.b16 %v9273
      %v9306 = vunpack.c.l.b16 %v9274
      %v9307 = vunpack.c.l.b16 %v9275
      %v9308 = vunpack.c.l.b16 %v9276
      %v9309 = vunpack.c.l.b16 %v9277
      %v9310 = vunpack.c.l.b16 %v9278
      %v9311 = vunpack.c.l.b16 %v9279
      %v9312 = vunpack.c.l.b16 %v9280
      %v9313 = vunpack.c.l.b16 %v9281
      %v9314 = vunpack.c.l.b16 %v9282
      %v9315 = vunpack.c.l.b16 %v9283
      %v9316 = vunpack.c.l.b16 %v9284
      %v9317 = vunpack.c.l.b16 %v9285
      %v9318 = vunpack.c.l.b16 %v9286
      %v9319 = vunpack.c.l.b16 %v9287
      %v9320 = vunpack.c.l.b16 %v9288
      %v9321 = vpack.c.b16 %v9306, %v9305
      %v9322 = vpack.c.b16 %v9308, %v9307
      %v9323 = vpack.c.b16 %v9310, %v9309
      %v9324 = vpack.c.b16 %v9312, %v9311
      %v9325 = vpack.c.b16 %v9314, %v9313
      %v9326 = vpack.c.b16 %v9316, %v9315
      %v9327 = vpack.c.b16 %v9318, %v9317
      %v9328 = vpack.c.b16 %v9320, %v9319
      %9337 = vmatprep.subr.bf16.mxu0 0
      %9338 = vmatpush1.bf16.msra.mxu0 %v9321
      %9339 = vmatprep.subr.bf16.mxu0 0
      %9340 = vmatpush1.bf16.msra.mxu0 %v9322
      %9341 = vmatprep.subr.bf16.mxu0 0
      %9342 = vmatpush1.bf16.msra.mxu0 %v9323
      %9343 = vmatprep.subr.bf16.mxu0 0
      %9344 = vmatpush1.bf16.msra.mxu0 %v9324
      %9345 = vmatprep.subr.bf16.mxu0 0
      %9346 = vmatpush1.bf16.msra.mxu0 %v9325
      %9347 = vmatprep.subr.bf16.mxu0 0
      %9348 = vmatpush1.bf16.msra.mxu0 %v9326
      %9349 = vmatprep.subr.bf16.mxu0 0
      %9350 = vmatpush1.bf16.msra.mxu0 %v9327
      %9351 = vmatprep.subr.bf16.mxu0 0
      %9352 = vmatpush1.bf16.msra.mxu0 %v9328
      %9353 = vmatprep.subr.bf16.mxu0 0
      %9354 = vmatpush1.bf16.msra.mxu0 0
      %9355 = vmatprep.subr.bf16.mxu0 0
      %9356 = vmatpush1.bf16.msra.mxu0 0
      %9357 = vmatprep.subr.bf16.mxu0 0
      %9358 = vmatpush1.bf16.msra.mxu0 0
      %9359 = vmatprep.subr.bf16.mxu0 0
      %9360 = vmatpush1.bf16.msra.mxu0 0
      %9361 = vmatprep.subr.bf16.mxu0 0
      %9362 = vmatpush1.bf16.msra.mxu0 0
      %9363 = vmatprep.subr.bf16.mxu0 0
      %9364 = vmatpush1.bf16.msra.mxu0 0
      %9365 = vmatprep.subr.bf16.mxu0 0
      %9366 = vmatpush1.bf16.msra.mxu0 0
      %9367 = vmatprep.subr.bf16.mxu0 0
      %9368 = vmatpush1.bf16.msra.mxu0 0
      %9369 = vmatprep.mubr.bf16.mxu0 0
      %9370 = vmatmul.mubr.bf16.gmra.mrb[0].mxu0 %v9271
      %v9371 = vpop.f32.mrb[0].mxu0
      %v9372 = vadd.f32 0.0, %v9371
      %v9373 = vpop.f32.mrb[0].mxu0
      %v9374 = vpop.f32.mrb[0].mxu0
      %v9375 = vadd.f32 0.0, %v9374
      %v9376 = vpop.f32.mrb[0].mxu0
      %9377 = vdwg.mxu0
      %v9378 = vadd.f32 %v9269, %v9372
      %v9379 = vadd.f32 %v9270, %v9375
      %s9380 = scalar_lea.vmem %s4, 5
      %v9381 = vld [vmem:[%s9380] sm:$0x1]
      %v9383 = vlaneseq
      %v9384 = vshrl.u32 %v9383, 7
      %v9385 = vsub.s32 0, %v9384
      %v9386 = vrot.slane %v9381, %v9385
      %v9388 = vadd.f32 %v9378, %v9386
      %v9389 = vadd.f32 %v9379, %v9386
      %v9390 = vmul.f32 %v9388, %v9388
      %v9391 = vmul.f32 %v9389, %v9389
      %v9392 = vsub.f32 0.0, %v9390
      %v9393 = vsub.f32 0.0, %v9391
      %v9394 = vmul.f32 %v9392, 1.442695
      %v9395 = vpow.pop %v9394
      %v9396 = vmul.f32 %v9393, 1.442695
      %v9397 = vpow.pop %v9396
      %v9398 = vmul.f32 %v9395, %v8342
      %v9399 = vmul.f32 %v9397, %v8343
      %v9402 = vrot.slane %v9398, 7
      %v9403 = vrot.slane %v9399, 7
      %v9404 = vsel %vm230, %v9402, %v9403
      %v9408 = vsel %vm230, 0.0, %v9402
      %v9409 = vsel %vm230, %v9403, 0.0
      %v9410 = vpack.c.bf16 %v9404, %v9408
      %s9411 = scalar_lea.vmem %s1, 1536
      %v9412 = vld [vmem:[%s9411] sm:$0xf]
      %v9413 = vld [vmem:[%s9411 + $0x4] sm:$0xf]
      %v9414 = vld [vmem:[%s9411 + $0x8] sm:$0xf]
      %v9415 = vld [vmem:[%s9411 + $0xc] sm:$0xf]
      %v9416 = vld [vmem:[%s9411 + $0x10] sm:$0xf]
      %v9417 = vld [vmem:[%s9411 + $0x14] sm:$0xf]
      %v9418 = vld [vmem:[%s9411 + $0x18] sm:$0xf]
      %v9419 = vld [vmem:[%s9411 + $0x1c] sm:$0xf]
      %v9420 = vld [vmem:[%s9411 + $0x20] sm:$0xf]
      %v9421 = vld [vmem:[%s9411 + $0x24] sm:$0xf]
      %v9422 = vld [vmem:[%s9411 + $0x28] sm:$0xf]
      %v9423 = vld [vmem:[%s9411 + $0x2c] sm:$0xf]
      %v9424 = vld [vmem:[%s9411 + $0x30] sm:$0xf]
      %v9425 = vld [vmem:[%s9411 + $0x34] sm:$0xf]
      %v9426 = vld [vmem:[%s9411 + $0x38] sm:$0xf]
      %v9427 = vld [vmem:[%s9411 + $0x3c] sm:$0xf]
      %v9428 = vpack.c.bf16 %v9409, %v9409
      %s9429 = scalar_lea.vmem %s1, 1600
      %v9430 = vld [vmem:[%s9429] sm:$0xf]
      %v9431 = vld [vmem:[%s9429 + $0x4] sm:$0xf]
      %v9432 = vld [vmem:[%s9429 + $0x8] sm:$0xf]
      %v9433 = vld [vmem:[%s9429 + $0xc] sm:$0xf]
      %v9434 = vld [vmem:[%s9429 + $0x10] sm:$0xf]
      %v9435 = vld [vmem:[%s9429 + $0x14] sm:$0xf]
      %v9436 = vld [vmem:[%s9429 + $0x18] sm:$0xf]
      %v9437 = vld [vmem:[%s9429 + $0x1c] sm:$0xf]
      %v9438 = vld [vmem:[%s9429 + $0x20] sm:$0xf]
      %v9439 = vld [vmem:[%s9429 + $0x24] sm:$0xf]
      %v9440 = vld [vmem:[%s9429 + $0x28] sm:$0xf]
      %v9441 = vld [vmem:[%s9429 + $0x2c] sm:$0xf]
      %v9442 = vld [vmem:[%s9429 + $0x30] sm:$0xf]
      %v9443 = vld [vmem:[%s9429 + $0x34] sm:$0xf]
      %v9444 = vld [vmem:[%s9429 + $0x38] sm:$0xf]
      %v9445 = vld [vmem:[%s9429 + $0x3c] sm:$0xf]
      %v9447 = vshrl.u32 %v9410, 16
      %v9449 = vshll.u32 %v9410, 16
      %v9451 = vrot.slane %v9449, 1
      %v9452 = vor.u32 %v9447, %v9451
      %v9454 = vshll.u32 %v9428, 16
      %v9456 = vrot.slane %v9454, 1
      %v9457 = vsel %vm274, %v9452, %v9456
      %v9475 = vunpack.c.l.b16 %v9430
      %v9476 = vunpack.c.l.b16 %v9431
      %v9477 = vunpack.c.l.b16 %v9432
      %v9478 = vunpack.c.l.b16 %v9433
      %v9479 = vunpack.c.l.b16 %v9434
      %v9480 = vunpack.c.l.b16 %v9435
      %v9481 = vunpack.c.l.b16 %v9436
      %v9482 = vunpack.c.l.b16 %v9437
      %v9483 = vunpack.c.l.b16 %v9438
      %v9484 = vunpack.c.l.b16 %v9439
      %v9485 = vunpack.c.l.b16 %v9440
      %v9486 = vunpack.c.l.b16 %v9441
      %v9487 = vunpack.c.l.b16 %v9442
      %v9488 = vunpack.c.l.b16 %v9443
      %v9489 = vunpack.c.l.b16 %v9444
      %v9490 = vunpack.c.l.b16 %v9445
      %v9491 = vpack.c.b16 %v9476, %v9475
      %v9492 = vpack.c.b16 %v9478, %v9477
      %v9493 = vpack.c.b16 %v9480, %v9479
      %v9494 = vpack.c.b16 %v9482, %v9481
      %v9495 = vpack.c.b16 %v9484, %v9483
      %v9496 = vpack.c.b16 %v9486, %v9485
      %v9497 = vpack.c.b16 %v9488, %v9487
      %v9498 = vpack.c.b16 %v9490, %v9489
      %9507 = vmatprep.subr.bf16.mxu0 0
      %9508 = vmatpush1.bf16.msra.mxu0 %v9491
      %9509 = vmatprep.subr.bf16.mxu0 0
      %9510 = vmatpush1.bf16.msra.mxu0 %v9492
      %9511 = vmatprep.subr.bf16.mxu0 0
      %9512 = vmatpush1.bf16.msra.mxu0 %v9493
      %9513 = vmatprep.subr.bf16.mxu0 0
      %9514 = vmatpush1.bf16.msra.mxu0 %v9494
      %9515 = vmatprep.subr.bf16.mxu0 0
      %9516 = vmatpush1.bf16.msra.mxu0 %v9495
      %9517 = vmatprep.subr.bf16.mxu0 0
      %9518 = vmatpush1.bf16.msra.mxu0 %v9496
      %9519 = vmatprep.subr.bf16.mxu0 0
      %9520 = vmatpush1.bf16.msra.mxu0 %v9497
      %9521 = vmatprep.subr.bf16.mxu0 0
      %9522 = vmatpush1.bf16.msra.mxu0 %v9498
      %9523 = vmatprep.subr.bf16.mxu0 0
      %9524 = vmatpush1.bf16.msra.mxu0 0
      %9525 = vmatprep.subr.bf16.mxu0 0
      %9526 = vmatpush1.bf16.msra.mxu0 0
      %9527 = vmatprep.subr.bf16.mxu0 0
      %9528 = vmatpush1.bf16.msra.mxu0 0
      %9529 = vmatprep.subr.bf16.mxu0 0
      %9530 = vmatpush1.bf16.msra.mxu0 0
      %9531 = vmatprep.subr.bf16.mxu0 0
      %9532 = vmatpush1.bf16.msra.mxu0 0
      %9533 = vmatprep.subr.bf16.mxu0 0
      %9534 = vmatpush1.bf16.msra.mxu0 0
      %9535 = vmatprep.subr.bf16.mxu0 0
      %9536 = vmatpush1.bf16.msra.mxu0 0
      %9537 = vmatprep.subr.bf16.mxu0 0
      %9538 = vmatpush1.bf16.msra.mxu0 0
      %9539 = vmatprep.mubr.bf16.mxu0 0
      %9540 = vmatmul.mubr.bf16.gmra.mrb[0].mxu0 %v9457
      %v9541 = vpop.f32.mrb[0].mxu0
      %v9542 = vadd.f32 0.0, %v9541
      %v9543 = vpop.f32.mrb[0].mxu0
      %v9544 = vpop.f32.mrb[0].mxu0
      %v9545 = vadd.f32 0.0, %v9544
      %v9546 = vpop.f32.mrb[0].mxu0
      %9547 = vdwg.mxu0
      %v9564 = vunpack.c.l.b16 %v9412
      %v9565 = vunpack.c.l.b16 %v9413
      %v9566 = vunpack.c.l.b16 %v9414
      %v9567 = vunpack.c.l.b16 %v9415
      %v9568 = vunpack.c.l.b16 %v9416
      %v9569 = vunpack.c.l.b16 %v9417
      %v9570 = vunpack.c.l.b16 %v9418
      %v9571 = vunpack.c.l.b16 %v9419
      %v9572 = vunpack.c.l.b16 %v9420
      %v9573 = vunpack.c.l.b16 %v9421
      %v9574 = vunpack.c.l.b16 %v9422
      %v9575 = vunpack.c.l.b16 %v9423
      %v9576 = vunpack.c.l.b16 %v9424
      %v9577 = vunpack.c.l.b16 %v9425
      %v9578 = vunpack.c.l.b16 %v9426
      %v9579 = vunpack.c.l.b16 %v9427
      %v9580 = vpack.c.b16 %v9565, %v9564
      %v9581 = vpack.c.b16 %v9567, %v9566
      %v9582 = vpack.c.b16 %v9569, %v9568
      %v9583 = vpack.c.b16 %v9571, %v9570
      %v9584 = vpack.c.b16 %v9573, %v9572
      %v9585 = vpack.c.b16 %v9575, %v9574
      %v9586 = vpack.c.b16 %v9577, %v9576
      %v9587 = vpack.c.b16 %v9579, %v9578
      %9596 = vmatprep.subr.bf16.mxu0 0
      %9597 = vmatpush1.bf16.msra.mxu0 %v9580
      %9598 = vmatprep.subr.bf16.mxu0 0
      %9599 = vmatpush1.bf16.msra.mxu0 %v9581
      %9600 = vmatprep.subr.bf16.mxu0 0
      %9601 = vmatpush1.bf16.msra.mxu0 %v9582
      %9602 = vmatprep.subr.bf16.mxu0 0
      %9603 = vmatpush1.bf16.msra.mxu0 %v9583
      %9604 = vmatprep.subr.bf16.mxu0 0
      %9605 = vmatpush1.bf16.msra.mxu0 %v9584
      %9606 = vmatprep.subr.bf16.mxu0 0
      %9607 = vmatpush1.bf16.msra.mxu0 %v9585
      %9608 = vmatprep.subr.bf16.mxu0 0
      %9609 = vmatpush1.bf16.msra.mxu0 %v9586
      %9610 = vmatprep.subr.bf16.mxu0 0
      %9611 = vmatpush1.bf16.msra.mxu0 %v9587
      %9612 = vmatprep.subr.bf16.mxu0 0
      %9613 = vmatpush1.bf16.msra.mxu0 0
      %9614 = vmatprep.subr.bf16.mxu0 0
      %9615 = vmatpush1.bf16.msra.mxu0 0
      %9616 = vmatprep.subr.bf16.mxu0 0
      %9617 = vmatpush1.bf16.msra.mxu0 0
      %9618 = vmatprep.subr.bf16.mxu0 0
      %9619 = vmatpush1.bf16.msra.mxu0 0
      %9620 = vmatprep.subr.bf16.mxu0 0
      %9621 = vmatpush1.bf16.msra.mxu0 0
      %9622 = vmatprep.subr.bf16.mxu0 0
      %9623 = vmatpush1.bf16.msra.mxu0 0
      %9624 = vmatprep.subr.bf16.mxu0 0
      %9625 = vmatpush1.bf16.msra.mxu0 0
      %9626 = vmatprep.subr.bf16.mxu0 0
      %9627 = vmatpush1.bf16.msra.mxu0 0
      %9628 = vmatprep.mubr.bf16.mxu0 0
      %9629 = vmatmul.mubr.bf16.gmra.mrb[0].mxu0 %v9410
      %v9630 = vpop.f32.mrb[0].mxu0
      %v9631 = vadd.f32 %v9542, %v9630
      %v9632 = vpop.f32.mrb[0].mxu0
      %v9633 = vpop.f32.mrb[0].mxu0
      %v9634 = vadd.f32 %v9545, %v9633
      %v9635 = vpop.f32.mrb[0].mxu0
      %9636 = vdwg.mxu0
      %s9637 = scalar_lea.vmem %s1, 1664
      %v9638 = vld [vmem:[%s9637] sm:$0xf]
      %v9639 = vld [vmem:[%s9637 + $0x4] sm:$0xf]
      %v9640 = vld [vmem:[%s9637 + $0x8] sm:$0xf]
      %v9641 = vld [vmem:[%s9637 + $0xc] sm:$0xf]
      %v9642 = vld [vmem:[%s9637 + $0x10] sm:$0xf]
      %v9643 = vld [vmem:[%s9637 + $0x14] sm:$0xf]
      %v9644 = vld [vmem:[%s9637 + $0x18] sm:$0xf]
      %v9645 = vld [vmem:[%s9637 + $0x1c] sm:$0xf]
      %v9646 = vld [vmem:[%s9637 + $0x20] sm:$0xf]
      %v9647 = vld [vmem:[%s9637 + $0x24] sm:$0xf]
      %v9648 = vld [vmem:[%s9637 + $0x28] sm:$0xf]
      %v9649 = vld [vmem:[%s9637 + $0x2c] sm:$0xf]
      %v9650 = vld [vmem:[%s9637 + $0x30] sm:$0xf]
      %v9651 = vld [vmem:[%s9637 + $0x34] sm:$0xf]
      %v9652 = vld [vmem:[%s9637 + $0x38] sm:$0xf]
      %v9653 = vld [vmem:[%s9637 + $0x3c] sm:$0xf]
      %v9656 = vrot.slane %v9410, 1
      %v9657 = vrot.slane %v9428, 1
      %v9658 = vsel %vm485, %v9656, %v9657
      %v9676 = vunpack.c.l.b16 %v9638
      %v9677 = vunpack.c.l.b16 %v9639
      %v9678 = vunpack.c.l.b16 %v9640
      %v9679 = vunpack.c.l.b16 %v9641
      %v9680 = vunpack.c.l.b16 %v9642
      %v9681 = vunpack.c.l.b16 %v9643
      %v9682 = vunpack.c.l.b16 %v9644
      %v9683 = vunpack.c.l.b16 %v9645
      %v9684 = vunpack.c.l.b16 %v9646
      %v9685 = vunpack.c.l.b16 %v9647
      %v9686 = vunpack.c.l.b16 %v9648
      %v9687 = vunpack.c.l.b16 %v9649
      %v9688 = vunpack.c.l.b16 %v9650
      %v9689 = vunpack.c.l.b16 %v9651
      %v9690 = vunpack.c.l.b16 %v9652
      %v9691 = vunpack.c.l.b16 %v9653
      %v9692 = vpack.c.b16 %v9677, %v9676
      %v9693 = vpack.c.b16 %v9679, %v9678
      %v9694 = vpack.c.b16 %v9681, %v9680
      %v9695 = vpack.c.b16 %v9683, %v9682
      %v9696 = vpack.c.b16 %v9685, %v9684
      %v9697 = vpack.c.b16 %v9687, %v9686
      %v9698 = vpack.c.b16 %v9689, %v9688
      %v9699 = vpack.c.b16 %v9691, %v9690
      %9708 = vmatprep.subr.bf16.mxu0 0
      %9709 = vmatpush1.bf16.msra.mxu0 %v9692
      %9710 = vmatprep.subr.bf16.mxu0 0
      %9711 = vmatpush1.bf16.msra.mxu0 %v9693
      %9712 = vmatprep.subr.bf16.mxu0 0
      %9713 = vmatpush1.bf16.msra.mxu0 %v9694
      %9714 = vmatprep.subr.bf16.mxu0 0
      %9715 = vmatpush1.bf16.msra.mxu0 %v9695
      %9716 = vmatprep.subr.bf16.mxu0 0
      %9717 = vmatpush1.bf16.msra.mxu0 %v9696
      %9718 = vmatprep.subr.bf16.mxu0 0
      %9719 = vmatpush1.bf16.msra.mxu0 %v9697
      %9720 = vmatprep.subr.bf16.mxu0 0
      %9721 = vmatpush1.bf16.msra.mxu0 %v9698
      %9722 = vmatprep.subr.bf16.mxu0 0
      %9723 = vmatpush1.bf16.msra.mxu0 %v9699
      %9724 = vmatprep.subr.bf16.mxu0 0
      %9725 = vmatpush1.bf16.msra.mxu0 0
      %9726 = vmatprep.subr.bf16.mxu0 0
      %9727 = vmatpush1.bf16.msra.mxu0 0
      %9728 = vmatprep.subr.bf16.mxu0 0
      %9729 = vmatpush1.bf16.msra.mxu0 0
      %9730 = vmatprep.subr.bf16.mxu0 0
      %9731 = vmatpush1.bf16.msra.mxu0 0
      %9732 = vmatprep.subr.bf16.mxu0 0
      %9733 = vmatpush1.bf16.msra.mxu0 0
      %9734 = vmatprep.subr.bf16.mxu0 0
      %9735 = vmatpush1.bf16.msra.mxu0 0
      %9736 = vmatprep.subr.bf16.mxu0 0
      %9737 = vmatpush1.bf16.msra.mxu0 0
      %9738 = vmatprep.subr.bf16.mxu0 0
      %9739 = vmatpush1.bf16.msra.mxu0 0
      %9740 = vmatprep.mubr.bf16.mxu0 0
      %9741 = vmatmul.mubr.bf16.gmra.mrb[0].mxu0 %v9658
      %v9742 = vpop.f32.mrb[0].mxu0
      %v9743 = vadd.f32 0.0, %v9742
      %v9744 = vpop.f32.mrb[0].mxu0
      %v9745 = vpop.f32.mrb[0].mxu0
      %v9746 = vadd.f32 0.0, %v9745
      %v9747 = vpop.f32.mrb[0].mxu0
      %9748 = vdwg.mxu0
      %v9749 = vadd.f32 %v9631, %v9743
      %v9750 = vadd.f32 %v9634, %v9746
      %s9751 = scalar_lea.vmem %s1, 1728
      %v9752 = vld [vmem:[%s9751] sm:$0xf]
      %v9753 = vld [vmem:[%s9751 + $0x4] sm:$0xf]
      %v9754 = vld [vmem:[%s9751 + $0x8] sm:$0xf]
      %v9755 = vld [vmem:[%s9751 + $0xc] sm:$0xf]
      %v9756 = vld [vmem:[%s9751 + $0x10] sm:$0xf]
      %v9757 = vld [vmem:[%s9751 + $0x14] sm:$0xf]
      %v9758 = vld [vmem:[%s9751 + $0x18] sm:$0xf]
      %v9759 = vld [vmem:[%s9751 + $0x1c] sm:$0xf]
      %v9760 = vld [vmem:[%s9751 + $0x20] sm:$0xf]
      %v9761 = vld [vmem:[%s9751 + $0x24] sm:$0xf]
      %v9762 = vld [vmem:[%s9751 + $0x28] sm:$0xf]
      %v9763 = vld [vmem:[%s9751 + $0x2c] sm:$0xf]
      %v9764 = vld [vmem:[%s9751 + $0x30] sm:$0xf]
      %v9765 = vld [vmem:[%s9751 + $0x34] sm:$0xf]
      %v9766 = vld [vmem:[%s9751 + $0x38] sm:$0xf]
      %v9767 = vld [vmem:[%s9751 + $0x3c] sm:$0xf]
      %v9784 = vunpack.c.l.b16 %v9752
      %v9785 = vunpack.c.l.b16 %v9753
      %v9786 = vunpack.c.l.b16 %v9754
      %v9787 = vunpack.c.l.b16 %v9755
      %v9788 = vunpack.c.l.b16 %v9756
      %v9789 = vunpack.c.l.b16 %v9757
      %v9790 = vunpack.c.l.b16 %v9758
      %v9791 = vunpack.c.l.b16 %v9759
      %v9792 = vunpack.c.l.b16 %v9760
      %v9793 = vunpack.c.l.b16 %v9761
      %v9794 = vunpack.c.l.b16 %v9762
      %v9795 = vunpack.c.l.b16 %v9763
      %v9796 = vunpack.c.l.b16 %v9764
      %v9797 = vunpack.c.l.b16 %v9765
      %v9798 = vunpack.c.l.b16 %v9766
      %v9799 = vunpack.c.l.b16 %v9767
      %v9800 = vpack.c.b16 %v9785, %v9784
      %v9801 = vpack.c.b16 %v9787, %v9786
      %v9802 = vpack.c.b16 %v9789, %v9788
      %v9803 = vpack.c.b16 %v9791, %v9790
      %v9804 = vpack.c.b16 %v9793, %v9792
      %v9805 = vpack.c.b16 %v9795, %v9794
      %v9806 = vpack.c.b16 %v9797, %v9796
      %v9807 = vpack.c.b16 %v9799, %v9798
      %9816 = vmatprep.subr.bf16.mxu0 0
      %9817 = vmatpush1.bf16.msra.mxu0 %v9800
      %9818 = vmatprep.subr.bf16.mxu0 0
      %9819 = vmatpush1.bf16.msra.mxu0 %v9801
      %9820 = vmatprep.subr.bf16.mxu0 0
      %9821 = vmatpush1.bf16.msra.mxu0 %v9802
      %9822 = vmatprep.subr.bf16.mxu0 0
      %9823 = vmatpush1.bf16.msra.mxu0 %v9803
      %9824 = vmatprep.subr.bf16.mxu0 0
      %9825 = vmatpush1.bf16.msra.mxu0 %v9804
      %9826 = vmatprep.subr.bf16.mxu0 0
      %9827 = vmatpush1.bf16.msra.mxu0 %v9805
      %9828 = vmatprep.subr.bf16.mxu0 0
      %9829 = vmatpush1.bf16.msra.mxu0 %v9806
      %9830 = vmatprep.subr.bf16.mxu0 0
      %9831 = vmatpush1.bf16.msra.mxu0 %v9807
      %9832 = vmatprep.subr.bf16.mxu0 0
      %9833 = vmatpush1.bf16.msra.mxu0 0
      %9834 = vmatprep.subr.bf16.mxu0 0
      %9835 = vmatpush1.bf16.msra.mxu0 0
      %9836 = vmatprep.subr.bf16.mxu0 0
      %9837 = vmatpush1.bf16.msra.mxu0 0
      %9838 = vmatprep.subr.bf16.mxu0 0
      %9839 = vmatpush1.bf16.msra.mxu0 0
      %9840 = vmatprep.subr.bf16.mxu0 0
      %9841 = vmatpush1.bf16.msra.mxu0 0
      %9842 = vmatprep.subr.bf16.mxu0 0
      %9843 = vmatpush1.bf16.msra.mxu0 0
      %9844 = vmatprep.subr.bf16.mxu0 0
      %9845 = vmatpush1.bf16.msra.mxu0 0
      %9846 = vmatprep.subr.bf16.mxu0 0
      %9847 = vmatpush1.bf16.msra.mxu0 0
      %9848 = vmatprep.mubr.bf16.mxu0 0
      %9849 = vmatmul.mubr.bf16.gmra.mrb[0].mxu0 %v1660
      %v9850 = vpop.f32.mrb[0].mxu0
      %v9851 = vadd.f32 0.0, %v9850
      %v9852 = vpop.f32.mrb[0].mxu0
      %v9853 = vpop.f32.mrb[0].mxu0
      %v9854 = vadd.f32 0.0, %v9853
      %v9855 = vpop.f32.mrb[0].mxu0
      %9856 = vdwg.mxu0
      %v9857 = vadd.f32 %v9749, %v9851
      %v9858 = vadd.f32 %v9750, %v9854
      %s9859 = scalar_lea.vmem %s1, 1792
      %v9860 = vld [vmem:[%s9859] sm:$0xf]
      %v9861 = vld [vmem:[%s9859 + $0x4] sm:$0xf]
      %v9862 = vld [vmem:[%s9859 + $0x8] sm:$0xf]
      %v9863 = vld [vmem:[%s9859 + $0xc] sm:$0xf]
      %v9864 = vld [vmem:[%s9859 + $0x10] sm:$0xf]
      %v9865 = vld [vmem:[%s9859 + $0x14] sm:$0xf]
      %v9866 = vld [vmem:[%s9859 + $0x18] sm:$0xf]
      %v9867 = vld [vmem:[%s9859 + $0x1c] sm:$0xf]
      %v9868 = vld [vmem:[%s9859 + $0x20] sm:$0xf]
      %v9869 = vld [vmem:[%s9859 + $0x24] sm:$0xf]
      %v9870 = vld [vmem:[%s9859 + $0x28] sm:$0xf]
      %v9871 = vld [vmem:[%s9859 + $0x2c] sm:$0xf]
      %v9872 = vld [vmem:[%s9859 + $0x30] sm:$0xf]
      %v9873 = vld [vmem:[%s9859 + $0x34] sm:$0xf]
      %v9874 = vld [vmem:[%s9859 + $0x38] sm:$0xf]
      %v9875 = vld [vmem:[%s9859 + $0x3c] sm:$0xf]
      %v9892 = vunpack.c.l.b16 %v9860
      %v9893 = vunpack.c.l.b16 %v9861
      %v9894 = vunpack.c.l.b16 %v9862
      %v9895 = vunpack.c.l.b16 %v9863
      %v9896 = vunpack.c.l.b16 %v9864
      %v9897 = vunpack.c.l.b16 %v9865
      %v9898 = vunpack.c.l.b16 %v9866
      %v9899 = vunpack.c.l.b16 %v9867
      %v9900 = vunpack.c.l.b16 %v9868
      %v9901 = vunpack.c.l.b16 %v9869
      %v9902 = vunpack.c.l.b16 %v9870
      %v9903 = vunpack.c.l.b16 %v9871
      %v9904 = vunpack.c.l.b16 %v9872
      %v9905 = vunpack.c.l.b16 %v9873
      %v9906 = vunpack.c.l.b16 %v9874
      %v9907 = vunpack.c.l.b16 %v9875
      %v9908 = vpack.c.b16 %v9893, %v9892
      %v9909 = vpack.c.b16 %v9895, %v9894
      %v9910 = vpack.c.b16 %v9897, %v9896
      %v9911 = vpack.c.b16 %v9899, %v9898
      %v9912 = vpack.c.b16 %v9901, %v9900
      %v9913 = vpack.c.b16 %v9903, %v9902
      %v9914 = vpack.c.b16 %v9905, %v9904
      %v9915 = vpack.c.b16 %v9907, %v9906
      %9924 = vmatprep.subr.bf16.mxu0 0
      %9925 = vmatpush1.bf16.msra.mxu0 %v9908
      %9926 = vmatprep.subr.bf16.mxu0 0
      %9927 = vmatpush1.bf16.msra.mxu0 %v9909
      %9928 = vmatprep.subr.bf16.mxu0 0
      %9929 = vmatpush1.bf16.msra.mxu0 %v9910
      %9930 = vmatprep.subr.bf16.mxu0 0
      %9931 = vmatpush1.bf16.msra.mxu0 %v9911
      %9932 = vmatprep.subr.bf16.mxu0 0
      %9933 = vmatpush1.bf16.msra.mxu0 %v9912
      %9934 = vmatprep.subr.bf16.mxu0 0
      %9935 = vmatpush1.bf16.msra.mxu0 %v9913
      %9936 = vmatprep.subr.bf16.mxu0 0
      %9937 = vmatpush1.bf16.msra.mxu0 %v9914
      %9938 = vmatprep.subr.bf16.mxu0 0
      %9939 = vmatpush1.bf16.msra.mxu0 %v9915
      %9940 = vmatprep.subr.bf16.mxu0 0
      %9941 = vmatpush1.bf16.msra.mxu0 0
      %9942 = vmatprep.subr.bf16.mxu0 0
      %9943 = vmatpush1.bf16.msra.mxu0 0
      %9944 = vmatprep.subr.bf16.mxu0 0
      %9945 = vmatpush1.bf16.msra.mxu0 0
      %9946 = vmatprep.subr.bf16.mxu0 0
      %9947 = vmatpush1.bf16.msra.mxu0 0
      %9948 = vmatprep.subr.bf16.mxu0 0
      %9949 = vmatpush1.bf16.msra.mxu0 0
      %9950 = vmatprep.subr.bf16.mxu0 0
      %9951 = vmatpush1.bf16.msra.mxu0 0
      %9952 = vmatprep.subr.bf16.mxu0 0
      %9953 = vmatpush1.bf16.msra.mxu0 0
      %9954 = vmatprep.subr.bf16.mxu0 0
      %9955 = vmatpush1.bf16.msra.mxu0 0
      %9956 = vmatprep.mubr.bf16.mxu0 0
      %9957 = vmatmul.mubr.bf16.gmra.mrb[0].mxu0 %v1707
      %v9958 = vpop.f32.mrb[0].mxu0
      %v9959 = vadd.f32 0.0, %v9958
      %v9960 = vpop.f32.mrb[0].mxu0
      %v9961 = vpop.f32.mrb[0].mxu0
      %v9962 = vadd.f32 0.0, %v9961
      %v9963 = vpop.f32.mrb[0].mxu0
      %9964 = vdwg.mxu0
      %v9965 = vadd.f32 %v9857, %v9959
      %v9966 = vadd.f32 %v9858, %v9962
      %s9967 = scalar_lea.vmem %s1, 1856
      %v9968 = vld [vmem:[%s9967] sm:$0xf]
      %v9969 = vld [vmem:[%s9967 + $0x4] sm:$0xf]
      %v9970 = vld [vmem:[%s9967 + $0x8] sm:$0xf]
      %v9971 = vld [vmem:[%s9967 + $0xc] sm:$0xf]
      %v9972 = vld [vmem:[%s9967 + $0x10] sm:$0xf]
      %v9973 = vld [vmem:[%s9967 + $0x14] sm:$0xf]
      %v9974 = vld [vmem:[%s9967 + $0x18] sm:$0xf]
      %v9975 = vld [vmem:[%s9967 + $0x1c] sm:$0xf]
      %v9976 = vld [vmem:[%s9967 + $0x20] sm:$0xf]
      %v9977 = vld [vmem:[%s9967 + $0x24] sm:$0xf]
      %v9978 = vld [vmem:[%s9967 + $0x28] sm:$0xf]
      %v9979 = vld [vmem:[%s9967 + $0x2c] sm:$0xf]
      %v9980 = vld [vmem:[%s9967 + $0x30] sm:$0xf]
      %v9981 = vld [vmem:[%s9967 + $0x34] sm:$0xf]
      %v9982 = vld [vmem:[%s9967 + $0x38] sm:$0xf]
      %v9983 = vld [vmem:[%s9967 + $0x3c] sm:$0xf]
      %v10000 = vunpack.c.l.b16 %v9968
      %v10001 = vunpack.c.l.b16 %v9969
      %v10002 = vunpack.c.l.b16 %v9970
      %v10003 = vunpack.c.l.b16 %v9971
      %v10004 = vunpack.c.l.b16 %v9972
      %v10005 = vunpack.c.l.b16 %v9973
      %v10006 = vunpack.c.l.b16 %v9974
      %v10007 = vunpack.c.l.b16 %v9975
      %v10008 = vunpack.c.l.b16 %v9976
      %v10009 = vunpack.c.l.b16 %v9977
      %v10010 = vunpack.c.l.b16 %v9978
      %v10011 = vunpack.c.l.b16 %v9979
      %v10012 = vunpack.c.l.b16 %v9980
      %v10013 = vunpack.c.l.b16 %v9981
      %v10014 = vunpack.c.l.b16 %v9982
      %v10015 = vunpack.c.l.b16 %v9983
      %v10016 = vpack.c.b16 %v10001, %v10000
      %v10017 = vpack.c.b16 %v10003, %v10002
      %v10018 = vpack.c.b16 %v10005, %v10004
      %v10019 = vpack.c.b16 %v10007, %v10006
      %v10020 = vpack.c.b16 %v10009, %v10008
      %v10021 = vpack.c.b16 %v10011, %v10010
      %v10022 = vpack.c.b16 %v10013, %v10012
      %v10023 = vpack.c.b16 %v10015, %v10014
      %10032 = vmatprep.subr.bf16.mxu0 0
      %10033 = vmatpush1.bf16.msra.mxu0 %v10016
      %10034 = vmatprep.subr.bf16.mxu0 0
      %10035 = vmatpush1.bf16.msra.mxu0 %v10017
      %10036 = vmatprep.subr.bf16.mxu0 0
      %10037 = vmatpush1.bf16.msra.mxu0 %v10018
      %10038 = vmatprep.subr.bf16.mxu0 0
      %10039 = vmatpush1.bf16.msra.mxu0 %v10019
      %10040 = vmatprep.subr.bf16.mxu0 0
      %10041 = vmatpush1.bf16.msra.mxu0 %v10020
      %10042 = vmatprep.subr.bf16.mxu0 0
      %10043 = vmatpush1.bf16.msra.mxu0 %v10021
      %10044 = vmatprep.subr.bf16.mxu0 0
      %10045 = vmatpush1.bf16.msra.mxu0 %v10022
      %10046 = vmatprep.subr.bf16.mxu0 0
      %10047 = vmatpush1.bf16.msra.mxu0 %v10023
      %10048 = vmatprep.subr.bf16.mxu0 0
      %10049 = vmatpush1.bf16.msra.mxu0 0
      %10050 = vmatprep.subr.bf16.mxu0 0
      %10051 = vmatpush1.bf16.msra.mxu0 0
      %10052 = vmatprep.subr.bf16.mxu0 0
      %10053 = vmatpush1.bf16.msra.mxu0 0
      %10054 = vmatprep.subr.bf16.mxu0 0
      %10055 = vmatpush1.bf16.msra.mxu0 0
      %10056 = vmatprep.subr.bf16.mxu0 0
      %10057 = vmatpush1.bf16.msra.mxu0 0
      %10058 = vmatprep.subr.bf16.mxu0 0
      %10059 = vmatpush1.bf16.msra.mxu0 0
      %10060 = vmatprep.subr.bf16.mxu0 0
      %10061 = vmatpush1.bf16.msra.mxu0 0
      %10062 = vmatprep.subr.bf16.mxu0 0
      %10063 = vmatpush1.bf16.msra.mxu0 0
      %10064 = vmatprep.mubr.bf16.mxu0 0
      %10065 = vmatmul.mubr.bf16.gmra.mrb[0].mxu0 %v1908
      %v10066 = vpop.f32.mrb[0].mxu0
      %v10067 = vadd.f32 0.0, %v10066
      %v10068 = vpop.f32.mrb[0].mxu0
      %v10069 = vpop.f32.mrb[0].mxu0
      %v10070 = vadd.f32 0.0, %v10069
      %v10071 = vpop.f32.mrb[0].mxu0
      %10072 = vdwg.mxu0
      %v10073 = vadd.f32 %v9965, %v10067
      %v10074 = vadd.f32 %v9966, %v10070
      %s10075 = scalar_lea.vmem %s3, 6
      %v10076 = vld [vmem:[%s10075] sm:$0x1]
      %v10078 = vlaneseq
      %v10079 = vshrl.u32 %v10078, 7
      %v10080 = vsub.s32 0, %v10079
      %v10081 = vrot.slane %v10076, %v10080
      %v10083 = vadd.f32 %v10073, %v10081
      %v10084 = vadd.f32 %v10074, %v10081
      %v10085 = vmax.f32 %v10083, 0.0
      %v10086 = vmax.f32 %v10084, 0.0
      %v10089 = vrot.slane %v10085, 4
      %v10090 = vrot.slane %v10086, 4
      %v10091 = vsel %vm594, %v10089, %v10090
      %v10095 = vsel %vm594, 0.0, %v10089
      %v10096 = vsel %vm594, %v10090, 0.0
      %v10097 = vpack.c.bf16 %v10091, %v10095
      %s10098 = scalar_lea.vmem %s2, 3456
      %v10099 = vld [vmem:[%s10098] sm:$0xf]
      %v10100 = vld [vmem:[%s10098 + $0x4] sm:$0xf]
      %v10101 = vld [vmem:[%s10098 + $0x8] sm:$0xf]
      %v10102 = vld [vmem:[%s10098 + $0xc] sm:$0xf]
      %v10103 = vld [vmem:[%s10098 + $0x10] sm:$0xf]
      %v10104 = vld [vmem:[%s10098 + $0x14] sm:$0xf]
      %v10105 = vld [vmem:[%s10098 + $0x18] sm:$0xf]
      %v10106 = vld [vmem:[%s10098 + $0x1c] sm:$0xf]
      %v10107 = vld [vmem:[%s10098 + $0x20] sm:$0xf]
      %v10108 = vld [vmem:[%s10098 + $0x24] sm:$0xf]
      %v10109 = vld [vmem:[%s10098 + $0x28] sm:$0xf]
      %v10110 = vld [vmem:[%s10098 + $0x2c] sm:$0xf]
      %v10111 = vld [vmem:[%s10098 + $0x30] sm:$0xf]
      %v10112 = vld [vmem:[%s10098 + $0x34] sm:$0xf]
      %v10113 = vld [vmem:[%s10098 + $0x38] sm:$0xf]
      %v10114 = vld [vmem:[%s10098 + $0x3c] sm:$0xf]
      %v10115 = vpack.c.bf16 %v10096, %v10096
      %s10116 = scalar_lea.vmem %s2, 3520
      %v10117 = vld [vmem:[%s10116] sm:$0xf]
      %v10118 = vld [vmem:[%s10116 + $0x4] sm:$0xf]
      %v10119 = vld [vmem:[%s10116 + $0x8] sm:$0xf]
      %v10120 = vld [vmem:[%s10116 + $0xc] sm:$0xf]
      %v10121 = vld [vmem:[%s10116 + $0x10] sm:$0xf]
      %v10122 = vld [vmem:[%s10116 + $0x14] sm:$0xf]
      %v10123 = vld [vmem:[%s10116 + $0x18] sm:$0xf]
      %v10124 = vld [vmem:[%s10116 + $0x1c] sm:$0xf]
      %v10125 = vld [vmem:[%s10116 + $0x20] sm:$0xf]
      %v10126 = vld [vmem:[%s10116 + $0x24] sm:$0xf]
      %v10127 = vld [vmem:[%s10116 + $0x28] sm:$0xf]
      %v10128 = vld [vmem:[%s10116 + $0x2c] sm:$0xf]
      %v10129 = vld [vmem:[%s10116 + $0x30] sm:$0xf]
      %v10130 = vld [vmem:[%s10116 + $0x34] sm:$0xf]
      %v10131 = vld [vmem:[%s10116 + $0x38] sm:$0xf]
      %v10132 = vld [vmem:[%s10116 + $0x3c] sm:$0xf]
      %v10134 = vshrl.u32 %v10097, 16
      %v10136 = vshll.u32 %v10097, 16
      %v10138 = vrot.slane %v10136, 1
      %v10139 = vor.u32 %v10134, %v10138
      %v10141 = vshll.u32 %v10115, 16
      %v10143 = vrot.slane %v10141, 1
      %v10144 = vsel %vm274, %v10139, %v10143
      %v10162 = vunpack.c.l.b16 %v10117
      %v10163 = vunpack.c.l.b16 %v10118
      %v10164 = vunpack.c.l.b16 %v10119
      %v10165 = vunpack.c.l.b16 %v10120
      %v10166 = vunpack.c.l.b16 %v10121
      %v10167 = vunpack.c.l.b16 %v10122
      %v10168 = vunpack.c.l.b16 %v10123
      %v10169 = vunpack.c.l.b16 %v10124
      %v10170 = vunpack.c.l.b16 %v10125
      %v10171 = vunpack.c.l.b16 %v10126
      %v10172 = vunpack.c.l.b16 %v10127
      %v10173 = vunpack.c.l.b16 %v10128
      %v10174 = vunpack.c.l.b16 %v10129
      %v10175 = vunpack.c.l.b16 %v10130
      %v10176 = vunpack.c.l.b16 %v10131
      %v10177 = vunpack.c.l.b16 %v10132
      %v10178 = vpack.c.b16 %v10163, %v10162
      %v10179 = vpack.c.b16 %v10165, %v10164
      %v10180 = vpack.c.b16 %v10167, %v10166
      %v10181 = vpack.c.b16 %v10169, %v10168
      %v10182 = vpack.c.b16 %v10171, %v10170
      %v10183 = vpack.c.b16 %v10173, %v10172
      %v10184 = vpack.c.b16 %v10175, %v10174
      %v10185 = vpack.c.b16 %v10177, %v10176
      %10194 = vmatprep.subr.bf16.mxu0 0
      %10195 = vmatpush1.bf16.msra.mxu0 %v10178
      %10196 = vmatprep.subr.bf16.mxu0 0
      %10197 = vmatpush1.bf16.msra.mxu0 %v10179
      %10198 = vmatprep.subr.bf16.mxu0 0
      %10199 = vmatpush1.bf16.msra.mxu0 %v10180
      %10200 = vmatprep.subr.bf16.mxu0 0
      %10201 = vmatpush1.bf16.msra.mxu0 %v10181
      %10202 = vmatprep.subr.bf16.mxu0 0
      %10203 = vmatpush1.bf16.msra.mxu0 %v10182
      %10204 = vmatprep.subr.bf16.mxu0 0
      %10205 = vmatpush1.bf16.msra.mxu0 %v10183
      %10206 = vmatprep.subr.bf16.mxu0 0
      %10207 = vmatpush1.bf16.msra.mxu0 %v10184
      %10208 = vmatprep.subr.bf16.mxu0 0
      %10209 = vmatpush1.bf16.msra.mxu0 %v10185
      %10210 = vmatprep.subr.bf16.mxu0 0
      %10211 = vmatpush1.bf16.msra.mxu0 0
      %10212 = vmatprep.subr.bf16.mxu0 0
      %10213 = vmatpush1.bf16.msra.mxu0 0
      %10214 = vmatprep.subr.bf16.mxu0 0
      %10215 = vmatpush1.bf16.msra.mxu0 0
      %10216 = vmatprep.subr.bf16.mxu0 0
      %10217 = vmatpush1.bf16.msra.mxu0 0
      %10218 = vmatprep.subr.bf16.mxu0 0
      %10219 = vmatpush1.bf16.msra.mxu0 0
      %10220 = vmatprep.subr.bf16.mxu0 0
      %10221 = vmatpush1.bf16.msra.mxu0 0
      %10222 = vmatprep.subr.bf16.mxu0 0
      %10223 = vmatpush1.bf16.msra.mxu0 0
      %10224 = vmatprep.subr.bf16.mxu0 0
      %10225 = vmatpush1.bf16.msra.mxu0 0
      %10226 = vmatprep.mubr.bf16.mxu0 0
      %10227 = vmatmul.mubr.bf16.gmra.mrb[0].mxu0 %v10144
      %v10228 = vpop.f32.mrb[0].mxu0
      %v10229 = vadd.f32 0.0, %v10228
      %v10230 = vpop.f32.mrb[0].mxu0
      %v10231 = vpop.f32.mrb[0].mxu0
      %v10232 = vadd.f32 0.0, %v10231
      %v10233 = vpop.f32.mrb[0].mxu0
      %10234 = vdwg.mxu0
      %v10251 = vunpack.c.l.b16 %v10099
      %v10252 = vunpack.c.l.b16 %v10100
      %v10253 = vunpack.c.l.b16 %v10101
      %v10254 = vunpack.c.l.b16 %v10102
      %v10255 = vunpack.c.l.b16 %v10103
      %v10256 = vunpack.c.l.b16 %v10104
      %v10257 = vunpack.c.l.b16 %v10105
      %v10258 = vunpack.c.l.b16 %v10106
      %v10259 = vunpack.c.l.b16 %v10107
      %v10260 = vunpack.c.l.b16 %v10108
      %v10261 = vunpack.c.l.b16 %v10109
      %v10262 = vunpack.c.l.b16 %v10110
      %v10263 = vunpack.c.l.b16 %v10111
      %v10264 = vunpack.c.l.b16 %v10112
      %v10265 = vunpack.c.l.b16 %v10113
      %v10266 = vunpack.c.l.b16 %v10114
      %v10267 = vpack.c.b16 %v10252, %v10251
      %v10268 = vpack.c.b16 %v10254, %v10253
      %v10269 = vpack.c.b16 %v10256, %v10255
      %v10270 = vpack.c.b16 %v10258, %v10257
      %v10271 = vpack.c.b16 %v10260, %v10259
      %v10272 = vpack.c.b16 %v10262, %v10261
      %v10273 = vpack.c.b16 %v10264, %v10263
      %v10274 = vpack.c.b16 %v10266, %v10265
      %10283 = vmatprep.subr.bf16.mxu0 0
      %10284 = vmatpush1.bf16.msra.mxu0 %v10267
      %10285 = vmatprep.subr.bf16.mxu0 0
      %10286 = vmatpush1.bf16.msra.mxu0 %v10268
      %10287 = vmatprep.subr.bf16.mxu0 0
      %10288 = vmatpush1.bf16.msra.mxu0 %v10269
      %10289 = vmatprep.subr.bf16.mxu0 0
      %10290 = vmatpush1.bf16.msra.mxu0 %v10270
      %10291 = vmatprep.subr.bf16.mxu0 0
      %10292 = vmatpush1.bf16.msra.mxu0 %v10271
      %10293 = vmatprep.subr.bf16.mxu0 0
      %10294 = vmatpush1.bf16.msra.mxu0 %v10272
      %10295 = vmatprep.subr.bf16.mxu0 0
      %10296 = vmatpush1.bf16.msra.mxu0 %v10273
      %10297 = vmatprep.subr.bf16.mxu0 0
      %10298 = vmatpush1.bf16.msra.mxu0 %v10274
      %10299 = vmatprep.subr.bf16.mxu0 0
      %10300 = vmatpush1.bf16.msra.mxu0 0
      %10301 = vmatprep.subr.bf16.mxu0 0
      %10302 = vmatpush1.bf16.msra.mxu0 0
      %10303 = vmatprep.subr.bf16.mxu0 0
      %10304 = vmatpush1.bf16.msra.mxu0 0
      %10305 = vmatprep.subr.bf16.mxu0 0
      %10306 = vmatpush1.bf16.msra.mxu0 0
      %10307 = vmatprep.subr.bf16.mxu0 0
      %10308 = vmatpush1.bf16.msra.mxu0 0
      %10309 = vmatprep.subr.bf16.mxu0 0
      %10310 = vmatpush1.bf16.msra.mxu0 0
      %10311 = vmatprep.subr.bf16.mxu0 0
      %10312 = vmatpush1.bf16.msra.mxu0 0
      %10313 = vmatprep.subr.bf16.mxu0 0
      %10314 = vmatpush1.bf16.msra.mxu0 0
      %10315 = vmatprep.mubr.bf16.mxu0 0
      %10316 = vmatmul.mubr.bf16.gmra.mrb[0].mxu0 %v10097
      %v10317 = vpop.f32.mrb[0].mxu0
      %v10318 = vadd.f32 %v10229, %v10317
      %v10319 = vpop.f32.mrb[0].mxu0
      %v10320 = vpop.f32.mrb[0].mxu0
      %v10321 = vadd.f32 %v10232, %v10320
      %v10322 = vpop.f32.mrb[0].mxu0
      %10323 = vdwg.mxu0
      %s10324 = scalar_lea.vmem %s2, 3584
      %v10325 = vld [vmem:[%s10324] sm:$0xf]
      %v10326 = vld [vmem:[%s10324 + $0x4] sm:$0xf]
      %v10327 = vld [vmem:[%s10324 + $0x8] sm:$0xf]
      %v10328 = vld [vmem:[%s10324 + $0xc] sm:$0xf]
      %v10329 = vld [vmem:[%s10324 + $0x10] sm:$0xf]
      %v10330 = vld [vmem:[%s10324 + $0x14] sm:$0xf]
      %v10331 = vld [vmem:[%s10324 + $0x18] sm:$0xf]
      %v10332 = vld [vmem:[%s10324 + $0x1c] sm:$0xf]
      %v10333 = vld [vmem:[%s10324 + $0x20] sm:$0xf]
      %v10334 = vld [vmem:[%s10324 + $0x24] sm:$0xf]
      %v10335 = vld [vmem:[%s10324 + $0x28] sm:$0xf]
      %v10336 = vld [vmem:[%s10324 + $0x2c] sm:$0xf]
      %v10337 = vld [vmem:[%s10324 + $0x30] sm:$0xf]
      %v10338 = vld [vmem:[%s10324 + $0x34] sm:$0xf]
      %v10339 = vld [vmem:[%s10324 + $0x38] sm:$0xf]
      %v10340 = vld [vmem:[%s10324 + $0x3c] sm:$0xf]
      %v10343 = vrot.slane %v10097, 1
      %v10344 = vrot.slane %v10115, 1
      %v10345 = vsel %vm485, %v10343, %v10344
      %v10363 = vunpack.c.l.b16 %v10325
      %v10364 = vunpack.c.l.b16 %v10326
      %v10365 = vunpack.c.l.b16 %v10327
      %v10366 = vunpack.c.l.b16 %v10328
      %v10367 = vunpack.c.l.b16 %v10329
      %v10368 = vunpack.c.l.b16 %v10330
      %v10369 = vunpack.c.l.b16 %v10331
      %v10370 = vunpack.c.l.b16 %v10332
      %v10371 = vunpack.c.l.b16 %v10333
      %v10372 = vunpack.c.l.b16 %v10334
      %v10373 = vunpack.c.l.b16 %v10335
      %v10374 = vunpack.c.l.b16 %v10336
      %v10375 = vunpack.c.l.b16 %v10337
      %v10376 = vunpack.c.l.b16 %v10338
      %v10377 = vunpack.c.l.b16 %v10339
      %v10378 = vunpack.c.l.b16 %v10340
      %v10379 = vpack.c.b16 %v10364, %v10363
      %v10380 = vpack.c.b16 %v10366, %v10365
      %v10381 = vpack.c.b16 %v10368, %v10367
      %v10382 = vpack.c.b16 %v10370, %v10369
      %v10383 = vpack.c.b16 %v10372, %v10371
      %v10384 = vpack.c.b16 %v10374, %v10373
      %v10385 = vpack.c.b16 %v10376, %v10375
      %v10386 = vpack.c.b16 %v10378, %v10377
      %10395 = vmatprep.subr.bf16.mxu0 0
      %10396 = vmatpush1.bf16.msra.mxu0 %v10379
      %10397 = vmatprep.subr.bf16.mxu0 0
      %10398 = vmatpush1.bf16.msra.mxu0 %v10380
      %10399 = vmatprep.subr.bf16.mxu0 0
      %10400 = vmatpush1.bf16.msra.mxu0 %v10381
      %10401 = vmatprep.subr.bf16.mxu0 0
      %10402 = vmatpush1.bf16.msra.mxu0 %v10382
      %10403 = vmatprep.subr.bf16.mxu0 0
      %10404 = vmatpush1.bf16.msra.mxu0 %v10383
      %10405 = vmatprep.subr.bf16.mxu0 0
      %10406 = vmatpush1.bf16.msra.mxu0 %v10384
      %10407 = vmatprep.subr.bf16.mxu0 0
      %10408 = vmatpush1.bf16.msra.mxu0 %v10385
      %10409 = vmatprep.subr.bf16.mxu0 0
      %10410 = vmatpush1.bf16.msra.mxu0 %v10386
      %10411 = vmatprep.subr.bf16.mxu0 0
      %10412 = vmatpush1.bf16.msra.mxu0 0
      %10413 = vmatprep.subr.bf16.mxu0 0
      %10414 = vmatpush1.bf16.msra.mxu0 0
      %10415 = vmatprep.subr.bf16.mxu0 0
      %10416 = vmatpush1.bf16.msra.mxu0 0
      %10417 = vmatprep.subr.bf16.mxu0 0
      %10418 = vmatpush1.bf16.msra.mxu0 0
      %10419 = vmatprep.subr.bf16.mxu0 0
      %10420 = vmatpush1.bf16.msra.mxu0 0
      %10421 = vmatprep.subr.bf16.mxu0 0
      %10422 = vmatpush1.bf16.msra.mxu0 0
      %10423 = vmatprep.subr.bf16.mxu0 0
      %10424 = vmatpush1.bf16.msra.mxu0 0
      %10425 = vmatprep.subr.bf16.mxu0 0
      %10426 = vmatpush1.bf16.msra.mxu0 0
      %10427 = vmatprep.mubr.bf16.mxu0 0
      %10428 = vmatmul.mubr.bf16.gmra.mrb[0].mxu0 %v10345
      %v10429 = vpop.f32.mrb[0].mxu0
      %v10430 = vadd.f32 0.0, %v10429
      %v10431 = vpop.f32.mrb[0].mxu0
      %v10432 = vpop.f32.mrb[0].mxu0
      %v10433 = vadd.f32 0.0, %v10432
      %v10434 = vpop.f32.mrb[0].mxu0
      %10435 = vdwg.mxu0
      %v10436 = vadd.f32 %v10318, %v10430
      %v10437 = vadd.f32 %v10321, %v10433
      %s10438 = scalar_lea.vmem %s2, 3648
      %v10439 = vld [vmem:[%s10438] sm:$0xf]
      %v10440 = vld [vmem:[%s10438 + $0x4] sm:$0xf]
      %v10441 = vld [vmem:[%s10438 + $0x8] sm:$0xf]
      %v10442 = vld [vmem:[%s10438 + $0xc] sm:$0xf]
      %v10443 = vld [vmem:[%s10438 + $0x10] sm:$0xf]
      %v10444 = vld [vmem:[%s10438 + $0x14] sm:$0xf]
      %v10445 = vld [vmem:[%s10438 + $0x18] sm:$0xf]
      %v10446 = vld [vmem:[%s10438 + $0x1c] sm:$0xf]
      %v10447 = vld [vmem:[%s10438 + $0x20] sm:$0xf]
      %v10448 = vld [vmem:[%s10438 + $0x24] sm:$0xf]
      %v10449 = vld [vmem:[%s10438 + $0x28] sm:$0xf]
      %v10450 = vld [vmem:[%s10438 + $0x2c] sm:$0xf]
      %v10451 = vld [vmem:[%s10438 + $0x30] sm:$0xf]
      %v10452 = vld [vmem:[%s10438 + $0x34] sm:$0xf]
      %v10453 = vld [vmem:[%s10438 + $0x38] sm:$0xf]
      %v10454 = vld [vmem:[%s10438 + $0x3c] sm:$0xf]
      %v10455 = vrot.slane %v10134, 1
      %v10456 = vrot.slane %v10136, 2
      %v10457 = vor.u32 %v10455, %v10456
      %v10458 = vshrl.u32 %v10115, 16
      %v10460 = vrot.slane %v10458, 1
      %v10461 = vrot.slane %v10141, 2
      %v10462 = vor.u32 %v10460, %v10461
      %v10463 = vsel %vm960, %v10457, %v10462
      %v10481 = vunpack.c.l.b16 %v10439
      %v10482 = vunpack.c.l.b16 %v10440
      %v10483 = vunpack.c.l.b16 %v10441
      %v10484 = vunpack.c.l.b16 %v10442
      %v10485 = vunpack.c.l.b16 %v10443
      %v10486 = vunpack.c.l.b16 %v10444
      %v10487 = vunpack.c.l.b16 %v10445
      %v10488 = vunpack.c.l.b16 %v10446
      %v10489 = vunpack.c.l.b16 %v10447
      %v10490 = vunpack.c.l.b16 %v10448
      %v10491 = vunpack.c.l.b16 %v10449
      %v10492 = vunpack.c.l.b16 %v10450
      %v10493 = vunpack.c.l.b16 %v10451
      %v10494 = vunpack.c.l.b16 %v10452
      %v10495 = vunpack.c.l.b16 %v10453
      %v10496 = vunpack.c.l.b16 %v10454
      %v10497 = vpack.c.b16 %v10482, %v10481
      %v10498 = vpack.c.b16 %v10484, %v10483
      %v10499 = vpack.c.b16 %v10486, %v10485
      %v10500 = vpack.c.b16 %v10488, %v10487
      %v10501 = vpack.c.b16 %v10490, %v10489
      %v10502 = vpack.c.b16 %v10492, %v10491
      %v10503 = vpack.c.b16 %v10494, %v10493
      %v10504 = vpack.c.b16 %v10496, %v10495
      %10513 = vmatprep.subr.bf16.mxu0 0
      %10514 = vmatpush1.bf16.msra.mxu0 %v10497
      %10515 = vmatprep.subr.bf16.mxu0 0
      %10516 = vmatpush1.bf16.msra.mxu0 %v10498
      %10517 = vmatprep.subr.bf16.mxu0 0
      %10518 = vmatpush1.bf16.msra.mxu0 %v10499
      %10519 = vmatprep.subr.bf16.mxu0 0
      %10520 = vmatpush1.bf16.msra.mxu0 %v10500
      %10521 = vmatprep.subr.bf16.mxu0 0
      %10522 = vmatpush1.bf16.msra.mxu0 %v10501
      %10523 = vmatprep.subr.bf16.mxu0 0
      %10524 = vmatpush1.bf16.msra.mxu0 %v10502
      %10525 = vmatprep.subr.bf16.mxu0 0
      %10526 = vmatpush1.bf16.msra.mxu0 %v10503
      %10527 = vmatprep.subr.bf16.mxu0 0
      %10528 = vmatpush1.bf16.msra.mxu0 %v10504
      %10529 = vmatprep.subr.bf16.mxu0 0
      %10530 = vmatpush1.bf16.msra.mxu0 0
      %10531 = vmatprep.subr.bf16.mxu0 0
      %10532 = vmatpush1.bf16.msra.mxu0 0
      %10533 = vmatprep.subr.bf16.mxu0 0
      %10534 = vmatpush1.bf16.msra.mxu0 0
      %10535 = vmatprep.subr.bf16.mxu0 0
      %10536 = vmatpush1.bf16.msra.mxu0 0
      %10537 = vmatprep.subr.bf16.mxu0 0
      %10538 = vmatpush1.bf16.msra.mxu0 0
      %10539 = vmatprep.subr.bf16.mxu0 0
      %10540 = vmatpush1.bf16.msra.mxu0 0
      %10541 = vmatprep.subr.bf16.mxu0 0
      %10542 = vmatpush1.bf16.msra.mxu0 0
      %10543 = vmatprep.subr.bf16.mxu0 0
      %10544 = vmatpush1.bf16.msra.mxu0 0
      %10545 = vmatprep.mubr.bf16.mxu0 0
      %10546 = vmatmul.mubr.bf16.gmra.mrb[0].mxu0 %v10463
      %v10547 = vpop.f32.mrb[0].mxu0
      %v10548 = vadd.f32 0.0, %v10547
      %v10549 = vpop.f32.mrb[0].mxu0
      %v10550 = vpop.f32.mrb[0].mxu0
      %v10551 = vadd.f32 0.0, %v10550
      %v10552 = vpop.f32.mrb[0].mxu0
      %10553 = vdwg.mxu0
      %v10554 = vadd.f32 %v10436, %v10548
      %v10555 = vadd.f32 %v10437, %v10551
      %s10556 = scalar_lea.vmem %s2, 3712
      %v10557 = vld [vmem:[%s10556] sm:$0xf]
      %v10558 = vld [vmem:[%s10556 + $0x4] sm:$0xf]
      %v10559 = vld [vmem:[%s10556 + $0x8] sm:$0xf]
      %v10560 = vld [vmem:[%s10556 + $0xc] sm:$0xf]
      %v10561 = vld [vmem:[%s10556 + $0x10] sm:$0xf]
      %v10562 = vld [vmem:[%s10556 + $0x14] sm:$0xf]
      %v10563 = vld [vmem:[%s10556 + $0x18] sm:$0xf]
      %v10564 = vld [vmem:[%s10556 + $0x1c] sm:$0xf]
      %v10565 = vld [vmem:[%s10556 + $0x20] sm:$0xf]
      %v10566 = vld [vmem:[%s10556 + $0x24] sm:$0xf]
      %v10567 = vld [vmem:[%s10556 + $0x28] sm:$0xf]
      %v10568 = vld [vmem:[%s10556 + $0x2c] sm:$0xf]
      %v10569 = vld [vmem:[%s10556 + $0x30] sm:$0xf]
      %v10570 = vld [vmem:[%s10556 + $0x34] sm:$0xf]
      %v10571 = vld [vmem:[%s10556 + $0x38] sm:$0xf]
      %v10572 = vld [vmem:[%s10556 + $0x3c] sm:$0xf]
      %v10573 = vrot.slane %v10097, 2
      %v10574 = vrot.slane %v10115, 2
      %v10575 = vsel %vm1079, %v10573, %v10574
      %v10593 = vunpack.c.l.b16 %v10557
      %v10594 = vunpack.c.l.b16 %v10558
      %v10595 = vunpack.c.l.b16 %v10559
      %v10596 = vunpack.c.l.b16 %v10560
      %v10597 = vunpack.c.l.b16 %v10561
      %v10598 = vunpack.c.l.b16 %v10562
      %v10599 = vunpack.c.l.b16 %v10563
      %v10600 = vunpack.c.l.b16 %v10564
      %v10601 = vunpack.c.l.b16 %v10565
      %v10602 = vunpack.c.l.b16 %v10566
      %v10603 = vunpack.c.l.b16 %v10567
      %v10604 = vunpack.c.l.b16 %v10568
      %v10605 = vunpack.c.l.b16 %v10569
      %v10606 = vunpack.c.l.b16 %v10570
      %v10607 = vunpack.c.l.b16 %v10571
      %v10608 = vunpack.c.l.b16 %v10572
      %v10609 = vpack.c.b16 %v10594, %v10593
      %v10610 = vpack.c.b16 %v10596, %v10595
      %v10611 = vpack.c.b16 %v10598, %v10597
      %v10612 = vpack.c.b16 %v10600, %v10599
      %v10613 = vpack.c.b16 %v10602, %v10601
      %v10614 = vpack.c.b16 %v10604, %v10603
      %v10615 = vpack.c.b16 %v10606, %v10605
      %v10616 = vpack.c.b16 %v10608, %v10607
      %10625 = vmatprep.subr.bf16.mxu0 0
      %10626 = vmatpush1.bf16.msra.mxu0 %v10609
      %10627 = vmatprep.subr.bf16.mxu0 0
      %10628 = vmatpush1.bf16.msra.mxu0 %v10610
      %10629 = vmatprep.subr.bf16.mxu0 0
      %10630 = vmatpush1.bf16.msra.mxu0 %v10611
      %10631 = vmatprep.subr.bf16.mxu0 0
      %10632 = vmatpush1.bf16.msra.mxu0 %v10612
      %10633 = vmatprep.subr.bf16.mxu0 0
      %10634 = vmatpush1.bf16.msra.mxu0 %v10613
      %10635 = vmatprep.subr.bf16.mxu0 0
      %10636 = vmatpush1.bf16.msra.mxu0 %v10614
      %10637 = vmatprep.subr.bf16.mxu0 0
      %10638 = vmatpush1.bf16.msra.mxu0 %v10615
      %10639 = vmatprep.subr.bf16.mxu0 0
      %10640 = vmatpush1.bf16.msra.mxu0 %v10616
      %10641 = vmatprep.subr.bf16.mxu0 0
      %10642 = vmatpush1.bf16.msra.mxu0 0
      %10643 = vmatprep.subr.bf16.mxu0 0
      %10644 = vmatpush1.bf16.msra.mxu0 0
      %10645 = vmatprep.subr.bf16.mxu0 0
      %10646 = vmatpush1.bf16.msra.mxu0 0
      %10647 = vmatprep.subr.bf16.mxu0 0
      %10648 = vmatpush1.bf16.msra.mxu0 0
      %10649 = vmatprep.subr.bf16.mxu0 0
      %10650 = vmatpush1.bf16.msra.mxu0 0
      %10651 = vmatprep.subr.bf16.mxu0 0
      %10652 = vmatpush1.bf16.msra.mxu0 0
      %10653 = vmatprep.subr.bf16.mxu0 0
      %10654 = vmatpush1.bf16.msra.mxu0 0
      %10655 = vmatprep.subr.bf16.mxu0 0
      %10656 = vmatpush1.bf16.msra.mxu0 0
      %10657 = vmatprep.mubr.bf16.mxu0 0
      %10658 = vmatmul.mubr.bf16.gmra.mrb[0].mxu0 %v10575
      %v10659 = vpop.f32.mrb[0].mxu0
      %v10660 = vadd.f32 0.0, %v10659
      %v10661 = vpop.f32.mrb[0].mxu0
      %v10662 = vpop.f32.mrb[0].mxu0
      %v10663 = vadd.f32 0.0, %v10662
      %v10664 = vpop.f32.mrb[0].mxu0
      %10665 = vdwg.mxu0
      %v10666 = vadd.f32 %v10554, %v10660
      %v10667 = vadd.f32 %v10555, %v10663
      %s10668 = scalar_lea.vmem %s2, 3776
      %v10669 = vld [vmem:[%s10668] sm:$0xf]
      %v10670 = vld [vmem:[%s10668 + $0x4] sm:$0xf]
      %v10671 = vld [vmem:[%s10668 + $0x8] sm:$0xf]
      %v10672 = vld [vmem:[%s10668 + $0xc] sm:$0xf]
      %v10673 = vld [vmem:[%s10668 + $0x10] sm:$0xf]
      %v10674 = vld [vmem:[%s10668 + $0x14] sm:$0xf]
      %v10675 = vld [vmem:[%s10668 + $0x18] sm:$0xf]
      %v10676 = vld [vmem:[%s10668 + $0x1c] sm:$0xf]
      %v10677 = vld [vmem:[%s10668 + $0x20] sm:$0xf]
      %v10678 = vld [vmem:[%s10668 + $0x24] sm:$0xf]
      %v10679 = vld [vmem:[%s10668 + $0x28] sm:$0xf]
      %v10680 = vld [vmem:[%s10668 + $0x2c] sm:$0xf]
      %v10681 = vld [vmem:[%s10668 + $0x30] sm:$0xf]
      %v10682 = vld [vmem:[%s10668 + $0x34] sm:$0xf]
      %v10683 = vld [vmem:[%s10668 + $0x38] sm:$0xf]
      %v10684 = vld [vmem:[%s10668 + $0x3c] sm:$0xf]
      %v10685 = vrot.slane %v10134, 2
      %v10686 = vrot.slane %v10136, 3
      %v10687 = vor.u32 %v10685, %v10686
      %v10688 = vrot.slane %v10458, 2
      %v10689 = vrot.slane %v10141, 3
      %v10690 = vor.u32 %v10688, %v10689
      %v10691 = vsel %vm1192, %v10687, %v10690
      %v10709 = vunpack.c.l.b16 %v10669
      %v10710 = vunpack.c.l.b16 %v10670
      %v10711 = vunpack.c.l.b16 %v10671
      %v10712 = vunpack.c.l.b16 %v10672
      %v10713 = vunpack.c.l.b16 %v10673
      %v10714 = vunpack.c.l.b16 %v10674
      %v10715 = vunpack.c.l.b16 %v10675
      %v10716 = vunpack.c.l.b16 %v10676
      %v10717 = vunpack.c.l.b16 %v10677
      %v10718 = vunpack.c.l.b16 %v10678
      %v10719 = vunpack.c.l.b16 %v10679
      %v10720 = vunpack.c.l.b16 %v10680
      %v10721 = vunpack.c.l.b16 %v10681
      %v10722 = vunpack.c.l.b16 %v10682
      %v10723 = vunpack.c.l.b16 %v10683
      %v10724 = vunpack.c.l.b16 %v10684
      %v10725 = vpack.c.b16 %v10710, %v10709
      %v10726 = vpack.c.b16 %v10712, %v10711
      %v10727 = vpack.c.b16 %v10714, %v10713
      %v10728 = vpack.c.b16 %v10716, %v10715
      %v10729 = vpack.c.b16 %v10718, %v10717
      %v10730 = vpack.c.b16 %v10720, %v10719
      %v10731 = vpack.c.b16 %v10722, %v10721
      %v10732 = vpack.c.b16 %v10724, %v10723
      %10741 = vmatprep.subr.bf16.mxu0 0
      %10742 = vmatpush1.bf16.msra.mxu0 %v10725
      %10743 = vmatprep.subr.bf16.mxu0 0
      %10744 = vmatpush1.bf16.msra.mxu0 %v10726
      %10745 = vmatprep.subr.bf16.mxu0 0
      %10746 = vmatpush1.bf16.msra.mxu0 %v10727
      %10747 = vmatprep.subr.bf16.mxu0 0
      %10748 = vmatpush1.bf16.msra.mxu0 %v10728
      %10749 = vmatprep.subr.bf16.mxu0 0
      %10750 = vmatpush1.bf16.msra.mxu0 %v10729
      %10751 = vmatprep.subr.bf16.mxu0 0
      %10752 = vmatpush1.bf16.msra.mxu0 %v10730
      %10753 = vmatprep.subr.bf16.mxu0 0
      %10754 = vmatpush1.bf16.msra.mxu0 %v10731
      %10755 = vmatprep.subr.bf16.mxu0 0
      %10756 = vmatpush1.bf16.msra.mxu0 %v10732
      %10757 = vmatprep.subr.bf16.mxu0 0
      %10758 = vmatpush1.bf16.msra.mxu0 0
      %10759 = vmatprep.subr.bf16.mxu0 0
      %10760 = vmatpush1.bf16.msra.mxu0 0
      %10761 = vmatprep.subr.bf16.mxu0 0
      %10762 = vmatpush1.bf16.msra.mxu0 0
      %10763 = vmatprep.subr.bf16.mxu0 0
      %10764 = vmatpush1.bf16.msra.mxu0 0
      %10765 = vmatprep.subr.bf16.mxu0 0
      %10766 = vmatpush1.bf16.msra.mxu0 0
      %10767 = vmatprep.subr.bf16.mxu0 0
      %10768 = vmatpush1.bf16.msra.mxu0 0
      %10769 = vmatprep.subr.bf16.mxu0 0
      %10770 = vmatpush1.bf16.msra.mxu0 0
      %10771 = vmatprep.subr.bf16.mxu0 0
      %10772 = vmatpush1.bf16.msra.mxu0 0
      %10773 = vmatprep.mubr.bf16.mxu0 0
      %10774 = vmatmul.mubr.bf16.gmra.mrb[0].mxu0 %v10691
      %v10775 = vpop.f32.mrb[0].mxu0
      %v10776 = vadd.f32 0.0, %v10775
      %v10777 = vpop.f32.mrb[0].mxu0
      %v10778 = vpop.f32.mrb[0].mxu0
      %v10779 = vadd.f32 0.0, %v10778
      %v10780 = vpop.f32.mrb[0].mxu0
      %10781 = vdwg.mxu0
      %v10782 = vadd.f32 %v10666, %v10776
      %v10783 = vadd.f32 %v10667, %v10779
      %s10784 = scalar_lea.vmem %s2, 3840
      %v10785 = vld [vmem:[%s10784] sm:$0xf]
      %v10786 = vld [vmem:[%s10784 + $0x4] sm:$0xf]
      %v10787 = vld [vmem:[%s10784 + $0x8] sm:$0xf]
      %v10788 = vld [vmem:[%s10784 + $0xc] sm:$0xf]
      %v10789 = vld [vmem:[%s10784 + $0x10] sm:$0xf]
      %v10790 = vld [vmem:[%s10784 + $0x14] sm:$0xf]
      %v10791 = vld [vmem:[%s10784 + $0x18] sm:$0xf]
      %v10792 = vld [vmem:[%s10784 + $0x1c] sm:$0xf]
      %v10793 = vld [vmem:[%s10784 + $0x20] sm:$0xf]
      %v10794 = vld [vmem:[%s10784 + $0x24] sm:$0xf]
      %v10795 = vld [vmem:[%s10784 + $0x28] sm:$0xf]
      %v10796 = vld [vmem:[%s10784 + $0x2c] sm:$0xf]
      %v10797 = vld [vmem:[%s10784 + $0x30] sm:$0xf]
      %v10798 = vld [vmem:[%s10784 + $0x34] sm:$0xf]
      %v10799 = vld [vmem:[%s10784 + $0x38] sm:$0xf]
      %v10800 = vld [vmem:[%s10784 + $0x3c] sm:$0xf]
      %v10801 = vrot.slane %v10097, 3
      %v10802 = vrot.slane %v10115, 3
      %v10803 = vsel %vm1309, %v10801, %v10802
      %v10821 = vunpack.c.l.b16 %v10785
      %v10822 = vunpack.c.l.b16 %v10786
      %v10823 = vunpack.c.l.b16 %v10787
      %v10824 = vunpack.c.l.b16 %v10788
      %v10825 = vunpack.c.l.b16 %v10789
      %v10826 = vunpack.c.l.b16 %v10790
      %v10827 = vunpack.c.l.b16 %v10791
      %v10828 = vunpack.c.l.b16 %v10792
      %v10829 = vunpack.c.l.b16 %v10793
      %v10830 = vunpack.c.l.b16 %v10794
      %v10831 = vunpack.c.l.b16 %v10795
      %v10832 = vunpack.c.l.b16 %v10796
      %v10833 = vunpack.c.l.b16 %v10797
      %v10834 = vunpack.c.l.b16 %v10798
      %v10835 = vunpack.c.l.b16 %v10799
      %v10836 = vunpack.c.l.b16 %v10800
      %v10837 = vpack.c.b16 %v10822, %v10821
      %v10838 = vpack.c.b16 %v10824, %v10823
      %v10839 = vpack.c.b16 %v10826, %v10825
      %v10840 = vpack.c.b16 %v10828, %v10827
      %v10841 = vpack.c.b16 %v10830, %v10829
      %v10842 = vpack.c.b16 %v10832, %v10831
      %v10843 = vpack.c.b16 %v10834, %v10833
      %v10844 = vpack.c.b16 %v10836, %v10835
      %10853 = vmatprep.subr.bf16.mxu0 0
      %10854 = vmatpush1.bf16.msra.mxu0 %v10837
      %10855 = vmatprep.subr.bf16.mxu0 0
      %10856 = vmatpush1.bf16.msra.mxu0 %v10838
      %10857 = vmatprep.subr.bf16.mxu0 0
      %10858 = vmatpush1.bf16.msra.mxu0 %v10839
      %10859 = vmatprep.subr.bf16.mxu0 0
      %10860 = vmatpush1.bf16.msra.mxu0 %v10840
      %10861 = vmatprep.subr.bf16.mxu0 0
      %10862 = vmatpush1.bf16.msra.mxu0 %v10841
      %10863 = vmatprep.subr.bf16.mxu0 0
      %10864 = vmatpush1.bf16.msra.mxu0 %v10842
      %10865 = vmatprep.subr.bf16.mxu0 0
      %10866 = vmatpush1.bf16.msra.mxu0 %v10843
      %10867 = vmatprep.subr.bf16.mxu0 0
      %10868 = vmatpush1.bf16.msra.mxu0 %v10844
      %10869 = vmatprep.subr.bf16.mxu0 0
      %10870 = vmatpush1.bf16.msra.mxu0 0
      %10871 = vmatprep.subr.bf16.mxu0 0
      %10872 = vmatpush1.bf16.msra.mxu0 0
      %10873 = vmatprep.subr.bf16.mxu0 0
      %10874 = vmatpush1.bf16.msra.mxu0 0
      %10875 = vmatprep.subr.bf16.mxu0 0
      %10876 = vmatpush1.bf16.msra.mxu0 0
      %10877 = vmatprep.subr.bf16.mxu0 0
      %10878 = vmatpush1.bf16.msra.mxu0 0
      %10879 = vmatprep.subr.bf16.mxu0 0
      %10880 = vmatpush1.bf16.msra.mxu0 0
      %10881 = vmatprep.subr.bf16.mxu0 0
      %10882 = vmatpush1.bf16.msra.mxu0 0
      %10883 = vmatprep.subr.bf16.mxu0 0
      %10884 = vmatpush1.bf16.msra.mxu0 0
      %10885 = vmatprep.mubr.bf16.mxu0 0
      %10886 = vmatmul.mubr.bf16.gmra.mrb[0].mxu0 %v10803
      %v10887 = vpop.f32.mrb[0].mxu0
      %v10888 = vadd.f32 0.0, %v10887
      %v10889 = vpop.f32.mrb[0].mxu0
      %v10890 = vpop.f32.mrb[0].mxu0
      %v10891 = vadd.f32 0.0, %v10890
      %v10892 = vpop.f32.mrb[0].mxu0
      %10893 = vdwg.mxu0
      %v10894 = vadd.f32 %v10782, %v10888
      %v10895 = vadd.f32 %v10783, %v10891
      %s10896 = scalar_lea.vmem %s2, 3904
      %v10897 = vld [vmem:[%s10896] sm:$0xf]
      %v10898 = vld [vmem:[%s10896 + $0x4] sm:$0xf]
      %v10899 = vld [vmem:[%s10896 + $0x8] sm:$0xf]
      %v10900 = vld [vmem:[%s10896 + $0xc] sm:$0xf]
      %v10901 = vld [vmem:[%s10896 + $0x10] sm:$0xf]
      %v10902 = vld [vmem:[%s10896 + $0x14] sm:$0xf]
      %v10903 = vld [vmem:[%s10896 + $0x18] sm:$0xf]
      %v10904 = vld [vmem:[%s10896 + $0x1c] sm:$0xf]
      %v10905 = vld [vmem:[%s10896 + $0x20] sm:$0xf]
      %v10906 = vld [vmem:[%s10896 + $0x24] sm:$0xf]
      %v10907 = vld [vmem:[%s10896 + $0x28] sm:$0xf]
      %v10908 = vld [vmem:[%s10896 + $0x2c] sm:$0xf]
      %v10909 = vld [vmem:[%s10896 + $0x30] sm:$0xf]
      %v10910 = vld [vmem:[%s10896 + $0x34] sm:$0xf]
      %v10911 = vld [vmem:[%s10896 + $0x38] sm:$0xf]
      %v10912 = vld [vmem:[%s10896 + $0x3c] sm:$0xf]
      %v10913 = vrot.slane %v10134, 3
      %v10914 = vrot.slane %v10136, 4
      %v10915 = vor.u32 %v10913, %v10914
      %v10916 = vrot.slane %v10458, 3
      %v10917 = vrot.slane %v10141, 4
      %v10918 = vor.u32 %v10916, %v10917
      %v10919 = vsel %vm1422, %v10915, %v10918
      %v10937 = vunpack.c.l.b16 %v10897
      %v10938 = vunpack.c.l.b16 %v10898
      %v10939 = vunpack.c.l.b16 %v10899
      %v10940 = vunpack.c.l.b16 %v10900
      %v10941 = vunpack.c.l.b16 %v10901
      %v10942 = vunpack.c.l.b16 %v10902
      %v10943 = vunpack.c.l.b16 %v10903
      %v10944 = vunpack.c.l.b16 %v10904
      %v10945 = vunpack.c.l.b16 %v10905
      %v10946 = vunpack.c.l.b16 %v10906
      %v10947 = vunpack.c.l.b16 %v10907
      %v10948 = vunpack.c.l.b16 %v10908
      %v10949 = vunpack.c.l.b16 %v10909
      %v10950 = vunpack.c.l.b16 %v10910
      %v10951 = vunpack.c.l.b16 %v10911
      %v10952 = vunpack.c.l.b16 %v10912
      %v10953 = vpack.c.b16 %v10938, %v10937
      %v10954 = vpack.c.b16 %v10940, %v10939
      %v10955 = vpack.c.b16 %v10942, %v10941
      %v10956 = vpack.c.b16 %v10944, %v10943
      %v10957 = vpack.c.b16 %v10946, %v10945
      %v10958 = vpack.c.b16 %v10948, %v10947
      %v10959 = vpack.c.b16 %v10950, %v10949
      %v10960 = vpack.c.b16 %v10952, %v10951
      %10969 = vmatprep.subr.bf16.mxu0 0
      %10970 = vmatpush1.bf16.msra.mxu0 %v10953
      %10971 = vmatprep.subr.bf16.mxu0 0
      %10972 = vmatpush1.bf16.msra.mxu0 %v10954
      %10973 = vmatprep.subr.bf16.mxu0 0
      %10974 = vmatpush1.bf16.msra.mxu0 %v10955
      %10975 = vmatprep.subr.bf16.mxu0 0
      %10976 = vmatpush1.bf16.msra.mxu0 %v10956
      %10977 = vmatprep.subr.bf16.mxu0 0
      %10978 = vmatpush1.bf16.msra.mxu0 %v10957
      %10979 = vmatprep.subr.bf16.mxu0 0
      %10980 = vmatpush1.bf16.msra.mxu0 %v10958
      %10981 = vmatprep.subr.bf16.mxu0 0
      %10982 = vmatpush1.bf16.msra.mxu0 %v10959
      %10983 = vmatprep.subr.bf16.mxu0 0
      %10984 = vmatpush1.bf16.msra.mxu0 %v10960
      %10985 = vmatprep.subr.bf16.mxu0 0
      %10986 = vmatpush1.bf16.msra.mxu0 0
      %10987 = vmatprep.subr.bf16.mxu0 0
      %10988 = vmatpush1.bf16.msra.mxu0 0
      %10989 = vmatprep.subr.bf16.mxu0 0
      %10990 = vmatpush1.bf16.msra.mxu0 0
      %10991 = vmatprep.subr.bf16.mxu0 0
      %10992 = vmatpush1.bf16.msra.mxu0 0
      %10993 = vmatprep.subr.bf16.mxu0 0
      %10994 = vmatpush1.bf16.msra.mxu0 0
      %10995 = vmatprep.subr.bf16.mxu0 0
      %10996 = vmatpush1.bf16.msra.mxu0 0
      %10997 = vmatprep.subr.bf16.mxu0 0
      %10998 = vmatpush1.bf16.msra.mxu0 0
      %10999 = vmatprep.subr.bf16.mxu0 0
      %11000 = vmatpush1.bf16.msra.mxu0 0
      %11001 = vmatprep.mubr.bf16.mxu0 0
      %11002 = vmatmul.mubr.bf16.gmra.mrb[0].mxu0 %v10919
      %v11003 = vpop.f32.mrb[0].mxu0
      %v11004 = vadd.f32 0.0, %v11003
      %v11005 = vpop.f32.mrb[0].mxu0
      %v11006 = vpop.f32.mrb[0].mxu0
      %v11007 = vadd.f32 0.0, %v11006
      %v11008 = vpop.f32.mrb[0].mxu0
      %11009 = vdwg.mxu0
      %v11010 = vadd.f32 %v10894, %v11004
      %v11011 = vadd.f32 %v10895, %v11007
      %v11012 = vpack.c.bf16 %v10096, %v10091
      %s11013 = scalar_lea.vmem %s2, 3968
      %v11014 = vld [vmem:[%s11013] sm:$0xf]
      %v11015 = vld [vmem:[%s11013 + $0x4] sm:$0xf]
      %v11016 = vld [vmem:[%s11013 + $0x8] sm:$0xf]
      %v11017 = vld [vmem:[%s11013 + $0xc] sm:$0xf]
      %v11018 = vld [vmem:[%s11013 + $0x10] sm:$0xf]
      %v11019 = vld [vmem:[%s11013 + $0x14] sm:$0xf]
      %v11020 = vld [vmem:[%s11013 + $0x18] sm:$0xf]
      %v11021 = vld [vmem:[%s11013 + $0x1c] sm:$0xf]
      %v11022 = vld [vmem:[%s11013 + $0x20] sm:$0xf]
      %v11023 = vld [vmem:[%s11013 + $0x24] sm:$0xf]
      %v11024 = vld [vmem:[%s11013 + $0x28] sm:$0xf]
      %v11025 = vld [vmem:[%s11013 + $0x2c] sm:$0xf]
      %v11026 = vld [vmem:[%s11013 + $0x30] sm:$0xf]
      %v11027 = vld [vmem:[%s11013 + $0x34] sm:$0xf]
      %v11028 = vld [vmem:[%s11013 + $0x38] sm:$0xf]
      %v11029 = vld [vmem:[%s11013 + $0x3c] sm:$0xf]
      %v11046 = vunpack.c.l.b16 %v11014
      %v11047 = vunpack.c.l.b16 %v11015
      %v11048 = vunpack.c.l.b16 %v11016
      %v11049 = vunpack.c.l.b16 %v11017
      %v11050 = vunpack.c.l.b16 %v11018
      %v11051 = vunpack.c.l.b16 %v11019
      %v11052 = vunpack.c.l.b16 %v11020
      %v11053 = vunpack.c.l.b16 %v11021
      %v11054 = vunpack.c.l.b16 %v11022
      %v11055 = vunpack.c.l.b16 %v11023
      %v11056 = vunpack.c.l.b16 %v11024
      %v11057 = vunpack.c.l.b16 %v11025
      %v11058 = vunpack.c.l.b16 %v11026
      %v11059 = vunpack.c.l.b16 %v11027
      %v11060 = vunpack.c.l.b16 %v11028
      %v11061 = vunpack.c.l.b16 %v11029
      %v11062 = vpack.c.b16 %v11047, %v11046
      %v11063 = vpack.c.b16 %v11049, %v11048
      %v11064 = vpack.c.b16 %v11051, %v11050
      %v11065 = vpack.c.b16 %v11053, %v11052
      %v11066 = vpack.c.b16 %v11055, %v11054
      %v11067 = vpack.c.b16 %v11057, %v11056
      %v11068 = vpack.c.b16 %v11059, %v11058
      %v11069 = vpack.c.b16 %v11061, %v11060
      %11078 = vmatprep.subr.bf16.mxu0 0
      %11079 = vmatpush1.bf16.msra.mxu0 %v11062
      %11080 = vmatprep.subr.bf16.mxu0 0
      %11081 = vmatpush1.bf16.msra.mxu0 %v11063
      %11082 = vmatprep.subr.bf16.mxu0 0
      %11083 = vmatpush1.bf16.msra.mxu0 %v11064
      %11084 = vmatprep.subr.bf16.mxu0 0
      %11085 = vmatpush1.bf16.msra.mxu0 %v11065
      %11086 = vmatprep.subr.bf16.mxu0 0
      %11087 = vmatpush1.bf16.msra.mxu0 %v11066
      %11088 = vmatprep.subr.bf16.mxu0 0
      %11089 = vmatpush1.bf16.msra.mxu0 %v11067
      %11090 = vmatprep.subr.bf16.mxu0 0
      %11091 = vmatpush1.bf16.msra.mxu0 %v11068
      %11092 = vmatprep.subr.bf16.mxu0 0
      %11093 = vmatpush1.bf16.msra.mxu0 %v11069
      %11094 = vmatprep.subr.bf16.mxu0 0
      %11095 = vmatpush1.bf16.msra.mxu0 0
      %11096 = vmatprep.subr.bf16.mxu0 0
      %11097 = vmatpush1.bf16.msra.mxu0 0
      %11098 = vmatprep.subr.bf16.mxu0 0
      %11099 = vmatpush1.bf16.msra.mxu0 0
      %11100 = vmatprep.subr.bf16.mxu0 0
      %11101 = vmatpush1.bf16.msra.mxu0 0
      %11102 = vmatprep.subr.bf16.mxu0 0
      %11103 = vmatpush1.bf16.msra.mxu0 0
      %11104 = vmatprep.subr.bf16.mxu0 0
      %11105 = vmatpush1.bf16.msra.mxu0 0
      %11106 = vmatprep.subr.bf16.mxu0 0
      %11107 = vmatpush1.bf16.msra.mxu0 0
      %11108 = vmatprep.subr.bf16.mxu0 0
      %11109 = vmatpush1.bf16.msra.mxu0 0
      %11110 = vmatprep.mubr.bf16.mxu0 0
      %11111 = vmatmul.mubr.bf16.gmra.mrb[0].mxu0 %v11012
      %v11112 = vpop.f32.mrb[0].mxu0
      %v11113 = vadd.f32 0.0, %v11112
      %v11114 = vpop.f32.mrb[0].mxu0
      %v11115 = vpop.f32.mrb[0].mxu0
      %v11116 = vadd.f32 0.0, %v11115
      %v11117 = vpop.f32.mrb[0].mxu0
      %11118 = vdwg.mxu0
      %v11119 = vadd.f32 %v11010, %v11113
      %v11120 = vadd.f32 %v11011, %v11116
      %s11121 = scalar_lea.vmem %s4, 6
      %v11122 = vld [vmem:[%s11121] sm:$0x1]
      %v11124 = vlaneseq
      %v11125 = vshrl.u32 %v11124, 7
      %v11126 = vsub.s32 0, %v11125
      %v11127 = vrot.slane %v11122, %v11126
      %v11129 = vadd.f32 %v11119, %v11127
      %v11130 = vadd.f32 %v11120, %v11127
      %v11131 = vmul.f32 %v11129, %v11129
      %v11132 = vmul.f32 %v11130, %v11130
      %v11133 = vsub.f32 0.0, %v11131
      %v11134 = vsub.f32 0.0, %v11132
      %v11135 = vmul.f32 %v11133, 1.442695
      %v11136 = vpow.pop %v11135
      %v11137 = vmul.f32 %v11134, 1.442695
      %v11138 = vpow.pop %v11137
      %v11139 = vmul.f32 %v11136, %v10083
      %v11140 = vmul.f32 %v11138, %v10084
      %11141 = vst [vmem:[%s224] sm:$0xff] %v11139
      %11142 = vst [vmem:[%s224 + $0x8] sm:$0xff] %v11140
      %p11143 = scmp.lt.s32.totalorder %s16, 1
      %s11144 = scalar_select %p11143, %s16, 1
      %s11145 = smul.addr %s11144, 2
      %s11146 = smul.addr %s11145, 8
      %s11147 = scalar_lea.vmem %s5, %s11146
      // Predicated region
      $region41: #{encoder_block_apply.1} parent=39 // pred_check
        %p11148 = pneg %p144
      $region42: #{encoder_block_apply.1} parent=39 // pred_check_branch
        %11150 = sbr.rel (%p11148) target = $region44
      $region43: #{encoder_block_apply.1} parent=39 // pred_region
        _
      $region44: #{encoder_block_apply.1} parent=39 // pred_fallthru
        _
    $region40: #{encoder_block_apply.1} parent=5 // pred_fallthru
      _
    %p11151 = scmp.le.s32.totalorder 2, %s11
    // Predicated region
    $region45: #{encoder_block_apply.1} parent=5 // pred_check
      %p11152 = pneg %p11151
    $region46: #{encoder_block_apply.1} parent=5 // pred_check_branch
      %11154 = sbr.rel (%p11152) target = $region48
    $region47: #{encoder_block_apply.1} parent=5 // pred_region
      %s11155 = ssub.s32 %s11, 2
      // Predicated region
      $region49: #{encoder_block_apply.1} parent=47 // pred_check
        %p11156 = pneg %p150
      $region50: #{encoder_block_apply.1} parent=47 // pred_check_branch
        %11158 = sbr.rel (%p11156) target = $region52
      $region51: #{encoder_block_apply.1} parent=47 // pred_region
        %p11159 = scmp.lt.s32.totalorder %s17, 1
        %s11160 = scalar_select %p11159, %s17, 1
        %s11161 = smul.addr %s11160, 2
        %s11162 = smul.addr %s11161, 8
        %s11163 = scalar_lea.vmem %s5, %s11162
      $region52: #{encoder_block_apply.1} parent=47 // pred_fallthru
        _
    $region48: #{encoder_block_apply.1} parent=5 // pred_fallthru
      _
  $region6: #{encoder_block_apply.1} parent=0 // loop_footer
    %s15 = sadd.s32 1, %s11
  $region7: #{encoder_block_apply.1} parent=0 // loop_footer_branch
    %10 = sbr.rel target = $region3
  $region8: #{encoder_block_apply.1} parent=0 // loop_exit
    _

</llo_original>
